<compile_context>
chip_gen: v6e
topology: v6e:2x2x1
jax: 0.10.0
libtpu: 0.0.40
codegen_flags: <defaults>
</compile_context>

<pallas_src>
import jax
import jax.numpy as jnp
from jax.experimental import pallas as pl
from jax.experimental.pallas import tpu as pltpu

EPS = 1e-5
LANE = 128
ROW_TILE_TARGET = 1024    # rows per tile for the 1x1 / elementwise stages
ROWS_3X3_TARGET = 128     # target rows of the matmul M dim per 3x3 spatial tile


def _round_up(x, m):
    return (x + m - 1) // m * m


def _pick_row_tile(m, target=ROW_TILE_TARGET):
    """Largest multiple-of-16 divisor of m that is <= target (else m itself).

    Multiple of 16 keeps bf16 tiles sublane-dense (unmasked vld/vst)."""
    best = None
    for tm in range(16, min(target, m) + 1, 16):
        if m % tm == 0:
            best = tm
    return best or m


def _pick_h_tile(h, w, target_rows=ROWS_3X3_TARGET):
    """h-tile for the 3x3 stage: th | h, (th*w) % 8 == 0, th*w near target."""
    best = None
    for th in range(1, h + 1):
        if h % th != 0 or (th * w) % 8 != 0:
            continue
        if th * w <= target_rows:
            best = th
        elif best is None:
            best = th
            break
    return best if best is not None else h


def _vmem_limit_bytes():
    """Generation-aware scoped-VMEM budget (v7x: 64 MiB/core; v5e/v6e: 128)."""
    try:
        cap = getattr(pltpu.get_tpu_info(), "vmem_capacity_bytes", None)
        if cap:
            return int(min(cap * 3 // 4, 100 * 1024 * 1024))
    except Exception:
        pass
    return 48 * 1024 * 1024


def _cparams(semantics, vmem):
    return pltpu.CompilerParams(dimension_semantics=semantics,
                                vmem_limit_bytes=vmem)


# ---------------------------------------------------------------------------
# Kernels
# ---------------------------------------------------------------------------

def conv1x1_stats_kernel(x_ref, w_ref, z_ref, sum_ref, ssq_ref):
    """z = x @ w (bf16 MXU, f32 accum); per-tile channel sum / sumsq (8 rows)."""
    z = jnp.dot(x_ref[...], w_ref[...], preferred_element_type=jnp.float32)
    z_ref[...] = z.astype(z_ref.dtype)
    tm, c = z.shape
    g = z.reshape(8, tm // 8, c)              # 8 sublane-dense partial rows
    sum_ref[0] = jnp.sum(g, axis=1)
    ssq_ref[0] = jnp.sum(g * g, axis=1)


def bn_relu_conv3x3_stats_kernel(z1_ref, sc_ref, sh_ref, w2_ref,
                                 z2_ref, sum_ref, ssq_ref, slab_ref):
    """y = relu(z1*scale+shift); z2 = conv3x3(y, pad=1).

    The kw taps are fused along K: a width-shifted slab (H+2, W, 3C) is built
    once per image (t == 0) in VMEM scratch; each h-tile then does 3 matmuls
    (one per kh) with K = 3C from contiguous leading-axis slab slices.
    """
    t = pl.program_id(1)
    _, H, W, C = z1_ref.shape
    th = z2_ref.shape[1]

    @pl.when(t == 0)
    def _():
        y = jnp.maximum(
            z1_ref[0].astype(jnp.float32) * sc_ref[...] + sh_ref[...], 0.0)
        yb = y.astype(slab_ref.dtype)
        zcol = jnp.zeros((H, 1, C), slab_ref.dtype)
        # slab[r, w, kw*C:(kw+1)*C] = ypad[r, w+kw], ypad = zero-padded y.
        slab_ref[1:H + 1, :, C:2 * C] = yb                       # kw=1 (center)
        slab_ref[1:H + 1, 1:W, 0:C] = yb[:, :W - 1, :]           # kw=0 (left)
        slab_ref[1:H + 1, 0:1, 0:C] = zcol
        slab_ref[1:H + 1, 0:W - 1, 2 * C:3 * C] = yb[:, 1:, :]   # kw=2 (right)
        slab_ref[1:H + 1, W - 1:W, 2 * C:3 * C] = zcol
        # Only the 1-row halo is zeroed (interior is fully overwritten above).
        slab_ref[0] = jnp.zeros((W, 3 * C), slab_ref.dtype)
        slab_ref[H + 1] = jnp.zeros((W, 3 * C), slab_ref.dtype)

    r0 = t * th
    x0 = slab_ref[pl.ds(r0 + 0, th)].reshape(th * W, 3 * C)
    x1 = slab_ref[pl.ds(r0 + 1, th)].reshape(th * W, 3 * C)
    x2 = slab_ref[pl.ds(r0 + 2, th)].reshape(th * W, 3 * C)
    acc = (jnp.dot(x0, w2_ref[0], preferred_element_type=jnp.float32)
           + jnp.dot(x1, w2_ref[1], preferred_element_type=jnp.float32)
           + jnp.dot(x2, w2_ref[2], preferred_element_type=jnp.float32))
    z2_ref[...] = acc.reshape(z2_ref.shape).astype(z2_ref.dtype)
    g = acc.reshape(8, (th * W) // 8, C)
    sum_ref[0, 0] = jnp.sum(g, axis=1)
    ssq_ref[0, 0] = jnp.sum(g * g, axis=1)


def bn_relu_conv1x1_stats_kernel(z_ref, sc_ref, sh_ref, w_ref,
                                 o_ref, sum_ref, ssq_ref):
    """y = relu(z*scale+shift); o = y @ w; per-tile channel sum / sumsq."""
    y = jnp.maximum(
        z_ref[...].astype(jnp.float32) * sc_ref[...] + sh_ref[...], 0.0)
    z = jnp.dot(y.astype(jnp.bfloat16), w_ref[...],
                preferred_element_type=jnp.float32)
    o_ref[...] = z.astype(o_ref.dtype)
    tm, c = z.shape
    g = z.reshape(8, tm // 8, c)
    sum_ref[0] = jnp.sum(g, axis=1)
    ssq_ref[0] = jnp.sum(g * g, axis=1)


def bn_add_relu_kernel(z_ref, sc_ref, sh_ref, r_ref, o_ref):
    """out = relu(z*scale + shift + residual)."""
    z = z_ref[...].astype(jnp.float32) * sc_ref[...] + sh_ref[...]
    o_ref[...] = jnp.maximum(z + r_ref[...].astype(jnp.float32),
                             0.0).astype(o_ref.dtype)


# ---------------------------------------------------------------------------
# Wrapper
# ---------------------------------------------------------------------------

def _bn_fold(ssum, ssq, gamma, beta, count):
    """Per-tile (sum, sumsq) partials -> folded BN scale/shift rows (f32)."""
    c = ssum.shape[-1]
    s = jnp.sum(ssum.reshape(-1, c), axis=0)
    q = jnp.sum(ssq.reshape(-1, c), axis=0)
    mean = s / count
    var = jnp.maximum(q / count - mean * mean, 0.0)   # biased (training) var
    scale = gamma * jax.lax.rsqrt(var + EPS)
    shift = beta - mean * scale
    return scale[None, :], shift[None, :]             # (1, C)


def bottleneck_forward(x_nchw, params, stride=1):
    """Bottleneck(inplanes, planes, stride=1, downsample=None).forward,
    BatchNorm in training mode (batch statistics)."""
    N, Cin, H, W = x_nchw.shape
    P = params["w1"].shape[0]            # planes
    Cout = 4 * P                         # expansion = 4
    assert stride == 1 and Cin == Cout, (
        "downsample=None requires stride=1 and inplanes == planes*4")
    # TODO(synk): downsample branch (strided 1x1 conv + BN) not implemented —
    #             the module is constructed with downsample=None.
    M = N * H * W
    assert M % 16 == 0 and W % 8 == 0, "layout constraints of this kernel"

    Cp = _round_up(Cin, LANE)            # == round_up(Cout, LANE) since Cin==Cout
    Pp = _round_up(P, LANE)
    tm = _pick_row_tile(M)
    gm = M // tm
    th = _pick_h_tile(H, W)
    ht = H // th
    f32, bf16 = jnp.float32, jnp.bfloat16
    vmem = _vmem_limit_bytes()

    # Single layout change at the block boundary.
    # TODO(synk): keep the surrounding model NHWC end-to-end to drop this.
    x_nhwc = jnp.transpose(x_nchw, (0, 2, 3, 1))
    # bf16 input/residual stream (halves HBM traffic of the mem-bound stages);
    # f32 accumulation stays in-kernel.
    xm = jnp.pad(x_nhwc.reshape(M, Cin), ((0, 0), (0, Cp - Cin))).astype(bf16)

    # Weights: pre-transpose, zero-pad channels to lane-dense 128 multiples,
    # bf16 for the MXU.  w2 is stacked per-kh with the kw taps fused along K:
    # w2s[kh, kw*Pp + cin, cout] = w2[cout, cin, kh, kw].
    w1 = jnp.pad(params["w1"].reshape(P, Cin).T,
                 ((0, Cp - Cin), (0, Pp - P))).astype(bf16)            # (Cp, Pp)
    w2s = jnp.pad(jnp.transpose(params["w2"], (2, 3, 1, 0)),
                  ((0, 0), (0, 0), (0, Pp - P), (0, Pp - P)))
    w2s = w2s.reshape(3, 3 * Pp, Pp).astype(bf16)                      # (3,3Pp,Pp)
    w3 = jnp.pad(params["w3"].reshape(Cout, P).T,
                 ((0, Pp - P), (0, Cp - Cout))).astype(bf16)           # (Pp, Cp)
    g1 = jnp.pad(params["g1"], (0, Pp - P)); b1 = jnp.pad(params["b1"], (0, Pp - P))
    g2 = jnp.pad(params["g2"], (0, Pp - P)); b2 = jnp.pad(params["b2"], (0, Pp - P))
    g3 = jnp.pad(params["g3"], (0, Cp - Cout)); b3 = jnp.pad(params["b3"], (0, Cp - Cout))

    # ---- stage 1: conv1 (1x1) + batch-stat partials -------------------------
    z1, s1, q1 = pl.pallas_call(
        conv1x1_stats_kernel,
        out_shape=(jax.ShapeDtypeStruct((M, Pp), bf16),
                   jax.ShapeDtypeStruct((gm, 8, Pp), f32),
                   jax.ShapeDtypeStruct((gm, 8, Pp), f32)),
        grid=(gm,),
        in_specs=[pl.BlockSpec((tm, Cp), lambda i: (i, 0)),
                  pl.BlockSpec((Cp, Pp), lambda i: (0, 0))],   # weight resident
        out_specs=(pl.BlockSpec((tm, Pp), lambda i: (i, 0)),
                   pl.BlockSpec((1, 8, Pp), lambda i: (i, 0, 0)),
                   pl.BlockSpec((1, 8, Pp), lambda i: (i, 0, 0))),
        compiler_params=_cparams(("parallel",), vmem),
        cost_estimate=pl.CostEstimate(
            flops=2 * M * Cp * Pp, transcendentals=0,
            bytes_accessed=2 * M * Cp + 2 * Cp * Pp + 2 * M * Pp + 64 * gm * Pp),
    )(xm, w1)
    sc1, sh1 = _bn_fold(s1, q1, g1, b1, M)

    # ---- stage 2: bn1+relu fused, conv2 (3x3, kw taps fused along K) --------
    z2, s2, q2 = pl.pallas_call(
        bn_relu_conv3x3_stats_kernel,
        out_shape=(jax.ShapeDtypeStruct((N, H, W, Pp), bf16),
                   jax.ShapeDtypeStruct((N, ht, 8, Pp), f32),
                   jax.ShapeDtypeStruct((N, ht, 8, Pp), f32)),
        grid=(N, ht),
        in_specs=[pl.BlockSpec((1, H, W, Pp), lambda n, t: (n, 0, 0, 0)),
                  pl.BlockSpec((1, Pp), lambda n, t: (0, 0)),
                  pl.BlockSpec((1, Pp), lambda n, t: (0, 0)),
                  pl.BlockSpec((3, 3 * Pp, Pp), lambda n, t: (0, 0, 0))],
        out_specs=(pl.BlockSpec((1, th, W, Pp), lambda n, t: (n, t, 0, 0)),
                   pl.BlockSpec((1, 1, 8, Pp), lambda n, t: (n, t, 0, 0)),
                   pl.BlockSpec((1, 1, 8, Pp), lambda n, t: (n, t, 0, 0))),
        scratch_shapes=[pltpu.VMEM((H + 2, W, 3 * Pp), bf16)],
        compiler_params=_cparams(("parallel", "arbitrary"), vmem),
        cost_estimate=pl.CostEstimate(
            flops=2 * M * 9 * Pp * Pp, transcendentals=0,
            bytes_accessed=2 * M * Pp + 18 * Pp * Pp + 2 * M * Pp
                           + 64 * N * ht * Pp),
    )(z1.reshape(N, H, W, Pp), sc1, sh1, w2s)
    sc2, sh2 = _bn_fold(s2, q2, g2, b2, M)

    # ---- stage 3: bn2+relu fused, conv3 (1x1) -------------------------------
    z3, s3, q3 = pl.pallas_call(
        bn_relu_conv1x1_stats_kernel,
        out_shape=(jax.ShapeDtypeStruct((M, Cp), bf16),
                   jax.ShapeDtypeStruct((gm, 8, Cp), f32),
                   jax.ShapeDtypeStruct((gm, 8, Cp), f32)),
        grid=(gm,),
        in_specs=[pl.BlockSpec((tm, Pp), lambda i: (i, 0)),
                  pl.BlockSpec((1, Pp), lambda i: (0, 0)),
                  pl.BlockSpec((1, Pp), lambda i: (0, 0)),
                  pl.BlockSpec((Pp, Cp), lambda i: (0, 0))],
        out_specs=(pl.BlockSpec((tm, Cp), lambda i: (i, 0)),
                   pl.BlockSpec((1, 8, Cp), lambda i: (i, 0, 0)),
                   pl.BlockSpec((1, 8, Cp), lambda i: (i, 0, 0))),
        compiler_params=_cparams(("parallel",), vmem),
        cost_estimate=pl.CostEstimate(
            flops=2 * M * Pp * Cp, transcendentals=0,
            bytes_accessed=2 * M * Pp + 2 * Pp * Cp + 2 * M * Cp + 64 * gm * Cp),
    )(z2.reshape(M, Pp), sc2, sh2, w3)
    sc3, sh3 = _bn_fold(s3, q3, g3, b3, M)

    # ---- stage 4: bn3 fused + identity residual + relu (bf16 streams) -------
    out_m = pl.pallas_call(
        bn_add_relu_kernel,
        out_shape=jax.ShapeDtypeStruct((M, Cp), bf16),
        grid=(gm,),
        in_specs=[pl.BlockSpec((tm, Cp), lambda i: (i, 0)),
                  pl.BlockSpec((1, Cp), lambda i: (0, 0)),
                  pl.BlockSpec((1, Cp), lambda i: (0, 0)),
                  pl.BlockSpec((tm, Cp), lambda i: (i, 0))],
        out_specs=pl.BlockSpec((tm, Cp), lambda i: (i, 0)),
        compiler_params=_cparams(("parallel",), vmem),
        cost_estimate=pl.CostEstimate(
            flops=4 * M * Cp, transcendentals=0,
            bytes_accessed=6 * M * Cp),
    )(z3, sc3, sh3, xm)

    out = out_m[:, :Cout].reshape(N, H, W, Cout)
    # TODO(synk): if the consumer takes NHWC, return `out` directly and skip
    #             this transpose (it is an extra HBM pass).
    return jnp.transpose(out, (0, 3, 1, 2)).astype(f32)


# ---------------------------------------------------------------------------
# Pure-JAX reference (training-mode BatchNorm) and demo
# ---------------------------------------------------------------------------

def _reference_forward(x, params):
    def bn(z, g, b):
        mean = jnp.mean(z, axis=(0, 2, 3), keepdims=True)
        var = jnp.mean((z - mean) ** 2, axis=(0, 2, 3), keepdims=True)
        zn = (z - mean) * jax.lax.rsqrt(var + EPS)
        return zn * g[None, :, None, None] + b[None, :, None, None]

    def conv(z, w, pad):
        return jax.lax.conv_general_dilated(
            z, w, (1, 1), pad, dimension_numbers=("NCHW", "OIHW", "NCHW"))

    z = conv(x, params["w1"], "VALID")
    z = jax.nn.relu(bn(z, params["g1"], params["b1"]))
    z = conv(z, params["w2"], "SAME")
    z = jax.nn.relu(bn(z, params["g2"], params["b2"]))
    z = conv(z, params["w3"], "VALID")
    z = bn(z, params["g3"], params["b3"]) + x
    return jax.nn.relu(z)


def init_params(key, inplanes, planes):
    ks = jax.random.split(key, 9)
    f32 = jnp.float32
    return {
        "w1": 0.1 * jax.random.normal(ks[0], (planes, inplanes, 1, 1), f32),
        "g1": 1.0 + 0.1 * jax.random.normal(ks[1], (planes,), f32),
        "b1": 0.1 * jax.random.normal(ks[2], (planes,), f32),
        "w2": 0.1 * jax.random.normal(ks[3], (planes, planes, 3, 3), f32),
        "g2": 1.0 + 0.1 * jax.random.normal(ks[4], (planes,), f32),
        "b2": 0.1 * jax.random.normal(ks[5], (planes,), f32),
        "w3": 0.1 * jax.random.normal(ks[6], (planes * 4, planes, 1, 1), f32),
        "g3": 1.0 + 0.1 * jax.random.normal(ks[7], (planes * 4,), f32),
        "b3": 0.1 * jax.random.normal(ks[8], (planes * 4,), f32),
    }


if __name__ == "__main__":
    key = jax.random.PRNGKey(0)
    k_x, k_p = jax.random.split(key)

    N, planes, H, W = 2, 4, 16, 16
    inplanes = planes * 4   # required for identity residual (downsample=None)

    x = jax.random.normal(k_x, (N, inplanes, H, W), jnp.float32)   # NCHW
    params = init_params(k_p, inplanes, planes)

    fwd = jax.jit(bottleneck_forward, static_argnames=("stride",))
    out = fwd(x, params)
    jax.block_until_ready(out)

    assert out.shape == (N, planes * 4, H, W)
    assert bool(jnp.all(jnp.isfinite(out)))
    assert bool(jnp.all(out >= 0.0))        # final ReLU

    ref = _reference_forward(x, params)     # f32 reference; kernels use bf16
    assert bool(jnp.allclose(out, ref, atol=5e-2, rtol=5e-2)), (
        "max abs err = %f" % float(jnp.max(jnp.abs(out - ref))))
    print("KERNEL_OK")
</pallas_src>

<mosaic_0001>
module attributes {stable_mosaic.version = 11 : i64} {
  func.func @conv1x1_stats_kernel(%arg0: i32, %arg1: memref<512x128xbf16, #tpu.memory_space<vmem>>, %arg2: memref<128x128xbf16, #tpu.memory_space<vmem>>, %arg3: memref<512x128xbf16, #tpu.memory_space<vmem>>, %arg4: memref<1x8x128xf32, #tpu.memory_space<vmem>>, %arg5: memref<1x8x128xf32, #tpu.memory_space<vmem>>) attributes {dimension_semantics = [#tpu.dimension_semantics<parallel>], iteration_bounds = array<i64: 1>, scalar_prefetch = 0 : i64, scratch_operands = 0 : i64, tpu.core_type = #tpu.core_type<tc>, window_params = [{transform_indices = @transform_0, window_bounds = array<i64: 512, 128>}, {pipeline_mode = #tpu.pipeline_mode<synchronous>, transform_indices = @transform_1, window_bounds = array<i64: 128, 128>}, {transform_indices = @transform_2, window_bounds = array<i64: 512, 128>}, {transform_indices = @transform_3, window_bounds = array<i64: 1, 8, 128>}, {transform_indices = @transform_4, window_bounds = array<i64: 1, 8, 128>}]} {
    %c0 = arith.constant 0 : index
    %c0_0 = arith.constant 0 : index
    %0 = vector.load %arg1[%c0, %c0_0] : memref<512x128xbf16, #tpu.memory_space<vmem>>, vector<512x128xbf16>
    %c0_1 = arith.constant 0 : index
    %c0_2 = arith.constant 0 : index
    %1 = vector.load %arg2[%c0_1, %c0_2] : memref<128x128xbf16, #tpu.memory_space<vmem>>, vector<128x128xbf16>
    %cst = arith.constant dense<0.000000e+00> : vector<512x128xf32>
    %2 = tpu.matmul %0, %1, %cst {dimension_numbers = #tpu.dot_dimension_numbers<[1], [0], [0], [1], [0, 0, 1, 1], [], []>} : vector<512x128xbf16>, vector<128x128xbf16>, vector<512x128xf32> -> vector<512x128xf32>
    %3 = arith.truncf %2 : vector<512x128xf32> to vector<512x128xbf16>
    %c0_3 = arith.constant 0 : index
    %c0_4 = arith.constant 0 : index
    %4 = vector.load %arg3[%c0_3, %c0_4] : memref<512x128xbf16, #tpu.memory_space<vmem>>, vector<512x128xbf16>
    tpu.vector_store %arg3[%c0_3, %c0_4], %3 {strides = array<i32>} : memref<512x128xbf16, #tpu.memory_space<vmem>>, vector<512x128xbf16>,
    %5 = vector.shape_cast %2 : vector<512x128xf32> to vector<8x64x128xf32>
    %cst_5 = arith.constant dense<0.000000e+00> : vector<8x128xf32>
    %6 = vector.multi_reduction <add>, %5, %cst_5 [1] : vector<8x64x128xf32> to vector<8x128xf32>
    %c0_6 = arith.constant 0 : index
    %c0_7 = arith.constant 0 : index
    %c0_8 = arith.constant 0 : index
    %7 = vector.load %arg4[%c0_6, %c0_7, %c0_8] : memref<1x8x128xf32, #tpu.memory_space<vmem>>, vector<1x8x128xf32>
    %8 = vector.shape_cast %7 : vector<1x8x128xf32> to vector<8x128xf32>
    %9 = vector.shape_cast %6 : vector<8x128xf32> to vector<1x8x128xf32>
    tpu.vector_store %arg4[%c0_6, %c0_7, %c0_8], %9 {strides = array<i32>} : memref<1x8x128xf32, #tpu.memory_space<vmem>>, vector<1x8x128xf32>,
    %10 = arith.mulf %5, %5 : vector<8x64x128xf32>
    %cst_9 = arith.constant dense<0.000000e+00> : vector<8x128xf32>
    %11 = vector.multi_reduction <add>, %10, %cst_9 [1] : vector<8x64x128xf32> to vector<8x128xf32>
    %c0_10 = arith.constant 0 : index
    %c0_11 = arith.constant 0 : index
    %c0_12 = arith.constant 0 : index
    %12 = vector.load %arg5[%c0_10, %c0_11, %c0_12] : memref<1x8x128xf32, #tpu.memory_space<vmem>>, vector<1x8x128xf32>
    %13 = vector.shape_cast %12 : vector<1x8x128xf32> to vector<8x128xf32>
    %14 = vector.shape_cast %11 : vector<8x128xf32> to vector<1x8x128xf32>
    tpu.vector_store %arg5[%c0_10, %c0_11, %c0_12], %14 {strides = array<i32>} : memref<1x8x128xf32, #tpu.memory_space<vmem>>, vector<1x8x128xf32>,
    return
  }
  func.func @transform_0(%arg0: i32) -> (i32, i32) {
    %c0_i32 = arith.constant 0 : i32
    %c0_i32_0 = arith.constant 0 : i32
    return %arg0, %c0_i32 : i32, i32
  }
  func.func @transform_1(%arg0: i32) -> (i32, i32) {
    %c0_i32 = arith.constant 0 : i32
    %c0_i32_0 = arith.constant 0 : i32
    %c0_i32_1 = arith.constant 0 : i32
    return %c0_i32, %c0_i32_0 : i32, i32
  }
  func.func @transform_2(%arg0: i32) -> (i32, i32) {
    %c0_i32 = arith.constant 0 : i32
    %c0_i32_0 = arith.constant 0 : i32
    return %arg0, %c0_i32 : i32, i32
  }
  func.func @transform_3(%arg0: i32) -> (i32, i32, i32) {
    %c0_i32 = arith.constant 0 : i32
    %c0_i32_0 = arith.constant 0 : i32
    %c0_i32_1 = arith.constant 0 : i32
    return %arg0, %c0_i32, %c0_i32_0 : i32, i32, i32
  }
  func.func @transform_4(%arg0: i32) -> (i32, i32, i32) {
    %c0_i32 = arith.constant 0 : i32
    %c0_i32_0 = arith.constant 0 : i32
    %c0_i32_1 = arith.constant 0 : i32
    return %arg0, %c0_i32, %c0_i32_0 : i32, i32, i32
  }
}

module attributes {stable_mosaic.version = 11 : i64} {
  func.func @bn_relu_conv3x3_stats_kernel(%arg0: i32, %arg1: i32, %arg2: memref<1x16x16x128xbf16, #tpu.memory_space<vmem>>, %arg3: memref<1x128xf32, #tpu.memory_space<vmem>>, %arg4: memref<1x128xf32, #tpu.memory_space<vmem>>, %arg5: memref<3x384x128xbf16, #tpu.memory_space<vmem>>, %arg6: memref<1x8x16x128xbf16, #tpu.memory_space<vmem>>, %arg7: memref<1x1x8x128xf32, #tpu.memory_space<vmem>>, %arg8: memref<1x1x8x128xf32, #tpu.memory_space<vmem>>, %arg9: memref<18x16x384xbf16, #tpu.memory_space<vmem>>) attributes {dimension_semantics = [#tpu.dimension_semantics<parallel>, #tpu.dimension_semantics<arbitrary>], iteration_bounds = array<i64: 2, 2>, scalar_prefetch = 0 : i64, scratch_operands = 1 : i64, tpu.core_type = #tpu.core_type<tc>, window_params = [{transform_indices = @transform_0, window_bounds = array<i64: 1, 16, 16, 128>}, {pipeline_mode = #tpu.pipeline_mode<synchronous>, transform_indices = @transform_1, window_bounds = array<i64: 1, 128>}, {pipeline_mode = #tpu.pipeline_mode<synchronous>, transform_indices = @transform_2, window_bounds = array<i64: 1, 128>}, {pipeline_mode = #tpu.pipeline_mode<synchronous>, transform_indices = @transform_3, window_bounds = array<i64: 3, 384, 128>}, {transform_indices = @transform_4, window_bounds = array<i64: 1, 8, 16, 128>}, {transform_indices = @transform_5, window_bounds = array<i64: 1, 1, 8, 128>}, {transform_indices = @transform_6, window_bounds = array<i64: 1, 1, 8, 128>}]} {
    %c0_i32 = arith.constant 0 : i32
    %0 = arith.cmpi eq, %arg1, %c0_i32 : i32
    %1 = arith.extui %0 : i1 to i32
    %c0_i32_0 = arith.constant 0 : i32
    %2 = arith.cmpi ne, %1, %c0_i32_0 : i32
    scf.if %2 {
      %c0_30 = arith.constant 0 : index
      %c0_31 = arith.constant 0 : index
      %c0_32 = arith.constant 0 : index
      %c0_33 = arith.constant 0 : index
      %40 = vector.load %arg2[%c0_30, %c0_31, %c0_32, %c0_33] : memref<1x16x16x128xbf16, #tpu.memory_space<vmem>>, vector<1x16x16x128xbf16>
      %41 = vector.shape_cast %40 : vector<1x16x16x128xbf16> to vector<16x16x128xbf16>
      %42 = arith.extf %41 : vector<16x16x128xbf16> to vector<16x16x128xf32>
      %c0_34 = arith.constant 0 : index
      %c0_35 = arith.constant 0 : index
      %43 = vector.load %arg3[%c0_34, %c0_35] : memref<1x128xf32, #tpu.memory_space<vmem>>, vector<1x128xf32>
      %44 = vector.shape_cast %43 : vector<1x128xf32> to vector<1x1x128xf32>
      %45 = vector.broadcast %44 : vector<1x1x128xf32> to vector<16x16x128xf32>
      %46 = arith.mulf %42, %45 : vector<16x16x128xf32>
      %c0_36 = arith.constant 0 : index
      %c0_37 = arith.constant 0 : index
      %47 = vector.load %arg4[%c0_36, %c0_37] : memref<1x128xf32, #tpu.memory_space<vmem>>, vector<1x128xf32>
      %48 = vector.shape_cast %47 : vector<1x128xf32> to vector<1x1x128xf32>
      %49 = vector.broadcast %48 : vector<1x1x128xf32> to vector<16x16x128xf32>
      %50 = arith.addf %46, %49 : vector<16x16x128xf32>
      %cst_38 = arith.constant 0.000000e+00 : f32
      %51 = vector.broadcast %cst_38 : f32 to vector<16x16x128xf32>
      %52 = arith.maximumf %50, %51 : vector<16x16x128xf32>
      %53 = arith.truncf %52 : vector<16x16x128xf32> to vector<16x16x128xbf16>
      %cst_39 = arith.constant 0.000000e+00 : bf16
      %54 = vector.broadcast %cst_39 : bf16 to vector<16x1x128xbf16>
      %c1_40 = arith.constant 1 : index
      %c0_41 = arith.constant 0 : index
      %c128 = arith.constant 128 : index
      %55 = vector.load %arg9[%c1_40, %c0_41, %c128] : memref<18x16x384xbf16, #tpu.memory_space<vmem>>, vector<16x16x128xbf16>
      tpu.vector_store %arg9[%c1_40, %c0_41, %c128], %53 {strides = array<i32>} : memref<18x16x384xbf16, #tpu.memory_space<vmem>>, vector<16x16x128xbf16>,
      %56 = vector.extract_strided_slice %53 {offsets = [0, 0, 0], sizes = [16, 15, 128], strides = [1, 1, 1]} : vector<16x16x128xbf16> to vector<16x15x128xbf16>
      %c1_42 = arith.constant 1 : index
      %c1_43 = arith.constant 1 : index
      %c0_44 = arith.constant 0 : index
      %57 = vector.load %arg9[%c1_42, %c1_43, %c0_44] : memref<18x16x384xbf16, #tpu.memory_space<vmem>>, vector<16x15x128xbf16>
      tpu.vector_store %arg9[%c1_42, %c1_43, %c0_44], %56 {strides = array<i32>} : memref<18x16x384xbf16, #tpu.memory_space<vmem>>, vector<16x15x128xbf16>,
      %c1_45 = arith.constant 1 : index
      %c0_46 = arith.constant 0 : index
      %c0_47 = arith.constant 0 : index
      %58 = vector.load %arg9[%c1_45, %c0_46, %c0_47] : memref<18x16x384xbf16, #tpu.memory_space<vmem>>, vector<16x1x128xbf16>
      tpu.vector_store %arg9[%c1_45, %c0_46, %c0_47], %54 {strides = array<i32>} : memref<18x16x384xbf16, #tpu.memory_space<vmem>>, vector<16x1x128xbf16>,
      %59 = vector.extract_strided_slice %53 {offsets = [0, 1, 0], sizes = [16, 15, 128], strides = [1, 1, 1]} : vector<16x16x128xbf16> to vector<16x15x128xbf16>
      %c1_48 = arith.constant 1 : index
      %c0_49 = arith.constant 0 : index
      %c256 = arith.constant 256 : index
      %60 = vector.load %arg9[%c1_48, %c0_49, %c256] : memref<18x16x384xbf16, #tpu.memory_space<vmem>>, vector<16x15x128xbf16>
      tpu.vector_store %arg9[%c1_48, %c0_49, %c256], %59 {strides = array<i32>} : memref<18x16x384xbf16, #tpu.memory_space<vmem>>, vector<16x15x128xbf16>,
      %c1_50 = arith.constant 1 : index
      %c15 = arith.constant 15 : index
      %c256_51 = arith.constant 256 : index
      %61 = vector.load %arg9[%c1_50, %c15, %c256_51] : memref<18x16x384xbf16, #tpu.memory_space<vmem>>, vector<16x1x128xbf16>
      tpu.vector_store %arg9[%c1_50, %c15, %c256_51], %54 {strides = array<i32>} : memref<18x16x384xbf16, #tpu.memory_space<vmem>>, vector<16x1x128xbf16>,
      %cst_52 = arith.constant 0.000000e+00 : bf16
      %62 = vector.broadcast %cst_52 : bf16 to vector<16x384xbf16>
      %c0_53 = arith.constant 0 : index
      %c0_54 = arith.constant 0 : index
      %c0_55 = arith.constant 0 : index
      %63 = vector.load %arg9[%c0_53, %c0_54, %c0_55] : memref<18x16x384xbf16, #tpu.memory_space<vmem>>, vector<1x16x384xbf16>
      %64 = vector.shape_cast %63 : vector<1x16x384xbf16> to vector<16x384xbf16>
      %65 = vector.shape_cast %62 : vector<16x384xbf16> to vector<1x16x384xbf16>
      tpu.vector_store %arg9[%c0_53, %c0_54, %c0_55], %65 {strides = array<i32>} : memref<18x16x384xbf16, #tpu.memory_space<vmem>>, vector<1x16x384xbf16>,
      %cst_56 = arith.constant 0.000000e+00 : bf16
      %66 = vector.broadcast %cst_56 : bf16 to vector<16x384xbf16>
      %c17 = arith.constant 17 : index
      %c0_57 = arith.constant 0 : index
      %c0_58 = arith.constant 0 : index
      %67 = vector.load %arg9[%c17, %c0_57, %c0_58] : memref<18x16x384xbf16, #tpu.memory_space<vmem>>, vector<1x16x384xbf16>
      %68 = vector.shape_cast %67 : vector<1x16x384xbf16> to vector<16x384xbf16>
      %69 = vector.shape_cast %66 : vector<16x384xbf16> to vector<1x16x384xbf16>
      tpu.vector_store %arg9[%c17, %c0_57, %c0_58], %69 {strides = array<i32>} : memref<18x16x384xbf16, #tpu.memory_space<vmem>>, vector<1x16x384xbf16>,
    } else {
    }
    %c8_i32 = arith.constant 8 : i32
    %3 = arith.muli %arg1, %c8_i32 : i32
    %c0_i32_1 = arith.constant 0 : i32
    %4 = arith.addi %3, %c0_i32_1 : i32
    %5 = arith.index_cast %4 : i32 to index
    %c0 = arith.constant 0 : index
    %c0_2 = arith.constant 0 : index
    %6 = vector.load %arg9[%5, %c0, %c0_2] : memref<18x16x384xbf16, #tpu.memory_space<vmem>>, vector<8x16x384xbf16>
    %7 = vector.shape_cast %6 : vector<8x16x384xbf16> to vector<128x384xbf16>
    %c1_i32 = arith.constant 1 : i32
    %8 = arith.addi %3, %c1_i32 : i32
    %9 = arith.index_cast %8 : i32 to index
    %c0_3 = arith.constant 0 : index
    %c0_4 = arith.constant 0 : index
    %10 = vector.load %arg9[%9, %c0_3, %c0_4] : memref<18x16x384xbf16, #tpu.memory_space<vmem>>, vector<8x16x384xbf16>
    %11 = vector.shape_cast %10 : vector<8x16x384xbf16> to vector<128x384xbf16>
    %c2_i32 = arith.constant 2 : i32
    %12 = arith.addi %3, %c2_i32 : i32
    %13 = arith.index_cast %12 : i32 to index
    %c0_5 = arith.constant 0 : index
    %c0_6 = arith.constant 0 : index
    %14 = vector.load %arg9[%13, %c0_5, %c0_6] : memref<18x16x384xbf16, #tpu.memory_space<vmem>>, vector<8x16x384xbf16>
    %15 = vector.shape_cast %14 : vector<8x16x384xbf16> to vector<128x384xbf16>
    %c0_7 = arith.constant 0 : index
    %c0_8 = arith.constant 0 : index
    %c0_9 = arith.constant 0 : index
    %16 = vector.load %arg5[%c0_7, %c0_8, %c0_9] : memref<3x384x128xbf16, #tpu.memory_space<vmem>>, vector<1x384x128xbf16>
    %17 = vector.shape_cast %16 : vector<1x384x128xbf16> to vector<384x128xbf16>
    %cst = arith.constant dense<0.000000e+00> : vector<128x128xf32>
    %18 = tpu.matmul %7, %17, %cst {dimension_numbers = #tpu.dot_dimension_numbers<[1], [0], [0], [1], [0, 0, 1, 1], [], []>} : vector<128x384xbf16>, vector<384x128xbf16>, vector<128x128xf32> -> vector<128x128xf32>
    %c1 = arith.constant 1 : index
    %c0_10 = arith.constant 0 : index
    %c0_11 = arith.constant 0 : index
    %19 = vector.load %arg5[%c1, %c0_10, %c0_11] : memref<3x384x128xbf16, #tpu.memory_space<vmem>>, vector<1x384x128xbf16>
    %20 = vector.shape_cast %19 : vector<1x384x128xbf16> to vector<384x128xbf16>
    %cst_12 = arith.constant dense<0.000000e+00> : vector<128x128xf32>
    %21 = tpu.matmul %11, %20, %cst_12 {dimension_numbers = #tpu.dot_dimension_numbers<[1], [0], [0], [1], [0, 0, 1, 1], [], []>} : vector<128x384xbf16>, vector<384x128xbf16>, vector<128x128xf32> -> vector<128x128xf32>
    %22 = arith.addf %18, %21 : vector<128x128xf32>
    %c2 = arith.constant 2 : index
    %c0_13 = arith.constant 0 : index
    %c0_14 = arith.constant 0 : index
    %23 = vector.load %arg5[%c2, %c0_13, %c0_14] : memref<3x384x128xbf16, #tpu.memory_space<vmem>>, vector<1x384x128xbf16>
    %24 = vector.shape_cast %23 : vector<1x384x128xbf16> to vector<384x128xbf16>
    %cst_15 = arith.constant dense<0.000000e+00> : vector<128x128xf32>
    %25 = tpu.matmul %15, %24, %cst_15 {dimension_numbers = #tpu.dot_dimension_numbers<[1], [0], [0], [1], [0, 0, 1, 1], [], []>} : vector<128x384xbf16>, vector<384x128xbf16>, vector<128x128xf32> -> vector<128x128xf32>
    %26 = arith.addf %22, %25 : vector<128x128xf32>
    %27 = vector.shape_cast %26 : vector<128x128xf32> to vector<1x8x16x128xf32>
    %28 = arith.truncf %27 : vector<1x8x16x128xf32> to vector<1x8x16x128xbf16>
    %c0_16 = arith.constant 0 : index
    %c0_17 = arith.constant 0 : index
    %c0_18 = arith.constant 0 : index
    %c0_19 = arith.constant 0 : index
    %29 = vector.load %arg6[%c0_16, %c0_17, %c0_18, %c0_19] : memref<1x8x16x128xbf16, #tpu.memory_space<vmem>>, vector<1x8x16x128xbf16>
    tpu.vector_store %arg6[%c0_16, %c0_17, %c0_18, %c0_19], %28 {strides = array<i32>} : memref<1x8x16x128xbf16, #tpu.memory_space<vmem>>, vector<1x8x16x128xbf16>,
    %30 = vector.shape_cast %26 : vector<128x128xf32> to vector<8x16x128xf32>
    %cst_20 = arith.constant dense<0.000000e+00> : vector<8x128xf32>
    %31 = vector.multi_reduction <add>, %30, %cst_20 [1] : vector<8x16x128xf32> to vector<8x128xf32>
    %c0_21 = arith.constant 0 : index
    %c0_22 = arith.constant 0 : index
    %c0_23 = arith.constant 0 : index
    %c0_24 = arith.constant 0 : index
    %32 = vector.load %arg7[%c0_21, %c0_22, %c0_23, %c0_24] : memref<1x1x8x128xf32, #tpu.memory_space<vmem>>, vector<1x1x8x128xf32>
    %33 = vector.shape_cast %32 : vector<1x1x8x128xf32> to vector<8x128xf32>
    %34 = vector.shape_cast %31 : vector<8x128xf32> to vector<1x1x8x128xf32>
    tpu.vector_store %arg7[%c0_21, %c0_22, %c0_23, %c0_24], %34 {strides = array<i32>} : memref<1x1x8x128xf32, #tpu.memory_space<vmem>>, vector<1x1x8x128xf32>,
    %35 = arith.mulf %30, %30 : vector<8x16x128xf32>
    %cst_25 = arith.constant dense<0.000000e+00> : vector<8x128xf32>
    %36 = vector.multi_reduction <add>, %35, %cst_25 [1] : vector<8x16x128xf32> to vector<8x128xf32>
    %c0_26 = arith.constant 0 : index
    %c0_27 = arith.constant 0 : index
    %c0_28 = arith.constant 0 : index
    %c0_29 = arith.constant 0 : index
    %37 = vector.load %arg8[%c0_26, %c0_27, %c0_28, %c0_29] : memref<1x1x8x128xf32, #tpu.memory_space<vmem>>, vector<1x1x8x128xf32>
    %38 = vector.shape_cast %37 : vector<1x1x8x128xf32> to vector<8x128xf32>
    %39 = vector.shape_cast %36 : vector<8x128xf32> to vector<1x1x8x128xf32>
    tpu.vector_store %arg8[%c0_26, %c0_27, %c0_28, %c0_29], %39 {strides = array<i32>} : memref<1x1x8x128xf32, #tpu.memory_space<vmem>>, vector<1x1x8x128xf32>,
    return
  }
  func.func @transform_0(%arg0: i32, %arg1: i32) -> (i32, i32, i32, i32) {
    %c0_i32 = arith.constant 0 : i32
    %c0_i32_0 = arith.constant 0 : i32
    %c0_i32_1 = arith.constant 0 : i32
    %c0_i32_2 = arith.constant 0 : i32
    return %arg0, %c0_i32, %c0_i32_0, %c0_i32_1 : i32, i32, i32, i32
  }
  func.func @transform_1(%arg0: i32, %arg1: i32) -> (i32, i32) {
    %c0_i32 = arith.constant 0 : i32
    %c0_i32_0 = arith.constant 0 : i32
    %c0_i32_1 = arith.constant 0 : i32
    return %c0_i32, %c0_i32_0 : i32, i32
  }
  func.func @transform_2(%arg0: i32, %arg1: i32) -> (i32, i32) {
    %c0_i32 = arith.constant 0 : i32
    %c0_i32_0 = arith.constant 0 : i32
    %c0_i32_1 = arith.constant 0 : i32
    return %c0_i32, %c0_i32_0 : i32, i32
  }
  func.func @transform_3(%arg0: i32, %arg1: i32) -> (i32, i32, i32) {
    %c0_i32 = arith.constant 0 : i32
    %c0_i32_0 = arith.constant 0 : i32
    %c0_i32_1 = arith.constant 0 : i32
    %c0_i32_2 = arith.constant 0 : i32
    return %c0_i32, %c0_i32_0, %c0_i32_1 : i32, i32, i32
  }
  func.func @transform_4(%arg0: i32, %arg1: i32) -> (i32, i32, i32, i32) {
    %c0_i32 = arith.constant 0 : i32
    %c0_i32_0 = arith.constant 0 : i32
    %c0_i32_1 = arith.constant 0 : i32
    return %arg0, %arg1, %c0_i32, %c0_i32_0 : i32, i32, i32, i32
  }
  func.func @transform_5(%arg0: i32, %arg1: i32) -> (i32, i32, i32, i32) {
    %c0_i32 = arith.constant 0 : i32
    %c0_i32_0 = arith.constant 0 : i32
    %c0_i32_1 = arith.constant 0 : i32
    return %arg0, %arg1, %c0_i32, %c0_i32_0 : i32, i32, i32, i32
  }
  func.func @transform_6(%arg0: i32, %arg1: i32) -> (i32, i32, i32, i32) {
    %c0_i32 = arith.constant 0 : i32
    %c0_i32_0 = arith.constant 0 : i32
    %c0_i32_1 = arith.constant 0 : i32
    return %arg0, %arg1, %c0_i32, %c0_i32_0 : i32, i32, i32, i32
  }
}

module attributes {stable_mosaic.version = 11 : i64} {
  func.func @bn_relu_conv1x1_stats_kernel(%arg0: i32, %arg1: memref<512x128xbf16, #tpu.memory_space<vmem>>, %arg2: memref<1x128xf32, #tpu.memory_space<vmem>>, %arg3: memref<1x128xf32, #tpu.memory_space<vmem>>, %arg4: memref<128x128xbf16, #tpu.memory_space<vmem>>, %arg5: memref<512x128xbf16, #tpu.memory_space<vmem>>, %arg6: memref<1x8x128xf32, #tpu.memory_space<vmem>>, %arg7: memref<1x8x128xf32, #tpu.memory_space<vmem>>) attributes {dimension_semantics = [#tpu.dimension_semantics<parallel>], iteration_bounds = array<i64: 1>, scalar_prefetch = 0 : i64, scratch_operands = 0 : i64, tpu.core_type = #tpu.core_type<tc>, window_params = [{transform_indices = @transform_0, window_bounds = array<i64: 512, 128>}, {pipeline_mode = #tpu.pipeline_mode<synchronous>, transform_indices = @transform_1, window_bounds = array<i64: 1, 128>}, {pipeline_mode = #tpu.pipeline_mode<synchronous>, transform_indices = @transform_2, window_bounds = array<i64: 1, 128>}, {pipeline_mode = #tpu.pipeline_mode<synchronous>, transform_indices = @transform_3, window_bounds = array<i64: 128, 128>}, {transform_indices = @transform_4, window_bounds = array<i64: 512, 128>}, {transform_indices = @transform_5, window_bounds = array<i64: 1, 8, 128>}, {transform_indices = @transform_6, window_bounds = array<i64: 1, 8, 128>}]} {
    %c0 = arith.constant 0 : index
    %c0_0 = arith.constant 0 : index
    %0 = vector.load %arg1[%c0, %c0_0] : memref<512x128xbf16, #tpu.memory_space<vmem>>, vector<512x128xbf16>
    %1 = arith.extf %0 : vector<512x128xbf16> to vector<512x128xf32>
    %c0_1 = arith.constant 0 : index
    %c0_2 = arith.constant 0 : index
    %2 = vector.load %arg2[%c0_1, %c0_2] : memref<1x128xf32, #tpu.memory_space<vmem>>, vector<1x128xf32>
    %3 = vector.broadcast %2 : vector<1x128xf32> to vector<512x128xf32>
    %4 = arith.mulf %1, %3 : vector<512x128xf32>
    %c0_3 = arith.constant 0 : index
    %c0_4 = arith.constant 0 : index
    %5 = vector.load %arg3[%c0_3, %c0_4] : memref<1x128xf32, #tpu.memory_space<vmem>>, vector<1x128xf32>
    %6 = vector.broadcast %5 : vector<1x128xf32> to vector<512x128xf32>
    %7 = arith.addf %4, %6 : vector<512x128xf32>
    %cst = arith.constant 0.000000e+00 : f32
    %8 = vector.broadcast %cst : f32 to vector<512x128xf32>
    %9 = arith.maximumf %7, %8 : vector<512x128xf32>
    %10 = arith.truncf %9 : vector<512x128xf32> to vector<512x128xbf16>
    %c0_5 = arith.constant 0 : index
    %c0_6 = arith.constant 0 : index
    %11 = vector.load %arg4[%c0_5, %c0_6] : memref<128x128xbf16, #tpu.memory_space<vmem>>, vector<128x128xbf16>
    %cst_7 = arith.constant dense<0.000000e+00> : vector<512x128xf32>
    %12 = tpu.matmul %10, %11, %cst_7 {dimension_numbers = #tpu.dot_dimension_numbers<[1], [0], [0], [1], [0, 0, 1, 1], [], []>} : vector<512x128xbf16>, vector<128x128xbf16>, vector<512x128xf32> -> vector<512x128xf32>
    %13 = arith.truncf %12 : vector<512x128xf32> to vector<512x128xbf16>
    %c0_8 = arith.constant 0 : index
    %c0_9 = arith.constant 0 : index
    %14 = vector.load %arg5[%c0_8, %c0_9] : memref<512x128xbf16, #tpu.memory_space<vmem>>, vector<512x128xbf16>
    tpu.vector_store %arg5[%c0_8, %c0_9], %13 {strides = array<i32>} : memref<512x128xbf16, #tpu.memory_space<vmem>>, vector<512x128xbf16>,
    %15 = vector.shape_cast %12 : vector<512x128xf32> to vector<8x64x128xf32>
    %cst_10 = arith.constant dense<0.000000e+00> : vector<8x128xf32>
    %16 = vector.multi_reduction <add>, %15, %cst_10 [1] : vector<8x64x128xf32> to vector<8x128xf32>
    %c0_11 = arith.constant 0 : index
    %c0_12 = arith.constant 0 : index
    %c0_13 = arith.constant 0 : index
    %17 = vector.load %arg6[%c0_11, %c0_12, %c0_13] : memref<1x8x128xf32, #tpu.memory_space<vmem>>, vector<1x8x128xf32>
    %18 = vector.shape_cast %17 : vector<1x8x128xf32> to vector<8x128xf32>
    %19 = vector.shape_cast %16 : vector<8x128xf32> to vector<1x8x128xf32>
    tpu.vector_store %arg6[%c0_11, %c0_12, %c0_13], %19 {strides = array<i32>} : memref<1x8x128xf32, #tpu.memory_space<vmem>>, vector<1x8x128xf32>,
    %20 = arith.mulf %15, %15 : vector<8x64x128xf32>
    %cst_14 = arith.constant dense<0.000000e+00> : vector<8x128xf32>
    %21 = vector.multi_reduction <add>, %20, %cst_14 [1] : vector<8x64x128xf32> to vector<8x128xf32>
    %c0_15 = arith.constant 0 : index
    %c0_16 = arith.constant 0 : index
    %c0_17 = arith.constant 0 : index
    %22 = vector.load %arg7[%c0_15, %c0_16, %c0_17] : memref<1x8x128xf32, #tpu.memory_space<vmem>>, vector<1x8x128xf32>
    %23 = vector.shape_cast %22 : vector<1x8x128xf32> to vector<8x128xf32>
    %24 = vector.shape_cast %21 : vector<8x128xf32> to vector<1x8x128xf32>
    tpu.vector_store %arg7[%c0_15, %c0_16, %c0_17], %24 {strides = array<i32>} : memref<1x8x128xf32, #tpu.memory_space<vmem>>, vector<1x8x128xf32>,
    return
  }
  func.func @transform_0(%arg0: i32) -> (i32, i32) {
    %c0_i32 = arith.constant 0 : i32
    %c0_i32_0 = arith.constant 0 : i32
    return %arg0, %c0_i32 : i32, i32
  }
  func.func @transform_1(%arg0: i32) -> (i32, i32) {
    %c0_i32 = arith.constant 0 : i32
    %c0_i32_0 = arith.constant 0 : i32
    %c0_i32_1 = arith.constant 0 : i32
    return %c0_i32, %c0_i32_0 : i32, i32
  }
  func.func @transform_2(%arg0: i32) -> (i32, i32) {
    %c0_i32 = arith.constant 0 : i32
    %c0_i32_0 = arith.constant 0 : i32
    %c0_i32_1 = arith.constant 0 : i32
    return %c0_i32, %c0_i32_0 : i32, i32
  }
  func.func @transform_3(%arg0: i32) -> (i32, i32) {
    %c0_i32 = arith.constant 0 : i32
    %c0_i32_0 = arith.constant 0 : i32
    %c0_i32_1 = arith.constant 0 : i32
    return %c0_i32, %c0_i32_0 : i32, i32
  }
  func.func @transform_4(%arg0: i32) -> (i32, i32) {
    %c0_i32 = arith.constant 0 : i32
    %c0_i32_0 = arith.constant 0 : i32
    return %arg0, %c0_i32 : i32, i32
  }
  func.func @transform_5(%arg0: i32) -> (i32, i32, i32) {
    %c0_i32 = arith.constant 0 : i32
    %c0_i32_0 = arith.constant 0 : i32
    %c0_i32_1 = arith.constant 0 : i32
    return %arg0, %c0_i32, %c0_i32_0 : i32, i32, i32
  }
  func.func @transform_6(%arg0: i32) -> (i32, i32, i32) {
    %c0_i32 = arith.constant 0 : i32
    %c0_i32_0 = arith.constant 0 : i32
    %c0_i32_1 = arith.constant 0 : i32
    return %arg0, %c0_i32, %c0_i32_0 : i32, i32, i32
  }
}

module attributes {stable_mosaic.version = 11 : i64} {
  func.func @bn_add_relu_kernel(%arg0: i32, %arg1: memref<512x128xbf16, #tpu.memory_space<vmem>>, %arg2: memref<1x128xf32, #tpu.memory_space<vmem>>, %arg3: memref<1x128xf32, #tpu.memory_space<vmem>>, %arg4: memref<512x128xbf16, #tpu.memory_space<vmem>>, %arg5: memref<512x128xbf16, #tpu.memory_space<vmem>>) attributes {dimension_semantics = [#tpu.dimension_semantics<parallel>], iteration_bounds = array<i64: 1>, scalar_prefetch = 0 : i64, scratch_operands = 0 : i64, tpu.core_type = #tpu.core_type<tc>, window_params = [{transform_indices = @transform_0, window_bounds = array<i64: 512, 128>}, {pipeline_mode = #tpu.pipeline_mode<synchronous>, transform_indices = @transform_1, window_bounds = array<i64: 1, 128>}, {pipeline_mode = #tpu.pipeline_mode<synchronous>, transform_indices = @transform_2, window_bounds = array<i64: 1, 128>}, {transform_indices = @transform_3, window_bounds = array<i64: 512, 128>}, {transform_indices = @transform_4, window_bounds = array<i64: 512, 128>}]} {
    %c0 = arith.constant 0 : index
    %c0_0 = arith.constant 0 : index
    %0 = vector.load %arg1[%c0, %c0_0] : memref<512x128xbf16, #tpu.memory_space<vmem>>, vector<512x128xbf16>
    %1 = arith.extf %0 : vector<512x128xbf16> to vector<512x128xf32>
    %c0_1 = arith.constant 0 : index
    %c0_2 = arith.constant 0 : index
    %2 = vector.load %arg2[%c0_1, %c0_2] : memref<1x128xf32, #tpu.memory_space<vmem>>, vector<1x128xf32>
    %3 = vector.broadcast %2 : vector<1x128xf32> to vector<512x128xf32>
    %4 = arith.mulf %1, %3 : vector<512x128xf32>
    %c0_3 = arith.constant 0 : index
    %c0_4 = arith.constant 0 : index
    %5 = vector.load %arg3[%c0_3, %c0_4] : memref<1x128xf32, #tpu.memory_space<vmem>>, vector<1x128xf32>
    %6 = vector.broadcast %5 : vector<1x128xf32> to vector<512x128xf32>
    %7 = arith.addf %4, %6 : vector<512x128xf32>
    %c0_5 = arith.constant 0 : index
    %c0_6 = arith.constant 0 : index
    %8 = vector.load %arg4[%c0_5, %c0_6] : memref<512x128xbf16, #tpu.memory_space<vmem>>, vector<512x128xbf16>
    %9 = arith.extf %8 : vector<512x128xbf16> to vector<512x128xf32>
    %10 = arith.addf %7, %9 : vector<512x128xf32>
    %cst = arith.constant 0.000000e+00 : f32
    %11 = vector.broadcast %cst : f32 to vector<512x128xf32>
    %12 = arith.maximumf %10, %11 : vector<512x128xf32>
    %13 = arith.truncf %12 : vector<512x128xf32> to vector<512x128xbf16>
    %c0_7 = arith.constant 0 : index
    %c0_8 = arith.constant 0 : index
    %14 = vector.load %arg5[%c0_7, %c0_8] : memref<512x128xbf16, #tpu.memory_space<vmem>>, vector<512x128xbf16>
    tpu.vector_store %arg5[%c0_7, %c0_8], %13 {strides = array<i32>} : memref<512x128xbf16, #tpu.memory_space<vmem>>, vector<512x128xbf16>,
    return
  }
  func.func @transform_0(%arg0: i32) -> (i32, i32) {
    %c0_i32 = arith.constant 0 : i32
    %c0_i32_0 = arith.constant 0 : i32
    return %arg0, %c0_i32 : i32, i32
  }
  func.func @transform_1(%arg0: i32) -> (i32, i32) {
    %c0_i32 = arith.constant 0 : i32
    %c0_i32_0 = arith.constant 0 : i32
    %c0_i32_1 = arith.constant 0 : i32
    return %c0_i32, %c0_i32_0 : i32, i32
  }
  func.func @transform_2(%arg0: i32) -> (i32, i32) {
    %c0_i32 = arith.constant 0 : i32
    %c0_i32_0 = arith.constant 0 : i32
    %c0_i32_1 = arith.constant 0 : i32
    return %c0_i32, %c0_i32_0 : i32, i32
  }
  func.func @transform_3(%arg0: i32) -> (i32, i32) {
    %c0_i32 = arith.constant 0 : i32
    %c0_i32_0 = arith.constant 0 : i32
    return %arg0, %c0_i32 : i32, i32
  }
  func.func @transform_4(%arg0: i32) -> (i32, i32) {
    %c0_i32 = arith.constant 0 : i32
    %c0_i32_0 = arith.constant 0 : i32
    return %arg0, %c0_i32 : i32, i32
  }
}

</mosaic_0001>

<llo_original>
// kernel: bottleneck_forward.4
$region0: #{bottleneck_forward.4}
  #allocation0 [shape = 'u32[]', space=smem, size = 0x4, offset = 0x4, fixed_abs, tag = 'smem constant byte address 0x4 - core index']
  #allocation1 [shape = 'u32[144,128]{1,0:T(1,128)}', space=vmem, size = 0x12000, scoped, tag = 'internal scratch']
  %s0 = inlined_call_operand.vmem [shape: bf16[512,128], index: 0, kind: input, shape index: {}]
  %s1 = inlined_call_operand.vmem [shape: bf16[128,128], index: 1, kind: input, shape index: {}]
  %s2 = inlined_call_operand.vmem [shape: bf16[512,128], index: 2, kind: output, shape index: {0}]
  %s3 = inlined_call_operand.vmem [shape: f32[1,8,128], index: 3, kind: output, shape index: {1}]
  %s4 = inlined_call_operand.vmem [shape: f32[1,8,128], index: 4, kind: output, shape index: {2}]
  %5 = xla_tuple %s2, %s3, %s4
  %s6 = sld [smem:[#allocation0]]
  $region34: #{bottleneck_forward.4} parent=0
    _
  %s8 = ssub.s32 1, %s6
  %s9 = scalar_select 0, %s8, %s6
  // Predicated region
  $region2: #{bottleneck_forward.4} parent=0 // pred_check
    _
  $region3: #{bottleneck_forward.4} parent=0 // pred_check_branch
    %11 = sbr.rel (0) target = $region5
  $region4: #{bottleneck_forward.4} parent=0 // pred_region
    _
  $region5: #{bottleneck_forward.4} parent=0 // pred_fallthru
    _
  // Predicated region
  $region6: #{bottleneck_forward.4} parent=0 // pred_check
    _
  $region7: #{bottleneck_forward.4} parent=0 // pred_check_branch
    %13 = sbr.rel (0) target = $region9
  $region8: #{bottleneck_forward.4} parent=0 // pred_region
    _
  $region9: #{bottleneck_forward.4} parent=0 // pred_fallthru
    _
  %v15 = vld [vmem:[%s0] sm:$0xf]
  %v16 = vld [vmem:[%s0 + $0x4] sm:$0xf]
  %v17 = vld [vmem:[%s0 + $0x8] sm:$0xf]
  %v18 = vld [vmem:[%s0 + $0xc] sm:$0xf]
  %v19 = vld [vmem:[%s0 + $0x10] sm:$0xf]
  %v20 = vld [vmem:[%s0 + $0x14] sm:$0xf]
  %v21 = vld [vmem:[%s0 + $0x18] sm:$0xf]
  %v22 = vld [vmem:[%s0 + $0x1c] sm:$0xf]
  %v23 = vld [vmem:[%s0 + $0x20] sm:$0xf]
  %v24 = vld [vmem:[%s0 + $0x24] sm:$0xf]
  %v25 = vld [vmem:[%s0 + $0x28] sm:$0xf]
  %v26 = vld [vmem:[%s0 + $0x2c] sm:$0xf]
  %v27 = vld [vmem:[%s0 + $0x30] sm:$0xf]
  %v28 = vld [vmem:[%s0 + $0x34] sm:$0xf]
  %v29 = vld [vmem:[%s0 + $0x38] sm:$0xf]
  %v30 = vld [vmem:[%s0 + $0x3c] sm:$0xf]
  %v31 = vld [vmem:[%s0 + $0x40] sm:$0xf]
  %v32 = vld [vmem:[%s0 + $0x44] sm:$0xf]
  %v33 = vld [vmem:[%s0 + $0x48] sm:$0xf]
  %v34 = vld [vmem:[%s0 + $0x4c] sm:$0xf]
  %v35 = vld [vmem:[%s0 + $0x50] sm:$0xf]
  %v36 = vld [vmem:[%s0 + $0x54] sm:$0xf]
  %v37 = vld [vmem:[%s0 + $0x58] sm:$0xf]
  %v38 = vld [vmem:[%s0 + $0x5c] sm:$0xf]
  %v39 = vld [vmem:[%s0 + $0x60] sm:$0xf]
  %v40 = vld [vmem:[%s0 + $0x64] sm:$0xf]
  %v41 = vld [vmem:[%s0 + $0x68] sm:$0xf]
  %v42 = vld [vmem:[%s0 + $0x6c] sm:$0xf]
  %v43 = vld [vmem:[%s0 + $0x70] sm:$0xf]
  %v44 = vld [vmem:[%s0 + $0x74] sm:$0xf]
  %v45 = vld [vmem:[%s0 + $0x78] sm:$0xf]
  %v46 = vld [vmem:[%s0 + $0x7c] sm:$0xf]
  %v47 = vld [vmem:[%s0 + $0x80] sm:$0xf]
  %v48 = vld [vmem:[%s0 + $0x84] sm:$0xf]
  %v49 = vld [vmem:[%s0 + $0x88] sm:$0xf]
  %v50 = vld [vmem:[%s0 + $0x8c] sm:$0xf]
  %v51 = vld [vmem:[%s0 + $0x90] sm:$0xf]
  %v52 = vld [vmem:[%s0 + $0x94] sm:$0xf]
  %v53 = vld [vmem:[%s0 + $0x98] sm:$0xf]
  %v54 = vld [vmem:[%s0 + $0x9c] sm:$0xf]
  %v55 = vld [vmem:[%s0 + $0xa0] sm:$0xf]
  %v56 = vld [vmem:[%s0 + $0xa4] sm:$0xf]
  %v57 = vld [vmem:[%s0 + $0xa8] sm:$0xf]
  %v58 = vld [vmem:[%s0 + $0xac] sm:$0xf]
  %v59 = vld [vmem:[%s0 + $0xb0] sm:$0xf]
  %v60 = vld [vmem:[%s0 + $0xb4] sm:$0xf]
  %v61 = vld [vmem:[%s0 + $0xb8] sm:$0xf]
  %v62 = vld [vmem:[%s0 + $0xbc] sm:$0xf]
  %v63 = vld [vmem:[%s0 + $0xc0] sm:$0xf]
  %v64 = vld [vmem:[%s0 + $0xc4] sm:$0xf]
  %v65 = vld [vmem:[%s0 + $0xc8] sm:$0xf]
  %v66 = vld [vmem:[%s0 + $0xcc] sm:$0xf]
  %v67 = vld [vmem:[%s0 + $0xd0] sm:$0xf]
  %v68 = vld [vmem:[%s0 + $0xd4] sm:$0xf]
  %v69 = vld [vmem:[%s0 + $0xd8] sm:$0xf]
  %v70 = vld [vmem:[%s0 + $0xdc] sm:$0xf]
  %v71 = vld [vmem:[%s0 + $0xe0] sm:$0xf]
  %v72 = vld [vmem:[%s0 + $0xe4] sm:$0xf]
  %v73 = vld [vmem:[%s0 + $0xe8] sm:$0xf]
  %v74 = vld [vmem:[%s0 + $0xec] sm:$0xf]
  %v75 = vld [vmem:[%s0 + $0xf0] sm:$0xf]
  %v76 = vld [vmem:[%s0 + $0xf4] sm:$0xf]
  %v77 = vld [vmem:[%s0 + $0xf8] sm:$0xf]
  %v78 = vld [vmem:[%s0 + $0xfc] sm:$0xf]
  %v79 = vld [vmem:[%s1] sm:$0xf]
  %v80 = vld [vmem:[%s1 + $0x4] sm:$0xf]
  %v81 = vld [vmem:[%s1 + $0x8] sm:$0xf]
  %v82 = vld [vmem:[%s1 + $0xc] sm:$0xf]
  %v83 = vld [vmem:[%s1 + $0x10] sm:$0xf]
  %v84 = vld [vmem:[%s1 + $0x14] sm:$0xf]
  %v85 = vld [vmem:[%s1 + $0x18] sm:$0xf]
  %v86 = vld [vmem:[%s1 + $0x1c] sm:$0xf]
  %v87 = vld [vmem:[%s1 + $0x20] sm:$0xf]
  %v88 = vld [vmem:[%s1 + $0x24] sm:$0xf]
  %v89 = vld [vmem:[%s1 + $0x28] sm:$0xf]
  %v90 = vld [vmem:[%s1 + $0x2c] sm:$0xf]
  %v91 = vld [vmem:[%s1 + $0x30] sm:$0xf]
  %v92 = vld [vmem:[%s1 + $0x34] sm:$0xf]
  %v93 = vld [vmem:[%s1 + $0x38] sm:$0xf]
  %v94 = vld [vmem:[%s1 + $0x3c] sm:$0xf]
  %v159 = vunpack.c.l.b16 %v15
  %v160 = vunpack.c.l.b16 %v16
  %v161 = vunpack.c.l.b16 %v17
  %v162 = vunpack.c.l.b16 %v18
  %v163 = vunpack.c.l.b16 %v19
  %v164 = vunpack.c.l.b16 %v20
  %v165 = vunpack.c.l.b16 %v21
  %v166 = vunpack.c.l.b16 %v22
  %v167 = vunpack.c.l.b16 %v23
  %v168 = vunpack.c.l.b16 %v24
  %v169 = vunpack.c.l.b16 %v25
  %v170 = vunpack.c.l.b16 %v26
  %v171 = vunpack.c.l.b16 %v27
  %v172 = vunpack.c.l.b16 %v28
  %v173 = vunpack.c.l.b16 %v29
  %v174 = vunpack.c.l.b16 %v30
  %v175 = vunpack.c.l.b16 %v31
  %v176 = vunpack.c.l.b16 %v32
  %v177 = vunpack.c.l.b16 %v33
  %v178 = vunpack.c.l.b16 %v34
  %v179 = vunpack.c.l.b16 %v35
  %v180 = vunpack.c.l.b16 %v36
  %v181 = vunpack.c.l.b16 %v37
  %v182 = vunpack.c.l.b16 %v38
  %v183 = vunpack.c.l.b16 %v39
  %v184 = vunpack.c.l.b16 %v40
  %v185 = vunpack.c.l.b16 %v41
  %v186 = vunpack.c.l.b16 %v42
  %v187 = vunpack.c.l.b16 %v43
  %v188 = vunpack.c.l.b16 %v44
  %v189 = vunpack.c.l.b16 %v45
  %v190 = vunpack.c.l.b16 %v46
  %v191 = vunpack.c.l.b16 %v47
  %v192 = vunpack.c.l.b16 %v48
  %v193 = vunpack.c.l.b16 %v49
  %v194 = vunpack.c.l.b16 %v50
  %v195 = vunpack.c.l.b16 %v51
  %v196 = vunpack.c.l.b16 %v52
  %v197 = vunpack.c.l.b16 %v53
  %v198 = vunpack.c.l.b16 %v54
  %v199 = vunpack.c.l.b16 %v55
  %v200 = vunpack.c.l.b16 %v56
  %v201 = vunpack.c.l.b16 %v57
  %v202 = vunpack.c.l.b16 %v58
  %v203 = vunpack.c.l.b16 %v59
  %v204 = vunpack.c.l.b16 %v60
  %v205 = vunpack.c.l.b16 %v61
  %v206 = vunpack.c.l.b16 %v62
  %v207 = vunpack.c.l.b16 %v63
  %v208 = vunpack.c.l.b16 %v64
  %v209 = vunpack.c.l.b16 %v65
  %v210 = vunpack.c.l.b16 %v66
  %v211 = vunpack.c.l.b16 %v67
  %v212 = vunpack.c.l.b16 %v68
  %v213 = vunpack.c.l.b16 %v69
  %v214 = vunpack.c.l.b16 %v70
  %v215 = vunpack.c.l.b16 %v71
  %v216 = vunpack.c.l.b16 %v72
  %v217 = vunpack.c.l.b16 %v73
  %v218 = vunpack.c.l.b16 %v74
  %v219 = vunpack.c.l.b16 %v75
  %v220 = vunpack.c.l.b16 %v76
  %v221 = vunpack.c.l.b16 %v77
  %v222 = vunpack.c.l.b16 %v78
  %v223 = vpack.c.b16 %v160, %v159
  %v224 = vpack.c.b16 %v162, %v161
  %v225 = vpack.c.b16 %v164, %v163
  %v226 = vpack.c.b16 %v166, %v165
  %v227 = vpack.c.b16 %v168, %v167
  %v228 = vpack.c.b16 %v170, %v169
  %v229 = vpack.c.b16 %v172, %v171
  %v230 = vpack.c.b16 %v174, %v173
  %v231 = vpack.c.b16 %v176, %v175
  %v232 = vpack.c.b16 %v178, %v177
  %v233 = vpack.c.b16 %v180, %v179
  %v234 = vpack.c.b16 %v182, %v181
  %v235 = vpack.c.b16 %v184, %v183
  %v236 = vpack.c.b16 %v186, %v185
  %v237 = vpack.c.b16 %v188, %v187
  %v238 = vpack.c.b16 %v190, %v189
  %v239 = vpack.c.b16 %v192, %v191
  %v240 = vpack.c.b16 %v194, %v193
  %v241 = vpack.c.b16 %v196, %v195
  %v242 = vpack.c.b16 %v198, %v197
  %v243 = vpack.c.b16 %v200, %v199
  %v244 = vpack.c.b16 %v202, %v201
  %v245 = vpack.c.b16 %v204, %v203
  %v246 = vpack.c.b16 %v206, %v205
  %v247 = vpack.c.b16 %v208, %v207
  %v248 = vpack.c.b16 %v210, %v209
  %v249 = vpack.c.b16 %v212, %v211
  %v250 = vpack.c.b16 %v214, %v213
  %v251 = vpack.c.b16 %v216, %v215
  %v252 = vpack.c.b16 %v218, %v217
  %v253 = vpack.c.b16 %v220, %v219
  %v254 = vpack.c.b16 %v222, %v221
  %v303 = vunpack.c.l.b16 %v79
  %v304 = vunpack.c.l.b16 %v80
  %v305 = vunpack.c.l.b16 %v81
  %v306 = vunpack.c.l.b16 %v82
  %v307 = vunpack.c.l.b16 %v83
  %v308 = vunpack.c.l.b16 %v84
  %v309 = vunpack.c.l.b16 %v85
  %v310 = vunpack.c.l.b16 %v86
  %v311 = vunpack.c.l.b16 %v87
  %v312 = vunpack.c.l.b16 %v88
  %v313 = vunpack.c.l.b16 %v89
  %v314 = vunpack.c.l.b16 %v90
  %v315 = vunpack.c.l.b16 %v91
  %v316 = vunpack.c.l.b16 %v92
  %v317 = vunpack.c.l.b16 %v93
  %v318 = vunpack.c.l.b16 %v94
  %v319 = vpack.c.b16 %v304, %v303
  %v320 = vpack.c.b16 %v306, %v305
  %v321 = vpack.c.b16 %v308, %v307
  %v322 = vpack.c.b16 %v310, %v309
  %v323 = vpack.c.b16 %v312, %v311
  %v324 = vpack.c.b16 %v314, %v313
  %v325 = vpack.c.b16 %v316, %v315
  %v326 = vpack.c.b16 %v318, %v317
  %335 = vmatprep.subr.bf16.mxu0 0
  %336 = vmatpush1.bf16.msra.mxu0 %v326
  %337 = vmatprep.subr.bf16.mxu0 0
  %338 = vmatpush1.bf16.msra.mxu0 %v325
  %339 = vmatprep.subr.bf16.mxu0 0
  %340 = vmatpush1.bf16.msra.mxu0 %v324
  %341 = vmatprep.subr.bf16.mxu0 0
  %342 = vmatpush1.bf16.msra.mxu0 %v323
  %343 = vmatprep.subr.bf16.mxu0 0
  %344 = vmatpush1.bf16.msra.mxu0 %v322
  %345 = vmatprep.subr.bf16.mxu0 0
  %346 = vmatpush1.bf16.msra.mxu0 %v321
  %347 = vmatprep.subr.bf16.mxu0 0
  %348 = vmatpush1.bf16.msra.mxu0 %v320
  %349 = vmatprep.subr.bf16.mxu0 0
  %350 = vmatpush1.bf16.msra.mxu0 %v319
  %351 = vmatprep.subr.bf16.mxu0 0
  %352 = vmatpush2.bf16.msra.mxu0 0
  %353 = vmatprep.subr.bf16.mxu0 0
  %354 = vmatpush2.bf16.msra.mxu0 0
  %355 = vmatprep.subr.bf16.mxu0 0
  %356 = vmatpush2.bf16.msra.mxu0 0
  %357 = vmatprep.subr.bf16.mxu0 0
  %358 = vmatpush2.bf16.msra.mxu0 0
  %359 = vmatprep.subr.bf16.mxu0 0
  %360 = vmatpush2.bf16.msra.mxu0 0
  %361 = vmatprep.subr.bf16.mxu0 0
  %362 = vmatpush2.bf16.msra.mxu0 0
  %363 = vmatprep.subr.bf16.mxu0 0
  %364 = vmatpush2.bf16.msra.mxu0 0
  %365 = vmatprep.subr.bf16.mxu0 0
  %366 = vmatpush2.bf16.msra.mxu0 0
  %367 = vmatprep.mubr.bf16.mxu0 0
  %368 = vmatmul.mubr.bf16.gmra.mxu0 %v223
  %v369 = vpop.f32.mrf.mxu0
  %v370 = vadd.f32 0.0, %v369
  %v371 = vpop.f32.mrf.mxu0
  %v372 = vpop.f32.mrf.mxu0
  %v373 = vadd.f32 0.0, %v372
  %v374 = vpop.f32.mrf.mxu0
  %375 = vmatprep.mubr.bf16.mxu0 0
  %376 = vmatmul.mubr.bf16.gmra.mxu0 %v224
  %v377 = vpop.f32.mrf.mxu0
  %v378 = vadd.f32 0.0, %v377
  %v379 = vpop.f32.mrf.mxu0
  %v380 = vpop.f32.mrf.mxu0
  %v381 = vadd.f32 0.0, %v380
  %v382 = vpop.f32.mrf.mxu0
  %383 = vmatprep.mubr.bf16.mxu0 0
  %384 = vmatmul.mubr.bf16.gmra.mxu0 %v225
  %v385 = vpop.f32.mrf.mxu0
  %v386 = vadd.f32 0.0, %v385
  %v387 = vpop.f32.mrf.mxu0
  %v388 = vpop.f32.mrf.mxu0
  %v389 = vadd.f32 0.0, %v388
  %v390 = vpop.f32.mrf.mxu0
  %391 = vmatprep.mubr.bf16.mxu0 0
  %392 = vmatmul.mubr.bf16.gmra.mxu0 %v226
  %v393 = vpop.f32.mrf.mxu0
  %v394 = vadd.f32 0.0, %v393
  %v395 = vpop.f32.mrf.mxu0
  %v396 = vpop.f32.mrf.mxu0
  %v397 = vadd.f32 0.0, %v396
  %v398 = vpop.f32.mrf.mxu0
  %399 = vmatprep.mubr.bf16.mxu0 0
  %400 = vmatmul.mubr.bf16.gmra.mxu0 %v227
  %v401 = vpop.f32.mrf.mxu0
  %v402 = vadd.f32 0.0, %v401
  %v403 = vpop.f32.mrf.mxu0
  %v404 = vpop.f32.mrf.mxu0
  %v405 = vadd.f32 0.0, %v404
  %v406 = vpop.f32.mrf.mxu0
  %407 = vmatprep.mubr.bf16.mxu0 0
  %408 = vmatmul.mubr.bf16.gmra.mxu0 %v228
  %v409 = vpop.f32.mrf.mxu0
  %v410 = vadd.f32 0.0, %v409
  %v411 = vpop.f32.mrf.mxu0
  %v412 = vpop.f32.mrf.mxu0
  %v413 = vadd.f32 0.0, %v412
  %v414 = vpop.f32.mrf.mxu0
  %415 = vmatprep.mubr.bf16.mxu0 0
  %416 = vmatmul.mubr.bf16.gmra.mxu0 %v229
  %v417 = vpop.f32.mrf.mxu0
  %v418 = vadd.f32 0.0, %v417
  %v419 = vpop.f32.mrf.mxu0
  %v420 = vpop.f32.mrf.mxu0
  %v421 = vadd.f32 0.0, %v420
  %v422 = vpop.f32.mrf.mxu0
  %423 = vmatprep.mubr.bf16.mxu0 0
  %424 = vmatmul.mubr.bf16.gmra.mxu0 %v230
  %v425 = vpop.f32.mrf.mxu0
  %v426 = vadd.f32 0.0, %v425
  %v427 = vpop.f32.mrf.mxu0
  %v428 = vpop.f32.mrf.mxu0
  %v429 = vadd.f32 0.0, %v428
  %v430 = vpop.f32.mrf.mxu0
  %431 = vmatprep.mubr.bf16.mxu0 0
  %432 = vmatmul.mubr.bf16.gmra.mxu0 %v231
  %v433 = vpop.f32.mrf.mxu0
  %v434 = vadd.f32 0.0, %v433
  %v435 = vpop.f32.mrf.mxu0
  %v436 = vpop.f32.mrf.mxu0
  %v437 = vadd.f32 0.0, %v436
  %v438 = vpop.f32.mrf.mxu0
  %439 = vmatprep.mubr.bf16.mxu0 0
  %440 = vmatmul.mubr.bf16.gmra.mxu0 %v232
  %v441 = vpop.f32.mrf.mxu0
  %v442 = vadd.f32 0.0, %v441
  %v443 = vpop.f32.mrf.mxu0
  %v444 = vpop.f32.mrf.mxu0
  %v445 = vadd.f32 0.0, %v444
  %v446 = vpop.f32.mrf.mxu0
  %447 = vmatprep.mubr.bf16.mxu0 0
  %448 = vmatmul.mubr.bf16.gmra.mxu0 %v233
  %v449 = vpop.f32.mrf.mxu0
  %v450 = vadd.f32 0.0, %v449
  %v451 = vpop.f32.mrf.mxu0
  %v452 = vpop.f32.mrf.mxu0
  %v453 = vadd.f32 0.0, %v452
  %v454 = vpop.f32.mrf.mxu0
  %455 = vmatprep.mubr.bf16.mxu0 0
  %456 = vmatmul.mubr.bf16.gmra.mxu0 %v234
  %v457 = vpop.f32.mrf.mxu0
  %v458 = vadd.f32 0.0, %v457
  %v459 = vpop.f32.mrf.mxu0
  %v460 = vpop.f32.mrf.mxu0
  %v461 = vadd.f32 0.0, %v460
  %v462 = vpop.f32.mrf.mxu0
  %463 = vmatprep.mubr.bf16.mxu0 0
  %464 = vmatmul.mubr.bf16.gmra.mxu0 %v235
  %v465 = vpop.f32.mrf.mxu0
  %v466 = vadd.f32 0.0, %v465
  %v467 = vpop.f32.mrf.mxu0
  %v468 = vpop.f32.mrf.mxu0
  %v469 = vadd.f32 0.0, %v468
  %v470 = vpop.f32.mrf.mxu0
  %471 = vmatprep.mubr.bf16.mxu0 0
  %472 = vmatmul.mubr.bf16.gmra.mxu0 %v236
  %v473 = vpop.f32.mrf.mxu0
  %v474 = vadd.f32 0.0, %v473
  %v475 = vpop.f32.mrf.mxu0
  %v476 = vpop.f32.mrf.mxu0
  %v477 = vadd.f32 0.0, %v476
  %v478 = vpop.f32.mrf.mxu0
  %479 = vmatprep.mubr.bf16.mxu0 0
  %480 = vmatmul.mubr.bf16.gmra.mxu0 %v237
  %v481 = vpop.f32.mrf.mxu0
  %v482 = vadd.f32 0.0, %v481
  %v483 = vpop.f32.mrf.mxu0
  %v484 = vpop.f32.mrf.mxu0
  %v485 = vadd.f32 0.0, %v484
  %v486 = vpop.f32.mrf.mxu0
  %487 = vmatprep.mubr.bf16.mxu0 0
  %488 = vmatmul.mubr.bf16.gmra.mxu0 %v238
  %v489 = vpop.f32.mrf.mxu0
  %v490 = vadd.f32 0.0, %v489
  %v491 = vpop.f32.mrf.mxu0
  %v492 = vpop.f32.mrf.mxu0
  %v493 = vadd.f32 0.0, %v492
  %v494 = vpop.f32.mrf.mxu0
  %495 = vmatprep.mubr.bf16.mxu0 0
  %496 = vmatmul.mubr.bf16.gmra.mxu0 %v239
  %v497 = vpop.f32.mrf.mxu0
  %v498 = vadd.f32 0.0, %v497
  %v499 = vpop.f32.mrf.mxu0
  %v500 = vpop.f32.mrf.mxu0
  %v501 = vadd.f32 0.0, %v500
  %v502 = vpop.f32.mrf.mxu0
  %503 = vmatprep.mubr.bf16.mxu0 0
  %504 = vmatmul.mubr.bf16.gmra.mxu0 %v240
  %v505 = vpop.f32.mrf.mxu0
  %v506 = vadd.f32 0.0, %v505
  %v507 = vpop.f32.mrf.mxu0
  %v508 = vpop.f32.mrf.mxu0
  %v509 = vadd.f32 0.0, %v508
  %v510 = vpop.f32.mrf.mxu0
  %511 = vmatprep.mubr.bf16.mxu0 0
  %512 = vmatmul.mubr.bf16.gmra.mxu0 %v241
  %v513 = vpop.f32.mrf.mxu0
  %v514 = vadd.f32 0.0, %v513
  %v515 = vpop.f32.mrf.mxu0
  %v516 = vpop.f32.mrf.mxu0
  %v517 = vadd.f32 0.0, %v516
  %v518 = vpop.f32.mrf.mxu0
  %519 = vmatprep.mubr.bf16.mxu0 0
  %520 = vmatmul.mubr.bf16.gmra.mxu0 %v242
  %v521 = vpop.f32.mrf.mxu0
  %v522 = vadd.f32 0.0, %v521
  %v523 = vpop.f32.mrf.mxu0
  %v524 = vpop.f32.mrf.mxu0
  %v525 = vadd.f32 0.0, %v524
  %v526 = vpop.f32.mrf.mxu0
  %527 = vmatprep.mubr.bf16.mxu0 0
  %528 = vmatmul.mubr.bf16.gmra.mxu0 %v243
  %v529 = vpop.f32.mrf.mxu0
  %v530 = vadd.f32 0.0, %v529
  %v531 = vpop.f32.mrf.mxu0
  %v532 = vpop.f32.mrf.mxu0
  %v533 = vadd.f32 0.0, %v532
  %v534 = vpop.f32.mrf.mxu0
  %535 = vmatprep.mubr.bf16.mxu0 0
  %536 = vmatmul.mubr.bf16.gmra.mxu0 %v244
  %v537 = vpop.f32.mrf.mxu0
  %v538 = vadd.f32 0.0, %v537
  %v539 = vpop.f32.mrf.mxu0
  %v540 = vpop.f32.mrf.mxu0
  %v541 = vadd.f32 0.0, %v540
  %v542 = vpop.f32.mrf.mxu0
  %543 = vmatprep.mubr.bf16.mxu0 0
  %544 = vmatmul.mubr.bf16.gmra.mxu0 %v245
  %v545 = vpop.f32.mrf.mxu0
  %v546 = vadd.f32 0.0, %v545
  %v547 = vpop.f32.mrf.mxu0
  %v548 = vpop.f32.mrf.mxu0
  %v549 = vadd.f32 0.0, %v548
  %v550 = vpop.f32.mrf.mxu0
  %551 = vmatprep.mubr.bf16.mxu0 0
  %552 = vmatmul.mubr.bf16.gmra.mxu0 %v246
  %v553 = vpop.f32.mrf.mxu0
  %v554 = vadd.f32 0.0, %v553
  %v555 = vpop.f32.mrf.mxu0
  %v556 = vpop.f32.mrf.mxu0
  %v557 = vadd.f32 0.0, %v556
  %v558 = vpop.f32.mrf.mxu0
  %559 = vmatprep.mubr.bf16.mxu0 0
  %560 = vmatmul.mubr.bf16.gmra.mxu0 %v247
  %v561 = vpop.f32.mrf.mxu0
  %v562 = vadd.f32 0.0, %v561
  %v563 = vpop.f32.mrf.mxu0
  %v564 = vpop.f32.mrf.mxu0
  %v565 = vadd.f32 0.0, %v564
  %v566 = vpop.f32.mrf.mxu0
  %567 = vmatprep.mubr.bf16.mxu0 0
  %568 = vmatmul.mubr.bf16.gmra.mxu0 %v248
  %v569 = vpop.f32.mrf.mxu0
  %v570 = vadd.f32 0.0, %v569
  %v571 = vpop.f32.mrf.mxu0
  %v572 = vpop.f32.mrf.mxu0
  %v573 = vadd.f32 0.0, %v572
  %v574 = vpop.f32.mrf.mxu0
  %575 = vmatprep.mubr.bf16.mxu0 0
  %576 = vmatmul.mubr.bf16.gmra.mxu0 %v249
  %v577 = vpop.f32.mrf.mxu0
  %v578 = vadd.f32 0.0, %v577
  %v579 = vpop.f32.mrf.mxu0
  %v580 = vpop.f32.mrf.mxu0
  %v581 = vadd.f32 0.0, %v580
  %v582 = vpop.f32.mrf.mxu0
  %583 = vmatprep.mubr.bf16.mxu0 0
  %584 = vmatmul.mubr.bf16.gmra.mxu0 %v250
  %v585 = vpop.f32.mrf.mxu0
  %v586 = vadd.f32 0.0, %v585
  %v587 = vpop.f32.mrf.mxu0
  %v588 = vpop.f32.mrf.mxu0
  %v589 = vadd.f32 0.0, %v588
  %v590 = vpop.f32.mrf.mxu0
  %591 = vmatprep.mubr.bf16.mxu0 0
  %592 = vmatmul.mubr.bf16.gmra.mxu0 %v251
  %v593 = vpop.f32.mrf.mxu0
  %v594 = vadd.f32 0.0, %v593
  %v595 = vpop.f32.mrf.mxu0
  %v596 = vpop.f32.mrf.mxu0
  %v597 = vadd.f32 0.0, %v596
  %v598 = vpop.f32.mrf.mxu0
  %599 = vmatprep.mubr.bf16.mxu0 0
  %600 = vmatmul.mubr.bf16.gmra.mxu0 %v252
  %v601 = vpop.f32.mrf.mxu0
  %v602 = vadd.f32 0.0, %v601
  %v603 = vpop.f32.mrf.mxu0
  %v604 = vpop.f32.mrf.mxu0
  %v605 = vadd.f32 0.0, %v604
  %v606 = vpop.f32.mrf.mxu0
  %607 = vmatprep.mubr.bf16.mxu0 0
  %608 = vmatmul.mubr.bf16.gmra.mxu0 %v253
  %v609 = vpop.f32.mrf.mxu0
  %v610 = vadd.f32 0.0, %v609
  %v611 = vpop.f32.mrf.mxu0
  %v612 = vpop.f32.mrf.mxu0
  %v613 = vadd.f32 0.0, %v612
  %v614 = vpop.f32.mrf.mxu0
  %615 = vmatprep.mubr.bf16.mxu0 0
  %616 = vmatmul.mubr.bf16.gmra.mxu0 %v254
  %v617 = vpop.f32.mrf.mxu0
  %v618 = vadd.f32 0.0, %v617
  %v619 = vpop.f32.mrf.mxu0
  %v620 = vpop.f32.mrf.mxu0
  %v621 = vadd.f32 0.0, %v620
  %v622 = vpop.f32.mrf.mxu0
  %623 = vdwg.mxu0
  %v624 = vpack.c.bf16 %v373, %v370
  %v625 = vpack.c.bf16 %v381, %v378
  %v626 = vpack.c.bf16 %v389, %v386
  %v627 = vpack.c.bf16 %v397, %v394
  %v628 = vpack.c.bf16 %v405, %v402
  %v629 = vpack.c.bf16 %v413, %v410
  %v630 = vpack.c.bf16 %v421, %v418
  %v631 = vpack.c.bf16 %v429, %v426
  %v632 = vpack.c.bf16 %v437, %v434
  %v633 = vpack.c.bf16 %v445, %v442
  %v634 = vpack.c.bf16 %v453, %v450
  %v635 = vpack.c.bf16 %v461, %v458
  %v636 = vpack.c.bf16 %v469, %v466
  %v637 = vpack.c.bf16 %v477, %v474
  %v638 = vpack.c.bf16 %v485, %v482
  %v639 = vpack.c.bf16 %v493, %v490
  %v640 = vpack.c.bf16 %v501, %v498
  %v641 = vpack.c.bf16 %v509, %v506
  %v642 = vpack.c.bf16 %v517, %v514
  %v643 = vpack.c.bf16 %v525, %v522
  %v644 = vpack.c.bf16 %v533, %v530
  %v645 = vpack.c.bf16 %v541, %v538
  %v646 = vpack.c.bf16 %v549, %v546
  %v647 = vpack.c.bf16 %v557, %v554
  %v648 = vpack.c.bf16 %v565, %v562
  %v649 = vpack.c.bf16 %v573, %v570
  %v650 = vpack.c.bf16 %v581, %v578
  %v651 = vpack.c.bf16 %v589, %v586
  %v652 = vpack.c.bf16 %v597, %v594
  %v653 = vpack.c.bf16 %v605, %v602
  %v654 = vpack.c.bf16 %v613, %v610
  %v655 = vpack.c.bf16 %v621, %v618
  %v688 = vunpack.c.l.b16 %v624
  %v689 = vunpack.c.h.b16 %v624
  %v690 = vunpack.c.l.b16 %v625
  %v691 = vunpack.c.h.b16 %v625
  %v692 = vunpack.c.l.b16 %v626
  %v693 = vunpack.c.h.b16 %v626
  %v694 = vunpack.c.l.b16 %v627
  %v695 = vunpack.c.h.b16 %v627
  %v696 = vunpack.c.l.b16 %v628
  %v697 = vunpack.c.h.b16 %v628
  %v698 = vunpack.c.l.b16 %v629
  %v699 = vunpack.c.h.b16 %v629
  %v700 = vunpack.c.l.b16 %v630
  %v701 = vunpack.c.h.b16 %v630
  %v702 = vunpack.c.l.b16 %v631
  %v703 = vunpack.c.h.b16 %v631
  %v704 = vunpack.c.l.b16 %v632
  %v705 = vunpack.c.h.b16 %v632
  %v706 = vunpack.c.l.b16 %v633
  %v707 = vunpack.c.h.b16 %v633
  %v708 = vunpack.c.l.b16 %v634
  %v709 = vunpack.c.h.b16 %v634
  %v710 = vunpack.c.l.b16 %v635
  %v711 = vunpack.c.h.b16 %v635
  %v712 = vunpack.c.l.b16 %v636
  %v713 = vunpack.c.h.b16 %v636
  %v714 = vunpack.c.l.b16 %v637
  %v715 = vunpack.c.h.b16 %v637
  %v716 = vunpack.c.l.b16 %v638
  %v717 = vunpack.c.h.b16 %v638
  %v718 = vunpack.c.l.b16 %v639
  %v719 = vunpack.c.h.b16 %v639
  %v720 = vunpack.c.l.b16 %v640
  %v721 = vunpack.c.h.b16 %v640
  %v722 = vunpack.c.l.b16 %v641
  %v723 = vunpack.c.h.b16 %v641
  %v724 = vunpack.c.l.b16 %v642
  %v725 = vunpack.c.h.b16 %v642
  %v726 = vunpack.c.l.b16 %v643
  %v727 = vunpack.c.h.b16 %v643
  %v728 = vunpack.c.l.b16 %v644
  %v729 = vunpack.c.h.b16 %v644
  %v730 = vunpack.c.l.b16 %v645
  %v731 = vunpack.c.h.b16 %v645
  %v732 = vunpack.c.l.b16 %v646
  %v733 = vunpack.c.h.b16 %v646
  %v734 = vunpack.c.l.b16 %v647
  %v735 = vunpack.c.h.b16 %v647
  %v736 = vunpack.c.l.b16 %v648
  %v737 = vunpack.c.h.b16 %v648
  %v738 = vunpack.c.l.b16 %v649
  %v739 = vunpack.c.h.b16 %v649
  %v740 = vunpack.c.l.b16 %v650
  %v741 = vunpack.c.h.b16 %v650
  %v742 = vunpack.c.l.b16 %v651
  %v743 = vunpack.c.h.b16 %v651
  %v744 = vunpack.c.l.b16 %v652
  %v745 = vunpack.c.h.b16 %v652
  %v746 = vunpack.c.l.b16 %v653
  %v747 = vunpack.c.h.b16 %v653
  %v748 = vunpack.c.l.b16 %v654
  %v749 = vunpack.c.h.b16 %v654
  %v750 = vunpack.c.l.b16 %v655
  %v751 = vunpack.c.h.b16 %v655
  %v752 = vpack.c.b16 %v688, %v688
  %v753 = vpack.c.b16 %v689, %v689
  %v754 = vpack.c.b16 %v690, %v690
  %v755 = vpack.c.b16 %v691, %v691
  %v756 = vpack.c.b16 %v692, %v692
  %v757 = vpack.c.b16 %v693, %v693
  %v758 = vpack.c.b16 %v694, %v694
  %v759 = vpack.c.b16 %v695, %v695
  %v760 = vpack.c.b16 %v696, %v696
  %v761 = vpack.c.b16 %v697, %v697
  %v762 = vpack.c.b16 %v698, %v698
  %v763 = vpack.c.b16 %v699, %v699
  %v764 = vpack.c.b16 %v700, %v700
  %v765 = vpack.c.b16 %v701, %v701
  %v766 = vpack.c.b16 %v702, %v702
  %v767 = vpack.c.b16 %v703, %v703
  %v768 = vpack.c.b16 %v704, %v704
  %v769 = vpack.c.b16 %v705, %v705
  %v770 = vpack.c.b16 %v706, %v706
  %v771 = vpack.c.b16 %v707, %v707
  %v772 = vpack.c.b16 %v708, %v708
  %v773 = vpack.c.b16 %v709, %v709
  %v774 = vpack.c.b16 %v710, %v710
  %v775 = vpack.c.b16 %v711, %v711
  %v776 = vpack.c.b16 %v712, %v712
  %v777 = vpack.c.b16 %v713, %v713
  %v778 = vpack.c.b16 %v714, %v714
  %v779 = vpack.c.b16 %v715, %v715
  %v780 = vpack.c.b16 %v716, %v716
  %v781 = vpack.c.b16 %v717, %v717
  %v782 = vpack.c.b16 %v718, %v718
  %v783 = vpack.c.b16 %v719, %v719
  %v784 = vpack.c.b16 %v720, %v720
  %v785 = vpack.c.b16 %v721, %v721
  %v786 = vpack.c.b16 %v722, %v722
  %v787 = vpack.c.b16 %v723, %v723
  %v788 = vpack.c.b16 %v724, %v724
  %v789 = vpack.c.b16 %v725, %v725
  %v790 = vpack.c.b16 %v726, %v726
  %v791 = vpack.c.b16 %v727, %v727
  %v792 = vpack.c.b16 %v728, %v728
  %v793 = vpack.c.b16 %v729, %v729
  %v794 = vpack.c.b16 %v730, %v730
  %v795 = vpack.c.b16 %v731, %v731
  %v796 = vpack.c.b16 %v732, %v732
  %v797 = vpack.c.b16 %v733, %v733
  %v798 = vpack.c.b16 %v734, %v734
  %v799 = vpack.c.b16 %v735, %v735
  %v800 = vpack.c.b16 %v736, %v736
  %v801 = vpack.c.b16 %v737, %v737
  %v802 = vpack.c.b16 %v738, %v738
  %v803 = vpack.c.b16 %v739, %v739
  %v804 = vpack.c.b16 %v740, %v740
  %v805 = vpack.c.b16 %v741, %v741
  %v806 = vpack.c.b16 %v742, %v742
  %v807 = vpack.c.b16 %v743, %v743
  %v808 = vpack.c.b16 %v744, %v744
  %v809 = vpack.c.b16 %v745, %v745
  %v810 = vpack.c.b16 %v746, %v746
  %v811 = vpack.c.b16 %v747, %v747
  %v812 = vpack.c.b16 %v748, %v748
  %v813 = vpack.c.b16 %v749, %v749
  %v814 = vpack.c.b16 %v750, %v750
  %v815 = vpack.c.b16 %v751, %v751
  %880 = vst [vmem:[%s2] sm:$0xf] %v752
  %881 = vst [vmem:[%s2 + $0x4] sm:$0xf] %v753
  %882 = vst [vmem:[%s2 + $0x8] sm:$0xf] %v754
  %883 = vst [vmem:[%s2 + $0xc] sm:$0xf] %v755
  %884 = vst [vmem:[%s2 + $0x10] sm:$0xf] %v756
  %885 = vst [vmem:[%s2 + $0x14] sm:$0xf] %v757
  %886 = vst [vmem:[%s2 + $0x18] sm:$0xf] %v758
  %887 = vst [vmem:[%s2 + $0x1c] sm:$0xf] %v759
  %888 = vst [vmem:[%s2 + $0x20] sm:$0xf] %v760
  %889 = vst [vmem:[%s2 + $0x24] sm:$0xf] %v761
  %890 = vst [vmem:[%s2 + $0x28] sm:$0xf] %v762
  %891 = vst [vmem:[%s2 + $0x2c] sm:$0xf] %v763
  %892 = vst [vmem:[%s2 + $0x30] sm:$0xf] %v764
  %893 = vst [vmem:[%s2 + $0x34] sm:$0xf] %v765
  %894 = vst [vmem:[%s2 + $0x38] sm:$0xf] %v766
  %895 = vst [vmem:[%s2 + $0x3c] sm:$0xf] %v767
  %896 = vst [vmem:[%s2 + $0x40] sm:$0xf] %v768
  %897 = vst [vmem:[%s2 + $0x44] sm:$0xf] %v769
  %898 = vst [vmem:[%s2 + $0x48] sm:$0xf] %v770
  %899 = vst [vmem:[%s2 + $0x4c] sm:$0xf] %v771
  %900 = vst [vmem:[%s2 + $0x50] sm:$0xf] %v772
  %901 = vst [vmem:[%s2 + $0x54] sm:$0xf] %v773
  %902 = vst [vmem:[%s2 + $0x58] sm:$0xf] %v774
  %903 = vst [vmem:[%s2 + $0x5c] sm:$0xf] %v775
  %904 = vst [vmem:[%s2 + $0x60] sm:$0xf] %v776
  %905 = vst [vmem:[%s2 + $0x64] sm:$0xf] %v777
  %906 = vst [vmem:[%s2 + $0x68] sm:$0xf] %v778
  %907 = vst [vmem:[%s2 + $0x6c] sm:$0xf] %v779
  %908 = vst [vmem:[%s2 + $0x70] sm:$0xf] %v780
  %909 = vst [vmem:[%s2 + $0x74] sm:$0xf] %v781
  %910 = vst [vmem:[%s2 + $0x78] sm:$0xf] %v782
  %911 = vst [vmem:[%s2 + $0x7c] sm:$0xf] %v783
  %912 = vst [vmem:[%s2 + $0x80] sm:$0xf] %v784
  %913 = vst [vmem:[%s2 + $0x84] sm:$0xf] %v785
  %914 = vst [vmem:[%s2 + $0x88] sm:$0xf] %v786
  %915 = vst [vmem:[%s2 + $0x8c] sm:$0xf] %v787
  %916 = vst [vmem:[%s2 + $0x90] sm:$0xf] %v788
  %917 = vst [vmem:[%s2 + $0x94] sm:$0xf] %v789
  %918 = vst [vmem:[%s2 + $0x98] sm:$0xf] %v790
  %919 = vst [vmem:[%s2 + $0x9c] sm:$0xf] %v791
  %920 = vst [vmem:[%s2 + $0xa0] sm:$0xf] %v792
  %921 = vst [vmem:[%s2 + $0xa4] sm:$0xf] %v793
  %922 = vst [vmem:[%s2 + $0xa8] sm:$0xf] %v794
  %923 = vst [vmem:[%s2 + $0xac] sm:$0xf] %v795
  %924 = vst [vmem:[%s2 + $0xb0] sm:$0xf] %v796
  %925 = vst [vmem:[%s2 + $0xb4] sm:$0xf] %v797
  %926 = vst [vmem:[%s2 + $0xb8] sm:$0xf] %v798
  %927 = vst [vmem:[%s2 + $0xbc] sm:$0xf] %v799
  %928 = vst [vmem:[%s2 + $0xc0] sm:$0xf] %v800
  %929 = vst [vmem:[%s2 + $0xc4] sm:$0xf] %v801
  %930 = vst [vmem:[%s2 + $0xc8] sm:$0xf] %v802
  %931 = vst [vmem:[%s2 + $0xcc] sm:$0xf] %v803
  %932 = vst [vmem:[%s2 + $0xd0] sm:$0xf] %v804
  %933 = vst [vmem:[%s2 + $0xd4] sm:$0xf] %v805
  %934 = vst [vmem:[%s2 + $0xd8] sm:$0xf] %v806
  %935 = vst [vmem:[%s2 + $0xdc] sm:$0xf] %v807
  %936 = vst [vmem:[%s2 + $0xe0] sm:$0xf] %v808
  %937 = vst [vmem:[%s2 + $0xe4] sm:$0xf] %v809
  %938 = vst [vmem:[%s2 + $0xe8] sm:$0xf] %v810
  %939 = vst [vmem:[%s2 + $0xec] sm:$0xf] %v811
  %940 = vst [vmem:[%s2 + $0xf0] sm:$0xf] %v812
  %941 = vst [vmem:[%s2 + $0xf4] sm:$0xf] %v813
  %942 = vst [vmem:[%s2 + $0xf8] sm:$0xf] %v814
  %943 = vst [vmem:[%s2 + $0xfc] sm:$0xf] %v815
  %v944 = vadd.f32 %v370, %v373
  %v945 = vadd.f32 %v944, %v378
  %v946 = vadd.f32 %v945, %v381
  %v947 = vadd.f32 %v946, %v386
  %v948 = vadd.f32 %v947, %v389
  %v949 = vadd.f32 %v948, %v394
  %v950 = vadd.f32 %v949, %v397
  %v951 = vrot.slane %v950, 4
  %v952 = vadd.f32 %v950, %v951
  %v953 = vrot.slane %v952, 2
  %v954 = vadd.f32 %v952, %v953
  %v955 = vrot.slane %v954, 1
  %v956 = vadd.f32 %v954, %v955
  %v957 = vadd.f32 %v402, %v405
  %v958 = vadd.f32 %v957, %v410
  %v959 = vadd.f32 %v958, %v413
  %v960 = vadd.f32 %v959, %v418
  %v961 = vadd.f32 %v960, %v421
  %v962 = vadd.f32 %v961, %v426
  %v963 = vadd.f32 %v962, %v429
  %v964 = vrot.slane %v963, 4
  %v965 = vadd.f32 %v963, %v964
  %v966 = vrot.slane %v965, 2
  %v967 = vadd.f32 %v965, %v966
  %v968 = vrot.slane %v967, 1
  %v969 = vadd.f32 %v967, %v968
  %v970 = vadd.f32 %v434, %v437
  %v971 = vadd.f32 %v970, %v442
  %v972 = vadd.f32 %v971, %v445
  %v973 = vadd.f32 %v972, %v450
  %v974 = vadd.f32 %v973, %v453
  %v975 = vadd.f32 %v974, %v458
  %v976 = vadd.f32 %v975, %v461
  %v977 = vrot.slane %v976, 4
  %v978 = vadd.f32 %v976, %v977
  %v979 = vrot.slane %v978, 2
  %v980 = vadd.f32 %v978, %v979
  %v981 = vrot.slane %v980, 1
  %v982 = vadd.f32 %v980, %v981
  %v983 = vadd.f32 %v466, %v469
  %v984 = vadd.f32 %v983, %v474
  %v985 = vadd.f32 %v984, %v477
  %v986 = vadd.f32 %v985, %v482
  %v987 = vadd.f32 %v986, %v485
  %v988 = vadd.f32 %v987, %v490
  %v989 = vadd.f32 %v988, %v493
  %v990 = vrot.slane %v989, 4
  %v991 = vadd.f32 %v989, %v990
  %v992 = vrot.slane %v991, 2
  %v993 = vadd.f32 %v991, %v992
  %v994 = vrot.slane %v993, 1
  %v995 = vadd.f32 %v993, %v994
  %v996 = vadd.f32 %v498, %v501
  %v997 = vadd.f32 %v996, %v506
  %v998 = vadd.f32 %v997, %v509
  %v999 = vadd.f32 %v998, %v514
  %v1000 = vadd.f32 %v999, %v517
  %v1001 = vadd.f32 %v1000, %v522
  %v1002 = vadd.f32 %v1001, %v525
  %v1003 = vrot.slane %v1002, 4
  %v1004 = vadd.f32 %v1002, %v1003
  %v1005 = vrot.slane %v1004, 2
  %v1006 = vadd.f32 %v1004, %v1005
  %v1007 = vrot.slane %v1006, 1
  %v1008 = vadd.f32 %v1006, %v1007
  %v1009 = vadd.f32 %v530, %v533
  %v1010 = vadd.f32 %v1009, %v538
  %v1011 = vadd.f32 %v1010, %v541
  %v1012 = vadd.f32 %v1011, %v546
  %v1013 = vadd.f32 %v1012, %v549
  %v1014 = vadd.f32 %v1013, %v554
  %v1015 = vadd.f32 %v1014, %v557
  %v1016 = vrot.slane %v1015, 4
  %v1017 = vadd.f32 %v1015, %v1016
  %v1018 = vrot.slane %v1017, 2
  %v1019 = vadd.f32 %v1017, %v1018
  %v1020 = vrot.slane %v1019, 1
  %v1021 = vadd.f32 %v1019, %v1020
  %v1022 = vadd.f32 %v562, %v565
  %v1023 = vadd.f32 %v1022, %v570
  %v1024 = vadd.f32 %v1023, %v573
  %v1025 = vadd.f32 %v1024, %v578
  %v1026 = vadd.f32 %v1025, %v581
  %v1027 = vadd.f32 %v1026, %v586
  %v1028 = vadd.f32 %v1027, %v589
  %v1029 = vrot.slane %v1028, 4
  %v1030 = vadd.f32 %v1028, %v1029
  %v1031 = vrot.slane %v1030, 2
  %v1032 = vadd.f32 %v1030, %v1031
  %v1033 = vrot.slane %v1032, 1
  %v1034 = vadd.f32 %v1032, %v1033
  %v1035 = vadd.f32 %v594, %v597
  %v1036 = vadd.f32 %v1035, %v602
  %v1037 = vadd.f32 %v1036, %v605
  %v1038 = vadd.f32 %v1037, %v610
  %v1039 = vadd.f32 %v1038, %v613
  %v1040 = vadd.f32 %v1039, %v618
  %v1041 = vadd.f32 %v1040, %v621
  %v1042 = vrot.slane %v1041, 4
  %v1043 = vadd.f32 %v1041, %v1042
  %v1044 = vrot.slane %v1043, 2
  %v1045 = vadd.f32 %v1043, %v1044
  %v1046 = vrot.slane %v1045, 1
  %v1047 = vadd.f32 %v1045, %v1046
  %vm1056 = vcmask 1041409
  %v1057 = vsel %vm1056, %v969, %v956
  %vm1058 = vcmask 1042434
  %v1059 = vsel %vm1058, %v982, %v1057
  %vm1060 = vcmask 1043459
  %v1061 = vsel %vm1060, %v995, %v1059
  %vm1062 = vcmask 1044484
  %v1063 = vsel %vm1062, %v1008, %v1061
  %vm1064 = vcmask 1045509
  %v1065 = vsel %vm1064, %v1021, %v1063
  %vm1066 = vcmask 1046534
  %v1067 = vsel %vm1066, %v1034, %v1065
  %vm1068 = vcmask 1047559
  %v1069 = vsel %vm1068, %v1047, %v1067
  %1071 = vst [vmem:[%s3] sm:$0xff] %v1069
  %v1072 = vmul.f32 %v370, %v370
  %v1073 = vmul.f32 %v373, %v373
  %v1074 = vmul.f32 %v378, %v378
  %v1075 = vmul.f32 %v381, %v381
  %v1076 = vmul.f32 %v386, %v386
  %v1077 = vmul.f32 %v389, %v389
  %v1078 = vmul.f32 %v394, %v394
  %v1079 = vmul.f32 %v397, %v397
  %v1080 = vmul.f32 %v402, %v402
  %v1081 = vmul.f32 %v405, %v405
  %v1082 = vmul.f32 %v410, %v410
  %v1083 = vmul.f32 %v413, %v413
  %v1084 = vmul.f32 %v418, %v418
  %v1085 = vmul.f32 %v421, %v421
  %v1086 = vmul.f32 %v426, %v426
  %v1087 = vmul.f32 %v429, %v429
  %v1088 = vmul.f32 %v434, %v434
  %v1089 = vmul.f32 %v437, %v437
  %v1090 = vmul.f32 %v442, %v442
  %v1091 = vmul.f32 %v445, %v445
  %v1092 = vmul.f32 %v450, %v450
  %v1093 = vmul.f32 %v453, %v453
  %v1094 = vmul.f32 %v458, %v458
  %v1095 = vmul.f32 %v461, %v461
  %v1096 = vmul.f32 %v466, %v466
  %v1097 = vmul.f32 %v469, %v469
  %v1098 = vmul.f32 %v474, %v474
  %v1099 = vmul.f32 %v477, %v477
  %v1100 = vmul.f32 %v482, %v482
  %v1101 = vmul.f32 %v485, %v485
  %v1102 = vmul.f32 %v490, %v490
  %v1103 = vmul.f32 %v493, %v493
  %v1104 = vmul.f32 %v498, %v498
  %v1105 = vmul.f32 %v501, %v501
  %v1106 = vmul.f32 %v506, %v506
  %v1107 = vmul.f32 %v509, %v509
  %v1108 = vmul.f32 %v514, %v514
  %v1109 = vmul.f32 %v517, %v517
  %v1110 = vmul.f32 %v522, %v522
  %v1111 = vmul.f32 %v525, %v525
  %v1112 = vmul.f32 %v530, %v530
  %v1113 = vmul.f32 %v533, %v533
  %v1114 = vmul.f32 %v538, %v538
  %v1115 = vmul.f32 %v541, %v541
  %v1116 = vmul.f32 %v546, %v546
  %v1117 = vmul.f32 %v549, %v549
  %v1118 = vmul.f32 %v554, %v554
  %v1119 = vmul.f32 %v557, %v557
  %v1120 = vmul.f32 %v562, %v562
  %v1121 = vmul.f32 %v565, %v565
  %v1122 = vmul.f32 %v570, %v570
  %v1123 = vmul.f32 %v573, %v573
  %v1124 = vmul.f32 %v578, %v578
  %v1125 = vmul.f32 %v581, %v581
  %v1126 = vmul.f32 %v586, %v586
  %v1127 = vmul.f32 %v589, %v589
  %v1128 = vmul.f32 %v594, %v594
  %v1129 = vmul.f32 %v597, %v597
  %v1130 = vmul.f32 %v602, %v602
  %v1131 = vmul.f32 %v605, %v605
  %v1132 = vmul.f32 %v610, %v610
  %v1133 = vmul.f32 %v613, %v613
  %v1134 = vmul.f32 %v618, %v618
  %v1135 = vmul.f32 %v621, %v621
  %v1136 = vadd.f32 %v1072, %v1073
  %v1137 = vadd.f32 %v1136, %v1074
  %v1138 = vadd.f32 %v1137, %v1075
  %v1139 = vadd.f32 %v1138, %v1076
  %v1140 = vadd.f32 %v1139, %v1077
  %v1141 = vadd.f32 %v1140, %v1078
  %v1142 = vadd.f32 %v1141, %v1079
  %v1143 = vrot.slane %v1142, 4
  %v1144 = vadd.f32 %v1142, %v1143
  %v1145 = vrot.slane %v1144, 2
  %v1146 = vadd.f32 %v1144, %v1145
  %v1147 = vrot.slane %v1146, 1
  %v1148 = vadd.f32 %v1146, %v1147
  %v1149 = vadd.f32 %v1080, %v1081
  %v1150 = vadd.f32 %v1149, %v1082
  %v1151 = vadd.f32 %v1150, %v1083
  %v1152 = vadd.f32 %v1151, %v1084
  %v1153 = vadd.f32 %v1152, %v1085
  %v1154 = vadd.f32 %v1153, %v1086
  %v1155 = vadd.f32 %v1154, %v1087
  %v1156 = vrot.slane %v1155, 4
  %v1157 = vadd.f32 %v1155, %v1156
  %v1158 = vrot.slane %v1157, 2
  %v1159 = vadd.f32 %v1157, %v1158
  %v1160 = vrot.slane %v1159, 1
  %v1161 = vadd.f32 %v1159, %v1160
  %v1162 = vadd.f32 %v1088, %v1089
  %v1163 = vadd.f32 %v1162, %v1090
  %v1164 = vadd.f32 %v1163, %v1091
  %v1165 = vadd.f32 %v1164, %v1092
  %v1166 = vadd.f32 %v1165, %v1093
  %v1167 = vadd.f32 %v1166, %v1094
  %v1168 = vadd.f32 %v1167, %v1095
  %v1169 = vrot.slane %v1168, 4
  %v1170 = vadd.f32 %v1168, %v1169
  %v1171 = vrot.slane %v1170, 2
  %v1172 = vadd.f32 %v1170, %v1171
  %v1173 = vrot.slane %v1172, 1
  %v1174 = vadd.f32 %v1172, %v1173
  %v1175 = vadd.f32 %v1096, %v1097
  %v1176 = vadd.f32 %v1175, %v1098
  %v1177 = vadd.f32 %v1176, %v1099
  %v1178 = vadd.f32 %v1177, %v1100
  %v1179 = vadd.f32 %v1178, %v1101
  %v1180 = vadd.f32 %v1179, %v1102
  %v1181 = vadd.f32 %v1180, %v1103
  %v1182 = vrot.slane %v1181, 4
  %v1183 = vadd.f32 %v1181, %v1182
  %v1184 = vrot.slane %v1183, 2
  %v1185 = vadd.f32 %v1183, %v1184
  %v1186 = vrot.slane %v1185, 1
  %v1187 = vadd.f32 %v1185, %v1186
  %v1188 = vadd.f32 %v1104, %v1105
  %v1189 = vadd.f32 %v1188, %v1106
  %v1190 = vadd.f32 %v1189, %v1107
  %v1191 = vadd.f32 %v1190, %v1108
  %v1192 = vadd.f32 %v1191, %v1109
  %v1193 = vadd.f32 %v1192, %v1110
  %v1194 = vadd.f32 %v1193, %v1111
  %v1195 = vrot.slane %v1194, 4
  %v1196 = vadd.f32 %v1194, %v1195
  %v1197 = vrot.slane %v1196, 2
  %v1198 = vadd.f32 %v1196, %v1197
  %v1199 = vrot.slane %v1198, 1
  %v1200 = vadd.f32 %v1198, %v1199
  %v1201 = vadd.f32 %v1112, %v1113
  %v1202 = vadd.f32 %v1201, %v1114
  %v1203 = vadd.f32 %v1202, %v1115
  %v1204 = vadd.f32 %v1203, %v1116
  %v1205 = vadd.f32 %v1204, %v1117
  %v1206 = vadd.f32 %v1205, %v1118
  %v1207 = vadd.f32 %v1206, %v1119
  %v1208 = vrot.slane %v1207, 4
  %v1209 = vadd.f32 %v1207, %v1208
  %v1210 = vrot.slane %v1209, 2
  %v1211 = vadd.f32 %v1209, %v1210
  %v1212 = vrot.slane %v1211, 1
  %v1213 = vadd.f32 %v1211, %v1212
  %v1214 = vadd.f32 %v1120, %v1121
  %v1215 = vadd.f32 %v1214, %v1122
  %v1216 = vadd.f32 %v1215, %v1123
  %v1217 = vadd.f32 %v1216, %v1124
  %v1218 = vadd.f32 %v1217, %v1125
  %v1219 = vadd.f32 %v1218, %v1126
  %v1220 = vadd.f32 %v1219, %v1127
  %v1221 = vrot.slane %v1220, 4
  %v1222 = vadd.f32 %v1220, %v1221
  %v1223 = vrot.slane %v1222, 2
  %v1224 = vadd.f32 %v1222, %v1223
  %v1225 = vrot.slane %v1224, 1
  %v1226 = vadd.f32 %v1224, %v1225
  %v1227 = vadd.f32 %v1128, %v1129
  %v1228 = vadd.f32 %v1227, %v1130
  %v1229 = vadd.f32 %v1228, %v1131
  %v1230 = vadd.f32 %v1229, %v1132
  %v1231 = vadd.f32 %v1230, %v1133
  %v1232 = vadd.f32 %v1231, %v1134
  %v1233 = vadd.f32 %v1232, %v1135
  %v1234 = vrot.slane %v1233, 4
  %v1235 = vadd.f32 %v1233, %v1234
  %v1236 = vrot.slane %v1235, 2
  %v1237 = vadd.f32 %v1235, %v1236
  %v1238 = vrot.slane %v1237, 1
  %v1239 = vadd.f32 %v1237, %v1238
  %v1248 = vsel %vm1056, %v1161, %v1148
  %v1249 = vsel %vm1058, %v1174, %v1248
  %v1250 = vsel %vm1060, %v1187, %v1249
  %v1251 = vsel %vm1062, %v1200, %v1250
  %v1252 = vsel %vm1064, %v1213, %v1251
  %v1253 = vsel %vm1066, %v1226, %v1252
  %v1254 = vsel %vm1068, %v1239, %v1253
  %1256 = vst [vmem:[%s4] sm:$0xff] %v1254
  // Predicated region
  $region10: #{bottleneck_forward.4} parent=0 // pred_check
    _
  $region11: #{bottleneck_forward.4} parent=0 // pred_check_branch
    %1258 = sbr.rel (0) target = $region13
  $region12: #{bottleneck_forward.4} parent=0 // pred_region
    _
  $region13: #{bottleneck_forward.4} parent=0 // pred_fallthru
    _
  // Predicated region
  $region14: #{bottleneck_forward.4} parent=0 // pred_check
    _
  $region15: #{bottleneck_forward.4} parent=0 // pred_check_branch
    %1260 = sbr.rel (0) target = $region17
  $region16: #{bottleneck_forward.4} parent=0 // pred_region
    _
  $region17: #{bottleneck_forward.4} parent=0 // pred_fallthru
    _
  // Predicated region
  $region18: #{bottleneck_forward.4} parent=0 // pred_check
    _
  $region19: #{bottleneck_forward.4} parent=0 // pred_check_branch
    %1262 = sbr.rel (0) target = $region21
  $region20: #{bottleneck_forward.4} parent=0 // pred_region
    _
  $region21: #{bottleneck_forward.4} parent=0 // pred_fallthru
    _
  // Predicated region
  $region22: #{bottleneck_forward.4} parent=0 // pred_check
    _
  $region23: #{bottleneck_forward.4} parent=0 // pred_check_branch
    %1264 = sbr.rel (0) target = $region25
  $region24: #{bottleneck_forward.4} parent=0 // pred_region
    _
  $region25: #{bottleneck_forward.4} parent=0 // pred_fallthru
    _
  // Predicated region
  $region26: #{bottleneck_forward.4} parent=0 // pred_check
    _
  $region27: #{bottleneck_forward.4} parent=0 // pred_check_branch
    %1266 = sbr.rel (0) target = $region29
  $region28: #{bottleneck_forward.4} parent=0 // pred_region
    _
  $region29: #{bottleneck_forward.4} parent=0 // pred_fallthru
    _
  // Predicated region
  $region30: #{bottleneck_forward.4} parent=0 // pred_check
    _
  $region31: #{bottleneck_forward.4} parent=0 // pred_check_branch
    %1268 = sbr.rel (0) target = $region33
  $region32: #{bottleneck_forward.4} parent=0 // pred_region
    _
  $region33: #{bottleneck_forward.4} parent=0 // pred_fallthru
    _

// kernel: bottleneck_forward.6
$region0: #{bottleneck_forward.6}
  #allocation0 [shape = 'u32[]', space=smem, size = 0x4, offset = 0x4, fixed_abs, tag = 'smem constant byte address 0x4 - core index']
  #allocation1 [shape = 'u32[144,128]{1,0:T(1,128)}', space=vmem, size = 0x12000, scoped, tag = 'internal scratch']
  %s0 = inlined_call_operand.vmem [shape: bf16[512,128], index: 0, kind: input, shape index: {}]
  %s1 = inlined_call_operand.vmem [shape: f32[1,128], index: 1, kind: input, shape index: {}]
  %s2 = inlined_call_operand.vmem [shape: f32[1,128], index: 2, kind: input, shape index: {}]
  %s3 = inlined_call_operand.vmem [shape: bf16[128,128], index: 3, kind: input, shape index: {}]
  %s4 = inlined_call_operand.vmem [shape: bf16[512,128], index: 4, kind: output, shape index: {0}]
  %s5 = inlined_call_operand.vmem [shape: f32[1,8,128], index: 5, kind: output, shape index: {1}]
  %s6 = inlined_call_operand.vmem [shape: f32[1,8,128], index: 6, kind: output, shape index: {2}]
  %7 = xla_tuple %s4, %s5, %s6
  %s8 = sld [smem:[#allocation0]]
  $region42: #{bottleneck_forward.6} parent=0
    _
  %s10 = ssub.s32 1, %s8
  %s11 = scalar_select 0, %s10, %s8
  // Predicated region
  $region2: #{bottleneck_forward.6} parent=0 // pred_check
    _
  $region3: #{bottleneck_forward.6} parent=0 // pred_check_branch
    %13 = sbr.rel (0) target = $region5
  $region4: #{bottleneck_forward.6} parent=0 // pred_region
    _
  $region5: #{bottleneck_forward.6} parent=0 // pred_fallthru
    _
  // Predicated region
  $region6: #{bottleneck_forward.6} parent=0 // pred_check
    _
  $region7: #{bottleneck_forward.6} parent=0 // pred_check_branch
    %15 = sbr.rel (0) target = $region9
  $region8: #{bottleneck_forward.6} parent=0 // pred_region
    _
  $region9: #{bottleneck_forward.6} parent=0 // pred_fallthru
    _
  // Predicated region
  $region10: #{bottleneck_forward.6} parent=0 // pred_check
    _
  $region11: #{bottleneck_forward.6} parent=0 // pred_check_branch
    %17 = sbr.rel (0) target = $region13
  $region12: #{bottleneck_forward.6} parent=0 // pred_region
    _
  $region13: #{bottleneck_forward.6} parent=0 // pred_fallthru
    _
  // Predicated region
  $region14: #{bottleneck_forward.6} parent=0 // pred_check
    _
  $region15: #{bottleneck_forward.6} parent=0 // pred_check_branch
    %19 = sbr.rel (0) target = $region17
  $region16: #{bottleneck_forward.6} parent=0 // pred_region
    _
  $region17: #{bottleneck_forward.6} parent=0 // pred_fallthru
    _
  %v21 = vld [vmem:[%s0] sm:$0xf]
  %v22 = vld [vmem:[%s0 + $0x4] sm:$0xf]
  %v23 = vld [vmem:[%s0 + $0x8] sm:$0xf]
  %v24 = vld [vmem:[%s0 + $0xc] sm:$0xf]
  %v25 = vld [vmem:[%s0 + $0x10] sm:$0xf]
  %v26 = vld [vmem:[%s0 + $0x14] sm:$0xf]
  %v27 = vld [vmem:[%s0 + $0x18] sm:$0xf]
  %v28 = vld [vmem:[%s0 + $0x1c] sm:$0xf]
  %v29 = vld [vmem:[%s0 + $0x20] sm:$0xf]
  %v30 = vld [vmem:[%s0 + $0x24] sm:$0xf]
  %v31 = vld [vmem:[%s0 + $0x28] sm:$0xf]
  %v32 = vld [vmem:[%s0 + $0x2c] sm:$0xf]
  %v33 = vld [vmem:[%s0 + $0x30] sm:$0xf]
  %v34 = vld [vmem:[%s0 + $0x34] sm:$0xf]
  %v35 = vld [vmem:[%s0 + $0x38] sm:$0xf]
  %v36 = vld [vmem:[%s0 + $0x3c] sm:$0xf]
  %v37 = vld [vmem:[%s0 + $0x40] sm:$0xf]
  %v38 = vld [vmem:[%s0 + $0x44] sm:$0xf]
  %v39 = vld [vmem:[%s0 + $0x48] sm:$0xf]
  %v40 = vld [vmem:[%s0 + $0x4c] sm:$0xf]
  %v41 = vld [vmem:[%s0 + $0x50] sm:$0xf]
  %v42 = vld [vmem:[%s0 + $0x54] sm:$0xf]
  %v43 = vld [vmem:[%s0 + $0x58] sm:$0xf]
  %v44 = vld [vmem:[%s0 + $0x5c] sm:$0xf]
  %v45 = vld [vmem:[%s0 + $0x60] sm:$0xf]
  %v46 = vld [vmem:[%s0 + $0x64] sm:$0xf]
  %v47 = vld [vmem:[%s0 + $0x68] sm:$0xf]
  %v48 = vld [vmem:[%s0 + $0x6c] sm:$0xf]
  %v49 = vld [vmem:[%s0 + $0x70] sm:$0xf]
  %v50 = vld [vmem:[%s0 + $0x74] sm:$0xf]
  %v51 = vld [vmem:[%s0 + $0x78] sm:$0xf]
  %v52 = vld [vmem:[%s0 + $0x7c] sm:$0xf]
  %v53 = vld [vmem:[%s0 + $0x80] sm:$0xf]
  %v54 = vld [vmem:[%s0 + $0x84] sm:$0xf]
  %v55 = vld [vmem:[%s0 + $0x88] sm:$0xf]
  %v56 = vld [vmem:[%s0 + $0x8c] sm:$0xf]
  %v57 = vld [vmem:[%s0 + $0x90] sm:$0xf]
  %v58 = vld [vmem:[%s0 + $0x94] sm:$0xf]
  %v59 = vld [vmem:[%s0 + $0x98] sm:$0xf]
  %v60 = vld [vmem:[%s0 + $0x9c] sm:$0xf]
  %v61 = vld [vmem:[%s0 + $0xa0] sm:$0xf]
  %v62 = vld [vmem:[%s0 + $0xa4] sm:$0xf]
  %v63 = vld [vmem:[%s0 + $0xa8] sm:$0xf]
  %v64 = vld [vmem:[%s0 + $0xac] sm:$0xf]
  %v65 = vld [vmem:[%s0 + $0xb0] sm:$0xf]
  %v66 = vld [vmem:[%s0 + $0xb4] sm:$0xf]
  %v67 = vld [vmem:[%s0 + $0xb8] sm:$0xf]
  %v68 = vld [vmem:[%s0 + $0xbc] sm:$0xf]
  %v69 = vld [vmem:[%s0 + $0xc0] sm:$0xf]
  %v70 = vld [vmem:[%s0 + $0xc4] sm:$0xf]
  %v71 = vld [vmem:[%s0 + $0xc8] sm:$0xf]
  %v72 = vld [vmem:[%s0 + $0xcc] sm:$0xf]
  %v73 = vld [vmem:[%s0 + $0xd0] sm:$0xf]
  %v74 = vld [vmem:[%s0 + $0xd4] sm:$0xf]
  %v75 = vld [vmem:[%s0 + $0xd8] sm:$0xf]
  %v76 = vld [vmem:[%s0 + $0xdc] sm:$0xf]
  %v77 = vld [vmem:[%s0 + $0xe0] sm:$0xf]
  %v78 = vld [vmem:[%s0 + $0xe4] sm:$0xf]
  %v79 = vld [vmem:[%s0 + $0xe8] sm:$0xf]
  %v80 = vld [vmem:[%s0 + $0xec] sm:$0xf]
  %v81 = vld [vmem:[%s0 + $0xf0] sm:$0xf]
  %v82 = vld [vmem:[%s0 + $0xf4] sm:$0xf]
  %v83 = vld [vmem:[%s0 + $0xf8] sm:$0xf]
  %v84 = vld [vmem:[%s0 + $0xfc] sm:$0xf]
  %v85 = vunpack.c.l.bf16 %v21
  %v86 = vunpack.c.l.bf16 %v22
  %v87 = vunpack.c.l.bf16 %v23
  %v88 = vunpack.c.l.bf16 %v24
  %v89 = vunpack.c.l.bf16 %v25
  %v90 = vunpack.c.l.bf16 %v26
  %v91 = vunpack.c.l.bf16 %v27
  %v92 = vunpack.c.l.bf16 %v28
  %v93 = vunpack.c.l.bf16 %v29
  %v94 = vunpack.c.l.bf16 %v30
  %v95 = vunpack.c.l.bf16 %v31
  %v96 = vunpack.c.l.bf16 %v32
  %v97 = vunpack.c.l.bf16 %v33
  %v98 = vunpack.c.l.bf16 %v34
  %v99 = vunpack.c.l.bf16 %v35
  %v100 = vunpack.c.l.bf16 %v36
  %v101 = vunpack.c.l.bf16 %v37
  %v102 = vunpack.c.l.bf16 %v38
  %v103 = vunpack.c.l.bf16 %v39
  %v104 = vunpack.c.l.bf16 %v40
  %v105 = vunpack.c.l.bf16 %v41
  %v106 = vunpack.c.l.bf16 %v42
  %v107 = vunpack.c.l.bf16 %v43
  %v108 = vunpack.c.l.bf16 %v44
  %v109 = vunpack.c.l.bf16 %v45
  %v110 = vunpack.c.l.bf16 %v46
  %v111 = vunpack.c.l.bf16 %v47
  %v112 = vunpack.c.l.bf16 %v48
  %v113 = vunpack.c.l.bf16 %v49
  %v114 = vunpack.c.l.bf16 %v50
  %v115 = vunpack.c.l.bf16 %v51
  %v116 = vunpack.c.l.bf16 %v52
  %v117 = vunpack.c.l.bf16 %v53
  %v118 = vunpack.c.l.bf16 %v54
  %v119 = vunpack.c.l.bf16 %v55
  %v120 = vunpack.c.l.bf16 %v56
  %v121 = vunpack.c.l.bf16 %v57
  %v122 = vunpack.c.l.bf16 %v58
  %v123 = vunpack.c.l.bf16 %v59
  %v124 = vunpack.c.l.bf16 %v60
  %v125 = vunpack.c.l.bf16 %v61
  %v126 = vunpack.c.l.bf16 %v62
  %v127 = vunpack.c.l.bf16 %v63
  %v128 = vunpack.c.l.bf16 %v64
  %v129 = vunpack.c.l.bf16 %v65
  %v130 = vunpack.c.l.bf16 %v66
  %v131 = vunpack.c.l.bf16 %v67
  %v132 = vunpack.c.l.bf16 %v68
  %v133 = vunpack.c.l.bf16 %v69
  %v134 = vunpack.c.l.bf16 %v70
  %v135 = vunpack.c.l.bf16 %v71
  %v136 = vunpack.c.l.bf16 %v72
  %v137 = vunpack.c.l.bf16 %v73
  %v138 = vunpack.c.l.bf16 %v74
  %v139 = vunpack.c.l.bf16 %v75
  %v140 = vunpack.c.l.bf16 %v76
  %v141 = vunpack.c.l.bf16 %v77
  %v142 = vunpack.c.l.bf16 %v78
  %v143 = vunpack.c.l.bf16 %v79
  %v144 = vunpack.c.l.bf16 %v80
  %v145 = vunpack.c.l.bf16 %v81
  %v146 = vunpack.c.l.bf16 %v82
  %v147 = vunpack.c.l.bf16 %v83
  %v148 = vunpack.c.l.bf16 %v84
  %v149 = vld [vmem:[%s1] sm:$0x1]
  %v151 = vlaneseq
  %v152 = vshrl.u32 %v151, 7
  %v153 = vsub.s32 0, %v152
  %v154 = vrot.slane %v149, %v153
  %v156 = vmul.f32 %v85, %v154
  %v157 = vmul.f32 %v86, %v154
  %v158 = vmul.f32 %v87, %v154
  %v159 = vmul.f32 %v88, %v154
  %v160 = vmul.f32 %v89, %v154
  %v161 = vmul.f32 %v90, %v154
  %v162 = vmul.f32 %v91, %v154
  %v163 = vmul.f32 %v92, %v154
  %v164 = vmul.f32 %v93, %v154
  %v165 = vmul.f32 %v94, %v154
  %v166 = vmul.f32 %v95, %v154
  %v167 = vmul.f32 %v96, %v154
  %v168 = vmul.f32 %v97, %v154
  %v169 = vmul.f32 %v98, %v154
  %v170 = vmul.f32 %v99, %v154
  %v171 = vmul.f32 %v100, %v154
  %v172 = vmul.f32 %v101, %v154
  %v173 = vmul.f32 %v102, %v154
  %v174 = vmul.f32 %v103, %v154
  %v175 = vmul.f32 %v104, %v154
  %v176 = vmul.f32 %v105, %v154
  %v177 = vmul.f32 %v106, %v154
  %v178 = vmul.f32 %v107, %v154
  %v179 = vmul.f32 %v108, %v154
  %v180 = vmul.f32 %v109, %v154
  %v181 = vmul.f32 %v110, %v154
  %v182 = vmul.f32 %v111, %v154
  %v183 = vmul.f32 %v112, %v154
  %v184 = vmul.f32 %v113, %v154
  %v185 = vmul.f32 %v114, %v154
  %v186 = vmul.f32 %v115, %v154
  %v187 = vmul.f32 %v116, %v154
  %v188 = vmul.f32 %v117, %v154
  %v189 = vmul.f32 %v118, %v154
  %v190 = vmul.f32 %v119, %v154
  %v191 = vmul.f32 %v120, %v154
  %v192 = vmul.f32 %v121, %v154
  %v193 = vmul.f32 %v122, %v154
  %v194 = vmul.f32 %v123, %v154
  %v195 = vmul.f32 %v124, %v154
  %v196 = vmul.f32 %v125, %v154
  %v197 = vmul.f32 %v126, %v154
  %v198 = vmul.f32 %v127, %v154
  %v199 = vmul.f32 %v128, %v154
  %v200 = vmul.f32 %v129, %v154
  %v201 = vmul.f32 %v130, %v154
  %v202 = vmul.f32 %v131, %v154
  %v203 = vmul.f32 %v132, %v154
  %v204 = vmul.f32 %v133, %v154
  %v205 = vmul.f32 %v134, %v154
  %v206 = vmul.f32 %v135, %v154
  %v207 = vmul.f32 %v136, %v154
  %v208 = vmul.f32 %v137, %v154
  %v209 = vmul.f32 %v138, %v154
  %v210 = vmul.f32 %v139, %v154
  %v211 = vmul.f32 %v140, %v154
  %v212 = vmul.f32 %v141, %v154
  %v213 = vmul.f32 %v142, %v154
  %v214 = vmul.f32 %v143, %v154
  %v215 = vmul.f32 %v144, %v154
  %v216 = vmul.f32 %v145, %v154
  %v217 = vmul.f32 %v146, %v154
  %v218 = vmul.f32 %v147, %v154
  %v219 = vmul.f32 %v148, %v154
  %v220 = vld [vmem:[%s2] sm:$0x1]
  %v222 = vlaneseq
  %v223 = vshrl.u32 %v222, 7
  %v224 = vsub.s32 0, %v223
  %v225 = vrot.slane %v220, %v224
  %v227 = vadd.f32 %v156, %v225
  %v228 = vadd.f32 %v157, %v225
  %v229 = vadd.f32 %v158, %v225
  %v230 = vadd.f32 %v159, %v225
  %v231 = vadd.f32 %v160, %v225
  %v232 = vadd.f32 %v161, %v225
  %v233 = vadd.f32 %v162, %v225
  %v234 = vadd.f32 %v163, %v225
  %v235 = vadd.f32 %v164, %v225
  %v236 = vadd.f32 %v165, %v225
  %v237 = vadd.f32 %v166, %v225
  %v238 = vadd.f32 %v167, %v225
  %v239 = vadd.f32 %v168, %v225
  %v240 = vadd.f32 %v169, %v225
  %v241 = vadd.f32 %v170, %v225
  %v242 = vadd.f32 %v171, %v225
  %v243 = vadd.f32 %v172, %v225
  %v244 = vadd.f32 %v173, %v225
  %v245 = vadd.f32 %v174, %v225
  %v246 = vadd.f32 %v175, %v225
  %v247 = vadd.f32 %v176, %v225
  %v248 = vadd.f32 %v177, %v225
  %v249 = vadd.f32 %v178, %v225
  %v250 = vadd.f32 %v179, %v225
  %v251 = vadd.f32 %v180, %v225
  %v252 = vadd.f32 %v181, %v225
  %v253 = vadd.f32 %v182, %v225
  %v254 = vadd.f32 %v183, %v225
  %v255 = vadd.f32 %v184, %v225
  %v256 = vadd.f32 %v185, %v225
  %v257 = vadd.f32 %v186, %v225
  %v258 = vadd.f32 %v187, %v225
  %v259 = vadd.f32 %v188, %v225
  %v260 = vadd.f32 %v189, %v225
  %v261 = vadd.f32 %v190, %v225
  %v262 = vadd.f32 %v191, %v225
  %v263 = vadd.f32 %v192, %v225
  %v264 = vadd.f32 %v193, %v225
  %v265 = vadd.f32 %v194, %v225
  %v266 = vadd.f32 %v195, %v225
  %v267 = vadd.f32 %v196, %v225
  %v268 = vadd.f32 %v197, %v225
  %v269 = vadd.f32 %v198, %v225
  %v270 = vadd.f32 %v199, %v225
  %v271 = vadd.f32 %v200, %v225
  %v272 = vadd.f32 %v201, %v225
  %v273 = vadd.f32 %v202, %v225
  %v274 = vadd.f32 %v203, %v225
  %v275 = vadd.f32 %v204, %v225
  %v276 = vadd.f32 %v205, %v225
  %v277 = vadd.f32 %v206, %v225
  %v278 = vadd.f32 %v207, %v225
  %v279 = vadd.f32 %v208, %v225
  %v280 = vadd.f32 %v209, %v225
  %v281 = vadd.f32 %v210, %v225
  %v282 = vadd.f32 %v211, %v225
  %v283 = vadd.f32 %v212, %v225
  %v284 = vadd.f32 %v213, %v225
  %v285 = vadd.f32 %v214, %v225
  %v286 = vadd.f32 %v215, %v225
  %v287 = vadd.f32 %v216, %v225
  %v288 = vadd.f32 %v217, %v225
  %v289 = vadd.f32 %v218, %v225
  %v290 = vadd.f32 %v219, %v225
  %v291 = vmax.f32 %v227, 0.0
  %v292 = vmax.f32 %v228, 0.0
  %v293 = vmax.f32 %v229, 0.0
  %v294 = vmax.f32 %v230, 0.0
  %v295 = vmax.f32 %v231, 0.0
  %v296 = vmax.f32 %v232, 0.0
  %v297 = vmax.f32 %v233, 0.0
  %v298 = vmax.f32 %v234, 0.0
  %v299 = vmax.f32 %v235, 0.0
  %v300 = vmax.f32 %v236, 0.0
  %v301 = vmax.f32 %v237, 0.0
  %v302 = vmax.f32 %v238, 0.0
  %v303 = vmax.f32 %v239, 0.0
  %v304 = vmax.f32 %v240, 0.0
  %v305 = vmax.f32 %v241, 0.0
  %v306 = vmax.f32 %v242, 0.0
  %v307 = vmax.f32 %v243, 0.0
  %v308 = vmax.f32 %v244, 0.0
  %v309 = vmax.f32 %v245, 0.0
  %v310 = vmax.f32 %v246, 0.0
  %v311 = vmax.f32 %v247, 0.0
  %v312 = vmax.f32 %v248, 0.0
  %v313 = vmax.f32 %v249, 0.0
  %v314 = vmax.f32 %v250, 0.0
  %v315 = vmax.f32 %v251, 0.0
  %v316 = vmax.f32 %v252, 0.0
  %v317 = vmax.f32 %v253, 0.0
  %v318 = vmax.f32 %v254, 0.0
  %v319 = vmax.f32 %v255, 0.0
  %v320 = vmax.f32 %v256, 0.0
  %v321 = vmax.f32 %v257, 0.0
  %v322 = vmax.f32 %v258, 0.0
  %v323 = vmax.f32 %v259, 0.0
  %v324 = vmax.f32 %v260, 0.0
  %v325 = vmax.f32 %v261, 0.0
  %v326 = vmax.f32 %v262, 0.0
  %v327 = vmax.f32 %v263, 0.0
  %v328 = vmax.f32 %v264, 0.0
  %v329 = vmax.f32 %v265, 0.0
  %v330 = vmax.f32 %v266, 0.0
  %v331 = vmax.f32 %v267, 0.0
  %v332 = vmax.f32 %v268, 0.0
  %v333 = vmax.f32 %v269, 0.0
  %v334 = vmax.f32 %v270, 0.0
  %v335 = vmax.f32 %v271, 0.0
  %v336 = vmax.f32 %v272, 0.0
  %v337 = vmax.f32 %v273, 0.0
  %v338 = vmax.f32 %v274, 0.0
  %v339 = vmax.f32 %v275, 0.0
  %v340 = vmax.f32 %v276, 0.0
  %v341 = vmax.f32 %v277, 0.0
  %v342 = vmax.f32 %v278, 0.0
  %v343 = vmax.f32 %v279, 0.0
  %v344 = vmax.f32 %v280, 0.0
  %v345 = vmax.f32 %v281, 0.0
  %v346 = vmax.f32 %v282, 0.0
  %v347 = vmax.f32 %v283, 0.0
  %v348 = vmax.f32 %v284, 0.0
  %v349 = vmax.f32 %v285, 0.0
  %v350 = vmax.f32 %v286, 0.0
  %v351 = vmax.f32 %v287, 0.0
  %v352 = vmax.f32 %v288, 0.0
  %v353 = vmax.f32 %v289, 0.0
  %v354 = vmax.f32 %v290, 0.0
  %v355 = vpack.c.bf16 %v292, %v291
  %v356 = vpack.c.bf16 %v294, %v293
  %v357 = vpack.c.bf16 %v296, %v295
  %v358 = vpack.c.bf16 %v298, %v297
  %v359 = vpack.c.bf16 %v300, %v299
  %v360 = vpack.c.bf16 %v302, %v301
  %v361 = vpack.c.bf16 %v304, %v303
  %v362 = vpack.c.bf16 %v306, %v305
  %v363 = vpack.c.bf16 %v308, %v307
  %v364 = vpack.c.bf16 %v310, %v309
  %v365 = vpack.c.bf16 %v312, %v311
  %v366 = vpack.c.bf16 %v314, %v313
  %v367 = vpack.c.bf16 %v316, %v315
  %v368 = vpack.c.bf16 %v318, %v317
  %v369 = vpack.c.bf16 %v320, %v319
  %v370 = vpack.c.bf16 %v322, %v321
  %v371 = vpack.c.bf16 %v324, %v323
  %v372 = vpack.c.bf16 %v326, %v325
  %v373 = vpack.c.bf16 %v328, %v327
  %v374 = vpack.c.bf16 %v330, %v329
  %v375 = vpack.c.bf16 %v332, %v331
  %v376 = vpack.c.bf16 %v334, %v333
  %v377 = vpack.c.bf16 %v336, %v335
  %v378 = vpack.c.bf16 %v338, %v337
  %v379 = vpack.c.bf16 %v340, %v339
  %v380 = vpack.c.bf16 %v342, %v341
  %v381 = vpack.c.bf16 %v344, %v343
  %v382 = vpack.c.bf16 %v346, %v345
  %v383 = vpack.c.bf16 %v348, %v347
  %v384 = vpack.c.bf16 %v350, %v349
  %v385 = vpack.c.bf16 %v352, %v351
  %v386 = vpack.c.bf16 %v354, %v353
  %v387 = vld [vmem:[%s3] sm:$0xf]
  %v388 = vld [vmem:[%s3 + $0x4] sm:$0xf]
  %v389 = vld [vmem:[%s3 + $0x8] sm:$0xf]
  %v390 = vld [vmem:[%s3 + $0xc] sm:$0xf]
  %v391 = vld [vmem:[%s3 + $0x10] sm:$0xf]
  %v392 = vld [vmem:[%s3 + $0x14] sm:$0xf]
  %v393 = vld [vmem:[%s3 + $0x18] sm:$0xf]
  %v394 = vld [vmem:[%s3 + $0x1c] sm:$0xf]
  %v395 = vld [vmem:[%s3 + $0x20] sm:$0xf]
  %v396 = vld [vmem:[%s3 + $0x24] sm:$0xf]
  %v397 = vld [vmem:[%s3 + $0x28] sm:$0xf]
  %v398 = vld [vmem:[%s3 + $0x2c] sm:$0xf]
  %v399 = vld [vmem:[%s3 + $0x30] sm:$0xf]
  %v400 = vld [vmem:[%s3 + $0x34] sm:$0xf]
  %v401 = vld [vmem:[%s3 + $0x38] sm:$0xf]
  %v402 = vld [vmem:[%s3 + $0x3c] sm:$0xf]
  %v419 = vunpack.c.l.b16 %v387
  %v420 = vunpack.c.l.b16 %v388
  %v421 = vunpack.c.l.b16 %v389
  %v422 = vunpack.c.l.b16 %v390
  %v423 = vunpack.c.l.b16 %v391
  %v424 = vunpack.c.l.b16 %v392
  %v425 = vunpack.c.l.b16 %v393
  %v426 = vunpack.c.l.b16 %v394
  %v427 = vunpack.c.l.b16 %v395
  %v428 = vunpack.c.l.b16 %v396
  %v429 = vunpack.c.l.b16 %v397
  %v430 = vunpack.c.l.b16 %v398
  %v431 = vunpack.c.l.b16 %v399
  %v432 = vunpack.c.l.b16 %v400
  %v433 = vunpack.c.l.b16 %v401
  %v434 = vunpack.c.l.b16 %v402
  %v435 = vpack.c.b16 %v420, %v419
  %v436 = vpack.c.b16 %v422, %v421
  %v437 = vpack.c.b16 %v424, %v423
  %v438 = vpack.c.b16 %v426, %v425
  %v439 = vpack.c.b16 %v428, %v427
  %v440 = vpack.c.b16 %v430, %v429
  %v441 = vpack.c.b16 %v432, %v431
  %v442 = vpack.c.b16 %v434, %v433
  %451 = vmatprep.subr.bf16.mxu0 0
  %452 = vmatpush1.bf16.msra.mxu0 %v442
  %453 = vmatprep.subr.bf16.mxu0 0
  %454 = vmatpush1.bf16.msra.mxu0 %v441
  %455 = vmatprep.subr.bf16.mxu0 0
  %456 = vmatpush1.bf16.msra.mxu0 %v440
  %457 = vmatprep.subr.bf16.mxu0 0
  %458 = vmatpush1.bf16.msra.mxu0 %v439
  %459 = vmatprep.subr.bf16.mxu0 0
  %460 = vmatpush1.bf16.msra.mxu0 %v438
  %461 = vmatprep.subr.bf16.mxu0 0
  %462 = vmatpush1.bf16.msra.mxu0 %v437
  %463 = vmatprep.subr.bf16.mxu0 0
  %464 = vmatpush1.bf16.msra.mxu0 %v436
  %465 = vmatprep.subr.bf16.mxu0 0
  %466 = vmatpush1.bf16.msra.mxu0 %v435
  %467 = vmatprep.subr.bf16.mxu0 0
  %468 = vmatpush2.bf16.msra.mxu0 0
  %469 = vmatprep.subr.bf16.mxu0 0
  %470 = vmatpush2.bf16.msra.mxu0 0
  %471 = vmatprep.subr.bf16.mxu0 0
  %472 = vmatpush2.bf16.msra.mxu0 0
  %473 = vmatprep.subr.bf16.mxu0 0
  %474 = vmatpush2.bf16.msra.mxu0 0
  %475 = vmatprep.subr.bf16.mxu0 0
  %476 = vmatpush2.bf16.msra.mxu0 0
  %477 = vmatprep.subr.bf16.mxu0 0
  %478 = vmatpush2.bf16.msra.mxu0 0
  %479 = vmatprep.subr.bf16.mxu0 0
  %480 = vmatpush2.bf16.msra.mxu0 0
  %481 = vmatprep.subr.bf16.mxu0 0
  %482 = vmatpush2.bf16.msra.mxu0 0
  %483 = vmatprep.mubr.bf16.mxu0 0
  %484 = vmatmul.mubr.bf16.gmra.mxu0 %v355
  %v485 = vpop.f32.mrf.mxu0
  %v486 = vadd.f32 0.0, %v485
  %v487 = vpop.f32.mrf.mxu0
  %v488 = vpop.f32.mrf.mxu0
  %v489 = vadd.f32 0.0, %v488
  %v490 = vpop.f32.mrf.mxu0
  %491 = vmatprep.mubr.bf16.mxu0 0
  %492 = vmatmul.mubr.bf16.gmra.mxu0 %v356
  %v493 = vpop.f32.mrf.mxu0
  %v494 = vadd.f32 0.0, %v493
  %v495 = vpop.f32.mrf.mxu0
  %v496 = vpop.f32.mrf.mxu0
  %v497 = vadd.f32 0.0, %v496
  %v498 = vpop.f32.mrf.mxu0
  %499 = vmatprep.mubr.bf16.mxu0 0
  %500 = vmatmul.mubr.bf16.gmra.mxu0 %v357
  %v501 = vpop.f32.mrf.mxu0
  %v502 = vadd.f32 0.0, %v501
  %v503 = vpop.f32.mrf.mxu0
  %v504 = vpop.f32.mrf.mxu0
  %v505 = vadd.f32 0.0, %v504
  %v506 = vpop.f32.mrf.mxu0
  %507 = vmatprep.mubr.bf16.mxu0 0
  %508 = vmatmul.mubr.bf16.gmra.mxu0 %v358
  %v509 = vpop.f32.mrf.mxu0
  %v510 = vadd.f32 0.0, %v509
  %v511 = vpop.f32.mrf.mxu0
  %v512 = vpop.f32.mrf.mxu0
  %v513 = vadd.f32 0.0, %v512
  %v514 = vpop.f32.mrf.mxu0
  %515 = vmatprep.mubr.bf16.mxu0 0
  %516 = vmatmul.mubr.bf16.gmra.mxu0 %v359
  %v517 = vpop.f32.mrf.mxu0
  %v518 = vadd.f32 0.0, %v517
  %v519 = vpop.f32.mrf.mxu0
  %v520 = vpop.f32.mrf.mxu0
  %v521 = vadd.f32 0.0, %v520
  %v522 = vpop.f32.mrf.mxu0
  %523 = vmatprep.mubr.bf16.mxu0 0
  %524 = vmatmul.mubr.bf16.gmra.mxu0 %v360
  %v525 = vpop.f32.mrf.mxu0
  %v526 = vadd.f32 0.0, %v525
  %v527 = vpop.f32.mrf.mxu0
  %v528 = vpop.f32.mrf.mxu0
  %v529 = vadd.f32 0.0, %v528
  %v530 = vpop.f32.mrf.mxu0
  %531 = vmatprep.mubr.bf16.mxu0 0
  %532 = vmatmul.mubr.bf16.gmra.mxu0 %v361
  %v533 = vpop.f32.mrf.mxu0
  %v534 = vadd.f32 0.0, %v533
  %v535 = vpop.f32.mrf.mxu0
  %v536 = vpop.f32.mrf.mxu0
  %v537 = vadd.f32 0.0, %v536
  %v538 = vpop.f32.mrf.mxu0
  %539 = vmatprep.mubr.bf16.mxu0 0
  %540 = vmatmul.mubr.bf16.gmra.mxu0 %v362
  %v541 = vpop.f32.mrf.mxu0
  %v542 = vadd.f32 0.0, %v541
  %v543 = vpop.f32.mrf.mxu0
  %v544 = vpop.f32.mrf.mxu0
  %v545 = vadd.f32 0.0, %v544
  %v546 = vpop.f32.mrf.mxu0
  %547 = vmatprep.mubr.bf16.mxu0 0
  %548 = vmatmul.mubr.bf16.gmra.mxu0 %v363
  %v549 = vpop.f32.mrf.mxu0
  %v550 = vadd.f32 0.0, %v549
  %v551 = vpop.f32.mrf.mxu0
  %v552 = vpop.f32.mrf.mxu0
  %v553 = vadd.f32 0.0, %v552
  %v554 = vpop.f32.mrf.mxu0
  %555 = vmatprep.mubr.bf16.mxu0 0
  %556 = vmatmul.mubr.bf16.gmra.mxu0 %v364
  %v557 = vpop.f32.mrf.mxu0
  %v558 = vadd.f32 0.0, %v557
  %v559 = vpop.f32.mrf.mxu0
  %v560 = vpop.f32.mrf.mxu0
  %v561 = vadd.f32 0.0, %v560
  %v562 = vpop.f32.mrf.mxu0
  %563 = vmatprep.mubr.bf16.mxu0 0
  %564 = vmatmul.mubr.bf16.gmra.mxu0 %v365
  %v565 = vpop.f32.mrf.mxu0
  %v566 = vadd.f32 0.0, %v565
  %v567 = vpop.f32.mrf.mxu0
  %v568 = vpop.f32.mrf.mxu0
  %v569 = vadd.f32 0.0, %v568
  %v570 = vpop.f32.mrf.mxu0
  %571 = vmatprep.mubr.bf16.mxu0 0
  %572 = vmatmul.mubr.bf16.gmra.mxu0 %v366
  %v573 = vpop.f32.mrf.mxu0
  %v574 = vadd.f32 0.0, %v573
  %v575 = vpop.f32.mrf.mxu0
  %v576 = vpop.f32.mrf.mxu0
  %v577 = vadd.f32 0.0, %v576
  %v578 = vpop.f32.mrf.mxu0
  %579 = vmatprep.mubr.bf16.mxu0 0
  %580 = vmatmul.mubr.bf16.gmra.mxu0 %v367
  %v581 = vpop.f32.mrf.mxu0
  %v582 = vadd.f32 0.0, %v581
  %v583 = vpop.f32.mrf.mxu0
  %v584 = vpop.f32.mrf.mxu0
  %v585 = vadd.f32 0.0, %v584
  %v586 = vpop.f32.mrf.mxu0
  %587 = vmatprep.mubr.bf16.mxu0 0
  %588 = vmatmul.mubr.bf16.gmra.mxu0 %v368
  %v589 = vpop.f32.mrf.mxu0
  %v590 = vadd.f32 0.0, %v589
  %v591 = vpop.f32.mrf.mxu0
  %v592 = vpop.f32.mrf.mxu0
  %v593 = vadd.f32 0.0, %v592
  %v594 = vpop.f32.mrf.mxu0
  %595 = vmatprep.mubr.bf16.mxu0 0
  %596 = vmatmul.mubr.bf16.gmra.mxu0 %v369
  %v597 = vpop.f32.mrf.mxu0
  %v598 = vadd.f32 0.0, %v597
  %v599 = vpop.f32.mrf.mxu0
  %v600 = vpop.f32.mrf.mxu0
  %v601 = vadd.f32 0.0, %v600
  %v602 = vpop.f32.mrf.mxu0
  %603 = vmatprep.mubr.bf16.mxu0 0
  %604 = vmatmul.mubr.bf16.gmra.mxu0 %v370
  %v605 = vpop.f32.mrf.mxu0
  %v606 = vadd.f32 0.0, %v605
  %v607 = vpop.f32.mrf.mxu0
  %v608 = vpop.f32.mrf.mxu0
  %v609 = vadd.f32 0.0, %v608
  %v610 = vpop.f32.mrf.mxu0
  %611 = vmatprep.mubr.bf16.mxu0 0
  %612 = vmatmul.mubr.bf16.gmra.mxu0 %v371
  %v613 = vpop.f32.mrf.mxu0
  %v614 = vadd.f32 0.0, %v613
  %v615 = vpop.f32.mrf.mxu0
  %v616 = vpop.f32.mrf.mxu0
  %v617 = vadd.f32 0.0, %v616
  %v618 = vpop.f32.mrf.mxu0
  %619 = vmatprep.mubr.bf16.mxu0 0
  %620 = vmatmul.mubr.bf16.gmra.mxu0 %v372
  %v621 = vpop.f32.mrf.mxu0
  %v622 = vadd.f32 0.0, %v621
  %v623 = vpop.f32.mrf.mxu0
  %v624 = vpop.f32.mrf.mxu0
  %v625 = vadd.f32 0.0, %v624
  %v626 = vpop.f32.mrf.mxu0
  %627 = vmatprep.mubr.bf16.mxu0 0
  %628 = vmatmul.mubr.bf16.gmra.mxu0 %v373
  %v629 = vpop.f32.mrf.mxu0
  %v630 = vadd.f32 0.0, %v629
  %v631 = vpop.f32.mrf.mxu0
  %v632 = vpop.f32.mrf.mxu0
  %v633 = vadd.f32 0.0, %v632
  %v634 = vpop.f32.mrf.mxu0
  %635 = vmatprep.mubr.bf16.mxu0 0
  %636 = vmatmul.mubr.bf16.gmra.mxu0 %v374
  %v637 = vpop.f32.mrf.mxu0
  %v638 = vadd.f32 0.0, %v637
  %v639 = vpop.f32.mrf.mxu0
  %v640 = vpop.f32.mrf.mxu0
  %v641 = vadd.f32 0.0, %v640
  %v642 = vpop.f32.mrf.mxu0
  %643 = vmatprep.mubr.bf16.mxu0 0
  %644 = vmatmul.mubr.bf16.gmra.mxu0 %v375
  %v645 = vpop.f32.mrf.mxu0
  %v646 = vadd.f32 0.0, %v645
  %v647 = vpop.f32.mrf.mxu0
  %v648 = vpop.f32.mrf.mxu0
  %v649 = vadd.f32 0.0, %v648
  %v650 = vpop.f32.mrf.mxu0
  %651 = vmatprep.mubr.bf16.mxu0 0
  %652 = vmatmul.mubr.bf16.gmra.mxu0 %v376
  %v653 = vpop.f32.mrf.mxu0
  %v654 = vadd.f32 0.0, %v653
  %v655 = vpop.f32.mrf.mxu0
  %v656 = vpop.f32.mrf.mxu0
  %v657 = vadd.f32 0.0, %v656
  %v658 = vpop.f32.mrf.mxu0
  %659 = vmatprep.mubr.bf16.mxu0 0
  %660 = vmatmul.mubr.bf16.gmra.mxu0 %v377
  %v661 = vpop.f32.mrf.mxu0
  %v662 = vadd.f32 0.0, %v661
  %v663 = vpop.f32.mrf.mxu0
  %v664 = vpop.f32.mrf.mxu0
  %v665 = vadd.f32 0.0, %v664
  %v666 = vpop.f32.mrf.mxu0
  %667 = vmatprep.mubr.bf16.mxu0 0
  %668 = vmatmul.mubr.bf16.gmra.mxu0 %v378
  %v669 = vpop.f32.mrf.mxu0
  %v670 = vadd.f32 0.0, %v669
  %v671 = vpop.f32.mrf.mxu0
  %v672 = vpop.f32.mrf.mxu0
  %v673 = vadd.f32 0.0, %v672
  %v674 = vpop.f32.mrf.mxu0
  %675 = vmatprep.mubr.bf16.mxu0 0
  %676 = vmatmul.mubr.bf16.gmra.mxu0 %v379
  %v677 = vpop.f32.mrf.mxu0
  %v678 = vadd.f32 0.0, %v677
  %v679 = vpop.f32.mrf.mxu0
  %v680 = vpop.f32.mrf.mxu0
  %v681 = vadd.f32 0.0, %v680
  %v682 = vpop.f32.mrf.mxu0
  %683 = vmatprep.mubr.bf16.mxu0 0
  %684 = vmatmul.mubr.bf16.gmra.mxu0 %v380
  %v685 = vpop.f32.mrf.mxu0
  %v686 = vadd.f32 0.0, %v685
  %v687 = vpop.f32.mrf.mxu0
  %v688 = vpop.f32.mrf.mxu0
  %v689 = vadd.f32 0.0, %v688
  %v690 = vpop.f32.mrf.mxu0
  %691 = vmatprep.mubr.bf16.mxu0 0
  %692 = vmatmul.mubr.bf16.gmra.mxu0 %v381
  %v693 = vpop.f32.mrf.mxu0
  %v694 = vadd.f32 0.0, %v693
  %v695 = vpop.f32.mrf.mxu0
  %v696 = vpop.f32.mrf.mxu0
  %v697 = vadd.f32 0.0, %v696
  %v698 = vpop.f32.mrf.mxu0
  %699 = vmatprep.mubr.bf16.mxu0 0
  %700 = vmatmul.mubr.bf16.gmra.mxu0 %v382
  %v701 = vpop.f32.mrf.mxu0
  %v702 = vadd.f32 0.0, %v701
  %v703 = vpop.f32.mrf.mxu0
  %v704 = vpop.f32.mrf.mxu0
  %v705 = vadd.f32 0.0, %v704
  %v706 = vpop.f32.mrf.mxu0
  %707 = vmatprep.mubr.bf16.mxu0 0
  %708 = vmatmul.mubr.bf16.gmra.mxu0 %v383
  %v709 = vpop.f32.mrf.mxu0
  %v710 = vadd.f32 0.0, %v709
  %v711 = vpop.f32.mrf.mxu0
  %v712 = vpop.f32.mrf.mxu0
  %v713 = vadd.f32 0.0, %v712
  %v714 = vpop.f32.mrf.mxu0
  %715 = vmatprep.mubr.bf16.mxu0 0
  %716 = vmatmul.mubr.bf16.gmra.mxu0 %v384
  %v717 = vpop.f32.mrf.mxu0
  %v718 = vadd.f32 0.0, %v717
  %v719 = vpop.f32.mrf.mxu0
  %v720 = vpop.f32.mrf.mxu0
  %v721 = vadd.f32 0.0, %v720
  %v722 = vpop.f32.mrf.mxu0
  %723 = vmatprep.mubr.bf16.mxu0 0
  %724 = vmatmul.mubr.bf16.gmra.mxu0 %v385
  %v725 = vpop.f32.mrf.mxu0
  %v726 = vadd.f32 0.0, %v725
  %v727 = vpop.f32.mrf.mxu0
  %v728 = vpop.f32.mrf.mxu0
  %v729 = vadd.f32 0.0, %v728
  %v730 = vpop.f32.mrf.mxu0
  %731 = vmatprep.mubr.bf16.mxu0 0
  %732 = vmatmul.mubr.bf16.gmra.mxu0 %v386
  %v733 = vpop.f32.mrf.mxu0
  %v734 = vadd.f32 0.0, %v733
  %v735 = vpop.f32.mrf.mxu0
  %v736 = vpop.f32.mrf.mxu0
  %v737 = vadd.f32 0.0, %v736
  %v738 = vpop.f32.mrf.mxu0
  %739 = vdwg.mxu0
  %v740 = vpack.c.bf16 %v489, %v486
  %v741 = vpack.c.bf16 %v497, %v494
  %v742 = vpack.c.bf16 %v505, %v502
  %v743 = vpack.c.bf16 %v513, %v510
  %v744 = vpack.c.bf16 %v521, %v518
  %v745 = vpack.c.bf16 %v529, %v526
  %v746 = vpack.c.bf16 %v537, %v534
  %v747 = vpack.c.bf16 %v545, %v542
  %v748 = vpack.c.bf16 %v553, %v550
  %v749 = vpack.c.bf16 %v561, %v558
  %v750 = vpack.c.bf16 %v569, %v566
  %v751 = vpack.c.bf16 %v577, %v574
  %v752 = vpack.c.bf16 %v585, %v582
  %v753 = vpack.c.bf16 %v593, %v590
  %v754 = vpack.c.bf16 %v601, %v598
  %v755 = vpack.c.bf16 %v609, %v606
  %v756 = vpack.c.bf16 %v617, %v614
  %v757 = vpack.c.bf16 %v625, %v622
  %v758 = vpack.c.bf16 %v633, %v630
  %v759 = vpack.c.bf16 %v641, %v638
  %v760 = vpack.c.bf16 %v649, %v646
  %v761 = vpack.c.bf16 %v657, %v654
  %v762 = vpack.c.bf16 %v665, %v662
  %v763 = vpack.c.bf16 %v673, %v670
  %v764 = vpack.c.bf16 %v681, %v678
  %v765 = vpack.c.bf16 %v689, %v686
  %v766 = vpack.c.bf16 %v697, %v694
  %v767 = vpack.c.bf16 %v705, %v702
  %v768 = vpack.c.bf16 %v713, %v710
  %v769 = vpack.c.bf16 %v721, %v718
  %v770 = vpack.c.bf16 %v729, %v726
  %v771 = vpack.c.bf16 %v737, %v734
  %v804 = vunpack.c.l.b16 %v740
  %v805 = vunpack.c.h.b16 %v740
  %v806 = vunpack.c.l.b16 %v741
  %v807 = vunpack.c.h.b16 %v741
  %v808 = vunpack.c.l.b16 %v742
  %v809 = vunpack.c.h.b16 %v742
  %v810 = vunpack.c.l.b16 %v743
  %v811 = vunpack.c.h.b16 %v743
  %v812 = vunpack.c.l.b16 %v744
  %v813 = vunpack.c.h.b16 %v744
  %v814 = vunpack.c.l.b16 %v745
  %v815 = vunpack.c.h.b16 %v745
  %v816 = vunpack.c.l.b16 %v746
  %v817 = vunpack.c.h.b16 %v746
  %v818 = vunpack.c.l.b16 %v747
  %v819 = vunpack.c.h.b16 %v747
  %v820 = vunpack.c.l.b16 %v748
  %v821 = vunpack.c.h.b16 %v748
  %v822 = vunpack.c.l.b16 %v749
  %v823 = vunpack.c.h.b16 %v749
  %v824 = vunpack.c.l.b16 %v750
  %v825 = vunpack.c.h.b16 %v750
  %v826 = vunpack.c.l.b16 %v751
  %v827 = vunpack.c.h.b16 %v751
  %v828 = vunpack.c.l.b16 %v752
  %v829 = vunpack.c.h.b16 %v752
  %v830 = vunpack.c.l.b16 %v753
  %v831 = vunpack.c.h.b16 %v753
  %v832 = vunpack.c.l.b16 %v754
  %v833 = vunpack.c.h.b16 %v754
  %v834 = vunpack.c.l.b16 %v755
  %v835 = vunpack.c.h.b16 %v755
  %v836 = vunpack.c.l.b16 %v756
  %v837 = vunpack.c.h.b16 %v756
  %v838 = vunpack.c.l.b16 %v757
  %v839 = vunpack.c.h.b16 %v757
  %v840 = vunpack.c.l.b16 %v758
  %v841 = vunpack.c.h.b16 %v758
  %v842 = vunpack.c.l.b16 %v759
  %v843 = vunpack.c.h.b16 %v759
  %v844 = vunpack.c.l.b16 %v760
  %v845 = vunpack.c.h.b16 %v760
  %v846 = vunpack.c.l.b16 %v761
  %v847 = vunpack.c.h.b16 %v761
  %v848 = vunpack.c.l.b16 %v762
  %v849 = vunpack.c.h.b16 %v762
  %v850 = vunpack.c.l.b16 %v763
  %v851 = vunpack.c.h.b16 %v763
  %v852 = vunpack.c.l.b16 %v764
  %v853 = vunpack.c.h.b16 %v764
  %v854 = vunpack.c.l.b16 %v765
  %v855 = vunpack.c.h.b16 %v765
  %v856 = vunpack.c.l.b16 %v766
  %v857 = vunpack.c.h.b16 %v766
  %v858 = vunpack.c.l.b16 %v767
  %v859 = vunpack.c.h.b16 %v767
  %v860 = vunpack.c.l.b16 %v768
  %v861 = vunpack.c.h.b16 %v768
  %v862 = vunpack.c.l.b16 %v769
  %v863 = vunpack.c.h.b16 %v769
  %v864 = vunpack.c.l.b16 %v770
  %v865 = vunpack.c.h.b16 %v770
  %v866 = vunpack.c.l.b16 %v771
  %v867 = vunpack.c.h.b16 %v771
  %v868 = vpack.c.b16 %v804, %v804
  %v869 = vpack.c.b16 %v805, %v805
  %v870 = vpack.c.b16 %v806, %v806
  %v871 = vpack.c.b16 %v807, %v807
  %v872 = vpack.c.b16 %v808, %v808
  %v873 = vpack.c.b16 %v809, %v809
  %v874 = vpack.c.b16 %v810, %v810
  %v875 = vpack.c.b16 %v811, %v811
  %v876 = vpack.c.b16 %v812, %v812
  %v877 = vpack.c.b16 %v813, %v813
  %v878 = vpack.c.b16 %v814, %v814
  %v879 = vpack.c.b16 %v815, %v815
  %v880 = vpack.c.b16 %v816, %v816
  %v881 = vpack.c.b16 %v817, %v817
  %v882 = vpack.c.b16 %v818, %v818
  %v883 = vpack.c.b16 %v819, %v819
  %v884 = vpack.c.b16 %v820, %v820
  %v885 = vpack.c.b16 %v821, %v821
  %v886 = vpack.c.b16 %v822, %v822
  %v887 = vpack.c.b16 %v823, %v823
  %v888 = vpack.c.b16 %v824, %v824
  %v889 = vpack.c.b16 %v825, %v825
  %v890 = vpack.c.b16 %v826, %v826
  %v891 = vpack.c.b16 %v827, %v827
  %v892 = vpack.c.b16 %v828, %v828
  %v893 = vpack.c.b16 %v829, %v829
  %v894 = vpack.c.b16 %v830, %v830
  %v895 = vpack.c.b16 %v831, %v831
  %v896 = vpack.c.b16 %v832, %v832
  %v897 = vpack.c.b16 %v833, %v833
  %v898 = vpack.c.b16 %v834, %v834
  %v899 = vpack.c.b16 %v835, %v835
  %v900 = vpack.c.b16 %v836, %v836
  %v901 = vpack.c.b16 %v837, %v837
  %v902 = vpack.c.b16 %v838, %v838
  %v903 = vpack.c.b16 %v839, %v839
  %v904 = vpack.c.b16 %v840, %v840
  %v905 = vpack.c.b16 %v841, %v841
  %v906 = vpack.c.b16 %v842, %v842
  %v907 = vpack.c.b16 %v843, %v843
  %v908 = vpack.c.b16 %v844, %v844
  %v909 = vpack.c.b16 %v845, %v845
  %v910 = vpack.c.b16 %v846, %v846
  %v911 = vpack.c.b16 %v847, %v847
  %v912 = vpack.c.b16 %v848, %v848
  %v913 = vpack.c.b16 %v849, %v849
  %v914 = vpack.c.b16 %v850, %v850
  %v915 = vpack.c.b16 %v851, %v851
  %v916 = vpack.c.b16 %v852, %v852
  %v917 = vpack.c.b16 %v853, %v853
  %v918 = vpack.c.b16 %v854, %v854
  %v919 = vpack.c.b16 %v855, %v855
  %v920 = vpack.c.b16 %v856, %v856
  %v921 = vpack.c.b16 %v857, %v857
  %v922 = vpack.c.b16 %v858, %v858
  %v923 = vpack.c.b16 %v859, %v859
  %v924 = vpack.c.b16 %v860, %v860
  %v925 = vpack.c.b16 %v861, %v861
  %v926 = vpack.c.b16 %v862, %v862
  %v927 = vpack.c.b16 %v863, %v863
  %v928 = vpack.c.b16 %v864, %v864
  %v929 = vpack.c.b16 %v865, %v865
  %v930 = vpack.c.b16 %v866, %v866
  %v931 = vpack.c.b16 %v867, %v867
  %996 = vst [vmem:[%s4] sm:$0xf] %v868
  %997 = vst [vmem:[%s4 + $0x4] sm:$0xf] %v869
  %998 = vst [vmem:[%s4 + $0x8] sm:$0xf] %v870
  %999 = vst [vmem:[%s4 + $0xc] sm:$0xf] %v871
  %1000 = vst [vmem:[%s4 + $0x10] sm:$0xf] %v872
  %1001 = vst [vmem:[%s4 + $0x14] sm:$0xf] %v873
  %1002 = vst [vmem:[%s4 + $0x18] sm:$0xf] %v874
  %1003 = vst [vmem:[%s4 + $0x1c] sm:$0xf] %v875
  %1004 = vst [vmem:[%s4 + $0x20] sm:$0xf] %v876
  %1005 = vst [vmem:[%s4 + $0x24] sm:$0xf] %v877
  %1006 = vst [vmem:[%s4 + $0x28] sm:$0xf] %v878
  %1007 = vst [vmem:[%s4 + $0x2c] sm:$0xf] %v879
  %1008 = vst [vmem:[%s4 + $0x30] sm:$0xf] %v880
  %1009 = vst [vmem:[%s4 + $0x34] sm:$0xf] %v881
  %1010 = vst [vmem:[%s4 + $0x38] sm:$0xf] %v882
  %1011 = vst [vmem:[%s4 + $0x3c] sm:$0xf] %v883
  %1012 = vst [vmem:[%s4 + $0x40] sm:$0xf] %v884
  %1013 = vst [vmem:[%s4 + $0x44] sm:$0xf] %v885
  %1014 = vst [vmem:[%s4 + $0x48] sm:$0xf] %v886
  %1015 = vst [vmem:[%s4 + $0x4c] sm:$0xf] %v887
  %1016 = vst [vmem:[%s4 + $0x50] sm:$0xf] %v888
  %1017 = vst [vmem:[%s4 + $0x54] sm:$0xf] %v889
  %1018 = vst [vmem:[%s4 + $0x58] sm:$0xf] %v890
  %1019 = vst [vmem:[%s4 + $0x5c] sm:$0xf] %v891
  %1020 = vst [vmem:[%s4 + $0x60] sm:$0xf] %v892
  %1021 = vst [vmem:[%s4 + $0x64] sm:$0xf] %v893
  %1022 = vst [vmem:[%s4 + $0x68] sm:$0xf] %v894
  %1023 = vst [vmem:[%s4 + $0x6c] sm:$0xf] %v895
  %1024 = vst [vmem:[%s4 + $0x70] sm:$0xf] %v896
  %1025 = vst [vmem:[%s4 + $0x74] sm:$0xf] %v897
  %1026 = vst [vmem:[%s4 + $0x78] sm:$0xf] %v898
  %1027 = vst [vmem:[%s4 + $0x7c] sm:$0xf] %v899
  %1028 = vst [vmem:[%s4 + $0x80] sm:$0xf] %v900
  %1029 = vst [vmem:[%s4 + $0x84] sm:$0xf] %v901
  %1030 = vst [vmem:[%s4 + $0x88] sm:$0xf] %v902
  %1031 = vst [vmem:[%s4 + $0x8c] sm:$0xf] %v903
  %1032 = vst [vmem:[%s4 + $0x90] sm:$0xf] %v904
  %1033 = vst [vmem:[%s4 + $0x94] sm:$0xf] %v905
  %1034 = vst [vmem:[%s4 + $0x98] sm:$0xf] %v906
  %1035 = vst [vmem:[%s4 + $0x9c] sm:$0xf] %v907
  %1036 = vst [vmem:[%s4 + $0xa0] sm:$0xf] %v908
  %1037 = vst [vmem:[%s4 + $0xa4] sm:$0xf] %v909
  %1038 = vst [vmem:[%s4 + $0xa8] sm:$0xf] %v910
  %1039 = vst [vmem:[%s4 + $0xac] sm:$0xf] %v911
  %1040 = vst [vmem:[%s4 + $0xb0] sm:$0xf] %v912
  %1041 = vst [vmem:[%s4 + $0xb4] sm:$0xf] %v913
  %1042 = vst [vmem:[%s4 + $0xb8] sm:$0xf] %v914
  %1043 = vst [vmem:[%s4 + $0xbc] sm:$0xf] %v915
  %1044 = vst [vmem:[%s4 + $0xc0] sm:$0xf] %v916
  %1045 = vst [vmem:[%s4 + $0xc4] sm:$0xf] %v917
  %1046 = vst [vmem:[%s4 + $0xc8] sm:$0xf] %v918
  %1047 = vst [vmem:[%s4 + $0xcc] sm:$0xf] %v919
  %1048 = vst [vmem:[%s4 + $0xd0] sm:$0xf] %v920
  %1049 = vst [vmem:[%s4 + $0xd4] sm:$0xf] %v921
  %1050 = vst [vmem:[%s4 + $0xd8] sm:$0xf] %v922
  %1051 = vst [vmem:[%s4 + $0xdc] sm:$0xf] %v923
  %1052 = vst [vmem:[%s4 + $0xe0] sm:$0xf] %v924
  %1053 = vst [vmem:[%s4 + $0xe4] sm:$0xf] %v925
  %1054 = vst [vmem:[%s4 + $0xe8] sm:$0xf] %v926
  %1055 = vst [vmem:[%s4 + $0xec] sm:$0xf] %v927
  %1056 = vst [vmem:[%s4 + $0xf0] sm:$0xf] %v928
  %1057 = vst [vmem:[%s4 + $0xf4] sm:$0xf] %v929
  %1058 = vst [vmem:[%s4 + $0xf8] sm:$0xf] %v930
  %1059 = vst [vmem:[%s4 + $0xfc] sm:$0xf] %v931
  %v1060 = vadd.f32 %v486, %v489
  %v1061 = vadd.f32 %v1060, %v494
  %v1062 = vadd.f32 %v1061, %v497
  %v1063 = vadd.f32 %v1062, %v502
  %v1064 = vadd.f32 %v1063, %v505
  %v1065 = vadd.f32 %v1064, %v510
  %v1066 = vadd.f32 %v1065, %v513
  %v1067 = vrot.slane %v1066, 4
  %v1068 = vadd.f32 %v1066, %v1067
  %v1069 = vrot.slane %v1068, 2
  %v1070 = vadd.f32 %v1068, %v1069
  %v1071 = vrot.slane %v1070, 1
  %v1072 = vadd.f32 %v1070, %v1071
  %v1073 = vadd.f32 %v518, %v521
  %v1074 = vadd.f32 %v1073, %v526
  %v1075 = vadd.f32 %v1074, %v529
  %v1076 = vadd.f32 %v1075, %v534
  %v1077 = vadd.f32 %v1076, %v537
  %v1078 = vadd.f32 %v1077, %v542
  %v1079 = vadd.f32 %v1078, %v545
  %v1080 = vrot.slane %v1079, 4
  %v1081 = vadd.f32 %v1079, %v1080
  %v1082 = vrot.slane %v1081, 2
  %v1083 = vadd.f32 %v1081, %v1082
  %v1084 = vrot.slane %v1083, 1
  %v1085 = vadd.f32 %v1083, %v1084
  %v1086 = vadd.f32 %v550, %v553
  %v1087 = vadd.f32 %v1086, %v558
  %v1088 = vadd.f32 %v1087, %v561
  %v1089 = vadd.f32 %v1088, %v566
  %v1090 = vadd.f32 %v1089, %v569
  %v1091 = vadd.f32 %v1090, %v574
  %v1092 = vadd.f32 %v1091, %v577
  %v1093 = vrot.slane %v1092, 4
  %v1094 = vadd.f32 %v1092, %v1093
  %v1095 = vrot.slane %v1094, 2
  %v1096 = vadd.f32 %v1094, %v1095
  %v1097 = vrot.slane %v1096, 1
  %v1098 = vadd.f32 %v1096, %v1097
  %v1099 = vadd.f32 %v582, %v585
  %v1100 = vadd.f32 %v1099, %v590
  %v1101 = vadd.f32 %v1100, %v593
  %v1102 = vadd.f32 %v1101, %v598
  %v1103 = vadd.f32 %v1102, %v601
  %v1104 = vadd.f32 %v1103, %v606
  %v1105 = vadd.f32 %v1104, %v609
  %v1106 = vrot.slane %v1105, 4
  %v1107 = vadd.f32 %v1105, %v1106
  %v1108 = vrot.slane %v1107, 2
  %v1109 = vadd.f32 %v1107, %v1108
  %v1110 = vrot.slane %v1109, 1
  %v1111 = vadd.f32 %v1109, %v1110
  %v1112 = vadd.f32 %v614, %v617
  %v1113 = vadd.f32 %v1112, %v622
  %v1114 = vadd.f32 %v1113, %v625
  %v1115 = vadd.f32 %v1114, %v630
  %v1116 = vadd.f32 %v1115, %v633
  %v1117 = vadd.f32 %v1116, %v638
  %v1118 = vadd.f32 %v1117, %v641
  %v1119 = vrot.slane %v1118, 4
  %v1120 = vadd.f32 %v1118, %v1119
  %v1121 = vrot.slane %v1120, 2
  %v1122 = vadd.f32 %v1120, %v1121
  %v1123 = vrot.slane %v1122, 1
  %v1124 = vadd.f32 %v1122, %v1123
  %v1125 = vadd.f32 %v646, %v649
  %v1126 = vadd.f32 %v1125, %v654
  %v1127 = vadd.f32 %v1126, %v657
  %v1128 = vadd.f32 %v1127, %v662
  %v1129 = vadd.f32 %v1128, %v665
  %v1130 = vadd.f32 %v1129, %v670
  %v1131 = vadd.f32 %v1130, %v673
  %v1132 = vrot.slane %v1131, 4
  %v1133 = vadd.f32 %v1131, %v1132
  %v1134 = vrot.slane %v1133, 2
  %v1135 = vadd.f32 %v1133, %v1134
  %v1136 = vrot.slane %v1135, 1
  %v1137 = vadd.f32 %v1135, %v1136
  %v1138 = vadd.f32 %v678, %v681
  %v1139 = vadd.f32 %v1138, %v686
  %v1140 = vadd.f32 %v1139, %v689
  %v1141 = vadd.f32 %v1140, %v694
  %v1142 = vadd.f32 %v1141, %v697
  %v1143 = vadd.f32 %v1142, %v702
  %v1144 = vadd.f32 %v1143, %v705
  %v1145 = vrot.slane %v1144, 4
  %v1146 = vadd.f32 %v1144, %v1145
  %v1147 = vrot.slane %v1146, 2
  %v1148 = vadd.f32 %v1146, %v1147
  %v1149 = vrot.slane %v1148, 1
  %v1150 = vadd.f32 %v1148, %v1149
  %v1151 = vadd.f32 %v710, %v713
  %v1152 = vadd.f32 %v1151, %v718
  %v1153 = vadd.f32 %v1152, %v721
  %v1154 = vadd.f32 %v1153, %v726
  %v1155 = vadd.f32 %v1154, %v729
  %v1156 = vadd.f32 %v1155, %v734
  %v1157 = vadd.f32 %v1156, %v737
  %v1158 = vrot.slane %v1157, 4
  %v1159 = vadd.f32 %v1157, %v1158
  %v1160 = vrot.slane %v1159, 2
  %v1161 = vadd.f32 %v1159, %v1160
  %v1162 = vrot.slane %v1161, 1
  %v1163 = vadd.f32 %v1161, %v1162
  %vm1172 = vcmask 1041409
  %v1173 = vsel %vm1172, %v1085, %v1072
  %vm1174 = vcmask 1042434
  %v1175 = vsel %vm1174, %v1098, %v1173
  %vm1176 = vcmask 1043459
  %v1177 = vsel %vm1176, %v1111, %v1175
  %vm1178 = vcmask 1044484
  %v1179 = vsel %vm1178, %v1124, %v1177
  %vm1180 = vcmask 1045509
  %v1181 = vsel %vm1180, %v1137, %v1179
  %vm1182 = vcmask 1046534
  %v1183 = vsel %vm1182, %v1150, %v1181
  %vm1184 = vcmask 1047559
  %v1185 = vsel %vm1184, %v1163, %v1183
  %1187 = vst [vmem:[%s5] sm:$0xff] %v1185
  %v1188 = vmul.f32 %v486, %v486
  %v1189 = vmul.f32 %v489, %v489
  %v1190 = vmul.f32 %v494, %v494
  %v1191 = vmul.f32 %v497, %v497
  %v1192 = vmul.f32 %v502, %v502
  %v1193 = vmul.f32 %v505, %v505
  %v1194 = vmul.f32 %v510, %v510
  %v1195 = vmul.f32 %v513, %v513
  %v1196 = vmul.f32 %v518, %v518
  %v1197 = vmul.f32 %v521, %v521
  %v1198 = vmul.f32 %v526, %v526
  %v1199 = vmul.f32 %v529, %v529
  %v1200 = vmul.f32 %v534, %v534
  %v1201 = vmul.f32 %v537, %v537
  %v1202 = vmul.f32 %v542, %v542
  %v1203 = vmul.f32 %v545, %v545
  %v1204 = vmul.f32 %v550, %v550
  %v1205 = vmul.f32 %v553, %v553
  %v1206 = vmul.f32 %v558, %v558
  %v1207 = vmul.f32 %v561, %v561
  %v1208 = vmul.f32 %v566, %v566
  %v1209 = vmul.f32 %v569, %v569
  %v1210 = vmul.f32 %v574, %v574
  %v1211 = vmul.f32 %v577, %v577
  %v1212 = vmul.f32 %v582, %v582
  %v1213 = vmul.f32 %v585, %v585
  %v1214 = vmul.f32 %v590, %v590
  %v1215 = vmul.f32 %v593, %v593
  %v1216 = vmul.f32 %v598, %v598
  %v1217 = vmul.f32 %v601, %v601
  %v1218 = vmul.f32 %v606, %v606
  %v1219 = vmul.f32 %v609, %v609
  %v1220 = vmul.f32 %v614, %v614
  %v1221 = vmul.f32 %v617, %v617
  %v1222 = vmul.f32 %v622, %v622
  %v1223 = vmul.f32 %v625, %v625
  %v1224 = vmul.f32 %v630, %v630
  %v1225 = vmul.f32 %v633, %v633
  %v1226 = vmul.f32 %v638, %v638
  %v1227 = vmul.f32 %v641, %v641
  %v1228 = vmul.f32 %v646, %v646
  %v1229 = vmul.f32 %v649, %v649
  %v1230 = vmul.f32 %v654, %v654
  %v1231 = vmul.f32 %v657, %v657
  %v1232 = vmul.f32 %v662, %v662
  %v1233 = vmul.f32 %v665, %v665
  %v1234 = vmul.f32 %v670, %v670
  %v1235 = vmul.f32 %v673, %v673
  %v1236 = vmul.f32 %v678, %v678
  %v1237 = vmul.f32 %v681, %v681
  %v1238 = vmul.f32 %v686, %v686
  %v1239 = vmul.f32 %v689, %v689
  %v1240 = vmul.f32 %v694, %v694
  %v1241 = vmul.f32 %v697, %v697
  %v1242 = vmul.f32 %v702, %v702
  %v1243 = vmul.f32 %v705, %v705
  %v1244 = vmul.f32 %v710, %v710
  %v1245 = vmul.f32 %v713, %v713
  %v1246 = vmul.f32 %v718, %v718
  %v1247 = vmul.f32 %v721, %v721
  %v1248 = vmul.f32 %v726, %v726
  %v1249 = vmul.f32 %v729, %v729
  %v1250 = vmul.f32 %v734, %v734
  %v1251 = vmul.f32 %v737, %v737
  %v1252 = vadd.f32 %v1188, %v1189
  %v1253 = vadd.f32 %v1252, %v1190
  %v1254 = vadd.f32 %v1253, %v1191
  %v1255 = vadd.f32 %v1254, %v1192
  %v1256 = vadd.f32 %v1255, %v1193
  %v1257 = vadd.f32 %v1256, %v1194
  %v1258 = vadd.f32 %v1257, %v1195
  %v1259 = vrot.slane %v1258, 4
  %v1260 = vadd.f32 %v1258, %v1259
  %v1261 = vrot.slane %v1260, 2
  %v1262 = vadd.f32 %v1260, %v1261
  %v1263 = vrot.slane %v1262, 1
  %v1264 = vadd.f32 %v1262, %v1263
  %v1265 = vadd.f32 %v1196, %v1197
  %v1266 = vadd.f32 %v1265, %v1198
  %v1267 = vadd.f32 %v1266, %v1199
  %v1268 = vadd.f32 %v1267, %v1200
  %v1269 = vadd.f32 %v1268, %v1201
  %v1270 = vadd.f32 %v1269, %v1202
  %v1271 = vadd.f32 %v1270, %v1203
  %v1272 = vrot.slane %v1271, 4
  %v1273 = vadd.f32 %v1271, %v1272
  %v1274 = vrot.slane %v1273, 2
  %v1275 = vadd.f32 %v1273, %v1274
  %v1276 = vrot.slane %v1275, 1
  %v1277 = vadd.f32 %v1275, %v1276
  %v1278 = vadd.f32 %v1204, %v1205
  %v1279 = vadd.f32 %v1278, %v1206
  %v1280 = vadd.f32 %v1279, %v1207
  %v1281 = vadd.f32 %v1280, %v1208
  %v1282 = vadd.f32 %v1281, %v1209
  %v1283 = vadd.f32 %v1282, %v1210
  %v1284 = vadd.f32 %v1283, %v1211
  %v1285 = vrot.slane %v1284, 4
  %v1286 = vadd.f32 %v1284, %v1285
  %v1287 = vrot.slane %v1286, 2
  %v1288 = vadd.f32 %v1286, %v1287
  %v1289 = vrot.slane %v1288, 1
  %v1290 = vadd.f32 %v1288, %v1289
  %v1291 = vadd.f32 %v1212, %v1213
  %v1292 = vadd.f32 %v1291, %v1214
  %v1293 = vadd.f32 %v1292, %v1215
  %v1294 = vadd.f32 %v1293, %v1216
  %v1295 = vadd.f32 %v1294, %v1217
  %v1296 = vadd.f32 %v1295, %v1218
  %v1297 = vadd.f32 %v1296, %v1219
  %v1298 = vrot.slane %v1297, 4
  %v1299 = vadd.f32 %v1297, %v1298
  %v1300 = vrot.slane %v1299, 2
  %v1301 = vadd.f32 %v1299, %v1300
  %v1302 = vrot.slane %v1301, 1
  %v1303 = vadd.f32 %v1301, %v1302
  %v1304 = vadd.f32 %v1220, %v1221
  %v1305 = vadd.f32 %v1304, %v1222
  %v1306 = vadd.f32 %v1305, %v1223
  %v1307 = vadd.f32 %v1306, %v1224
  %v1308 = vadd.f32 %v1307, %v1225
  %v1309 = vadd.f32 %v1308, %v1226
  %v1310 = vadd.f32 %v1309, %v1227
  %v1311 = vrot.slane %v1310, 4
  %v1312 = vadd.f32 %v1310, %v1311
  %v1313 = vrot.slane %v1312, 2
  %v1314 = vadd.f32 %v1312, %v1313
  %v1315 = vrot.slane %v1314, 1
  %v1316 = vadd.f32 %v1314, %v1315
  %v1317 = vadd.f32 %v1228, %v1229
  %v1318 = vadd.f32 %v1317, %v1230
  %v1319 = vadd.f32 %v1318, %v1231
  %v1320 = vadd.f32 %v1319, %v1232
  %v1321 = vadd.f32 %v1320, %v1233
  %v1322 = vadd.f32 %v1321, %v1234
  %v1323 = vadd.f32 %v1322, %v1235
  %v1324 = vrot.slane %v1323, 4
  %v1325 = vadd.f32 %v1323, %v1324
  %v1326 = vrot.slane %v1325, 2
  %v1327 = vadd.f32 %v1325, %v1326
  %v1328 = vrot.slane %v1327, 1
  %v1329 = vadd.f32 %v1327, %v1328
  %v1330 = vadd.f32 %v1236, %v1237
  %v1331 = vadd.f32 %v1330, %v1238
  %v1332 = vadd.f32 %v1331, %v1239
  %v1333 = vadd.f32 %v1332, %v1240
  %v1334 = vadd.f32 %v1333, %v1241
  %v1335 = vadd.f32 %v1334, %v1242
  %v1336 = vadd.f32 %v1335, %v1243
  %v1337 = vrot.slane %v1336, 4
  %v1338 = vadd.f32 %v1336, %v1337
  %v1339 = vrot.slane %v1338, 2
  %v1340 = vadd.f32 %v1338, %v1339
  %v1341 = vrot.slane %v1340, 1
  %v1342 = vadd.f32 %v1340, %v1341
  %v1343 = vadd.f32 %v1244, %v1245
  %v1344 = vadd.f32 %v1343, %v1246
  %v1345 = vadd.f32 %v1344, %v1247
  %v1346 = vadd.f32 %v1345, %v1248
  %v1347 = vadd.f32 %v1346, %v1249
  %v1348 = vadd.f32 %v1347, %v1250
  %v1349 = vadd.f32 %v1348, %v1251
  %v1350 = vrot.slane %v1349, 4
  %v1351 = vadd.f32 %v1349, %v1350
  %v1352 = vrot.slane %v1351, 2
  %v1353 = vadd.f32 %v1351, %v1352
  %v1354 = vrot.slane %v1353, 1
  %v1355 = vadd.f32 %v1353, %v1354
  %v1364 = vsel %vm1172, %v1277, %v1264
  %v1365 = vsel %vm1174, %v1290, %v1364
  %v1366 = vsel %vm1176, %v1303, %v1365
  %v1367 = vsel %vm1178, %v1316, %v1366
  %v1368 = vsel %vm1180, %v1329, %v1367
  %v1369 = vsel %vm1182, %v1342, %v1368
  %v1370 = vsel %vm1184, %v1355, %v1369
  %1372 = vst [vmem:[%s6] sm:$0xff] %v1370
  // Predicated region
  $region18: #{bottleneck_forward.6} parent=0 // pred_check
    _
  $region19: #{bottleneck_forward.6} parent=0 // pred_check_branch
    %1374 = sbr.rel (0) target = $region21
  $region20: #{bottleneck_forward.6} parent=0 // pred_region
    _
  $region21: #{bottleneck_forward.6} parent=0 // pred_fallthru
    _
  // Predicated region
  $region22: #{bottleneck_forward.6} parent=0 // pred_check
    _
  $region23: #{bottleneck_forward.6} parent=0 // pred_check_branch
    %1376 = sbr.rel (0) target = $region25
  $region24: #{bottleneck_forward.6} parent=0 // pred_region
    _
  $region25: #{bottleneck_forward.6} parent=0 // pred_fallthru
    _
  // Predicated region
  $region26: #{bottleneck_forward.6} parent=0 // pred_check
    _
  $region27: #{bottleneck_forward.6} parent=0 // pred_check_branch
    %1378 = sbr.rel (0) target = $region29
  $region28: #{bottleneck_forward.6} parent=0 // pred_region
    _
  $region29: #{bottleneck_forward.6} parent=0 // pred_fallthru
    _
  // Predicated region
  $region30: #{bottleneck_forward.6} parent=0 // pred_check
    _
  $region31: #{bottleneck_forward.6} parent=0 // pred_check_branch
    %1380 = sbr.rel (0) target = $region33
  $region32: #{bottleneck_forward.6} parent=0 // pred_region
    _
  $region33: #{bottleneck_forward.6} parent=0 // pred_fallthru
    _
  // Predicated region
  $region34: #{bottleneck_forward.6} parent=0 // pred_check
    _
  $region35: #{bottleneck_forward.6} parent=0 // pred_check_branch
    %1382 = sbr.rel (0) target = $region37
  $region36: #{bottleneck_forward.6} parent=0 // pred_region
    _
  $region37: #{bottleneck_forward.6} parent=0 // pred_fallthru
    _
  // Predicated region
  $region38: #{bottleneck_forward.6} parent=0 // pred_check
    _
  $region39: #{bottleneck_forward.6} parent=0 // pred_check_branch
    %1384 = sbr.rel (0) target = $region41
  $region40: #{bottleneck_forward.6} parent=0 // pred_region
    _
  $region41: #{bottleneck_forward.6} parent=0 // pred_fallthru
    _

// kernel: bottleneck_forward.7
$region0: #{bottleneck_forward.7}
  #allocation0 [shape = 'u32[]', space=smem, size = 0x4, offset = 0x4, fixed_abs, tag = 'smem constant byte address 0x4 - core index']
  #allocation1 [shape = 'u32[144,128]{1,0:T(1,128)}', space=vmem, size = 0x12000, scoped, tag = 'internal scratch']
  %s0 = inlined_call_operand.vmem [shape: bf16[512,128], index: 0, kind: input, shape index: {}]
  %s1 = inlined_call_operand.vmem [shape: f32[1,128], index: 1, kind: input, shape index: {}]
  %s2 = inlined_call_operand.vmem [shape: f32[1,128], index: 2, kind: input, shape index: {}]
  %s3 = inlined_call_operand.vmem [shape: bf16[512,128], index: 3, kind: input, shape index: {}]
  %s4 = inlined_call_operand.vmem [shape: bf16[512,128], index: 4, kind: output, shape index: {}]
  %s5 = sld [smem:[#allocation0]]
  $region26: #{bottleneck_forward.7} parent=0
    _
  %s7 = ssub.s32 1, %s5
  %s8 = scalar_select 0, %s7, %s5
  // Predicated region
  $region2: #{bottleneck_forward.7} parent=0 // pred_check
    _
  $region3: #{bottleneck_forward.7} parent=0 // pred_check_branch
    %10 = sbr.rel (0) target = $region5
  $region4: #{bottleneck_forward.7} parent=0 // pred_region
    _
  $region5: #{bottleneck_forward.7} parent=0 // pred_fallthru
    _
  // Predicated region
  $region6: #{bottleneck_forward.7} parent=0 // pred_check
    _
  $region7: #{bottleneck_forward.7} parent=0 // pred_check_branch
    %12 = sbr.rel (0) target = $region9
  $region8: #{bottleneck_forward.7} parent=0 // pred_region
    _
  $region9: #{bottleneck_forward.7} parent=0 // pred_fallthru
    _
  // Predicated region
  $region10: #{bottleneck_forward.7} parent=0 // pred_check
    _
  $region11: #{bottleneck_forward.7} parent=0 // pred_check_branch
    %14 = sbr.rel (0) target = $region13
  $region12: #{bottleneck_forward.7} parent=0 // pred_region
    _
  $region13: #{bottleneck_forward.7} parent=0 // pred_fallthru
    _
  // Predicated region
  $region14: #{bottleneck_forward.7} parent=0 // pred_check
    _
  $region15: #{bottleneck_forward.7} parent=0 // pred_check_branch
    %16 = sbr.rel (0) target = $region17
  $region16: #{bottleneck_forward.7} parent=0 // pred_region
    _
  $region17: #{bottleneck_forward.7} parent=0 // pred_fallthru
    _
  %v17 = vld [vmem:[%s0] sm:$0xf]
  %v18 = vld [vmem:[%s0 + $0x4] sm:$0xf]
  %v19 = vld [vmem:[%s0 + $0x8] sm:$0xf]
  %v20 = vld [vmem:[%s0 + $0xc] sm:$0xf]
  %v21 = vld [vmem:[%s0 + $0x10] sm:$0xf]
  %v22 = vld [vmem:[%s0 + $0x14] sm:$0xf]
  %v23 = vld [vmem:[%s0 + $0x18] sm:$0xf]
  %v24 = vld [vmem:[%s0 + $0x1c] sm:$0xf]
  %v25 = vld [vmem:[%s0 + $0x20] sm:$0xf]
  %v26 = vld [vmem:[%s0 + $0x24] sm:$0xf]
  %v27 = vld [vmem:[%s0 + $0x28] sm:$0xf]
  %v28 = vld [vmem:[%s0 + $0x2c] sm:$0xf]
  %v29 = vld [vmem:[%s0 + $0x30] sm:$0xf]
  %v30 = vld [vmem:[%s0 + $0x34] sm:$0xf]
  %v31 = vld [vmem:[%s0 + $0x38] sm:$0xf]
  %v32 = vld [vmem:[%s0 + $0x3c] sm:$0xf]
  %v33 = vld [vmem:[%s0 + $0x40] sm:$0xf]
  %v34 = vld [vmem:[%s0 + $0x44] sm:$0xf]
  %v35 = vld [vmem:[%s0 + $0x48] sm:$0xf]
  %v36 = vld [vmem:[%s0 + $0x4c] sm:$0xf]
  %v37 = vld [vmem:[%s0 + $0x50] sm:$0xf]
  %v38 = vld [vmem:[%s0 + $0x54] sm:$0xf]
  %v39 = vld [vmem:[%s0 + $0x58] sm:$0xf]
  %v40 = vld [vmem:[%s0 + $0x5c] sm:$0xf]
  %v41 = vld [vmem:[%s0 + $0x60] sm:$0xf]
  %v42 = vld [vmem:[%s0 + $0x64] sm:$0xf]
  %v43 = vld [vmem:[%s0 + $0x68] sm:$0xf]
  %v44 = vld [vmem:[%s0 + $0x6c] sm:$0xf]
  %v45 = vld [vmem:[%s0 + $0x70] sm:$0xf]
  %v46 = vld [vmem:[%s0 + $0x74] sm:$0xf]
  %v47 = vld [vmem:[%s0 + $0x78] sm:$0xf]
  %v48 = vld [vmem:[%s0 + $0x7c] sm:$0xf]
  %v49 = vld [vmem:[%s0 + $0x80] sm:$0xf]
  %v50 = vld [vmem:[%s0 + $0x84] sm:$0xf]
  %v51 = vld [vmem:[%s0 + $0x88] sm:$0xf]
  %v52 = vld [vmem:[%s0 + $0x8c] sm:$0xf]
  %v53 = vld [vmem:[%s0 + $0x90] sm:$0xf]
  %v54 = vld [vmem:[%s0 + $0x94] sm:$0xf]
  %v55 = vld [vmem:[%s0 + $0x98] sm:$0xf]
  %v56 = vld [vmem:[%s0 + $0x9c] sm:$0xf]
  %v57 = vld [vmem:[%s0 + $0xa0] sm:$0xf]
  %v58 = vld [vmem:[%s0 + $0xa4] sm:$0xf]
  %v59 = vld [vmem:[%s0 + $0xa8] sm:$0xf]
  %v60 = vld [vmem:[%s0 + $0xac] sm:$0xf]
  %v61 = vld [vmem:[%s0 + $0xb0] sm:$0xf]
  %v62 = vld [vmem:[%s0 + $0xb4] sm:$0xf]
  %v63 = vld [vmem:[%s0 + $0xb8] sm:$0xf]
  %v64 = vld [vmem:[%s0 + $0xbc] sm:$0xf]
  %v65 = vld [vmem:[%s0 + $0xc0] sm:$0xf]
  %v66 = vld [vmem:[%s0 + $0xc4] sm:$0xf]
  %v67 = vld [vmem:[%s0 + $0xc8] sm:$0xf]
  %v68 = vld [vmem:[%s0 + $0xcc] sm:$0xf]
  %v69 = vld [vmem:[%s0 + $0xd0] sm:$0xf]
  %v70 = vld [vmem:[%s0 + $0xd4] sm:$0xf]
  %v71 = vld [vmem:[%s0 + $0xd8] sm:$0xf]
  %v72 = vld [vmem:[%s0 + $0xdc] sm:$0xf]
  %v73 = vld [vmem:[%s0 + $0xe0] sm:$0xf]
  %v74 = vld [vmem:[%s0 + $0xe4] sm:$0xf]
  %v75 = vld [vmem:[%s0 + $0xe8] sm:$0xf]
  %v76 = vld [vmem:[%s0 + $0xec] sm:$0xf]
  %v77 = vld [vmem:[%s0 + $0xf0] sm:$0xf]
  %v78 = vld [vmem:[%s0 + $0xf4] sm:$0xf]
  %v79 = vld [vmem:[%s0 + $0xf8] sm:$0xf]
  %v80 = vld [vmem:[%s0 + $0xfc] sm:$0xf]
  %v81 = vunpack.c.l.bf16 %v17
  %v82 = vunpack.c.l.bf16 %v18
  %v83 = vunpack.c.l.bf16 %v19
  %v84 = vunpack.c.l.bf16 %v20
  %v85 = vunpack.c.l.bf16 %v21
  %v86 = vunpack.c.l.bf16 %v22
  %v87 = vunpack.c.l.bf16 %v23
  %v88 = vunpack.c.l.bf16 %v24
  %v89 = vunpack.c.l.bf16 %v25
  %v90 = vunpack.c.l.bf16 %v26
  %v91 = vunpack.c.l.bf16 %v27
  %v92 = vunpack.c.l.bf16 %v28
  %v93 = vunpack.c.l.bf16 %v29
  %v94 = vunpack.c.l.bf16 %v30
  %v95 = vunpack.c.l.bf16 %v31
  %v96 = vunpack.c.l.bf16 %v32
  %v97 = vunpack.c.l.bf16 %v33
  %v98 = vunpack.c.l.bf16 %v34
  %v99 = vunpack.c.l.bf16 %v35
  %v100 = vunpack.c.l.bf16 %v36
  %v101 = vunpack.c.l.bf16 %v37
  %v102 = vunpack.c.l.bf16 %v38
  %v103 = vunpack.c.l.bf16 %v39
  %v104 = vunpack.c.l.bf16 %v40
  %v105 = vunpack.c.l.bf16 %v41
  %v106 = vunpack.c.l.bf16 %v42
  %v107 = vunpack.c.l.bf16 %v43
  %v108 = vunpack.c.l.bf16 %v44
  %v109 = vunpack.c.l.bf16 %v45
  %v110 = vunpack.c.l.bf16 %v46
  %v111 = vunpack.c.l.bf16 %v47
  %v112 = vunpack.c.l.bf16 %v48
  %v113 = vunpack.c.l.bf16 %v49
  %v114 = vunpack.c.l.bf16 %v50
  %v115 = vunpack.c.l.bf16 %v51
  %v116 = vunpack.c.l.bf16 %v52
  %v117 = vunpack.c.l.bf16 %v53
  %v118 = vunpack.c.l.bf16 %v54
  %v119 = vunpack.c.l.bf16 %v55
  %v120 = vunpack.c.l.bf16 %v56
  %v121 = vunpack.c.l.bf16 %v57
  %v122 = vunpack.c.l.bf16 %v58
  %v123 = vunpack.c.l.bf16 %v59
  %v124 = vunpack.c.l.bf16 %v60
  %v125 = vunpack.c.l.bf16 %v61
  %v126 = vunpack.c.l.bf16 %v62
  %v127 = vunpack.c.l.bf16 %v63
  %v128 = vunpack.c.l.bf16 %v64
  %v129 = vunpack.c.l.bf16 %v65
  %v130 = vunpack.c.l.bf16 %v66
  %v131 = vunpack.c.l.bf16 %v67
  %v132 = vunpack.c.l.bf16 %v68
  %v133 = vunpack.c.l.bf16 %v69
  %v134 = vunpack.c.l.bf16 %v70
  %v135 = vunpack.c.l.bf16 %v71
  %v136 = vunpack.c.l.bf16 %v72
  %v137 = vunpack.c.l.bf16 %v73
  %v138 = vunpack.c.l.bf16 %v74
  %v139 = vunpack.c.l.bf16 %v75
  %v140 = vunpack.c.l.bf16 %v76
  %v141 = vunpack.c.l.bf16 %v77
  %v142 = vunpack.c.l.bf16 %v78
  %v143 = vunpack.c.l.bf16 %v79
  %v144 = vunpack.c.l.bf16 %v80
  %v145 = vld [vmem:[%s1] sm:$0x1]
  %v147 = vlaneseq
  %v148 = vshrl.u32 %v147, 7
  %v149 = vsub.s32 0, %v148
  %v150 = vrot.slane %v145, %v149
  %v152 = vmul.f32 %v81, %v150
  %v153 = vmul.f32 %v82, %v150
  %v154 = vmul.f32 %v83, %v150
  %v155 = vmul.f32 %v84, %v150
  %v156 = vmul.f32 %v85, %v150
  %v157 = vmul.f32 %v86, %v150
  %v158 = vmul.f32 %v87, %v150
  %v159 = vmul.f32 %v88, %v150
  %v160 = vmul.f32 %v89, %v150
  %v161 = vmul.f32 %v90, %v150
  %v162 = vmul.f32 %v91, %v150
  %v163 = vmul.f32 %v92, %v150
  %v164 = vmul.f32 %v93, %v150
  %v165 = vmul.f32 %v94, %v150
  %v166 = vmul.f32 %v95, %v150
  %v167 = vmul.f32 %v96, %v150
  %v168 = vmul.f32 %v97, %v150
  %v169 = vmul.f32 %v98, %v150
  %v170 = vmul.f32 %v99, %v150
  %v171 = vmul.f32 %v100, %v150
  %v172 = vmul.f32 %v101, %v150
  %v173 = vmul.f32 %v102, %v150
  %v174 = vmul.f32 %v103, %v150
  %v175 = vmul.f32 %v104, %v150
  %v176 = vmul.f32 %v105, %v150
  %v177 = vmul.f32 %v106, %v150
  %v178 = vmul.f32 %v107, %v150
  %v179 = vmul.f32 %v108, %v150
  %v180 = vmul.f32 %v109, %v150
  %v181 = vmul.f32 %v110, %v150
  %v182 = vmul.f32 %v111, %v150
  %v183 = vmul.f32 %v112, %v150
  %v184 = vmul.f32 %v113, %v150
  %v185 = vmul.f32 %v114, %v150
  %v186 = vmul.f32 %v115, %v150
  %v187 = vmul.f32 %v116, %v150
  %v188 = vmul.f32 %v117, %v150
  %v189 = vmul.f32 %v118, %v150
  %v190 = vmul.f32 %v119, %v150
  %v191 = vmul.f32 %v120, %v150
  %v192 = vmul.f32 %v121, %v150
  %v193 = vmul.f32 %v122, %v150
  %v194 = vmul.f32 %v123, %v150
  %v195 = vmul.f32 %v124, %v150
  %v196 = vmul.f32 %v125, %v150
  %v197 = vmul.f32 %v126, %v150
  %v198 = vmul.f32 %v127, %v150
  %v199 = vmul.f32 %v128, %v150
  %v200 = vmul.f32 %v129, %v150
  %v201 = vmul.f32 %v130, %v150
  %v202 = vmul.f32 %v131, %v150
  %v203 = vmul.f32 %v132, %v150
  %v204 = vmul.f32 %v133, %v150
  %v205 = vmul.f32 %v134, %v150
  %v206 = vmul.f32 %v135, %v150
  %v207 = vmul.f32 %v136, %v150
  %v208 = vmul.f32 %v137, %v150
  %v209 = vmul.f32 %v138, %v150
  %v210 = vmul.f32 %v139, %v150
  %v211 = vmul.f32 %v140, %v150
  %v212 = vmul.f32 %v141, %v150
  %v213 = vmul.f32 %v142, %v150
  %v214 = vmul.f32 %v143, %v150
  %v215 = vmul.f32 %v144, %v150
  %v216 = vld [vmem:[%s2] sm:$0x1]
  %v218 = vlaneseq
  %v219 = vshrl.u32 %v218, 7
  %v220 = vsub.s32 0, %v219
  %v221 = vrot.slane %v216, %v220
  %v223 = vadd.f32 %v152, %v221
  %v224 = vadd.f32 %v153, %v221
  %v225 = vadd.f32 %v154, %v221
  %v226 = vadd.f32 %v155, %v221
  %v227 = vadd.f32 %v156, %v221
  %v228 = vadd.f32 %v157, %v221
  %v229 = vadd.f32 %v158, %v221
  %v230 = vadd.f32 %v159, %v221
  %v231 = vadd.f32 %v160, %v221
  %v232 = vadd.f32 %v161, %v221
  %v233 = vadd.f32 %v162, %v221
  %v234 = vadd.f32 %v163, %v221
  %v235 = vadd.f32 %v164, %v221
  %v236 = vadd.f32 %v165, %v221
  %v237 = vadd.f32 %v166, %v221
  %v238 = vadd.f32 %v167, %v221
  %v239 = vadd.f32 %v168, %v221
  %v240 = vadd.f32 %v169, %v221
  %v241 = vadd.f32 %v170, %v221
  %v242 = vadd.f32 %v171, %v221
  %v243 = vadd.f32 %v172, %v221
  %v244 = vadd.f32 %v173, %v221
  %v245 = vadd.f32 %v174, %v221
  %v246 = vadd.f32 %v175, %v221
  %v247 = vadd.f32 %v176, %v221
  %v248 = vadd.f32 %v177, %v221
  %v249 = vadd.f32 %v178, %v221
  %v250 = vadd.f32 %v179, %v221
  %v251 = vadd.f32 %v180, %v221
  %v252 = vadd.f32 %v181, %v221
  %v253 = vadd.f32 %v182, %v221
  %v254 = vadd.f32 %v183, %v221
  %v255 = vadd.f32 %v184, %v221
  %v256 = vadd.f32 %v185, %v221
  %v257 = vadd.f32 %v186, %v221
  %v258 = vadd.f32 %v187, %v221
  %v259 = vadd.f32 %v188, %v221
  %v260 = vadd.f32 %v189, %v221
  %v261 = vadd.f32 %v190, %v221
  %v262 = vadd.f32 %v191, %v221
  %v263 = vadd.f32 %v192, %v221
  %v264 = vadd.f32 %v193, %v221
  %v265 = vadd.f32 %v194, %v221
  %v266 = vadd.f32 %v195, %v221
  %v267 = vadd.f32 %v196, %v221
  %v268 = vadd.f32 %v197, %v221
  %v269 = vadd.f32 %v198, %v221
  %v270 = vadd.f32 %v199, %v221
  %v271 = vadd.f32 %v200, %v221
  %v272 = vadd.f32 %v201, %v221
  %v273 = vadd.f32 %v202, %v221
  %v274 = vadd.f32 %v203, %v221
  %v275 = vadd.f32 %v204, %v221
  %v276 = vadd.f32 %v205, %v221
  %v277 = vadd.f32 %v206, %v221
  %v278 = vadd.f32 %v207, %v221
  %v279 = vadd.f32 %v208, %v221
  %v280 = vadd.f32 %v209, %v221
  %v281 = vadd.f32 %v210, %v221
  %v282 = vadd.f32 %v211, %v221
  %v283 = vadd.f32 %v212, %v221
  %v284 = vadd.f32 %v213, %v221
  %v285 = vadd.f32 %v214, %v221
  %v286 = vadd.f32 %v215, %v221
  %v287 = vld [vmem:[%s3] sm:$0xf]
  %v288 = vld [vmem:[%s3 + $0x4] sm:$0xf]
  %v289 = vld [vmem:[%s3 + $0x8] sm:$0xf]
  %v290 = vld [vmem:[%s3 + $0xc] sm:$0xf]
  %v291 = vld [vmem:[%s3 + $0x10] sm:$0xf]
  %v292 = vld [vmem:[%s3 + $0x14] sm:$0xf]
  %v293 = vld [vmem:[%s3 + $0x18] sm:$0xf]
  %v294 = vld [vmem:[%s3 + $0x1c] sm:$0xf]
  %v295 = vld [vmem:[%s3 + $0x20] sm:$0xf]
  %v296 = vld [vmem:[%s3 + $0x24] sm:$0xf]
  %v297 = vld [vmem:[%s3 + $0x28] sm:$0xf]
  %v298 = vld [vmem:[%s3 + $0x2c] sm:$0xf]
  %v299 = vld [vmem:[%s3 + $0x30] sm:$0xf]
  %v300 = vld [vmem:[%s3 + $0x34] sm:$0xf]
  %v301 = vld [vmem:[%s3 + $0x38] sm:$0xf]
  %v302 = vld [vmem:[%s3 + $0x3c] sm:$0xf]
  %v303 = vld [vmem:[%s3 + $0x40] sm:$0xf]
  %v304 = vld [vmem:[%s3 + $0x44] sm:$0xf]
  %v305 = vld [vmem:[%s3 + $0x48] sm:$0xf]
  %v306 = vld [vmem:[%s3 + $0x4c] sm:$0xf]
  %v307 = vld [vmem:[%s3 + $0x50] sm:$0xf]
  %v308 = vld [vmem:[%s3 + $0x54] sm:$0xf]
  %v309 = vld [vmem:[%s3 + $0x58] sm:$0xf]
  %v310 = vld [vmem:[%s3 + $0x5c] sm:$0xf]
  %v311 = vld [vmem:[%s3 + $0x60] sm:$0xf]
  %v312 = vld [vmem:[%s3 + $0x64] sm:$0xf]
  %v313 = vld [vmem:[%s3 + $0x68] sm:$0xf]
  %v314 = vld [vmem:[%s3 + $0x6c] sm:$0xf]
  %v315 = vld [vmem:[%s3 + $0x70] sm:$0xf]
  %v316 = vld [vmem:[%s3 + $0x74] sm:$0xf]
  %v317 = vld [vmem:[%s3 + $0x78] sm:$0xf]
  %v318 = vld [vmem:[%s3 + $0x7c] sm:$0xf]
  %v319 = vld [vmem:[%s3 + $0x80] sm:$0xf]
  %v320 = vld [vmem:[%s3 + $0x84] sm:$0xf]
  %v321 = vld [vmem:[%s3 + $0x88] sm:$0xf]
  %v322 = vld [vmem:[%s3 + $0x8c] sm:$0xf]
  %v323 = vld [vmem:[%s3 + $0x90] sm:$0xf]
  %v324 = vld [vmem:[%s3 + $0x94] sm:$0xf]
  %v325 = vld [vmem:[%s3 + $0x98] sm:$0xf]
  %v326 = vld [vmem:[%s3 + $0x9c] sm:$0xf]
  %v327 = vld [vmem:[%s3 + $0xa0] sm:$0xf]
  %v328 = vld [vmem:[%s3 + $0xa4] sm:$0xf]
  %v329 = vld [vmem:[%s3 + $0xa8] sm:$0xf]
  %v330 = vld [vmem:[%s3 + $0xac] sm:$0xf]
  %v331 = vld [vmem:[%s3 + $0xb0] sm:$0xf]
  %v332 = vld [vmem:[%s3 + $0xb4] sm:$0xf]
  %v333 = vld [vmem:[%s3 + $0xb8] sm:$0xf]
  %v334 = vld [vmem:[%s3 + $0xbc] sm:$0xf]
  %v335 = vld [vmem:[%s3 + $0xc0] sm:$0xf]
  %v336 = vld [vmem:[%s3 + $0xc4] sm:$0xf]
  %v337 = vld [vmem:[%s3 + $0xc8] sm:$0xf]
  %v338 = vld [vmem:[%s3 + $0xcc] sm:$0xf]
  %v339 = vld [vmem:[%s3 + $0xd0] sm:$0xf]
  %v340 = vld [vmem:[%s3 + $0xd4] sm:$0xf]
  %v341 = vld [vmem:[%s3 + $0xd8] sm:$0xf]
  %v342 = vld [vmem:[%s3 + $0xdc] sm:$0xf]
  %v343 = vld [vmem:[%s3 + $0xe0] sm:$0xf]
  %v344 = vld [vmem:[%s3 + $0xe4] sm:$0xf]
  %v345 = vld [vmem:[%s3 + $0xe8] sm:$0xf]
  %v346 = vld [vmem:[%s3 + $0xec] sm:$0xf]
  %v347 = vld [vmem:[%s3 + $0xf0] sm:$0xf]
  %v348 = vld [vmem:[%s3 + $0xf4] sm:$0xf]
  %v349 = vld [vmem:[%s3 + $0xf8] sm:$0xf]
  %v350 = vld [vmem:[%s3 + $0xfc] sm:$0xf]
  %v351 = vunpack.c.l.bf16 %v287
  %v352 = vunpack.c.l.bf16 %v288
  %v353 = vunpack.c.l.bf16 %v289
  %v354 = vunpack.c.l.bf16 %v290
  %v355 = vunpack.c.l.bf16 %v291
  %v356 = vunpack.c.l.bf16 %v292
  %v357 = vunpack.c.l.bf16 %v293
  %v358 = vunpack.c.l.bf16 %v294
  %v359 = vunpack.c.l.bf16 %v295
  %v360 = vunpack.c.l.bf16 %v296
  %v361 = vunpack.c.l.bf16 %v297
  %v362 = vunpack.c.l.bf16 %v298
  %v363 = vunpack.c.l.bf16 %v299
  %v364 = vunpack.c.l.bf16 %v300
  %v365 = vunpack.c.l.bf16 %v301
  %v366 = vunpack.c.l.bf16 %v302
  %v367 = vunpack.c.l.bf16 %v303
  %v368 = vunpack.c.l.bf16 %v304
  %v369 = vunpack.c.l.bf16 %v305
  %v370 = vunpack.c.l.bf16 %v306
  %v371 = vunpack.c.l.bf16 %v307
  %v372 = vunpack.c.l.bf16 %v308
  %v373 = vunpack.c.l.bf16 %v309
  %v374 = vunpack.c.l.bf16 %v310
  %v375 = vunpack.c.l.bf16 %v311
  %v376 = vunpack.c.l.bf16 %v312
  %v377 = vunpack.c.l.bf16 %v313
  %v378 = vunpack.c.l.bf16 %v314
  %v379 = vunpack.c.l.bf16 %v315
  %v380 = vunpack.c.l.bf16 %v316
  %v381 = vunpack.c.l.bf16 %v317
  %v382 = vunpack.c.l.bf16 %v318
  %v383 = vunpack.c.l.bf16 %v319
  %v384 = vunpack.c.l.bf16 %v320
  %v385 = vunpack.c.l.bf16 %v321
  %v386 = vunpack.c.l.bf16 %v322
  %v387 = vunpack.c.l.bf16 %v323
  %v388 = vunpack.c.l.bf16 %v324
  %v389 = vunpack.c.l.bf16 %v325
  %v390 = vunpack.c.l.bf16 %v326
  %v391 = vunpack.c.l.bf16 %v327
  %v392 = vunpack.c.l.bf16 %v328
  %v393 = vunpack.c.l.bf16 %v329
  %v394 = vunpack.c.l.bf16 %v330
  %v395 = vunpack.c.l.bf16 %v331
  %v396 = vunpack.c.l.bf16 %v332
  %v397 = vunpack.c.l.bf16 %v333
  %v398 = vunpack.c.l.bf16 %v334
  %v399 = vunpack.c.l.bf16 %v335
  %v400 = vunpack.c.l.bf16 %v336
  %v401 = vunpack.c.l.bf16 %v337
  %v402 = vunpack.c.l.bf16 %v338
  %v403 = vunpack.c.l.bf16 %v339
  %v404 = vunpack.c.l.bf16 %v340
  %v405 = vunpack.c.l.bf16 %v341
  %v406 = vunpack.c.l.bf16 %v342
  %v407 = vunpack.c.l.bf16 %v343
  %v408 = vunpack.c.l.bf16 %v344
  %v409 = vunpack.c.l.bf16 %v345
  %v410 = vunpack.c.l.bf16 %v346
  %v411 = vunpack.c.l.bf16 %v347
  %v412 = vunpack.c.l.bf16 %v348
  %v413 = vunpack.c.l.bf16 %v349
  %v414 = vunpack.c.l.bf16 %v350
  %v415 = vadd.f32 %v223, %v351
  %v416 = vadd.f32 %v224, %v352
  %v417 = vadd.f32 %v225, %v353
  %v418 = vadd.f32 %v226, %v354
  %v419 = vadd.f32 %v227, %v355
  %v420 = vadd.f32 %v228, %v356
  %v421 = vadd.f32 %v229, %v357
  %v422 = vadd.f32 %v230, %v358
  %v423 = vadd.f32 %v231, %v359
  %v424 = vadd.f32 %v232, %v360
  %v425 = vadd.f32 %v233, %v361
  %v426 = vadd.f32 %v234, %v362
  %v427 = vadd.f32 %v235, %v363
  %v428 = vadd.f32 %v236, %v364
  %v429 = vadd.f32 %v237, %v365
  %v430 = vadd.f32 %v238, %v366
  %v431 = vadd.f32 %v239, %v367
  %v432 = vadd.f32 %v240, %v368
  %v433 = vadd.f32 %v241, %v369
  %v434 = vadd.f32 %v242, %v370
  %v435 = vadd.f32 %v243, %v371
  %v436 = vadd.f32 %v244, %v372
  %v437 = vadd.f32 %v245, %v373
  %v438 = vadd.f32 %v246, %v374
  %v439 = vadd.f32 %v247, %v375
  %v440 = vadd.f32 %v248, %v376
  %v441 = vadd.f32 %v249, %v377
  %v442 = vadd.f32 %v250, %v378
  %v443 = vadd.f32 %v251, %v379
  %v444 = vadd.f32 %v252, %v380
  %v445 = vadd.f32 %v253, %v381
  %v446 = vadd.f32 %v254, %v382
  %v447 = vadd.f32 %v255, %v383
  %v448 = vadd.f32 %v256, %v384
  %v449 = vadd.f32 %v257, %v385
  %v450 = vadd.f32 %v258, %v386
  %v451 = vadd.f32 %v259, %v387
  %v452 = vadd.f32 %v260, %v388
  %v453 = vadd.f32 %v261, %v389
  %v454 = vadd.f32 %v262, %v390
  %v455 = vadd.f32 %v263, %v391
  %v456 = vadd.f32 %v264, %v392
  %v457 = vadd.f32 %v265, %v393
  %v458 = vadd.f32 %v266, %v394
  %v459 = vadd.f32 %v267, %v395
  %v460 = vadd.f32 %v268, %v396
  %v461 = vadd.f32 %v269, %v397
  %v462 = vadd.f32 %v270, %v398
  %v463 = vadd.f32 %v271, %v399
  %v464 = vadd.f32 %v272, %v400
  %v465 = vadd.f32 %v273, %v401
  %v466 = vadd.f32 %v274, %v402
  %v467 = vadd.f32 %v275, %v403
  %v468 = vadd.f32 %v276, %v404
  %v469 = vadd.f32 %v277, %v405
  %v470 = vadd.f32 %v278, %v406
  %v471 = vadd.f32 %v279, %v407
  %v472 = vadd.f32 %v280, %v408
  %v473 = vadd.f32 %v281, %v409
  %v474 = vadd.f32 %v282, %v410
  %v475 = vadd.f32 %v283, %v411
  %v476 = vadd.f32 %v284, %v412
  %v477 = vadd.f32 %v285, %v413
  %v478 = vadd.f32 %v286, %v414
  %v479 = vmax.f32 %v415, 0.0
  %v480 = vmax.f32 %v416, 0.0
  %v481 = vmax.f32 %v417, 0.0
  %v482 = vmax.f32 %v418, 0.0
  %v483 = vmax.f32 %v419, 0.0
  %v484 = vmax.f32 %v420, 0.0
  %v485 = vmax.f32 %v421, 0.0
  %v486 = vmax.f32 %v422, 0.0
  %v487 = vmax.f32 %v423, 0.0
  %v488 = vmax.f32 %v424, 0.0
  %v489 = vmax.f32 %v425, 0.0
  %v490 = vmax.f32 %v426, 0.0
  %v491 = vmax.f32 %v427, 0.0
  %v492 = vmax.f32 %v428, 0.0
  %v493 = vmax.f32 %v429, 0.0
  %v494 = vmax.f32 %v430, 0.0
  %v495 = vmax.f32 %v431, 0.0
  %v496 = vmax.f32 %v432, 0.0
  %v497 = vmax.f32 %v433, 0.0
  %v498 = vmax.f32 %v434, 0.0
  %v499 = vmax.f32 %v435, 0.0
  %v500 = vmax.f32 %v436, 0.0
  %v501 = vmax.f32 %v437, 0.0
  %v502 = vmax.f32 %v438, 0.0
  %v503 = vmax.f32 %v439, 0.0
  %v504 = vmax.f32 %v440, 0.0
  %v505 = vmax.f32 %v441, 0.0
  %v506 = vmax.f32 %v442, 0.0
  %v507 = vmax.f32 %v443, 0.0
  %v508 = vmax.f32 %v444, 0.0
  %v509 = vmax.f32 %v445, 0.0
  %v510 = vmax.f32 %v446, 0.0
  %v511 = vmax.f32 %v447, 0.0
  %v512 = vmax.f32 %v448, 0.0
  %v513 = vmax.f32 %v449, 0.0
  %v514 = vmax.f32 %v450, 0.0
  %v515 = vmax.f32 %v451, 0.0
  %v516 = vmax.f32 %v452, 0.0
  %v517 = vmax.f32 %v453, 0.0
  %v518 = vmax.f32 %v454, 0.0
  %v519 = vmax.f32 %v455, 0.0
  %v520 = vmax.f32 %v456, 0.0
  %v521 = vmax.f32 %v457, 0.0
  %v522 = vmax.f32 %v458, 0.0
  %v523 = vmax.f32 %v459, 0.0
  %v524 = vmax.f32 %v460, 0.0
  %v525 = vmax.f32 %v461, 0.0
  %v526 = vmax.f32 %v462, 0.0
  %v527 = vmax.f32 %v463, 0.0
  %v528 = vmax.f32 %v464, 0.0
  %v529 = vmax.f32 %v465, 0.0
  %v530 = vmax.f32 %v466, 0.0
  %v531 = vmax.f32 %v467, 0.0
  %v532 = vmax.f32 %v468, 0.0
  %v533 = vmax.f32 %v469, 0.0
  %v534 = vmax.f32 %v470, 0.0
  %v535 = vmax.f32 %v471, 0.0
  %v536 = vmax.f32 %v472, 0.0
  %v537 = vmax.f32 %v473, 0.0
  %v538 = vmax.f32 %v474, 0.0
  %v539 = vmax.f32 %v475, 0.0
  %v540 = vmax.f32 %v476, 0.0
  %v541 = vmax.f32 %v477, 0.0
  %v542 = vmax.f32 %v478, 0.0
  %v543 = vpack.c.bf16 %v480, %v479
  %v544 = vpack.c.bf16 %v482, %v481
  %v545 = vpack.c.bf16 %v484, %v483
  %v546 = vpack.c.bf16 %v486, %v485
  %v547 = vpack.c.bf16 %v488, %v487
  %v548 = vpack.c.bf16 %v490, %v489
  %v549 = vpack.c.bf16 %v492, %v491
  %v550 = vpack.c.bf16 %v494, %v493
  %v551 = vpack.c.bf16 %v496, %v495
  %v552 = vpack.c.bf16 %v498, %v497
  %v553 = vpack.c.bf16 %v500, %v499
  %v554 = vpack.c.bf16 %v502, %v501
  %v555 = vpack.c.bf16 %v504, %v503
  %v556 = vpack.c.bf16 %v506, %v505
  %v557 = vpack.c.bf16 %v508, %v507
  %v558 = vpack.c.bf16 %v510, %v509
  %v559 = vpack.c.bf16 %v512, %v511
  %v560 = vpack.c.bf16 %v514, %v513
  %v561 = vpack.c.bf16 %v516, %v515
  %v562 = vpack.c.bf16 %v518, %v517
  %v563 = vpack.c.bf16 %v520, %v519
  %v564 = vpack.c.bf16 %v522, %v521
  %v565 = vpack.c.bf16 %v524, %v523
  %v566 = vpack.c.bf16 %v526, %v525
  %v567 = vpack.c.bf16 %v528, %v527
  %v568 = vpack.c.bf16 %v530, %v529
  %v569 = vpack.c.bf16 %v532, %v531
  %v570 = vpack.c.bf16 %v534, %v533
  %v571 = vpack.c.bf16 %v536, %v535
  %v572 = vpack.c.bf16 %v538, %v537
  %v573 = vpack.c.bf16 %v540, %v539
  %v574 = vpack.c.bf16 %v542, %v541
  %v607 = vunpack.c.l.b16 %v543
  %v608 = vunpack.c.h.b16 %v543
  %v609 = vunpack.c.l.b16 %v544
  %v610 = vunpack.c.h.b16 %v544
  %v611 = vunpack.c.l.b16 %v545
  %v612 = vunpack.c.h.b16 %v545
  %v613 = vunpack.c.l.b16 %v546
  %v614 = vunpack.c.h.b16 %v546
  %v615 = vunpack.c.l.b16 %v547
  %v616 = vunpack.c.h.b16 %v547
  %v617 = vunpack.c.l.b16 %v548
  %v618 = vunpack.c.h.b16 %v548
  %v619 = vunpack.c.l.b16 %v549
  %v620 = vunpack.c.h.b16 %v549
  %v621 = vunpack.c.l.b16 %v550
  %v622 = vunpack.c.h.b16 %v550
  %v623 = vunpack.c.l.b16 %v551
  %v624 = vunpack.c.h.b16 %v551
  %v625 = vunpack.c.l.b16 %v552
  %v626 = vunpack.c.h.b16 %v552
  %v627 = vunpack.c.l.b16 %v553
  %v628 = vunpack.c.h.b16 %v553
  %v629 = vunpack.c.l.b16 %v554
  %v630 = vunpack.c.h.b16 %v554
  %v631 = vunpack.c.l.b16 %v555
  %v632 = vunpack.c.h.b16 %v555
  %v633 = vunpack.c.l.b16 %v556
  %v634 = vunpack.c.h.b16 %v556
  %v635 = vunpack.c.l.b16 %v557
  %v636 = vunpack.c.h.b16 %v557
  %v637 = vunpack.c.l.b16 %v558
  %v638 = vunpack.c.h.b16 %v558
  %v639 = vunpack.c.l.b16 %v559
  %v640 = vunpack.c.h.b16 %v559
  %v641 = vunpack.c.l.b16 %v560
  %v642 = vunpack.c.h.b16 %v560
  %v643 = vunpack.c.l.b16 %v561
  %v644 = vunpack.c.h.b16 %v561
  %v645 = vunpack.c.l.b16 %v562
  %v646 = vunpack.c.h.b16 %v562
  %v647 = vunpack.c.l.b16 %v563
  %v648 = vunpack.c.h.b16 %v563
  %v649 = vunpack.c.l.b16 %v564
  %v650 = vunpack.c.h.b16 %v564
  %v651 = vunpack.c.l.b16 %v565
  %v652 = vunpack.c.h.b16 %v565
  %v653 = vunpack.c.l.b16 %v566
  %v654 = vunpack.c.h.b16 %v566
  %v655 = vunpack.c.l.b16 %v567
  %v656 = vunpack.c.h.b16 %v567
  %v657 = vunpack.c.l.b16 %v568
  %v658 = vunpack.c.h.b16 %v568
  %v659 = vunpack.c.l.b16 %v569
  %v660 = vunpack.c.h.b16 %v569
  %v661 = vunpack.c.l.b16 %v570
  %v662 = vunpack.c.h.b16 %v570
  %v663 = vunpack.c.l.b16 %v571
  %v664 = vunpack.c.h.b16 %v571
  %v665 = vunpack.c.l.b16 %v572
  %v666 = vunpack.c.h.b16 %v572
  %v667 = vunpack.c.l.b16 %v573
  %v668 = vunpack.c.h.b16 %v573
  %v669 = vunpack.c.l.b16 %v574
  %v670 = vunpack.c.h.b16 %v574
  %v671 = vpack.c.b16 %v607, %v607
  %v672 = vpack.c.b16 %v608, %v608
  %v673 = vpack.c.b16 %v609, %v609
  %v674 = vpack.c.b16 %v610, %v610
  %v675 = vpack.c.b16 %v611, %v611
  %v676 = vpack.c.b16 %v612, %v612
  %v677 = vpack.c.b16 %v613, %v613
  %v678 = vpack.c.b16 %v614, %v614
  %v679 = vpack.c.b16 %v615, %v615
  %v680 = vpack.c.b16 %v616, %v616
  %v681 = vpack.c.b16 %v617, %v617
  %v682 = vpack.c.b16 %v618, %v618
  %v683 = vpack.c.b16 %v619, %v619
  %v684 = vpack.c.b16 %v620, %v620
  %v685 = vpack.c.b16 %v621, %v621
  %v686 = vpack.c.b16 %v622, %v622
  %v687 = vpack.c.b16 %v623, %v623
  %v688 = vpack.c.b16 %v624, %v624
  %v689 = vpack.c.b16 %v625, %v625
  %v690 = vpack.c.b16 %v626, %v626
  %v691 = vpack.c.b16 %v627, %v627
  %v692 = vpack.c.b16 %v628, %v628
  %v693 = vpack.c.b16 %v629, %v629
  %v694 = vpack.c.b16 %v630, %v630
  %v695 = vpack.c.b16 %v631, %v631
  %v696 = vpack.c.b16 %v632, %v632
  %v697 = vpack.c.b16 %v633, %v633
  %v698 = vpack.c.b16 %v634, %v634
  %v699 = vpack.c.b16 %v635, %v635
  %v700 = vpack.c.b16 %v636, %v636
  %v701 = vpack.c.b16 %v637, %v637
  %v702 = vpack.c.b16 %v638, %v638
  %v703 = vpack.c.b16 %v639, %v639
  %v704 = vpack.c.b16 %v640, %v640
  %v705 = vpack.c.b16 %v641, %v641
  %v706 = vpack.c.b16 %v642, %v642
  %v707 = vpack.c.b16 %v643, %v643
  %v708 = vpack.c.b16 %v644, %v644
  %v709 = vpack.c.b16 %v645, %v645
  %v710 = vpack.c.b16 %v646, %v646
  %v711 = vpack.c.b16 %v647, %v647
  %v712 = vpack.c.b16 %v648, %v648
  %v713 = vpack.c.b16 %v649, %v649
  %v714 = vpack.c.b16 %v650, %v650
  %v715 = vpack.c.b16 %v651, %v651
  %v716 = vpack.c.b16 %v652, %v652
  %v717 = vpack.c.b16 %v653, %v653
  %v718 = vpack.c.b16 %v654, %v654
  %v719 = vpack.c.b16 %v655, %v655
  %v720 = vpack.c.b16 %v656, %v656
  %v721 = vpack.c.b16 %v657, %v657
  %v722 = vpack.c.b16 %v658, %v658
  %v723 = vpack.c.b16 %v659, %v659
  %v724 = vpack.c.b16 %v660, %v660
  %v725 = vpack.c.b16 %v661, %v661
  %v726 = vpack.c.b16 %v662, %v662
  %v727 = vpack.c.b16 %v663, %v663
  %v728 = vpack.c.b16 %v664, %v664
  %v729 = vpack.c.b16 %v665, %v665
  %v730 = vpack.c.b16 %v666, %v666
  %v731 = vpack.c.b16 %v667, %v667
  %v732 = vpack.c.b16 %v668, %v668
  %v733 = vpack.c.b16 %v669, %v669
  %v734 = vpack.c.b16 %v670, %v670
  %799 = vst [vmem:[%s4] sm:$0xf] %v671
  %800 = vst [vmem:[%s4 + $0x4] sm:$0xf] %v672
  %801 = vst [vmem:[%s4 + $0x8] sm:$0xf] %v673
  %802 = vst [vmem:[%s4 + $0xc] sm:$0xf] %v674
  %803 = vst [vmem:[%s4 + $0x10] sm:$0xf] %v675
  %804 = vst [vmem:[%s4 + $0x14] sm:$0xf] %v676
  %805 = vst [vmem:[%s4 + $0x18] sm:$0xf] %v677
  %806 = vst [vmem:[%s4 + $0x1c] sm:$0xf] %v678
  %807 = vst [vmem:[%s4 + $0x20] sm:$0xf] %v679
  %808 = vst [vmem:[%s4 + $0x24] sm:$0xf] %v680
  %809 = vst [vmem:[%s4 + $0x28] sm:$0xf] %v681
  %810 = vst [vmem:[%s4 + $0x2c] sm:$0xf] %v682
  %811 = vst [vmem:[%s4 + $0x30] sm:$0xf] %v683
  %812 = vst [vmem:[%s4 + $0x34] sm:$0xf] %v684
  %813 = vst [vmem:[%s4 + $0x38] sm:$0xf] %v685
  %814 = vst [vmem:[%s4 + $0x3c] sm:$0xf] %v686
  %815 = vst [vmem:[%s4 + $0x40] sm:$0xf] %v687
  %816 = vst [vmem:[%s4 + $0x44] sm:$0xf] %v688
  %817 = vst [vmem:[%s4 + $0x48] sm:$0xf] %v689
  %818 = vst [vmem:[%s4 + $0x4c] sm:$0xf] %v690
  %819 = vst [vmem:[%s4 + $0x50] sm:$0xf] %v691
  %820 = vst [vmem:[%s4 + $0x54] sm:$0xf] %v692
  %821 = vst [vmem:[%s4 + $0x58] sm:$0xf] %v693
  %822 = vst [vmem:[%s4 + $0x5c] sm:$0xf] %v694
  %823 = vst [vmem:[%s4 + $0x60] sm:$0xf] %v695
  %824 = vst [vmem:[%s4 + $0x64] sm:$0xf] %v696
  %825 = vst [vmem:[%s4 + $0x68] sm:$0xf] %v697
  %826 = vst [vmem:[%s4 + $0x6c] sm:$0xf] %v698
  %827 = vst [vmem:[%s4 + $0x70] sm:$0xf] %v699
  %828 = vst [vmem:[%s4 + $0x74] sm:$0xf] %v700
  %829 = vst [vmem:[%s4 + $0x78] sm:$0xf] %v701
  %830 = vst [vmem:[%s4 + $0x7c] sm:$0xf] %v702
  %831 = vst [vmem:[%s4 + $0x80] sm:$0xf] %v703
  %832 = vst [vmem:[%s4 + $0x84] sm:$0xf] %v704
  %833 = vst [vmem:[%s4 + $0x88] sm:$0xf] %v705
  %834 = vst [vmem:[%s4 + $0x8c] sm:$0xf] %v706
  %835 = vst [vmem:[%s4 + $0x90] sm:$0xf] %v707
  %836 = vst [vmem:[%s4 + $0x94] sm:$0xf] %v708
  %837 = vst [vmem:[%s4 + $0x98] sm:$0xf] %v709
  %838 = vst [vmem:[%s4 + $0x9c] sm:$0xf] %v710
  %839 = vst [vmem:[%s4 + $0xa0] sm:$0xf] %v711
  %840 = vst [vmem:[%s4 + $0xa4] sm:$0xf] %v712
  %841 = vst [vmem:[%s4 + $0xa8] sm:$0xf] %v713
  %842 = vst [vmem:[%s4 + $0xac] sm:$0xf] %v714
  %843 = vst [vmem:[%s4 + $0xb0] sm:$0xf] %v715
  %844 = vst [vmem:[%s4 + $0xb4] sm:$0xf] %v716
  %845 = vst [vmem:[%s4 + $0xb8] sm:$0xf] %v717
  %846 = vst [vmem:[%s4 + $0xbc] sm:$0xf] %v718
  %847 = vst [vmem:[%s4 + $0xc0] sm:$0xf] %v719
  %848 = vst [vmem:[%s4 + $0xc4] sm:$0xf] %v720
  %849 = vst [vmem:[%s4 + $0xc8] sm:$0xf] %v721
  %850 = vst [vmem:[%s4 + $0xcc] sm:$0xf] %v722
  %851 = vst [vmem:[%s4 + $0xd0] sm:$0xf] %v723
  %852 = vst [vmem:[%s4 + $0xd4] sm:$0xf] %v724
  %853 = vst [vmem:[%s4 + $0xd8] sm:$0xf] %v725
  %854 = vst [vmem:[%s4 + $0xdc] sm:$0xf] %v726
  %855 = vst [vmem:[%s4 + $0xe0] sm:$0xf] %v727
  %856 = vst [vmem:[%s4 + $0xe4] sm:$0xf] %v728
  %857 = vst [vmem:[%s4 + $0xe8] sm:$0xf] %v729
  %858 = vst [vmem:[%s4 + $0xec] sm:$0xf] %v730
  %859 = vst [vmem:[%s4 + $0xf0] sm:$0xf] %v731
  %860 = vst [vmem:[%s4 + $0xf4] sm:$0xf] %v732
  %861 = vst [vmem:[%s4 + $0xf8] sm:$0xf] %v733
  %862 = vst [vmem:[%s4 + $0xfc] sm:$0xf] %v734
  // Predicated region
  $region18: #{bottleneck_forward.7} parent=0 // pred_check
    _
  $region19: #{bottleneck_forward.7} parent=0 // pred_check_branch
    %864 = sbr.rel (0) target = $region21
  $region20: #{bottleneck_forward.7} parent=0 // pred_region
    _
  $region21: #{bottleneck_forward.7} parent=0 // pred_fallthru
    _
  // Predicated region
  $region22: #{bottleneck_forward.7} parent=0 // pred_check
    _
  $region23: #{bottleneck_forward.7} parent=0 // pred_check_branch
    %866 = sbr.rel (0) target = $region25
  $region24: #{bottleneck_forward.7} parent=0 // pred_region
    _
  $region25: #{bottleneck_forward.7} parent=0 // pred_fallthru
    _

// kernel: bottleneck_forward.5
$region0: #{bottleneck_forward.5}
  #allocation0 [shape = 'u32[]', space=smem, size = 0x4, offset = 0x4, fixed_abs, tag = 'smem constant byte address 0x4 - core index']
  #allocation1 [shape = 'u32[144,128]{1,0:T(1,128)}', space=vmem, size = 0x12000, scoped, tag = 'internal scratch']
  #allocation2 [shape = 'bf16[18,16,384]{2,1,0:T(8,128)(2,1)}', space=vmem, size = 0x36000, scoped, tag = 'scratch operand']
  %s0 = inlined_call_operand.vmem [shape: bf16[2,16,16,128], index: 0, kind: input, shape index: {}]
  %s1 = inlined_call_operand.vmem [shape: f32[1,128], index: 1, kind: input, shape index: {}]
  %s2 = inlined_call_operand.vmem [shape: f32[1,128], index: 2, kind: input, shape index: {}]
  %s3 = inlined_call_operand.vmem [shape: bf16[3,384,128], index: 3, kind: input, shape index: {}]
  %s4 = inlined_call_operand.vmem [shape: bf16[2,16,16,128], index: 4, kind: output, shape index: {0}]
  %s5 = inlined_call_operand.vmem [shape: f32[2,2,8,128], index: 5, kind: output, shape index: {1}]
  %s6 = inlined_call_operand.vmem [shape: f32[2,2,8,128], index: 6, kind: output, shape index: {2}]
  %7 = xla_tuple %s4, %s5, %s6
  %s8 = sld [smem:[#allocation0]]
  $region69: #{bottleneck_forward.5} parent=0
    _
  %s10 = ssub.s32 1, %s8
  %s11 = scalar_select 0, %s10, %s8
  loop: start=0, step=1, limit=6
  $region2: #{bottleneck_forward.5} parent=0 // loop_pre_header
    _
  $region3: #{bottleneck_forward.5} parent=0 // loop_header
    %s13 = sphi 0, %s17
    %p14 = scmp.ge.s32.totalorder %s13, 6
    %s20 = sphi 0, %s32
    %s21 = sphi 0, %s28
    %s22 = sphi 0, %s20
    %s23 = sphi 0, %s21
    %s24 = sphi 0, %s22
    %s25 = sphi 0, %s23
    %s35 = sphi 0, %s37
    %s38 = sphi 0, %s35
    %s39 = sphi 0, %s38
    %s55 = sphi 0, %s39
    %s59 = sphi 0, %s59
    %s61 = sphi 0, %s59
    %s62 = sphi 0, %s61
    %s76 = sphi 0, %s62
    %s80 = sphi 0, %s80
    %s82 = sphi 0, %s80
    %s83 = sphi 0, %s82
    %s97 = sphi 0, %s83
    %s101 = sphi 0, %s101
    %s103 = sphi 0, %s101
    %s104 = sphi 0, %s103
    %s118 = sphi 0, %s104
    %s126 = sphi 0, %s128
    %s129 = sphi 0, %s126
    %s130 = sphi 0, %s129
    %s146 = sphi 0, %s130
    %s154 = sphi 0, %s156
    %s157 = sphi 0, %s154
    %s158 = sphi 0, %s157
    %s174 = sphi 0, %s158
    %s182 = sphi 0, %s184
    %s185 = sphi 0, %s182
    %s186 = sphi 0, %s185
    %s202 = sphi 0, %s186
  $region4: #{bottleneck_forward.5} parent=0 // loop_header_branch
    %16 = sbr.rel (%p14) target = $region8
  $region5: #{bottleneck_forward.5} parent=0 // loop_body
    %s18 = ssub.s32 %s13, 1
    %s19 = ssub.s32 %s13, 2
    %s26 = sadd.s32 1, %s21
    %p27 = scmp.ge.s32.totalorder %s26, 2
    %s28 = scalar_select %p27, 0, %s26
    %s29 = sadd.s32 1, %s20
    %s30 = scalar_select %p27, %s29, %s20
    %p31 = scmp.ge.s32.totalorder %s30, 2
    %s32 = scalar_select %p31, 0, %s30
    %s33 = ssub.s32 %s20, %s32
    %p34 = scmp.eq.s32.totalorder %s33, 0
    %s36 = sadd.s32 %s35, 1
    %s37 = scalar_select %p34, %s35, %s36
    %p40 = pneg %p34
    %p41 = scmp.eq.s32.totalorder %s13, 3
    %p42 = por %p40, %p41
    %p43 = scmp.ne.s32.totalorder %s35, %s38
    %p44 = scmp.eq.s32.totalorder %s13, 0
    %p45 = por %p43, %p44
    %p46 = scmp.ne.s32.totalorder %s35, %s38
    %p47 = scmp.eq.s32.totalorder %s18, 3
    %p48 = por %p46, %p47
    %p49 = scmp.ne.s32.totalorder %s38, %s39
    %p50 = scmp.eq.s32.totalorder %s18, 0
    %p51 = por %p49, %p50
    %p52 = scmp.ne.s32.totalorder %s38, %s39
    %p53 = scmp.eq.s32.totalorder %s19, 3
    %p54 = por %p52, %p53
    %p56 = scmp.ne.s32.totalorder %s39, %s55
    %p57 = scmp.eq.s32.totalorder %s19, 0
    %p58 = por %p56, %p57
    %s60 = sadd.s32 %s59, 1
    %p63 = scmp.eq.s32.totalorder %s13, 3
    %p64 = scmp.ne.s32.totalorder %s59, %s61
    %p65 = scmp.eq.s32.totalorder %s13, 0
    %p66 = por %p64, %p65
    %p67 = scmp.ne.s32.totalorder %s59, %s61
    %p68 = scmp.eq.s32.totalorder %s18, 3
    %p69 = por %p67, %p68
    %p70 = scmp.ne.s32.totalorder %s61, %s62
    %p71 = scmp.eq.s32.totalorder %s18, 0
    %p72 = por %p70, %p71
    %p73 = scmp.ne.s32.totalorder %s61, %s62
    %p74 = scmp.eq.s32.totalorder %s19, 3
    %p75 = por %p73, %p74
    %p77 = scmp.ne.s32.totalorder %s62, %s76
    %p78 = scmp.eq.s32.totalorder %s19, 0
    %p79 = por %p77, %p78
    %s81 = sadd.s32 %s80, 1
    %p84 = scmp.eq.s32.totalorder %s13, 3
    %p85 = scmp.ne.s32.totalorder %s80, %s82
    %p86 = scmp.eq.s32.totalorder %s13, 0
    %p87 = por %p85, %p86
    %p88 = scmp.ne.s32.totalorder %s80, %s82
    %p89 = scmp.eq.s32.totalorder %s18, 3
    %p90 = por %p88, %p89
    %p91 = scmp.ne.s32.totalorder %s82, %s83
    %p92 = scmp.eq.s32.totalorder %s18, 0
    %p93 = por %p91, %p92
    %p94 = scmp.ne.s32.totalorder %s82, %s83
    %p95 = scmp.eq.s32.totalorder %s19, 3
    %p96 = por %p94, %p95
    %p98 = scmp.ne.s32.totalorder %s83, %s97
    %p99 = scmp.eq.s32.totalorder %s19, 0
    %p100 = por %p98, %p99
    %s102 = sadd.s32 %s101, 1
    %p105 = scmp.eq.s32.totalorder %s13, 3
    %p106 = scmp.ne.s32.totalorder %s101, %s103
    %p107 = scmp.eq.s32.totalorder %s13, 0
    %p108 = por %p106, %p107
    %p109 = scmp.ne.s32.totalorder %s101, %s103
    %p110 = scmp.eq.s32.totalorder %s18, 3
    %p111 = por %p109, %p110
    %p112 = scmp.ne.s32.totalorder %s103, %s104
    %p113 = scmp.eq.s32.totalorder %s18, 0
    %p114 = por %p112, %p113
    %p115 = scmp.ne.s32.totalorder %s103, %s104
    %p116 = scmp.eq.s32.totalorder %s19, 3
    %p117 = por %p115, %p116
    %p119 = scmp.ne.s32.totalorder %s104, %s118
    %p120 = scmp.eq.s32.totalorder %s19, 0
    %p121 = por %p119, %p120
    %s122 = ssub.s32 %s20, %s32
    %s123 = ssub.s32 %s21, %s28
    %s124 = sor.u32 %s122, %s123
    %p125 = scmp.eq.s32.totalorder %s124, 0
    %s127 = sadd.s32 %s126, 1
    %s128 = scalar_select %p125, %s126, %s127
    %p131 = pneg %p125
    %p132 = scmp.eq.s32.totalorder %s13, 3
    %p133 = por %p131, %p132
    %p134 = scmp.ne.s32.totalorder %s126, %s129
    %p135 = scmp.eq.s32.totalorder %s13, 0
    %p136 = por %p134, %p135
    %p137 = scmp.ne.s32.totalorder %s126, %s129
    %p138 = scmp.eq.s32.totalorder %s18, 3
    %p139 = por %p137, %p138
    %p140 = scmp.ne.s32.totalorder %s129, %s130
    %p141 = scmp.eq.s32.totalorder %s18, 0
    %p142 = por %p140, %p141
    %p143 = scmp.ne.s32.totalorder %s129, %s130
    %p144 = scmp.eq.s32.totalorder %s19, 3
    %p145 = por %p143, %p144
    %p147 = scmp.ne.s32.totalorder %s130, %s146
    %p148 = scmp.eq.s32.totalorder %s19, 0
    %p149 = por %p147, %p148
    %s150 = ssub.s32 %s20, %s32
    %s151 = ssub.s32 %s21, %s28
    %s152 = sor.u32 %s150, %s151
    %p153 = scmp.eq.s32.totalorder %s152, 0
    %s155 = sadd.s32 %s154, 1
    %s156 = scalar_select %p153, %s154, %s155
    %p159 = pneg %p153
    %p160 = scmp.eq.s32.totalorder %s13, 3
    %p161 = por %p159, %p160
    %p162 = scmp.ne.s32.totalorder %s154, %s157
    %p163 = scmp.eq.s32.totalorder %s13, 0
    %p164 = por %p162, %p163
    %p165 = scmp.ne.s32.totalorder %s154, %s157
    %p166 = scmp.eq.s32.totalorder %s18, 3
    %p167 = por %p165, %p166
    %p168 = scmp.ne.s32.totalorder %s157, %s158
    %p169 = scmp.eq.s32.totalorder %s18, 0
    %p170 = por %p168, %p169
    %p171 = scmp.ne.s32.totalorder %s157, %s158
    %p172 = scmp.eq.s32.totalorder %s19, 3
    %p173 = por %p171, %p172
    %p175 = scmp.ne.s32.totalorder %s158, %s174
    %p176 = scmp.eq.s32.totalorder %s19, 0
    %p177 = por %p175, %p176
    %s178 = ssub.s32 %s20, %s32
    %s179 = ssub.s32 %s21, %s28
    %s180 = sor.u32 %s178, %s179
    %p181 = scmp.eq.s32.totalorder %s180, 0
    %s183 = sadd.s32 %s182, 1
    %s184 = scalar_select %p181, %s182, %s183
    %p187 = pneg %p181
    %p188 = scmp.eq.s32.totalorder %s13, 3
    %p189 = por %p187, %p188
    %p190 = scmp.ne.s32.totalorder %s182, %s185
    %p191 = scmp.eq.s32.totalorder %s13, 0
    %p192 = por %p190, %p191
    %p193 = scmp.ne.s32.totalorder %s182, %s185
    %p194 = scmp.eq.s32.totalorder %s18, 3
    %p195 = por %p193, %p194
    %p196 = scmp.ne.s32.totalorder %s185, %s186
    %p197 = scmp.eq.s32.totalorder %s18, 0
    %p198 = por %p196, %p197
    %p199 = scmp.ne.s32.totalorder %s185, %s186
    %p200 = scmp.eq.s32.totalorder %s19, 3
    %p201 = por %p199, %p200
    %p203 = scmp.ne.s32.totalorder %s186, %s202
    %p204 = scmp.eq.s32.totalorder %s19, 0
    %p205 = por %p203, %p204
    %p206 = scmp.le.s32.totalorder 1, %s13
    %p207 = scmp.lt.s32.totalorder %s13, 5
    %p208 = pnand %p206, %p207
    %p209 = pneg %p208
    // Predicated region
    $region9: #{bottleneck_forward.5} parent=5 // pred_check
      _
    $region10: #{bottleneck_forward.5} parent=5 // pred_check_branch
      %211 = sbr.rel (%p208) target = $region12
    $region11: #{bottleneck_forward.5} parent=5 // pred_region
      %s212 = ssub.s32 %s13, 1
      // Predicated region
      $region13: #{bottleneck_forward.5} parent=11 // pred_check
        %p213 = pneg %p72
      $region14: #{bottleneck_forward.5} parent=11 // pred_check_branch
        %215 = sbr.rel (%p213) target = $region16
      $region15: #{bottleneck_forward.5} parent=11 // pred_region
        _
      $region16: #{bottleneck_forward.5} parent=11 // pred_fallthru
        _
      // Predicated region
      $region17: #{bottleneck_forward.5} parent=11 // pred_check
        %p216 = pneg %p93
      $region18: #{bottleneck_forward.5} parent=11 // pred_check_branch
        %218 = sbr.rel (%p216) target = $region20
      $region19: #{bottleneck_forward.5} parent=11 // pred_region
        _
      $region20: #{bottleneck_forward.5} parent=11 // pred_fallthru
        _
      // Predicated region
      $region21: #{bottleneck_forward.5} parent=11 // pred_check
        %p219 = pneg %p114
      $region22: #{bottleneck_forward.5} parent=11 // pred_check_branch
        %221 = sbr.rel (%p219) target = $region24
      $region23: #{bottleneck_forward.5} parent=11 // pred_region
        _
      $region24: #{bottleneck_forward.5} parent=11 // pred_fallthru
        _
    $region12: #{bottleneck_forward.5} parent=5 // pred_fallthru
      _
    %p222 = scmp.lt.s32.totalorder %s13, 4
    // Predicated region
    $region25: #{bottleneck_forward.5} parent=5 // pred_check
      %p223 = pneg %p222
    $region26: #{bottleneck_forward.5} parent=5 // pred_check_branch
      %225 = sbr.rel (%p223) target = $region28
    $region27: #{bottleneck_forward.5} parent=5 // pred_region
      // Predicated region
      $region29: #{bottleneck_forward.5} parent=27 // pred_check
        %p226 = pneg %p45
      $region30: #{bottleneck_forward.5} parent=27 // pred_check_branch
        %228 = sbr.rel (%p226) target = $region32
      $region31: #{bottleneck_forward.5} parent=27 // pred_region
        %p229 = scmp.lt.s32.totalorder %s20, 1
        %s230 = scalar_select %p229, %s20, 1
        %s231 = smul.addr %s230, 32
        %s232 = smul.addr %s231, 4
        %s233 = scalar_lea.vmem %s0, %s232
      $region32: #{bottleneck_forward.5} parent=27 // pred_fallthru
        _
    $region28: #{bottleneck_forward.5} parent=5 // pred_fallthru
      _
    %p234 = scmp.le.s32.totalorder 1, %s13
    %p235 = scmp.lt.s32.totalorder %s13, 5
    %p236 = pnand %p234, %p235
    %p237 = pneg %p236
    // Predicated region
    $region33: #{bottleneck_forward.5} parent=5 // pred_check
      _
    $region34: #{bottleneck_forward.5} parent=5 // pred_check_branch
      %239 = sbr.rel (%p236) target = $region36
    $region35: #{bottleneck_forward.5} parent=5 // pred_region
      %s240 = ssub.s32 %s13, 1
      %p241 = scmp.lt.s32.totalorder %s22, 1
      %s242 = scalar_select %p241, %s22, 1
      %s243 = smul.addr %s242, 32
      %s244 = smul.addr %s243, 4
      %s245 = scalar_lea.vmem %s0, %s244
      %p246 = pneg %p51
      %p247 = pneg %p48
      %p248 = pneg %p72
      %p249 = pneg %p69
      %p250 = pneg %p93
      %p251 = pneg %p90
      %p252 = pneg %p114
      %p253 = pneg %p111
      %p254 = pneg %p142
      %p255 = pneg %p139
      %s256 = smul.u32 8, %s23
      %p257 = scmp.lt.s32.totalorder %s22, 1
      %s258 = scalar_select %p257, %s22, 1
      %p259 = scmp.lt.s32.totalorder %s256, 15
      %s260 = scalar_select %p259, %s256, 15
      %s261 = smul.addr %s260, 2
      %s262 = smul.addr %s258, 32
      %s263 = sadd.s32 %s261, %s262
      %s264 = smul.addr %s263, 4
      %s265 = scalar_lea.vmem %s4, %s264
      %p266 = pneg %p170
      %p267 = pneg %p167
      %p268 = scmp.lt.s32.totalorder %s22, 1
      %s269 = scalar_select %p268, %s22, 1
      %p270 = scmp.lt.s32.totalorder %s23, 1
      %s271 = scalar_select %p270, %s23, 1
      %s272 = smul.addr %s269, 2
      %s273 = sadd.s32 %s271, %s272
      %s274 = smul.addr %s273, 8
      %s275 = scalar_lea.vmem %s5, %s274
      %p276 = pneg %p198
      %p277 = pneg %p195
      %p278 = scmp.lt.s32.totalorder %s22, 1
      %s279 = scalar_select %p278, %s22, 1
      %p280 = scmp.lt.s32.totalorder %s23, 1
      %s281 = scalar_select %p280, %s23, 1
      %s282 = smul.addr %s279, 2
      %s283 = sadd.s32 %s281, %s282
      %s284 = smul.addr %s283, 8
      %s285 = scalar_lea.vmem %s6, %s284
      %p286 = scmp.lt.s32.totalorder %s22, 1
      %s287 = scalar_select %p286, %s22, 1
      %s288 = smul.addr %s287, 32
      %s289 = smul.addr %s288, 4
      %s290 = scalar_lea.vmem %s0, %s289
      %s291 = smul.u32 8, %s23
      %p292 = scmp.lt.s32.totalorder %s22, 1
      %s293 = scalar_select %p292, %s22, 1
      %p294 = scmp.lt.s32.totalorder %s291, 15
      %s295 = scalar_select %p294, %s291, 15
      %s296 = smul.addr %s295, 2
      %s297 = smul.addr %s293, 32
      %s298 = sadd.s32 %s296, %s297
      %s299 = smul.addr %s298, 4
      %s300 = scalar_lea.vmem %s4, %s299
      %s301 = smul.u32 8, %s23
      %p302 = scmp.lt.s32.totalorder %s22, 1
      %s303 = scalar_select %p302, %s22, 1
      %p304 = scmp.lt.s32.totalorder %s23, 1
      %s305 = scalar_select %p304, %s23, 1
      %s306 = smul.addr %s303, 2
      %s307 = sadd.s32 %s305, %s306
      %s308 = smul.addr %s307, 8
      %s309 = scalar_lea.vmem %s5, %s308
      %p310 = scmp.lt.s32.totalorder %s22, 1
      %s311 = scalar_select %p310, %s22, 1
      %p312 = scmp.lt.s32.totalorder %s23, 1
      %s313 = scalar_select %p312, %s23, 1
      %s314 = smul.addr %s311, 2
      %s315 = sadd.s32 %s313, %s314
      %s316 = smul.addr %s315, 8
      %s317 = scalar_lea.vmem %s6, %s316
      %p319 = scmp.eq.s32.totalorder %s23, 0
      // Predicated region
      $region37: #{bottleneck_forward.5} parent=35 // pred_check
        %p320 = pneg %p319
      $region38: #{bottleneck_forward.5} parent=35 // pred_check_branch
        %322 = sbr.rel (%p320) target = $region40
      $region39: #{bottleneck_forward.5} parent=35 // pred_region
        %v323 = vld [vmem:[%s290] sm:$0xf]
        %v324 = vld [vmem:[%s290 + $0x4] sm:$0xf]
        %v325 = vld [vmem:[%s290 + $0x8] sm:$0xf]
        %v326 = vld [vmem:[%s290 + $0xc] sm:$0xf]
        %v327 = vld [vmem:[%s290 + $0x10] sm:$0xf]
        %v328 = vld [vmem:[%s290 + $0x14] sm:$0xf]
        %v329 = vld [vmem:[%s290 + $0x18] sm:$0xf]
        %v330 = vld [vmem:[%s290 + $0x1c] sm:$0xf]
        %v331 = vld [vmem:[%s290 + $0x20] sm:$0xf]
        %v332 = vld [vmem:[%s290 + $0x24] sm:$0xf]
        %v333 = vld [vmem:[%s290 + $0x28] sm:$0xf]
        %v334 = vld [vmem:[%s290 + $0x2c] sm:$0xf]
        %v335 = vld [vmem:[%s290 + $0x30] sm:$0xf]
        %v336 = vld [vmem:[%s290 + $0x34] sm:$0xf]
        %v337 = vld [vmem:[%s290 + $0x38] sm:$0xf]
        %v338 = vld [vmem:[%s290 + $0x3c] sm:$0xf]
        %v339 = vld [vmem:[%s290 + $0x40] sm:$0xf]
        %v340 = vld [vmem:[%s290 + $0x44] sm:$0xf]
        %v341 = vld [vmem:[%s290 + $0x48] sm:$0xf]
        %v342 = vld [vmem:[%s290 + $0x4c] sm:$0xf]
        %v343 = vld [vmem:[%s290 + $0x50] sm:$0xf]
        %v344 = vld [vmem:[%s290 + $0x54] sm:$0xf]
        %v345 = vld [vmem:[%s290 + $0x58] sm:$0xf]
        %v346 = vld [vmem:[%s290 + $0x5c] sm:$0xf]
        %v347 = vld [vmem:[%s290 + $0x60] sm:$0xf]
        %v348 = vld [vmem:[%s290 + $0x64] sm:$0xf]
        %v349 = vld [vmem:[%s290 + $0x68] sm:$0xf]
        %v350 = vld [vmem:[%s290 + $0x6c] sm:$0xf]
        %v351 = vld [vmem:[%s290 + $0x70] sm:$0xf]
        %v352 = vld [vmem:[%s290 + $0x74] sm:$0xf]
        %v353 = vld [vmem:[%s290 + $0x78] sm:$0xf]
        %v354 = vld [vmem:[%s290 + $0x7c] sm:$0xf]
        %v355 = vunpack.c.l.bf16 %v323
        %v356 = vunpack.c.l.bf16 %v324
        %v357 = vunpack.c.l.bf16 %v325
        %v358 = vunpack.c.l.bf16 %v326
        %v359 = vunpack.c.l.bf16 %v327
        %v360 = vunpack.c.l.bf16 %v328
        %v361 = vunpack.c.l.bf16 %v329
        %v362 = vunpack.c.l.bf16 %v330
        %v363 = vunpack.c.l.bf16 %v331
        %v364 = vunpack.c.l.bf16 %v332
        %v365 = vunpack.c.l.bf16 %v333
        %v366 = vunpack.c.l.bf16 %v334
        %v367 = vunpack.c.l.bf16 %v335
        %v368 = vunpack.c.l.bf16 %v336
        %v369 = vunpack.c.l.bf16 %v337
        %v370 = vunpack.c.l.bf16 %v338
        %v371 = vunpack.c.l.bf16 %v339
        %v372 = vunpack.c.l.bf16 %v340
        %v373 = vunpack.c.l.bf16 %v341
        %v374 = vunpack.c.l.bf16 %v342
        %v375 = vunpack.c.l.bf16 %v343
        %v376 = vunpack.c.l.bf16 %v344
        %v377 = vunpack.c.l.bf16 %v345
        %v378 = vunpack.c.l.bf16 %v346
        %v379 = vunpack.c.l.bf16 %v347
        %v380 = vunpack.c.l.bf16 %v348
        %v381 = vunpack.c.l.bf16 %v349
        %v382 = vunpack.c.l.bf16 %v350
        %v383 = vunpack.c.l.bf16 %v351
        %v384 = vunpack.c.l.bf16 %v352
        %v385 = vunpack.c.l.bf16 %v353
        %v386 = vunpack.c.l.bf16 %v354
        %v387 = vld [vmem:[%s1] sm:$0x1]
        %v389 = vlaneseq
        %v390 = vshrl.u32 %v389, 7
        %v391 = vsub.s32 0, %v390
        %v392 = vrot.slane %v387, %v391
        %v394 = vmul.f32 %v355, %v392
        %v395 = vmul.f32 %v356, %v392
        %v396 = vmul.f32 %v357, %v392
        %v397 = vmul.f32 %v358, %v392
        %v398 = vmul.f32 %v359, %v392
        %v399 = vmul.f32 %v360, %v392
        %v400 = vmul.f32 %v361, %v392
        %v401 = vmul.f32 %v362, %v392
        %v402 = vmul.f32 %v363, %v392
        %v403 = vmul.f32 %v364, %v392
        %v404 = vmul.f32 %v365, %v392
        %v405 = vmul.f32 %v366, %v392
        %v406 = vmul.f32 %v367, %v392
        %v407 = vmul.f32 %v368, %v392
        %v408 = vmul.f32 %v369, %v392
        %v409 = vmul.f32 %v370, %v392
        %v410 = vmul.f32 %v371, %v392
        %v411 = vmul.f32 %v372, %v392
        %v412 = vmul.f32 %v373, %v392
        %v413 = vmul.f32 %v374, %v392
        %v414 = vmul.f32 %v375, %v392
        %v415 = vmul.f32 %v376, %v392
        %v416 = vmul.f32 %v377, %v392
        %v417 = vmul.f32 %v378, %v392
        %v418 = vmul.f32 %v379, %v392
        %v419 = vmul.f32 %v380, %v392
        %v420 = vmul.f32 %v381, %v392
        %v421 = vmul.f32 %v382, %v392
        %v422 = vmul.f32 %v383, %v392
        %v423 = vmul.f32 %v384, %v392
        %v424 = vmul.f32 %v385, %v392
        %v425 = vmul.f32 %v386, %v392
        %v426 = vld [vmem:[%s2] sm:$0x1]
        %v428 = vlaneseq
        %v429 = vshrl.u32 %v428, 7
        %v430 = vsub.s32 0, %v429
        %v431 = vrot.slane %v426, %v430
        %v433 = vadd.f32 %v394, %v431
        %v434 = vadd.f32 %v395, %v431
        %v435 = vadd.f32 %v396, %v431
        %v436 = vadd.f32 %v397, %v431
        %v437 = vadd.f32 %v398, %v431
        %v438 = vadd.f32 %v399, %v431
        %v439 = vadd.f32 %v400, %v431
        %v440 = vadd.f32 %v401, %v431
        %v441 = vadd.f32 %v402, %v431
        %v442 = vadd.f32 %v403, %v431
        %v443 = vadd.f32 %v404, %v431
        %v444 = vadd.f32 %v405, %v431
        %v445 = vadd.f32 %v406, %v431
        %v446 = vadd.f32 %v407, %v431
        %v447 = vadd.f32 %v408, %v431
        %v448 = vadd.f32 %v409, %v431
        %v449 = vadd.f32 %v410, %v431
        %v450 = vadd.f32 %v411, %v431
        %v451 = vadd.f32 %v412, %v431
        %v452 = vadd.f32 %v413, %v431
        %v453 = vadd.f32 %v414, %v431
        %v454 = vadd.f32 %v415, %v431
        %v455 = vadd.f32 %v416, %v431
        %v456 = vadd.f32 %v417, %v431
        %v457 = vadd.f32 %v418, %v431
        %v458 = vadd.f32 %v419, %v431
        %v459 = vadd.f32 %v420, %v431
        %v460 = vadd.f32 %v421, %v431
        %v461 = vadd.f32 %v422, %v431
        %v462 = vadd.f32 %v423, %v431
        %v463 = vadd.f32 %v424, %v431
        %v464 = vadd.f32 %v425, %v431
        %v465 = vmax.f32 %v433, 0.0
        %v466 = vmax.f32 %v434, 0.0
        %v467 = vmax.f32 %v435, 0.0
        %v468 = vmax.f32 %v436, 0.0
        %v469 = vmax.f32 %v437, 0.0
        %v470 = vmax.f32 %v438, 0.0
        %v471 = vmax.f32 %v439, 0.0
        %v472 = vmax.f32 %v440, 0.0
        %v473 = vmax.f32 %v441, 0.0
        %v474 = vmax.f32 %v442, 0.0
        %v475 = vmax.f32 %v443, 0.0
        %v476 = vmax.f32 %v444, 0.0
        %v477 = vmax.f32 %v445, 0.0
        %v478 = vmax.f32 %v446, 0.0
        %v479 = vmax.f32 %v447, 0.0
        %v480 = vmax.f32 %v448, 0.0
        %v481 = vmax.f32 %v449, 0.0
        %v482 = vmax.f32 %v450, 0.0
        %v483 = vmax.f32 %v451, 0.0
        %v484 = vmax.f32 %v452, 0.0
        %v485 = vmax.f32 %v453, 0.0
        %v486 = vmax.f32 %v454, 0.0
        %v487 = vmax.f32 %v455, 0.0
        %v488 = vmax.f32 %v456, 0.0
        %v489 = vmax.f32 %v457, 0.0
        %v490 = vmax.f32 %v458, 0.0
        %v491 = vmax.f32 %v459, 0.0
        %v492 = vmax.f32 %v460, 0.0
        %v493 = vmax.f32 %v461, 0.0
        %v494 = vmax.f32 %v462, 0.0
        %v495 = vmax.f32 %v463, 0.0
        %v496 = vmax.f32 %v464, 0.0
        %v497 = vpack.c.bf16 %v466, %v465
        %v498 = vpack.c.bf16 %v468, %v467
        %v499 = vpack.c.bf16 %v470, %v469
        %v500 = vpack.c.bf16 %v472, %v471
        %v501 = vpack.c.bf16 %v474, %v473
        %v502 = vpack.c.bf16 %v476, %v475
        %v503 = vpack.c.bf16 %v478, %v477
        %v504 = vpack.c.bf16 %v480, %v479
        %v505 = vpack.c.bf16 %v482, %v481
        %v506 = vpack.c.bf16 %v484, %v483
        %v507 = vpack.c.bf16 %v486, %v485
        %v508 = vpack.c.bf16 %v488, %v487
        %v509 = vpack.c.bf16 %v490, %v489
        %v510 = vpack.c.bf16 %v492, %v491
        %v511 = vpack.c.bf16 %v494, %v493
        %v512 = vpack.c.bf16 %v496, %v495
        %v529 = vunpack.c.l.b16 %v497
        %v530 = vunpack.c.h.b16 %v497
        %v531 = vunpack.c.l.b16 %v498
        %v532 = vunpack.c.h.b16 %v498
        %v533 = vunpack.c.l.b16 %v499
        %v534 = vunpack.c.h.b16 %v499
        %v535 = vunpack.c.l.b16 %v500
        %v536 = vunpack.c.h.b16 %v500
        %v537 = vunpack.c.l.b16 %v501
        %v538 = vunpack.c.h.b16 %v501
        %v539 = vunpack.c.l.b16 %v502
        %v540 = vunpack.c.h.b16 %v502
        %v541 = vunpack.c.l.b16 %v503
        %v542 = vunpack.c.h.b16 %v503
        %v543 = vunpack.c.l.b16 %v504
        %v544 = vunpack.c.h.b16 %v504
        %v545 = vunpack.c.l.b16 %v505
        %v546 = vunpack.c.h.b16 %v505
        %v547 = vunpack.c.l.b16 %v506
        %v548 = vunpack.c.h.b16 %v506
        %v549 = vunpack.c.l.b16 %v507
        %v550 = vunpack.c.h.b16 %v507
        %v551 = vunpack.c.l.b16 %v508
        %v552 = vunpack.c.h.b16 %v508
        %v553 = vunpack.c.l.b16 %v509
        %v554 = vunpack.c.h.b16 %v509
        %v555 = vunpack.c.l.b16 %v510
        %v556 = vunpack.c.h.b16 %v510
        %v557 = vunpack.c.l.b16 %v511
        %v558 = vunpack.c.h.b16 %v511
        %v559 = vunpack.c.l.b16 %v512
        %v560 = vunpack.c.h.b16 %v512
        %v561 = vpack.c.b16 %v529, %v529
        %v562 = vpack.c.b16 %v530, %v530
        %v563 = vpack.c.b16 %v531, %v531
        %v564 = vpack.c.b16 %v532, %v532
        %v565 = vpack.c.b16 %v533, %v533
        %v566 = vpack.c.b16 %v534, %v534
        %v567 = vpack.c.b16 %v535, %v535
        %v568 = vpack.c.b16 %v536, %v536
        %v569 = vpack.c.b16 %v537, %v537
        %v570 = vpack.c.b16 %v538, %v538
        %v571 = vpack.c.b16 %v539, %v539
        %v572 = vpack.c.b16 %v540, %v540
        %v573 = vpack.c.b16 %v541, %v541
        %v574 = vpack.c.b16 %v542, %v542
        %v575 = vpack.c.b16 %v543, %v543
        %v576 = vpack.c.b16 %v544, %v544
        %v577 = vpack.c.b16 %v545, %v545
        %v578 = vpack.c.b16 %v546, %v546
        %v579 = vpack.c.b16 %v547, %v547
        %v580 = vpack.c.b16 %v548, %v548
        %v581 = vpack.c.b16 %v549, %v549
        %v582 = vpack.c.b16 %v550, %v550
        %v583 = vpack.c.b16 %v551, %v551
        %v584 = vpack.c.b16 %v552, %v552
        %v585 = vpack.c.b16 %v553, %v553
        %v586 = vpack.c.b16 %v554, %v554
        %v587 = vpack.c.b16 %v555, %v555
        %v588 = vpack.c.b16 %v556, %v556
        %v589 = vpack.c.b16 %v557, %v557
        %v590 = vpack.c.b16 %v558, %v558
        %v591 = vpack.c.b16 %v559, %v559
        %v592 = vpack.c.b16 %v560, %v560
        %s625 = scalar_lea.vmem [#allocation2], 24
        %626 = vst [vmem:[%s625 + $0x4] sm:$0xf] %v561
        %627 = vst [vmem:[%s625 + $0x10] sm:$0xf] %v562
        %628 = vst [vmem:[%s625 + $0x1c] sm:$0xf] %v563
        %629 = vst [vmem:[%s625 + $0x28] sm:$0xf] %v564
        %630 = vst [vmem:[%s625 + $0x34] sm:$0xf] %v565
        %631 = vst [vmem:[%s625 + $0x40] sm:$0xf] %v566
        %632 = vst [vmem:[%s625 + $0x4c] sm:$0xf] %v567
        %633 = vst [vmem:[%s625 + $0x58] sm:$0xf] %v568
        %634 = vst [vmem:[%s625 + $0x64] sm:$0xf] %v569
        %635 = vst [vmem:[%s625 + $0x70] sm:$0xf] %v570
        %636 = vst [vmem:[%s625 + $0x7c] sm:$0xf] %v571
        %637 = vst [vmem:[%s625 + $0x88] sm:$0xf] %v572
        %638 = vst [vmem:[%s625 + $0x94] sm:$0xf] %v573
        %639 = vst [vmem:[%s625 + $0xa0] sm:$0xf] %v574
        %640 = vst [vmem:[%s625 + $0xac] sm:$0xf] %v575
        %641 = vst [vmem:[%s625 + $0xb8] sm:$0xf] %v576
        %642 = vst [vmem:[%s625 + $0xc4] sm:$0xf] %v577
        %643 = vst [vmem:[%s625 + $0xd0] sm:$0xf] %v578
        %644 = vst [vmem:[%s625 + $0xdc] sm:$0xf] %v579
        %645 = vst [vmem:[%s625 + $0xe8] sm:$0xf] %v580
        %646 = vst [vmem:[%s625 + $0xf4] sm:$0xf] %v581
        %647 = vst [vmem:[%s625 + $0x100] sm:$0xf] %v582
        %648 = vst [vmem:[%s625 + $0x10c] sm:$0xf] %v583
        %649 = vst [vmem:[%s625 + $0x118] sm:$0xf] %v584
        %650 = vst [vmem:[%s625 + $0x124] sm:$0xf] %v585
        %651 = vst [vmem:[%s625 + $0x130] sm:$0xf] %v586
        %652 = vst [vmem:[%s625 + $0x13c] sm:$0xf] %v587
        %653 = vst [vmem:[%s625 + $0x148] sm:$0xf] %v588
        %654 = vst [vmem:[%s625 + $0x154] sm:$0xf] %v589
        %655 = vst [vmem:[%s625 + $0x160] sm:$0xf] %v590
        %656 = vst [vmem:[%s625 + $0x16c] sm:$0xf] %v591
        %657 = vst [vmem:[%s625 + $0x178] sm:$0xf] %v592
        %vm658 = vsmask.f32 256
        %vm659 = vsmask.f32 4368
        %vm660 = vmor %vm658, %vm659
        %v662 = vshrl.u32 %v561, 16
        %v664 = vrot.slane %v662, 7
        %v665 = vshll.u32 %v561, 16
        %v667 = vor.u32 %v664, %v665
        %v668 = vrot.slane %v664, 4
        %v670 = vshrl.u32 %v562, 16
        %v672 = vrot.slane %v670, 7
        %v673 = vshll.u32 %v562, 16
        %v675 = vor.u32 %v672, %v673
        %v676 = vsel %vm660, %v668, %v675
        %v678 = vshrl.u32 %v563, 16
        %v680 = vrot.slane %v678, 7
        %v681 = vshll.u32 %v563, 16
        %v683 = vor.u32 %v680, %v681
        %v684 = vrot.slane %v680, 4
        %v686 = vshrl.u32 %v564, 16
        %v688 = vrot.slane %v686, 7
        %v689 = vshll.u32 %v564, 16
        %v691 = vor.u32 %v688, %v689
        %v692 = vsel %vm660, %v684, %v691
        %v694 = vshrl.u32 %v565, 16
        %v696 = vrot.slane %v694, 7
        %v697 = vshll.u32 %v565, 16
        %v699 = vor.u32 %v696, %v697
        %v700 = vrot.slane %v696, 4
        %v702 = vshrl.u32 %v566, 16
        %v704 = vrot.slane %v702, 7
        %v705 = vshll.u32 %v566, 16
        %v707 = vor.u32 %v704, %v705
        %v708 = vsel %vm660, %v700, %v707
        %v710 = vshrl.u32 %v567, 16
        %v712 = vrot.slane %v710, 7
        %v713 = vshll.u32 %v567, 16
        %v715 = vor.u32 %v712, %v713
        %v716 = vrot.slane %v712, 4
        %v718 = vshrl.u32 %v568, 16
        %v720 = vrot.slane %v718, 7
        %v721 = vshll.u32 %v568, 16
        %v723 = vor.u32 %v720, %v721
        %v724 = vsel %vm660, %v716, %v723
        %v726 = vshrl.u32 %v569, 16
        %v728 = vrot.slane %v726, 7
        %v729 = vshll.u32 %v569, 16
        %v731 = vor.u32 %v728, %v729
        %v732 = vrot.slane %v728, 4
        %v734 = vshrl.u32 %v570, 16
        %v736 = vrot.slane %v734, 7
        %v737 = vshll.u32 %v570, 16
        %v739 = vor.u32 %v736, %v737
        %v740 = vsel %vm660, %v732, %v739
        %v742 = vshrl.u32 %v571, 16
        %v744 = vrot.slane %v742, 7
        %v745 = vshll.u32 %v571, 16
        %v747 = vor.u32 %v744, %v745
        %v748 = vrot.slane %v744, 4
        %v750 = vshrl.u32 %v572, 16
        %v752 = vrot.slane %v750, 7
        %v753 = vshll.u32 %v572, 16
        %v755 = vor.u32 %v752, %v753
        %v756 = vsel %vm660, %v748, %v755
        %v758 = vshrl.u32 %v573, 16
        %v760 = vrot.slane %v758, 7
        %v761 = vshll.u32 %v573, 16
        %v763 = vor.u32 %v760, %v761
        %v764 = vrot.slane %v760, 4
        %v766 = vshrl.u32 %v574, 16
        %v768 = vrot.slane %v766, 7
        %v769 = vshll.u32 %v574, 16
        %v771 = vor.u32 %v768, %v769
        %v772 = vsel %vm660, %v764, %v771
        %v774 = vshrl.u32 %v575, 16
        %v776 = vrot.slane %v774, 7
        %v777 = vshll.u32 %v575, 16
        %v779 = vor.u32 %v776, %v777
        %v780 = vrot.slane %v776, 4
        %v782 = vshrl.u32 %v576, 16
        %v784 = vrot.slane %v782, 7
        %v785 = vshll.u32 %v576, 16
        %v787 = vor.u32 %v784, %v785
        %v788 = vsel %vm660, %v780, %v787
        %v790 = vshrl.u32 %v577, 16
        %v792 = vrot.slane %v790, 7
        %v793 = vshll.u32 %v577, 16
        %v795 = vor.u32 %v792, %v793
        %v796 = vrot.slane %v792, 4
        %v798 = vshrl.u32 %v578, 16
        %v800 = vrot.slane %v798, 7
        %v801 = vshll.u32 %v578, 16
        %v803 = vor.u32 %v800, %v801
        %v804 = vsel %vm660, %v796, %v803
        %v806 = vshrl.u32 %v579, 16
        %v808 = vrot.slane %v806, 7
        %v809 = vshll.u32 %v579, 16
        %v811 = vor.u32 %v808, %v809
        %v812 = vrot.slane %v808, 4
        %v814 = vshrl.u32 %v580, 16
        %v816 = vrot.slane %v814, 7
        %v817 = vshll.u32 %v580, 16
        %v819 = vor.u32 %v816, %v817
        %v820 = vsel %vm660, %v812, %v819
        %v822 = vshrl.u32 %v581, 16
        %v824 = vrot.slane %v822, 7
        %v825 = vshll.u32 %v581, 16
        %v827 = vor.u32 %v824, %v825
        %v828 = vrot.slane %v824, 4
        %v830 = vshrl.u32 %v582, 16
        %v832 = vrot.slane %v830, 7
        %v833 = vshll.u32 %v582, 16
        %v835 = vor.u32 %v832, %v833
        %v836 = vsel %vm660, %v828, %v835
        %v838 = vshrl.u32 %v583, 16
        %v840 = vrot.slane %v838, 7
        %v841 = vshll.u32 %v583, 16
        %v843 = vor.u32 %v840, %v841
        %v844 = vrot.slane %v840, 4
        %v846 = vshrl.u32 %v584, 16
        %v848 = vrot.slane %v846, 7
        %v849 = vshll.u32 %v584, 16
        %v851 = vor.u32 %v848, %v849
        %v852 = vsel %vm660, %v844, %v851
        %v854 = vshrl.u32 %v585, 16
        %v856 = vrot.slane %v854, 7
        %v857 = vshll.u32 %v585, 16
        %v859 = vor.u32 %v856, %v857
        %v860 = vrot.slane %v856, 4
        %v862 = vshrl.u32 %v586, 16
        %v864 = vrot.slane %v862, 7
        %v865 = vshll.u32 %v586, 16
        %v867 = vor.u32 %v864, %v865
        %v868 = vsel %vm660, %v860, %v867
        %v870 = vshrl.u32 %v587, 16
        %v872 = vrot.slane %v870, 7
        %v873 = vshll.u32 %v587, 16
        %v875 = vor.u32 %v872, %v873
        %v876 = vrot.slane %v872, 4
        %v878 = vshrl.u32 %v588, 16
        %v880 = vrot.slane %v878, 7
        %v881 = vshll.u32 %v588, 16
        %v883 = vor.u32 %v880, %v881
        %v884 = vsel %vm660, %v876, %v883
        %v886 = vshrl.u32 %v589, 16
        %v888 = vrot.slane %v886, 7
        %v889 = vshll.u32 %v589, 16
        %v891 = vor.u32 %v888, %v889
        %v892 = vrot.slane %v888, 4
        %v894 = vshrl.u32 %v590, 16
        %v896 = vrot.slane %v894, 7
        %v897 = vshll.u32 %v590, 16
        %v899 = vor.u32 %v896, %v897
        %v900 = vsel %vm660, %v892, %v899
        %v902 = vshrl.u32 %v591, 16
        %v904 = vrot.slane %v902, 7
        %v905 = vshll.u32 %v591, 16
        %v907 = vor.u32 %v904, %v905
        %v908 = vrot.slane %v904, 4
        %v910 = vshrl.u32 %v592, 16
        %v912 = vrot.slane %v910, 7
        %v913 = vshll.u32 %v592, 16
        %v915 = vor.u32 %v912, %v913
        %v916 = vsel %vm660, %v908, %v915
        %vm949 = vcmask 1043456
        %vm950 = vsmask.f32 7938
        %vm951 = vmand %vm949, %vm950
        %v952 = vld [vmem:[%s625] sm:$0xf]
        %v953 = vsel %vm951, %v667, %v952
        %954 = vst [vmem:[%s625] sm:$0xf] %v953
        %955 = vst [vmem:[%s625 + $0xc] sm:$0xf] %v676
        %v956 = vld [vmem:[%s625 + $0x18] sm:$0xf]
        %v957 = vsel %vm951, %v683, %v956
        %958 = vst [vmem:[%s625 + $0x18] sm:$0xf] %v957
        %959 = vst [vmem:[%s625 + $0x24] sm:$0xf] %v692
        %v960 = vld [vmem:[%s625 + $0x30] sm:$0xf]
        %v961 = vsel %vm951, %v699, %v960
        %962 = vst [vmem:[%s625 + $0x30] sm:$0xf] %v961
        %963 = vst [vmem:[%s625 + $0x3c] sm:$0xf] %v708
        %v964 = vld [vmem:[%s625 + $0x48] sm:$0xf]
        %v965 = vsel %vm951, %v715, %v964
        %966 = vst [vmem:[%s625 + $0x48] sm:$0xf] %v965
        %967 = vst [vmem:[%s625 + $0x54] sm:$0xf] %v724
        %v968 = vld [vmem:[%s625 + $0x60] sm:$0xf]
        %v969 = vsel %vm951, %v731, %v968
        %970 = vst [vmem:[%s625 + $0x60] sm:$0xf] %v969
        %971 = vst [vmem:[%s625 + $0x6c] sm:$0xf] %v740
        %v972 = vld [vmem:[%s625 + $0x78] sm:$0xf]
        %v973 = vsel %vm951, %v747, %v972
        %974 = vst [vmem:[%s625 + $0x78] sm:$0xf] %v973
        %975 = vst [vmem:[%s625 + $0x84] sm:$0xf] %v756
        %v976 = vld [vmem:[%s625 + $0x90] sm:$0xf]
        %v977 = vsel %vm951, %v763, %v976
        %978 = vst [vmem:[%s625 + $0x90] sm:$0xf] %v977
        %979 = vst [vmem:[%s625 + $0x9c] sm:$0xf] %v772
        %v980 = vld [vmem:[%s625 + $0xa8] sm:$0xf]
        %v981 = vsel %vm951, %v779, %v980
        %982 = vst [vmem:[%s625 + $0xa8] sm:$0xf] %v981
        %983 = vst [vmem:[%s625 + $0xb4] sm:$0xf] %v788
        %v984 = vld [vmem:[%s625 + $0xc0] sm:$0xf]
        %v985 = vsel %vm951, %v795, %v984
        %986 = vst [vmem:[%s625 + $0xc0] sm:$0xf] %v985
        %987 = vst [vmem:[%s625 + $0xcc] sm:$0xf] %v804
        %v988 = vld [vmem:[%s625 + $0xd8] sm:$0xf]
        %v989 = vsel %vm951, %v811, %v988
        %990 = vst [vmem:[%s625 + $0xd8] sm:$0xf] %v989
        %991 = vst [vmem:[%s625 + $0xe4] sm:$0xf] %v820
        %v992 = vld [vmem:[%s625 + $0xf0] sm:$0xf]
        %v993 = vsel %vm951, %v827, %v992
        %994 = vst [vmem:[%s625 + $0xf0] sm:$0xf] %v993
        %995 = vst [vmem:[%s625 + $0xfc] sm:$0xf] %v836
        %v996 = vld [vmem:[%s625 + $0x108] sm:$0xf]
        %v997 = vsel %vm951, %v843, %v996
        %998 = vst [vmem:[%s625 + $0x108] sm:$0xf] %v997
        %999 = vst [vmem:[%s625 + $0x114] sm:$0xf] %v852
        %v1000 = vld [vmem:[%s625 + $0x120] sm:$0xf]
        %v1001 = vsel %vm951, %v859, %v1000
        %1002 = vst [vmem:[%s625 + $0x120] sm:$0xf] %v1001
        %1003 = vst [vmem:[%s625 + $0x12c] sm:$0xf] %v868
        %v1004 = vld [vmem:[%s625 + $0x138] sm:$0xf]
        %v1005 = vsel %vm951, %v875, %v1004
        %1006 = vst [vmem:[%s625 + $0x138] sm:$0xf] %v1005
        %1007 = vst [vmem:[%s625 + $0x144] sm:$0xf] %v884
        %v1008 = vld [vmem:[%s625 + $0x150] sm:$0xf]
        %v1009 = vsel %vm951, %v891, %v1008
        %1010 = vst [vmem:[%s625 + $0x150] sm:$0xf] %v1009
        %1011 = vst [vmem:[%s625 + $0x15c] sm:$0xf] %v900
        %v1012 = vld [vmem:[%s625 + $0x168] sm:$0xf]
        %v1013 = vsel %vm951, %v907, %v1012
        %1014 = vst [vmem:[%s625 + $0x168] sm:$0xf] %v1013
        %1015 = vst [vmem:[%s625 + $0x174] sm:$0xf] %v916
        %vm1016 = vcmask 1040384
        %vm1017 = vmand %vm1016, %vm658
        %v1018 = vld [vmem:[%s625] sm:$0x1]
        %v1019 = vsel %vm1017, 0, %v1018
        %1020 = vst [vmem:[%s625] sm:$0x1] %v1019
        %v1021 = vld [vmem:[%s625 + $0x18] sm:$0x1]
        %v1022 = vsel %vm1017, 0, %v1021
        %1023 = vst [vmem:[%s625 + $0x18] sm:$0x1] %v1022
        %v1024 = vld [vmem:[%s625 + $0x30] sm:$0x1]
        %v1025 = vsel %vm1017, 0, %v1024
        %1026 = vst [vmem:[%s625 + $0x30] sm:$0x1] %v1025
        %v1027 = vld [vmem:[%s625 + $0x48] sm:$0x1]
        %v1028 = vsel %vm1017, 0, %v1027
        %1029 = vst [vmem:[%s625 + $0x48] sm:$0x1] %v1028
        %v1030 = vld [vmem:[%s625 + $0x60] sm:$0x1]
        %v1031 = vsel %vm1017, 0, %v1030
        %1032 = vst [vmem:[%s625 + $0x60] sm:$0x1] %v1031
        %v1033 = vld [vmem:[%s625 + $0x78] sm:$0x1]
        %v1034 = vsel %vm1017, 0, %v1033
        %1035 = vst [vmem:[%s625 + $0x78] sm:$0x1] %v1034
        %v1036 = vld [vmem:[%s625 + $0x90] sm:$0x1]
        %v1037 = vsel %vm1017, 0, %v1036
        %1038 = vst [vmem:[%s625 + $0x90] sm:$0x1] %v1037
        %v1039 = vld [vmem:[%s625 + $0xa8] sm:$0x1]
        %v1040 = vsel %vm1017, 0, %v1039
        %1041 = vst [vmem:[%s625 + $0xa8] sm:$0x1] %v1040
        %v1042 = vld [vmem:[%s625 + $0xc0] sm:$0x1]
        %v1043 = vsel %vm1017, 0, %v1042
        %1044 = vst [vmem:[%s625 + $0xc0] sm:$0x1] %v1043
        %v1045 = vld [vmem:[%s625 + $0xd8] sm:$0x1]
        %v1046 = vsel %vm1017, 0, %v1045
        %1047 = vst [vmem:[%s625 + $0xd8] sm:$0x1] %v1046
        %v1048 = vld [vmem:[%s625 + $0xf0] sm:$0x1]
        %v1049 = vsel %vm1017, 0, %v1048
        %1050 = vst [vmem:[%s625 + $0xf0] sm:$0x1] %v1049
        %v1051 = vld [vmem:[%s625 + $0x108] sm:$0x1]
        %v1052 = vsel %vm1017, 0, %v1051
        %1053 = vst [vmem:[%s625 + $0x108] sm:$0x1] %v1052
        %v1054 = vld [vmem:[%s625 + $0x120] sm:$0x1]
        %v1055 = vsel %vm1017, 0, %v1054
        %1056 = vst [vmem:[%s625 + $0x120] sm:$0x1] %v1055
        %v1057 = vld [vmem:[%s625 + $0x138] sm:$0x1]
        %v1058 = vsel %vm1017, 0, %v1057
        %1059 = vst [vmem:[%s625 + $0x138] sm:$0x1] %v1058
        %v1060 = vld [vmem:[%s625 + $0x150] sm:$0x1]
        %v1061 = vsel %vm1017, 0, %v1060
        %1062 = vst [vmem:[%s625 + $0x150] sm:$0x1] %v1061
        %v1063 = vld [vmem:[%s625 + $0x168] sm:$0x1]
        %v1064 = vsel %vm1017, 0, %v1063
        %1065 = vst [vmem:[%s625 + $0x168] sm:$0x1] %v1064
        %vm1066 = vsmask.f32 3328
        %vm1067 = vsmask.f32 7440
        %vm1068 = vmor %vm1066, %vm1067
        %v1069 = vrot.slane %v662, 4
        %v1070 = vrot.slane %v665, 5
        %v1071 = vor.u32 %v1069, %v1070
        %v1072 = vrot.slane %v1071, 4
        %v1073 = vrot.slane %v673, 5
        %v1074 = vsel %vm1068, %v1072, %v1073
        %v1075 = vrot.slane %v670, 4
        %v1076 = vor.u32 %v1075, %v1073
        %v1077 = vrot.slane %v1076, 4
        %v1078 = vrot.slane %v678, 4
        %v1079 = vrot.slane %v681, 5
        %v1080 = vor.u32 %v1078, %v1079
        %v1081 = vrot.slane %v1080, 4
        %v1082 = vrot.slane %v689, 5
        %v1083 = vsel %vm1068, %v1081, %v1082
        %v1084 = vrot.slane %v686, 4
        %v1085 = vor.u32 %v1084, %v1082
        %v1086 = vrot.slane %v1085, 4
        %v1087 = vrot.slane %v694, 4
        %v1088 = vrot.slane %v697, 5
        %v1089 = vor.u32 %v1087, %v1088
        %v1090 = vrot.slane %v1089, 4
        %v1091 = vrot.slane %v705, 5
        %v1092 = vsel %vm1068, %v1090, %v1091
        %v1093 = vrot.slane %v702, 4
        %v1094 = vor.u32 %v1093, %v1091
        %v1095 = vrot.slane %v1094, 4
        %v1096 = vrot.slane %v710, 4
        %v1097 = vrot.slane %v713, 5
        %v1098 = vor.u32 %v1096, %v1097
        %v1099 = vrot.slane %v1098, 4
        %v1100 = vrot.slane %v721, 5
        %v1101 = vsel %vm1068, %v1099, %v1100
        %v1102 = vrot.slane %v718, 4
        %v1103 = vor.u32 %v1102, %v1100
        %v1104 = vrot.slane %v1103, 4
        %v1105 = vrot.slane %v726, 4
        %v1106 = vrot.slane %v729, 5
        %v1107 = vor.u32 %v1105, %v1106
        %v1108 = vrot.slane %v1107, 4
        %v1109 = vrot.slane %v737, 5
        %v1110 = vsel %vm1068, %v1108, %v1109
        %v1111 = vrot.slane %v734, 4
        %v1112 = vor.u32 %v1111, %v1109
        %v1113 = vrot.slane %v1112, 4
        %v1114 = vrot.slane %v742, 4
        %v1115 = vrot.slane %v745, 5
        %v1116 = vor.u32 %v1114, %v1115
        %v1117 = vrot.slane %v1116, 4
        %v1118 = vrot.slane %v753, 5
        %v1119 = vsel %vm1068, %v1117, %v1118
        %v1120 = vrot.slane %v750, 4
        %v1121 = vor.u32 %v1120, %v1118
        %v1122 = vrot.slane %v1121, 4
        %v1123 = vrot.slane %v758, 4
        %v1124 = vrot.slane %v761, 5
        %v1125 = vor.u32 %v1123, %v1124
        %v1126 = vrot.slane %v1125, 4
        %v1127 = vrot.slane %v769, 5
        %v1128 = vsel %vm1068, %v1126, %v1127
        %v1129 = vrot.slane %v766, 4
        %v1130 = vor.u32 %v1129, %v1127
        %v1131 = vrot.slane %v1130, 4
        %v1132 = vrot.slane %v774, 4
        %v1133 = vrot.slane %v777, 5
        %v1134 = vor.u32 %v1132, %v1133
        %v1135 = vrot.slane %v1134, 4
        %v1136 = vrot.slane %v785, 5
        %v1137 = vsel %vm1068, %v1135, %v1136
        %v1138 = vrot.slane %v782, 4
        %v1139 = vor.u32 %v1138, %v1136
        %v1140 = vrot.slane %v1139, 4
        %v1141 = vrot.slane %v790, 4
        %v1142 = vrot.slane %v793, 5
        %v1143 = vor.u32 %v1141, %v1142
        %v1144 = vrot.slane %v1143, 4
        %v1145 = vrot.slane %v801, 5
        %v1146 = vsel %vm1068, %v1144, %v1145
        %v1147 = vrot.slane %v798, 4
        %v1148 = vor.u32 %v1147, %v1145
        %v1149 = vrot.slane %v1148, 4
        %v1150 = vrot.slane %v806, 4
        %v1151 = vrot.slane %v809, 5
        %v1152 = vor.u32 %v1150, %v1151
        %v1153 = vrot.slane %v1152, 4
        %v1154 = vrot.slane %v817, 5
        %v1155 = vsel %vm1068, %v1153, %v1154
        %v1156 = vrot.slane %v814, 4
        %v1157 = vor.u32 %v1156, %v1154
        %v1158 = vrot.slane %v1157, 4
        %v1159 = vrot.slane %v822, 4
        %v1160 = vrot.slane %v825, 5
        %v1161 = vor.u32 %v1159, %v1160
        %v1162 = vrot.slane %v1161, 4
        %v1163 = vrot.slane %v833, 5
        %v1164 = vsel %vm1068, %v1162, %v1163
        %v1165 = vrot.slane %v830, 4
        %v1166 = vor.u32 %v1165, %v1163
        %v1167 = vrot.slane %v1166, 4
        %v1168 = vrot.slane %v838, 4
        %v1169 = vrot.slane %v841, 5
        %v1170 = vor.u32 %v1168, %v1169
        %v1171 = vrot.slane %v1170, 4
        %v1172 = vrot.slane %v849, 5
        %v1173 = vsel %vm1068, %v1171, %v1172
        %v1174 = vrot.slane %v846, 4
        %v1175 = vor.u32 %v1174, %v1172
        %v1176 = vrot.slane %v1175, 4
        %v1177 = vrot.slane %v854, 4
        %v1178 = vrot.slane %v857, 5
        %v1179 = vor.u32 %v1177, %v1178
        %v1180 = vrot.slane %v1179, 4
        %v1181 = vrot.slane %v865, 5
        %v1182 = vsel %vm1068, %v1180, %v1181
        %v1183 = vrot.slane %v862, 4
        %v1184 = vor.u32 %v1183, %v1181
        %v1185 = vrot.slane %v1184, 4
        %v1186 = vrot.slane %v870, 4
        %v1187 = vrot.slane %v873, 5
        %v1188 = vor.u32 %v1186, %v1187
        %v1189 = vrot.slane %v1188, 4
        %v1190 = vrot.slane %v881, 5
        %v1191 = vsel %vm1068, %v1189, %v1190
        %v1192 = vrot.slane %v878, 4
        %v1193 = vor.u32 %v1192, %v1190
        %v1194 = vrot.slane %v1193, 4
        %v1195 = vrot.slane %v886, 4
        %v1196 = vrot.slane %v889, 5
        %v1197 = vor.u32 %v1195, %v1196
        %v1198 = vrot.slane %v1197, 4
        %v1199 = vrot.slane %v897, 5
        %v1200 = vsel %vm1068, %v1198, %v1199
        %v1201 = vrot.slane %v894, 4
        %v1202 = vor.u32 %v1201, %v1199
        %v1203 = vrot.slane %v1202, 4
        %v1204 = vrot.slane %v902, 4
        %v1205 = vrot.slane %v905, 5
        %v1206 = vor.u32 %v1204, %v1205
        %v1207 = vrot.slane %v1206, 4
        %v1208 = vrot.slane %v913, 5
        %v1209 = vsel %vm1068, %v1207, %v1208
        %v1210 = vrot.slane %v910, 4
        %v1211 = vor.u32 %v1210, %v1208
        %v1212 = vrot.slane %v1211, 4
        %1245 = vst [vmem:[%s625 + $0x8] sm:$0xf] %v1074
        %vm1246 = vmand %vm949, %vm1066
        %v1247 = vld [vmem:[%s625 + $0x14] sm:$0xf]
        %v1248 = vsel %vm1246, %v1077, %v1247
        %1249 = vst [vmem:[%s625 + $0x14] sm:$0xf] %v1248
        %1250 = vst [vmem:[%s625 + $0x20] sm:$0xf] %v1083
        %v1251 = vld [vmem:[%s625 + $0x2c] sm:$0xf]
        %v1252 = vsel %vm1246, %v1086, %v1251
        %1253 = vst [vmem:[%s625 + $0x2c] sm:$0xf] %v1252
        %1254 = vst [vmem:[%s625 + $0x38] sm:$0xf] %v1092
        %v1255 = vld [vmem:[%s625 + $0x44] sm:$0xf]
        %v1256 = vsel %vm1246, %v1095, %v1255
        %1257 = vst [vmem:[%s625 + $0x44] sm:$0xf] %v1256
        %1258 = vst [vmem:[%s625 + $0x50] sm:$0xf] %v1101
        %v1259 = vld [vmem:[%s625 + $0x5c] sm:$0xf]
        %v1260 = vsel %vm1246, %v1104, %v1259
        %1261 = vst [vmem:[%s625 + $0x5c] sm:$0xf] %v1260
        %1262 = vst [vmem:[%s625 + $0x68] sm:$0xf] %v1110
        %v1263 = vld [vmem:[%s625 + $0x74] sm:$0xf]
        %v1264 = vsel %vm1246, %v1113, %v1263
        %1265 = vst [vmem:[%s625 + $0x74] sm:$0xf] %v1264
        %1266 = vst [vmem:[%s625 + $0x80] sm:$0xf] %v1119
        %v1267 = vld [vmem:[%s625 + $0x8c] sm:$0xf]
        %v1268 = vsel %vm1246, %v1122, %v1267
        %1269 = vst [vmem:[%s625 + $0x8c] sm:$0xf] %v1268
        %1270 = vst [vmem:[%s625 + $0x98] sm:$0xf] %v1128
        %v1271 = vld [vmem:[%s625 + $0xa4] sm:$0xf]
        %v1272 = vsel %vm1246, %v1131, %v1271
        %1273 = vst [vmem:[%s625 + $0xa4] sm:$0xf] %v1272
        %1274 = vst [vmem:[%s625 + $0xb0] sm:$0xf] %v1137
        %v1275 = vld [vmem:[%s625 + $0xbc] sm:$0xf]
        %v1276 = vsel %vm1246, %v1140, %v1275
        %1277 = vst [vmem:[%s625 + $0xbc] sm:$0xf] %v1276
        %1278 = vst [vmem:[%s625 + $0xc8] sm:$0xf] %v1146
        %v1279 = vld [vmem:[%s625 + $0xd4] sm:$0xf]
        %v1280 = vsel %vm1246, %v1149, %v1279
        %1281 = vst [vmem:[%s625 + $0xd4] sm:$0xf] %v1280
        %1282 = vst [vmem:[%s625 + $0xe0] sm:$0xf] %v1155
        %v1283 = vld [vmem:[%s625 + $0xec] sm:$0xf]
        %v1284 = vsel %vm1246, %v1158, %v1283
        %1285 = vst [vmem:[%s625 + $0xec] sm:$0xf] %v1284
        %1286 = vst [vmem:[%s625 + $0xf8] sm:$0xf] %v1164
        %v1287 = vld [vmem:[%s625 + $0x104] sm:$0xf]
        %v1288 = vsel %vm1246, %v1167, %v1287
        %1289 = vst [vmem:[%s625 + $0x104] sm:$0xf] %v1288
        %1290 = vst [vmem:[%s625 + $0x110] sm:$0xf] %v1173
        %v1291 = vld [vmem:[%s625 + $0x11c] sm:$0xf]
        %v1292 = vsel %vm1246, %v1176, %v1291
        %1293 = vst [vmem:[%s625 + $0x11c] sm:$0xf] %v1292
        %1294 = vst [vmem:[%s625 + $0x128] sm:$0xf] %v1182
        %v1295 = vld [vmem:[%s625 + $0x134] sm:$0xf]
        %v1296 = vsel %vm1246, %v1185, %v1295
        %1297 = vst [vmem:[%s625 + $0x134] sm:$0xf] %v1296
        %1298 = vst [vmem:[%s625 + $0x140] sm:$0xf] %v1191
        %v1299 = vld [vmem:[%s625 + $0x14c] sm:$0xf]
        %v1300 = vsel %vm1246, %v1194, %v1299
        %1301 = vst [vmem:[%s625 + $0x14c] sm:$0xf] %v1300
        %1302 = vst [vmem:[%s625 + $0x158] sm:$0xf] %v1200
        %v1303 = vld [vmem:[%s625 + $0x164] sm:$0xf]
        %v1304 = vsel %vm1246, %v1203, %v1303
        %1305 = vst [vmem:[%s625 + $0x164] sm:$0xf] %v1304
        %1306 = vst [vmem:[%s625 + $0x170] sm:$0xf] %v1209
        %v1307 = vld [vmem:[%s625 + $0x17c] sm:$0xf]
        %v1308 = vsel %vm1246, %v1212, %v1307
        %1309 = vst [vmem:[%s625 + $0x17c] sm:$0xf] %v1308
        %vm1310 = vcmask 1043459
        %vm1311 = vsmask.f32 7950
        %vm1312 = vmand %vm1310, %vm1311
        %v1313 = vld [vmem:[%s625 + $0x14] sm:$0x8]
        %v1314 = vsel %vm1312, 0, %v1313
        %1315 = vst [vmem:[%s625 + $0x14] sm:$0x8] %v1314
        %v1316 = vld [vmem:[%s625 + $0x2c] sm:$0x8]
        %v1317 = vsel %vm1312, 0, %v1316
        %1318 = vst [vmem:[%s625 + $0x2c] sm:$0x8] %v1317
        %v1319 = vld [vmem:[%s625 + $0x44] sm:$0x8]
        %v1320 = vsel %vm1312, 0, %v1319
        %1321 = vst [vmem:[%s625 + $0x44] sm:$0x8] %v1320
        %v1322 = vld [vmem:[%s625 + $0x5c] sm:$0x8]
        %v1323 = vsel %vm1312, 0, %v1322
        %1324 = vst [vmem:[%s625 + $0x5c] sm:$0x8] %v1323
        %v1325 = vld [vmem:[%s625 + $0x74] sm:$0x8]
        %v1326 = vsel %vm1312, 0, %v1325
        %1327 = vst [vmem:[%s625 + $0x74] sm:$0x8] %v1326
        %v1328 = vld [vmem:[%s625 + $0x8c] sm:$0x8]
        %v1329 = vsel %vm1312, 0, %v1328
        %1330 = vst [vmem:[%s625 + $0x8c] sm:$0x8] %v1329
        %v1331 = vld [vmem:[%s625 + $0xa4] sm:$0x8]
        %v1332 = vsel %vm1312, 0, %v1331
        %1333 = vst [vmem:[%s625 + $0xa4] sm:$0x8] %v1332
        %v1334 = vld [vmem:[%s625 + $0xbc] sm:$0x8]
        %v1335 = vsel %vm1312, 0, %v1334
        %1336 = vst [vmem:[%s625 + $0xbc] sm:$0x8] %v1335
        %v1337 = vld [vmem:[%s625 + $0xd4] sm:$0x8]
        %v1338 = vsel %vm1312, 0, %v1337
        %1339 = vst [vmem:[%s625 + $0xd4] sm:$0x8] %v1338
        %v1340 = vld [vmem:[%s625 + $0xec] sm:$0x8]
        %v1341 = vsel %vm1312, 0, %v1340
        %1342 = vst [vmem:[%s625 + $0xec] sm:$0x8] %v1341
        %v1343 = vld [vmem:[%s625 + $0x104] sm:$0x8]
        %v1344 = vsel %vm1312, 0, %v1343
        %1345 = vst [vmem:[%s625 + $0x104] sm:$0x8] %v1344
        %v1346 = vld [vmem:[%s625 + $0x11c] sm:$0x8]
        %v1347 = vsel %vm1312, 0, %v1346
        %1348 = vst [vmem:[%s625 + $0x11c] sm:$0x8] %v1347
        %v1349 = vld [vmem:[%s625 + $0x134] sm:$0x8]
        %v1350 = vsel %vm1312, 0, %v1349
        %1351 = vst [vmem:[%s625 + $0x134] sm:$0x8] %v1350
        %v1352 = vld [vmem:[%s625 + $0x14c] sm:$0x8]
        %v1353 = vsel %vm1312, 0, %v1352
        %1354 = vst [vmem:[%s625 + $0x14c] sm:$0x8] %v1353
        %v1355 = vld [vmem:[%s625 + $0x164] sm:$0x8]
        %v1356 = vsel %vm1312, 0, %v1355
        %1357 = vst [vmem:[%s625 + $0x164] sm:$0x8] %v1356
        %v1358 = vld [vmem:[%s625 + $0x17c] sm:$0x8]
        %v1359 = vsel %vm1312, 0, %v1358
        %1360 = vst [vmem:[%s625 + $0x17c] sm:$0x8] %v1359
        %1361 = vst [vmem:[#allocation2] sm:$0xff] 0
        %1362 = vst [vmem:[#allocation2 + $0x8] sm:$0xf] 0
        %1363 = vst [vmem:[#allocation2 + $0xc] sm:$0xff] 0
        %1364 = vst [vmem:[#allocation2 + $0x14] sm:$0xf] 0
        %s1365 = scalar_lea.vmem [#allocation2], 408
        %1366 = vst [vmem:[%s1365] sm:$0xff] 0
        %1367 = vst [vmem:[%s1365 + $0x8] sm:$0xf] 0
        %1368 = vst [vmem:[%s1365 + $0xc] sm:$0xff] 0
        %1369 = vst [vmem:[%s1365 + $0x14] sm:$0xf] 0
      $region40: #{bottleneck_forward.5} parent=35 // pred_fallthru
        _
      %s1370 = smul.u32 %s23, 8
      %s1371 = smul.u32 %s1370, 6
      %s1372 = smul.addr %s1371, 4
      %s1373 = scalar_lea.vmem [#allocation2], %s1372
      %v1374 = vld [vmem:[%s1373] sm:$0xff]
      %v1375 = vld [vmem:[%s1373 + $0x8] sm:$0xf]
      %v1376 = vld [vmem:[%s1373 + $0xc] sm:$0xff]
      %v1377 = vld [vmem:[%s1373 + $0x14] sm:$0xf]
      %v1378 = vld [vmem:[%s1373 + $0x18] sm:$0xff]
      %v1379 = vld [vmem:[%s1373 + $0x20] sm:$0xf]
      %v1380 = vld [vmem:[%s1373 + $0x24] sm:$0xff]
      %v1381 = vld [vmem:[%s1373 + $0x2c] sm:$0xf]
      %v1382 = vld [vmem:[%s1373 + $0x30] sm:$0xff]
      %v1383 = vld [vmem:[%s1373 + $0x38] sm:$0xf]
      %v1384 = vld [vmem:[%s1373 + $0x3c] sm:$0xff]
      %v1385 = vld [vmem:[%s1373 + $0x44] sm:$0xf]
      %v1386 = vld [vmem:[%s1373 + $0x48] sm:$0xff]
      %v1387 = vld [vmem:[%s1373 + $0x50] sm:$0xf]
      %v1388 = vld [vmem:[%s1373 + $0x54] sm:$0xff]
      %v1389 = vld [vmem:[%s1373 + $0x5c] sm:$0xf]
      %v1390 = vld [vmem:[%s1373 + $0x60] sm:$0xff]
      %v1391 = vld [vmem:[%s1373 + $0x68] sm:$0xf]
      %v1392 = vld [vmem:[%s1373 + $0x6c] sm:$0xff]
      %v1393 = vld [vmem:[%s1373 + $0x74] sm:$0xf]
      %v1394 = vld [vmem:[%s1373 + $0x78] sm:$0xff]
      %v1395 = vld [vmem:[%s1373 + $0x80] sm:$0xf]
      %v1396 = vld [vmem:[%s1373 + $0x84] sm:$0xff]
      %v1397 = vld [vmem:[%s1373 + $0x8c] sm:$0xf]
      %v1398 = vld [vmem:[%s1373 + $0x90] sm:$0xff]
      %v1399 = vld [vmem:[%s1373 + $0x98] sm:$0xf]
      %v1400 = vld [vmem:[%s1373 + $0x9c] sm:$0xff]
      %v1401 = vld [vmem:[%s1373 + $0xa4] sm:$0xf]
      %v1402 = vld [vmem:[%s1373 + $0xa8] sm:$0xff]
      %v1403 = vld [vmem:[%s1373 + $0xb0] sm:$0xf]
      %v1404 = vld [vmem:[%s1373 + $0xb4] sm:$0xff]
      %v1405 = vld [vmem:[%s1373 + $0xbc] sm:$0xf]
      %s1406 = sadd.s32 %s1370, 1
      %s1407 = smul.u32 %s1406, 6
      %s1408 = smul.addr %s1407, 4
      %s1409 = scalar_lea.vmem [#allocation2], %s1408
      %v1410 = vld [vmem:[%s1409] sm:$0xff]
      %v1411 = vld [vmem:[%s1409 + $0x8] sm:$0xf]
      %v1412 = vld [vmem:[%s1409 + $0xc] sm:$0xff]
      %v1413 = vld [vmem:[%s1409 + $0x14] sm:$0xf]
      %v1414 = vld [vmem:[%s1409 + $0x18] sm:$0xff]
      %v1415 = vld [vmem:[%s1409 + $0x20] sm:$0xf]
      %v1416 = vld [vmem:[%s1409 + $0x24] sm:$0xff]
      %v1417 = vld [vmem:[%s1409 + $0x2c] sm:$0xf]
      %v1418 = vld [vmem:[%s1409 + $0x30] sm:$0xff]
      %v1419 = vld [vmem:[%s1409 + $0x38] sm:$0xf]
      %v1420 = vld [vmem:[%s1409 + $0x3c] sm:$0xff]
      %v1421 = vld [vmem:[%s1409 + $0x44] sm:$0xf]
      %v1422 = vld [vmem:[%s1409 + $0x48] sm:$0xff]
      %v1423 = vld [vmem:[%s1409 + $0x50] sm:$0xf]
      %v1424 = vld [vmem:[%s1409 + $0x54] sm:$0xff]
      %v1425 = vld [vmem:[%s1409 + $0x5c] sm:$0xf]
      %v1426 = vld [vmem:[%s1409 + $0x60] sm:$0xff]
      %v1427 = vld [vmem:[%s1409 + $0x68] sm:$0xf]
      %v1428 = vld [vmem:[%s1409 + $0x6c] sm:$0xff]
      %v1429 = vld [vmem:[%s1409 + $0x74] sm:$0xf]
      %v1430 = vld [vmem:[%s1409 + $0x78] sm:$0xff]
      %v1431 = vld [vmem:[%s1409 + $0x80] sm:$0xf]
      %v1432 = vld [vmem:[%s1409 + $0x84] sm:$0xff]
      %v1433 = vld [vmem:[%s1409 + $0x8c] sm:$0xf]
      %v1434 = vld [vmem:[%s1409 + $0x90] sm:$0xff]
      %v1435 = vld [vmem:[%s1409 + $0x98] sm:$0xf]
      %v1436 = vld [vmem:[%s1409 + $0x9c] sm:$0xff]
      %v1437 = vld [vmem:[%s1409 + $0xa4] sm:$0xf]
      %v1438 = vld [vmem:[%s1409 + $0xa8] sm:$0xff]
      %v1439 = vld [vmem:[%s1409 + $0xb0] sm:$0xf]
      %v1440 = vld [vmem:[%s1409 + $0xb4] sm:$0xff]
      %v1441 = vld [vmem:[%s1409 + $0xbc] sm:$0xf]
      %s1442 = sadd.s32 %s1370, 2
      %s1443 = smul.u32 %s1442, 6
      %s1444 = smul.addr %s1443, 4
      %s1445 = scalar_lea.vmem [#allocation2], %s1444
      %v1446 = vld [vmem:[%s1445] sm:$0xff]
      %v1447 = vld [vmem:[%s1445 + $0x8] sm:$0xf]
      %v1448 = vld [vmem:[%s1445 + $0xc] sm:$0xff]
      %v1449 = vld [vmem:[%s1445 + $0x14] sm:$0xf]
      %v1450 = vld [vmem:[%s1445 + $0x18] sm:$0xff]
      %v1451 = vld [vmem:[%s1445 + $0x20] sm:$0xf]
      %v1452 = vld [vmem:[%s1445 + $0x24] sm:$0xff]
      %v1453 = vld [vmem:[%s1445 + $0x2c] sm:$0xf]
      %v1454 = vld [vmem:[%s1445 + $0x30] sm:$0xff]
      %v1455 = vld [vmem:[%s1445 + $0x38] sm:$0xf]
      %v1456 = vld [vmem:[%s1445 + $0x3c] sm:$0xff]
      %v1457 = vld [vmem:[%s1445 + $0x44] sm:$0xf]
      %v1458 = vld [vmem:[%s1445 + $0x48] sm:$0xff]
      %v1459 = vld [vmem:[%s1445 + $0x50] sm:$0xf]
      %v1460 = vld [vmem:[%s1445 + $0x54] sm:$0xff]
      %v1461 = vld [vmem:[%s1445 + $0x5c] sm:$0xf]
      %v1462 = vld [vmem:[%s1445 + $0x60] sm:$0xff]
      %v1463 = vld [vmem:[%s1445 + $0x68] sm:$0xf]
      %v1464 = vld [vmem:[%s1445 + $0x6c] sm:$0xff]
      %v1465 = vld [vmem:[%s1445 + $0x74] sm:$0xf]
      %v1466 = vld [vmem:[%s1445 + $0x78] sm:$0xff]
      %v1467 = vld [vmem:[%s1445 + $0x80] sm:$0xf]
      %v1468 = vld [vmem:[%s1445 + $0x84] sm:$0xff]
      %v1469 = vld [vmem:[%s1445 + $0x8c] sm:$0xf]
      %v1470 = vld [vmem:[%s1445 + $0x90] sm:$0xff]
      %v1471 = vld [vmem:[%s1445 + $0x98] sm:$0xf]
      %v1472 = vld [vmem:[%s1445 + $0x9c] sm:$0xff]
      %v1473 = vld [vmem:[%s1445 + $0xa4] sm:$0xf]
      %v1474 = vld [vmem:[%s1445 + $0xa8] sm:$0xff]
      %v1475 = vld [vmem:[%s1445 + $0xb0] sm:$0xf]
      %v1476 = vld [vmem:[%s1445 + $0xb4] sm:$0xff]
      %v1477 = vld [vmem:[%s1445 + $0xbc] sm:$0xf]
      %v1478 = vld [vmem:[%s3] sm:$0xf]
      %v1479 = vld [vmem:[%s3 + $0x4] sm:$0xf]
      %v1480 = vld [vmem:[%s3 + $0x8] sm:$0xf]
      %v1481 = vld [vmem:[%s3 + $0xc] sm:$0xf]
      %v1482 = vld [vmem:[%s3 + $0x10] sm:$0xf]
      %v1483 = vld [vmem:[%s3 + $0x14] sm:$0xf]
      %v1484 = vld [vmem:[%s3 + $0x18] sm:$0xf]
      %v1485 = vld [vmem:[%s3 + $0x1c] sm:$0xf]
      %v1486 = vld [vmem:[%s3 + $0x20] sm:$0xf]
      %v1487 = vld [vmem:[%s3 + $0x24] sm:$0xf]
      %v1488 = vld [vmem:[%s3 + $0x28] sm:$0xf]
      %v1489 = vld [vmem:[%s3 + $0x2c] sm:$0xf]
      %v1490 = vld [vmem:[%s3 + $0x30] sm:$0xf]
      %v1491 = vld [vmem:[%s3 + $0x34] sm:$0xf]
      %v1492 = vld [vmem:[%s3 + $0x38] sm:$0xf]
      %v1493 = vld [vmem:[%s3 + $0x3c] sm:$0xf]
      %v1494 = vld [vmem:[%s3 + $0x40] sm:$0xf]
      %v1495 = vld [vmem:[%s3 + $0x44] sm:$0xf]
      %v1496 = vld [vmem:[%s3 + $0x48] sm:$0xf]
      %v1497 = vld [vmem:[%s3 + $0x4c] sm:$0xf]
      %v1498 = vld [vmem:[%s3 + $0x50] sm:$0xf]
      %v1499 = vld [vmem:[%s3 + $0x54] sm:$0xf]
      %v1500 = vld [vmem:[%s3 + $0x58] sm:$0xf]
      %v1501 = vld [vmem:[%s3 + $0x5c] sm:$0xf]
      %v1502 = vld [vmem:[%s3 + $0x60] sm:$0xf]
      %v1503 = vld [vmem:[%s3 + $0x64] sm:$0xf]
      %v1504 = vld [vmem:[%s3 + $0x68] sm:$0xf]
      %v1505 = vld [vmem:[%s3 + $0x6c] sm:$0xf]
      %v1506 = vld [vmem:[%s3 + $0x70] sm:$0xf]
      %v1507 = vld [vmem:[%s3 + $0x74] sm:$0xf]
      %v1508 = vld [vmem:[%s3 + $0x78] sm:$0xf]
      %v1509 = vld [vmem:[%s3 + $0x7c] sm:$0xf]
      %v1510 = vld [vmem:[%s3 + $0x80] sm:$0xf]
      %v1511 = vld [vmem:[%s3 + $0x84] sm:$0xf]
      %v1512 = vld [vmem:[%s3 + $0x88] sm:$0xf]
      %v1513 = vld [vmem:[%s3 + $0x8c] sm:$0xf]
      %v1514 = vld [vmem:[%s3 + $0x90] sm:$0xf]
      %v1515 = vld [vmem:[%s3 + $0x94] sm:$0xf]
      %v1516 = vld [vmem:[%s3 + $0x98] sm:$0xf]
      %v1517 = vld [vmem:[%s3 + $0x9c] sm:$0xf]
      %v1518 = vld [vmem:[%s3 + $0xa0] sm:$0xf]
      %v1519 = vld [vmem:[%s3 + $0xa4] sm:$0xf]
      %v1520 = vld [vmem:[%s3 + $0xa8] sm:$0xf]
      %v1521 = vld [vmem:[%s3 + $0xac] sm:$0xf]
      %v1522 = vld [vmem:[%s3 + $0xb0] sm:$0xf]
      %v1523 = vld [vmem:[%s3 + $0xb4] sm:$0xf]
      %v1524 = vld [vmem:[%s3 + $0xb8] sm:$0xf]
      %v1525 = vld [vmem:[%s3 + $0xbc] sm:$0xf]
      %s1526 = scalar_lea.vmem %s3, 192
      %v1527 = vld [vmem:[%s1526] sm:$0xf]
      %v1528 = vld [vmem:[%s1526 + $0x4] sm:$0xf]
      %v1529 = vld [vmem:[%s1526 + $0x8] sm:$0xf]
      %v1530 = vld [vmem:[%s1526 + $0xc] sm:$0xf]
      %v1531 = vld [vmem:[%s1526 + $0x10] sm:$0xf]
      %v1532 = vld [vmem:[%s1526 + $0x14] sm:$0xf]
      %v1533 = vld [vmem:[%s1526 + $0x18] sm:$0xf]
      %v1534 = vld [vmem:[%s1526 + $0x1c] sm:$0xf]
      %v1535 = vld [vmem:[%s1526 + $0x20] sm:$0xf]
      %v1536 = vld [vmem:[%s1526 + $0x24] sm:$0xf]
      %v1537 = vld [vmem:[%s1526 + $0x28] sm:$0xf]
      %v1538 = vld [vmem:[%s1526 + $0x2c] sm:$0xf]
      %v1539 = vld [vmem:[%s1526 + $0x30] sm:$0xf]
      %v1540 = vld [vmem:[%s1526 + $0x34] sm:$0xf]
      %v1541 = vld [vmem:[%s1526 + $0x38] sm:$0xf]
      %v1542 = vld [vmem:[%s1526 + $0x3c] sm:$0xf]
      %v1543 = vld [vmem:[%s1526 + $0x40] sm:$0xf]
      %v1544 = vld [vmem:[%s1526 + $0x44] sm:$0xf]
      %v1545 = vld [vmem:[%s1526 + $0x48] sm:$0xf]
      %v1546 = vld [vmem:[%s1526 + $0x4c] sm:$0xf]
      %v1547 = vld [vmem:[%s1526 + $0x50] sm:$0xf]
      %v1548 = vld [vmem:[%s1526 + $0x54] sm:$0xf]
      %v1549 = vld [vmem:[%s1526 + $0x58] sm:$0xf]
      %v1550 = vld [vmem:[%s1526 + $0x5c] sm:$0xf]
      %v1551 = vld [vmem:[%s1526 + $0x60] sm:$0xf]
      %v1552 = vld [vmem:[%s1526 + $0x64] sm:$0xf]
      %v1553 = vld [vmem:[%s1526 + $0x68] sm:$0xf]
      %v1554 = vld [vmem:[%s1526 + $0x6c] sm:$0xf]
      %v1555 = vld [vmem:[%s1526 + $0x70] sm:$0xf]
      %v1556 = vld [vmem:[%s1526 + $0x74] sm:$0xf]
      %v1557 = vld [vmem:[%s1526 + $0x78] sm:$0xf]
      %v1558 = vld [vmem:[%s1526 + $0x7c] sm:$0xf]
      %v1559 = vld [vmem:[%s1526 + $0x80] sm:$0xf]
      %v1560 = vld [vmem:[%s1526 + $0x84] sm:$0xf]
      %v1561 = vld [vmem:[%s1526 + $0x88] sm:$0xf]
      %v1562 = vld [vmem:[%s1526 + $0x8c] sm:$0xf]
      %v1563 = vld [vmem:[%s1526 + $0x90] sm:$0xf]
      %v1564 = vld [vmem:[%s1526 + $0x94] sm:$0xf]
      %v1565 = vld [vmem:[%s1526 + $0x98] sm:$0xf]
      %v1566 = vld [vmem:[%s1526 + $0x9c] sm:$0xf]
      %v1567 = vld [vmem:[%s1526 + $0xa0] sm:$0xf]
      %v1568 = vld [vmem:[%s1526 + $0xa4] sm:$0xf]
      %v1569 = vld [vmem:[%s1526 + $0xa8] sm:$0xf]
      %v1570 = vld [vmem:[%s1526 + $0xac] sm:$0xf]
      %v1571 = vld [vmem:[%s1526 + $0xb0] sm:$0xf]
      %v1572 = vld [vmem:[%s1526 + $0xb4] sm:$0xf]
      %v1573 = vld [vmem:[%s1526 + $0xb8] sm:$0xf]
      %v1574 = vld [vmem:[%s1526 + $0xbc] sm:$0xf]
      %v1607 = vunpack.c.l.b16 %v1410
      %v1608 = vunpack.c.h.b16 %v1410
      %v1609 = vunpack.c.l.b16 %v1411
      %v1610 = vunpack.c.l.b16 %v1412
      %v1611 = vunpack.c.h.b16 %v1412
      %v1612 = vunpack.c.l.b16 %v1413
      %v1613 = vunpack.c.l.b16 %v1414
      %v1614 = vunpack.c.h.b16 %v1414
      %v1615 = vunpack.c.l.b16 %v1415
      %v1616 = vunpack.c.l.b16 %v1416
      %v1617 = vunpack.c.h.b16 %v1416
      %v1618 = vunpack.c.l.b16 %v1417
      %v1619 = vunpack.c.l.b16 %v1418
      %v1620 = vunpack.c.h.b16 %v1418
      %v1621 = vunpack.c.l.b16 %v1419
      %v1622 = vunpack.c.l.b16 %v1420
      %v1623 = vunpack.c.h.b16 %v1420
      %v1624 = vunpack.c.l.b16 %v1421
      %v1625 = vunpack.c.l.b16 %v1422
      %v1626 = vunpack.c.h.b16 %v1422
      %v1627 = vunpack.c.l.b16 %v1423
      %v1628 = vunpack.c.l.b16 %v1424
      %v1629 = vunpack.c.h.b16 %v1424
      %v1630 = vunpack.c.l.b16 %v1425
      %v1631 = vunpack.c.l.b16 %v1426
      %v1632 = vunpack.c.h.b16 %v1426
      %v1633 = vunpack.c.l.b16 %v1427
      %v1634 = vunpack.c.l.b16 %v1428
      %v1635 = vunpack.c.h.b16 %v1428
      %v1636 = vunpack.c.l.b16 %v1429
      %v1637 = vunpack.c.l.b16 %v1430
      %v1638 = vunpack.c.h.b16 %v1430
      %v1639 = vunpack.c.l.b16 %v1431
      %v1640 = vunpack.c.l.b16 %v1432
      %v1641 = vunpack.c.h.b16 %v1432
      %v1642 = vunpack.c.l.b16 %v1433
      %v1643 = vunpack.c.l.b16 %v1434
      %v1644 = vunpack.c.h.b16 %v1434
      %v1645 = vunpack.c.l.b16 %v1435
      %v1646 = vunpack.c.l.b16 %v1436
      %v1647 = vunpack.c.h.b16 %v1436
      %v1648 = vunpack.c.l.b16 %v1437
      %v1649 = vunpack.c.l.b16 %v1438
      %v1650 = vunpack.c.h.b16 %v1438
      %v1651 = vunpack.c.l.b16 %v1439
      %v1652 = vunpack.c.l.b16 %v1440
      %v1653 = vunpack.c.h.b16 %v1440
      %v1654 = vunpack.c.l.b16 %v1441
      %v1655 = vpack.c.b16 %v1610, %v1607
      %v1656 = vpack.c.b16 %v1611, %v1608
      %v1657 = vpack.c.b16 %v1612, %v1609
      %v1658 = vpack.c.b16 %v1616, %v1613
      %v1659 = vpack.c.b16 %v1617, %v1614
      %v1660 = vpack.c.b16 %v1618, %v1615
      %v1661 = vpack.c.b16 %v1622, %v1619
      %v1662 = vpack.c.b16 %v1623, %v1620
      %v1663 = vpack.c.b16 %v1624, %v1621
      %v1664 = vpack.c.b16 %v1628, %v1625
      %v1665 = vpack.c.b16 %v1629, %v1626
      %v1666 = vpack.c.b16 %v1630, %v1627
      %v1667 = vpack.c.b16 %v1634, %v1631
      %v1668 = vpack.c.b16 %v1635, %v1632
      %v1669 = vpack.c.b16 %v1636, %v1633
      %v1670 = vpack.c.b16 %v1640, %v1637
      %v1671 = vpack.c.b16 %v1641, %v1638
      %v1672 = vpack.c.b16 %v1642, %v1639
      %v1673 = vpack.c.b16 %v1646, %v1643
      %v1674 = vpack.c.b16 %v1647, %v1644
      %v1675 = vpack.c.b16 %v1648, %v1645
      %v1676 = vpack.c.b16 %v1652, %v1649
      %v1677 = vpack.c.b16 %v1653, %v1650
      %v1678 = vpack.c.b16 %v1654, %v1651
      %v1751 = vunpack.c.l.b16 %v1527
      %v1752 = vunpack.c.l.b16 %v1528
      %v1753 = vunpack.c.l.b16 %v1529
      %v1754 = vunpack.c.l.b16 %v1530
      %v1755 = vunpack.c.l.b16 %v1531
      %v1756 = vunpack.c.l.b16 %v1532
      %v1757 = vunpack.c.l.b16 %v1533
      %v1758 = vunpack.c.l.b16 %v1534
      %v1759 = vunpack.c.l.b16 %v1535
      %v1760 = vunpack.c.l.b16 %v1536
      %v1761 = vunpack.c.l.b16 %v1537
      %v1762 = vunpack.c.l.b16 %v1538
      %v1763 = vunpack.c.l.b16 %v1539
      %v1764 = vunpack.c.l.b16 %v1540
      %v1765 = vunpack.c.l.b16 %v1541
      %v1766 = vunpack.c.l.b16 %v1542
      %v1767 = vunpack.c.l.b16 %v1543
      %v1768 = vunpack.c.l.b16 %v1544
      %v1769 = vunpack.c.l.b16 %v1545
      %v1770 = vunpack.c.l.b16 %v1546
      %v1771 = vunpack.c.l.b16 %v1547
      %v1772 = vunpack.c.l.b16 %v1548
      %v1773 = vunpack.c.l.b16 %v1549
      %v1774 = vunpack.c.l.b16 %v1550
      %v1775 = vunpack.c.l.b16 %v1551
      %v1776 = vunpack.c.l.b16 %v1552
      %v1777 = vunpack.c.l.b16 %v1553
      %v1778 = vunpack.c.l.b16 %v1554
      %v1779 = vunpack.c.l.b16 %v1555
      %v1780 = vunpack.c.l.b16 %v1556
      %v1781 = vunpack.c.l.b16 %v1557
      %v1782 = vunpack.c.l.b16 %v1558
      %v1783 = vunpack.c.l.b16 %v1559
      %v1784 = vunpack.c.l.b16 %v1560
      %v1785 = vunpack.c.l.b16 %v1561
      %v1786 = vunpack.c.l.b16 %v1562
      %v1787 = vunpack.c.l.b16 %v1563
      %v1788 = vunpack.c.l.b16 %v1564
      %v1789 = vunpack.c.l.b16 %v1565
      %v1790 = vunpack.c.l.b16 %v1566
      %v1791 = vunpack.c.l.b16 %v1567
      %v1792 = vunpack.c.l.b16 %v1568
      %v1793 = vunpack.c.l.b16 %v1569
      %v1794 = vunpack.c.l.b16 %v1570
      %v1795 = vunpack.c.l.b16 %v1571
      %v1796 = vunpack.c.l.b16 %v1572
      %v1797 = vunpack.c.l.b16 %v1573
      %v1798 = vunpack.c.l.b16 %v1574
      %v1799 = vpack.c.b16 %v1752, %v1751
      %v1800 = vpack.c.b16 %v1754, %v1753
      %v1801 = vpack.c.b16 %v1756, %v1755
      %v1802 = vpack.c.b16 %v1758, %v1757
      %v1803 = vpack.c.b16 %v1760, %v1759
      %v1804 = vpack.c.b16 %v1762, %v1761
      %v1805 = vpack.c.b16 %v1764, %v1763
      %v1806 = vpack.c.b16 %v1766, %v1765
      %v1807 = vpack.c.b16 %v1768, %v1767
      %v1808 = vpack.c.b16 %v1770, %v1769
      %v1809 = vpack.c.b16 %v1772, %v1771
      %v1810 = vpack.c.b16 %v1774, %v1773
      %v1811 = vpack.c.b16 %v1776, %v1775
      %v1812 = vpack.c.b16 %v1778, %v1777
      %v1813 = vpack.c.b16 %v1780, %v1779
      %v1814 = vpack.c.b16 %v1782, %v1781
      %v1815 = vpack.c.b16 %v1784, %v1783
      %v1816 = vpack.c.b16 %v1786, %v1785
      %v1817 = vpack.c.b16 %v1788, %v1787
      %v1818 = vpack.c.b16 %v1790, %v1789
      %v1819 = vpack.c.b16 %v1792, %v1791
      %v1820 = vpack.c.b16 %v1794, %v1793
      %v1821 = vpack.c.b16 %v1796, %v1795
      %v1822 = vpack.c.b16 %v1798, %v1797
      %1847 = vmatprep.subr.bf16.mxu0 0
      %1848 = vmatpush1.bf16.msra.mxu0 %v1806
      %1849 = vmatprep.subr.bf16.mxu0 0
      %1850 = vmatpush1.bf16.msra.mxu0 %v1805
      %1851 = vmatprep.subr.bf16.mxu0 0
      %1852 = vmatpush1.bf16.msra.mxu0 %v1804
      %1853 = vmatprep.subr.bf16.mxu0 0
      %1854 = vmatpush1.bf16.msra.mxu0 %v1803
      %1855 = vmatprep.subr.bf16.mxu0 0
      %1856 = vmatpush1.bf16.msra.mxu0 %v1802
      %1857 = vmatprep.subr.bf16.mxu0 0
      %1858 = vmatpush1.bf16.msra.mxu0 %v1801
      %1859 = vmatprep.subr.bf16.mxu0 0
      %1860 = vmatpush1.bf16.msra.mxu0 %v1800
      %1861 = vmatprep.subr.bf16.mxu0 0
      %1862 = vmatpush1.bf16.msra.mxu0 %v1799
      %1863 = vmatprep.subr.bf16.mxu0 0
      %1864 = vmatpush2.bf16.msra.mxu0 %v1814
      %1865 = vmatprep.subr.bf16.mxu0 0
      %1866 = vmatpush2.bf16.msra.mxu0 %v1813
      %1867 = vmatprep.subr.bf16.mxu0 0
      %1868 = vmatpush2.bf16.msra.mxu0 %v1812
      %1869 = vmatprep.subr.bf16.mxu0 0
      %1870 = vmatpush2.bf16.msra.mxu0 %v1811
      %1871 = vmatprep.subr.bf16.mxu0 0
      %1872 = vmatpush2.bf16.msra.mxu0 %v1810
      %1873 = vmatprep.subr.bf16.mxu0 0
      %1874 = vmatpush2.bf16.msra.mxu0 %v1809
      %1875 = vmatprep.subr.bf16.mxu0 0
      %1876 = vmatpush2.bf16.msra.mxu0 %v1808
      %1877 = vmatprep.subr.bf16.mxu0 0
      %1878 = vmatpush2.bf16.msra.mxu0 %v1807
      %1879 = vmatprep.mubr.bf16.mxu0 %v1656
      %1880 = vmatmul.mubr.bf16.gmra.mxu0 %v1655
      %v1881 = vpop.f32.mrf.mxu0
      %v1882 = vadd.f32 0.0, %v1881
      %v1883 = vpop.f32.mrf.mxu0
      %v1884 = vpop.f32.mrf.mxu0
      %v1885 = vadd.f32 0.0, %v1884
      %v1886 = vpop.f32.mrf.mxu0
      %1887 = vmatprep.mubr.bf16.mxu0 %v1659
      %1888 = vmatmul.mubr.bf16.gmra.mxu0 %v1658
      %v1889 = vpop.f32.mrf.mxu0
      %v1890 = vadd.f32 0.0, %v1889
      %v1891 = vpop.f32.mrf.mxu0
      %v1892 = vpop.f32.mrf.mxu0
      %v1893 = vadd.f32 0.0, %v1892
      %v1894 = vpop.f32.mrf.mxu0
      %1895 = vmatprep.mubr.bf16.mxu0 %v1662
      %1896 = vmatmul.mubr.bf16.gmra.mxu0 %v1661
      %v1897 = vpop.f32.mrf.mxu0
      %v1898 = vadd.f32 0.0, %v1897
      %v1899 = vpop.f32.mrf.mxu0
      %v1900 = vpop.f32.mrf.mxu0
      %v1901 = vadd.f32 0.0, %v1900
      %v1902 = vpop.f32.mrf.mxu0
      %1903 = vmatprep.mubr.bf16.mxu0 %v1665
      %1904 = vmatmul.mubr.bf16.gmra.mxu0 %v1664
      %v1905 = vpop.f32.mrf.mxu0
      %v1906 = vadd.f32 0.0, %v1905
      %v1907 = vpop.f32.mrf.mxu0
      %v1908 = vpop.f32.mrf.mxu0
      %v1909 = vadd.f32 0.0, %v1908
      %v1910 = vpop.f32.mrf.mxu0
      %1911 = vmatprep.mubr.bf16.mxu0 %v1668
      %1912 = vmatmul.mubr.bf16.gmra.mxu0 %v1667
      %v1913 = vpop.f32.mrf.mxu0
      %v1914 = vadd.f32 0.0, %v1913
      %v1915 = vpop.f32.mrf.mxu0
      %v1916 = vpop.f32.mrf.mxu0
      %v1917 = vadd.f32 0.0, %v1916
      %v1918 = vpop.f32.mrf.mxu0
      %1919 = vmatprep.mubr.bf16.mxu0 %v1671
      %1920 = vmatmul.mubr.bf16.gmra.mxu0 %v1670
      %v1921 = vpop.f32.mrf.mxu0
      %v1922 = vadd.f32 0.0, %v1921
      %v1923 = vpop.f32.mrf.mxu0
      %v1924 = vpop.f32.mrf.mxu0
      %v1925 = vadd.f32 0.0, %v1924
      %v1926 = vpop.f32.mrf.mxu0
      %1927 = vmatprep.mubr.bf16.mxu0 %v1674
      %1928 = vmatmul.mubr.bf16.gmra.mxu0 %v1673
      %v1929 = vpop.f32.mrf.mxu0
      %v1930 = vadd.f32 0.0, %v1929
      %v1931 = vpop.f32.mrf.mxu0
      %v1932 = vpop.f32.mrf.mxu0
      %v1933 = vadd.f32 0.0, %v1932
      %v1934 = vpop.f32.mrf.mxu0
      %1935 = vmatprep.mubr.bf16.mxu0 %v1677
      %1936 = vmatmul.mubr.bf16.gmra.mxu0 %v1676
      %v1937 = vpop.f32.mrf.mxu0
      %v1938 = vadd.f32 0.0, %v1937
      %v1939 = vpop.f32.mrf.mxu0
      %v1940 = vpop.f32.mrf.mxu0
      %v1941 = vadd.f32 0.0, %v1940
      %v1942 = vpop.f32.mrf.mxu0
      %1943 = vdwg.mxu0
      %1944 = vmatprep.subr.bf16.mxu0 0
      %1945 = vmatpush1.bf16.msra.mxu0 %v1822
      %1946 = vmatprep.subr.bf16.mxu0 0
      %1947 = vmatpush1.bf16.msra.mxu0 %v1821
      %1948 = vmatprep.subr.bf16.mxu0 0
      %1949 = vmatpush1.bf16.msra.mxu0 %v1820
      %1950 = vmatprep.subr.bf16.mxu0 0
      %1951 = vmatpush1.bf16.msra.mxu0 %v1819
      %1952 = vmatprep.subr.bf16.mxu0 0
      %1953 = vmatpush1.bf16.msra.mxu0 %v1818
      %1954 = vmatprep.subr.bf16.mxu0 0
      %1955 = vmatpush1.bf16.msra.mxu0 %v1817
      %1956 = vmatprep.subr.bf16.mxu0 0
      %1957 = vmatpush1.bf16.msra.mxu0 %v1816
      %1958 = vmatprep.subr.bf16.mxu0 0
      %1959 = vmatpush1.bf16.msra.mxu0 %v1815
      %1960 = vmatprep.subr.bf16.mxu0 0
      %1961 = vmatpush2.bf16.msra.mxu0 0
      %1962 = vmatprep.subr.bf16.mxu0 0
      %1963 = vmatpush2.bf16.msra.mxu0 0
      %1964 = vmatprep.subr.bf16.mxu0 0
      %1965 = vmatpush2.bf16.msra.mxu0 0
      %1966 = vmatprep.subr.bf16.mxu0 0
      %1967 = vmatpush2.bf16.msra.mxu0 0
      %1968 = vmatprep.subr.bf16.mxu0 0
      %1969 = vmatpush2.bf16.msra.mxu0 0
      %1970 = vmatprep.subr.bf16.mxu0 0
      %1971 = vmatpush2.bf16.msra.mxu0 0
      %1972 = vmatprep.subr.bf16.mxu0 0
      %1973 = vmatpush2.bf16.msra.mxu0 0
      %1974 = vmatprep.subr.bf16.mxu0 0
      %1975 = vmatpush2.bf16.msra.mxu0 0
      %1976 = vmatprep.mubr.bf16.mxu0 0
      %1977 = vmatmul.mubr.bf16.gmra.mxu0 %v1657
      %v1978 = vpop.f32.mrf.mxu0
      %v1979 = vadd.f32 %v1882, %v1978
      %v1980 = vpop.f32.mrf.mxu0
      %v1981 = vpop.f32.mrf.mxu0
      %v1982 = vadd.f32 %v1885, %v1981
      %v1983 = vpop.f32.mrf.mxu0
      %1984 = vmatprep.mubr.bf16.mxu0 0
      %1985 = vmatmul.mubr.bf16.gmra.mxu0 %v1660
      %v1986 = vpop.f32.mrf.mxu0
      %v1987 = vadd.f32 %v1890, %v1986
      %v1988 = vpop.f32.mrf.mxu0
      %v1989 = vpop.f32.mrf.mxu0
      %v1990 = vadd.f32 %v1893, %v1989
      %v1991 = vpop.f32.mrf.mxu0
      %1992 = vmatprep.mubr.bf16.mxu0 0
      %1993 = vmatmul.mubr.bf16.gmra.mxu0 %v1663
      %v1994 = vpop.f32.mrf.mxu0
      %v1995 = vadd.f32 %v1898, %v1994
      %v1996 = vpop.f32.mrf.mxu0
      %v1997 = vpop.f32.mrf.mxu0
      %v1998 = vadd.f32 %v1901, %v1997
      %v1999 = vpop.f32.mrf.mxu0
      %2000 = vmatprep.mubr.bf16.mxu0 0
      %2001 = vmatmul.mubr.bf16.gmra.mxu0 %v1666
      %v2002 = vpop.f32.mrf.mxu0
      %v2003 = vadd.f32 %v1906, %v2002
      %v2004 = vpop.f32.mrf.mxu0
      %v2005 = vpop.f32.mrf.mxu0
      %v2006 = vadd.f32 %v1909, %v2005
      %v2007 = vpop.f32.mrf.mxu0
      %2008 = vmatprep.mubr.bf16.mxu0 0
      %2009 = vmatmul.mubr.bf16.gmra.mxu0 %v1669
      %v2010 = vpop.f32.mrf.mxu0
      %v2011 = vadd.f32 %v1914, %v2010
      %v2012 = vpop.f32.mrf.mxu0
      %v2013 = vpop.f32.mrf.mxu0
      %v2014 = vadd.f32 %v1917, %v2013
      %v2015 = vpop.f32.mrf.mxu0
      %2016 = vmatprep.mubr.bf16.mxu0 0
      %2017 = vmatmul.mubr.bf16.gmra.mxu0 %v1672
      %v2018 = vpop.f32.mrf.mxu0
      %v2019 = vadd.f32 %v1922, %v2018
      %v2020 = vpop.f32.mrf.mxu0
      %v2021 = vpop.f32.mrf.mxu0
      %v2022 = vadd.f32 %v1925, %v2021
      %v2023 = vpop.f32.mrf.mxu0
      %2024 = vmatprep.mubr.bf16.mxu0 0
      %2025 = vmatmul.mubr.bf16.gmra.mxu0 %v1675
      %v2026 = vpop.f32.mrf.mxu0
      %v2027 = vadd.f32 %v1930, %v2026
      %v2028 = vpop.f32.mrf.mxu0
      %v2029 = vpop.f32.mrf.mxu0
      %v2030 = vadd.f32 %v1933, %v2029
      %v2031 = vpop.f32.mrf.mxu0
      %2032 = vmatprep.mubr.bf16.mxu0 0
      %2033 = vmatmul.mubr.bf16.gmra.mxu0 %v1678
      %v2034 = vpop.f32.mrf.mxu0
      %v2035 = vadd.f32 %v1938, %v2034
      %v2036 = vpop.f32.mrf.mxu0
      %v2037 = vpop.f32.mrf.mxu0
      %v2038 = vadd.f32 %v1941, %v2037
      %v2039 = vpop.f32.mrf.mxu0
      %2040 = vdwg.mxu0
      %v2073 = vunpack.c.l.b16 %v1374
      %v2074 = vunpack.c.h.b16 %v1374
      %v2075 = vunpack.c.l.b16 %v1375
      %v2076 = vunpack.c.l.b16 %v1376
      %v2077 = vunpack.c.h.b16 %v1376
      %v2078 = vunpack.c.l.b16 %v1377
      %v2079 = vunpack.c.l.b16 %v1378
      %v2080 = vunpack.c.h.b16 %v1378
      %v2081 = vunpack.c.l.b16 %v1379
      %v2082 = vunpack.c.l.b16 %v1380
      %v2083 = vunpack.c.h.b16 %v1380
      %v2084 = vunpack.c.l.b16 %v1381
      %v2085 = vunpack.c.l.b16 %v1382
      %v2086 = vunpack.c.h.b16 %v1382
      %v2087 = vunpack.c.l.b16 %v1383
      %v2088 = vunpack.c.l.b16 %v1384
      %v2089 = vunpack.c.h.b16 %v1384
      %v2090 = vunpack.c.l.b16 %v1385
      %v2091 = vunpack.c.l.b16 %v1386
      %v2092 = vunpack.c.h.b16 %v1386
      %v2093 = vunpack.c.l.b16 %v1387
      %v2094 = vunpack.c.l.b16 %v1388
      %v2095 = vunpack.c.h.b16 %v1388
      %v2096 = vunpack.c.l.b16 %v1389
      %v2097 = vunpack.c.l.b16 %v1390
      %v2098 = vunpack.c.h.b16 %v1390
      %v2099 = vunpack.c.l.b16 %v1391
      %v2100 = vunpack.c.l.b16 %v1392
      %v2101 = vunpack.c.h.b16 %v1392
      %v2102 = vunpack.c.l.b16 %v1393
      %v2103 = vunpack.c.l.b16 %v1394
      %v2104 = vunpack.c.h.b16 %v1394
      %v2105 = vunpack.c.l.b16 %v1395
      %v2106 = vunpack.c.l.b16 %v1396
      %v2107 = vunpack.c.h.b16 %v1396
      %v2108 = vunpack.c.l.b16 %v1397
      %v2109 = vunpack.c.l.b16 %v1398
      %v2110 = vunpack.c.h.b16 %v1398
      %v2111 = vunpack.c.l.b16 %v1399
      %v2112 = vunpack.c.l.b16 %v1400
      %v2113 = vunpack.c.h.b16 %v1400
      %v2114 = vunpack.c.l.b16 %v1401
      %v2115 = vunpack.c.l.b16 %v1402
      %v2116 = vunpack.c.h.b16 %v1402
      %v2117 = vunpack.c.l.b16 %v1403
      %v2118 = vunpack.c.l.b16 %v1404
      %v2119 = vunpack.c.h.b16 %v1404
      %v2120 = vunpack.c.l.b16 %v1405
      %v2121 = vpack.c.b16 %v2076, %v2073
      %v2122 = vpack.c.b16 %v2077, %v2074
      %v2123 = vpack.c.b16 %v2078, %v2075
      %v2124 = vpack.c.b16 %v2082, %v2079
      %v2125 = vpack.c.b16 %v2083, %v2080
      %v2126 = vpack.c.b16 %v2084, %v2081
      %v2127 = vpack.c.b16 %v2088, %v2085
      %v2128 = vpack.c.b16 %v2089, %v2086
      %v2129 = vpack.c.b16 %v2090, %v2087
      %v2130 = vpack.c.b16 %v2094, %v2091
      %v2131 = vpack.c.b16 %v2095, %v2092
      %v2132 = vpack.c.b16 %v2096, %v2093
      %v2133 = vpack.c.b16 %v2100, %v2097
      %v2134 = vpack.c.b16 %v2101, %v2098
      %v2135 = vpack.c.b16 %v2102, %v2099
      %v2136 = vpack.c.b16 %v2106, %v2103
      %v2137 = vpack.c.b16 %v2107, %v2104
      %v2138 = vpack.c.b16 %v2108, %v2105
      %v2139 = vpack.c.b16 %v2112, %v2109
      %v2140 = vpack.c.b16 %v2113, %v2110
      %v2141 = vpack.c.b16 %v2114, %v2111
      %v2142 = vpack.c.b16 %v2118, %v2115
      %v2143 = vpack.c.b16 %v2119, %v2116
      %v2144 = vpack.c.b16 %v2120, %v2117
      %v2217 = vunpack.c.l.b16 %v1478
      %v2218 = vunpack.c.l.b16 %v1479
      %v2219 = vunpack.c.l.b16 %v1480
      %v2220 = vunpack.c.l.b16 %v1481
      %v2221 = vunpack.c.l.b16 %v1482
      %v2222 = vunpack.c.l.b16 %v1483
      %v2223 = vunpack.c.l.b16 %v1484
      %v2224 = vunpack.c.l.b16 %v1485
      %v2225 = vunpack.c.l.b16 %v1486
      %v2226 = vunpack.c.l.b16 %v1487
      %v2227 = vunpack.c.l.b16 %v1488
      %v2228 = vunpack.c.l.b16 %v1489
      %v2229 = vunpack.c.l.b16 %v1490
      %v2230 = vunpack.c.l.b16 %v1491
      %v2231 = vunpack.c.l.b16 %v1492
      %v2232 = vunpack.c.l.b16 %v1493
      %v2233 = vunpack.c.l.b16 %v1494
      %v2234 = vunpack.c.l.b16 %v1495
      %v2235 = vunpack.c.l.b16 %v1496
      %v2236 = vunpack.c.l.b16 %v1497
      %v2237 = vunpack.c.l.b16 %v1498
      %v2238 = vunpack.c.l.b16 %v1499
      %v2239 = vunpack.c.l.b16 %v1500
      %v2240 = vunpack.c.l.b16 %v1501
      %v2241 = vunpack.c.l.b16 %v1502
      %v2242 = vunpack.c.l.b16 %v1503
      %v2243 = vunpack.c.l.b16 %v1504
      %v2244 = vunpack.c.l.b16 %v1505
      %v2245 = vunpack.c.l.b16 %v1506
      %v2246 = vunpack.c.l.b16 %v1507
      %v2247 = vunpack.c.l.b16 %v1508
      %v2248 = vunpack.c.l.b16 %v1509
      %v2249 = vunpack.c.l.b16 %v1510
      %v2250 = vunpack.c.l.b16 %v1511
      %v2251 = vunpack.c.l.b16 %v1512
      %v2252 = vunpack.c.l.b16 %v1513
      %v2253 = vunpack.c.l.b16 %v1514
      %v2254 = vunpack.c.l.b16 %v1515
      %v2255 = vunpack.c.l.b16 %v1516
      %v2256 = vunpack.c.l.b16 %v1517
      %v2257 = vunpack.c.l.b16 %v1518
      %v2258 = vunpack.c.l.b16 %v1519
      %v2259 = vunpack.c.l.b16 %v1520
      %v2260 = vunpack.c.l.b16 %v1521
      %v2261 = vunpack.c.l.b16 %v1522
      %v2262 = vunpack.c.l.b16 %v1523
      %v2263 = vunpack.c.l.b16 %v1524
      %v2264 = vunpack.c.l.b16 %v1525
      %v2265 = vpack.c.b16 %v2218, %v2217
      %v2266 = vpack.c.b16 %v2220, %v2219
      %v2267 = vpack.c.b16 %v2222, %v2221
      %v2268 = vpack.c.b16 %v2224, %v2223
      %v2269 = vpack.c.b16 %v2226, %v2225
      %v2270 = vpack.c.b16 %v2228, %v2227
      %v2271 = vpack.c.b16 %v2230, %v2229
      %v2272 = vpack.c.b16 %v2232, %v2231
      %v2273 = vpack.c.b16 %v2234, %v2233
      %v2274 = vpack.c.b16 %v2236, %v2235
      %v2275 = vpack.c.b16 %v2238, %v2237
      %v2276 = vpack.c.b16 %v2240, %v2239
      %v2277 = vpack.c.b16 %v2242, %v2241
      %v2278 = vpack.c.b16 %v2244, %v2243
      %v2279 = vpack.c.b16 %v2246, %v2245
      %v2280 = vpack.c.b16 %v2248, %v2247
      %v2281 = vpack.c.b16 %v2250, %v2249
      %v2282 = vpack.c.b16 %v2252, %v2251
      %v2283 = vpack.c.b16 %v2254, %v2253
      %v2284 = vpack.c.b16 %v2256, %v2255
      %v2285 = vpack.c.b16 %v2258, %v2257
      %v2286 = vpack.c.b16 %v2260, %v2259
      %v2287 = vpack.c.b16 %v2262, %v2261
      %v2288 = vpack.c.b16 %v2264, %v2263
      %2313 = vmatprep.subr.bf16.mxu0 0
      %2314 = vmatpush1.bf16.msra.mxu0 %v2272
      %2315 = vmatprep.subr.bf16.mxu0 0
      %2316 = vmatpush1.bf16.msra.mxu0 %v2271
      %2317 = vmatprep.subr.bf16.mxu0 0
      %2318 = vmatpush1.bf16.msra.mxu0 %v2270
      %2319 = vmatprep.subr.bf16.mxu0 0
      %2320 = vmatpush1.bf16.msra.mxu0 %v2269
      %2321 = vmatprep.subr.bf16.mxu0 0
      %2322 = vmatpush1.bf16.msra.mxu0 %v2268
      %2323 = vmatprep.subr.bf16.mxu0 0
      %2324 = vmatpush1.bf16.msra.mxu0 %v2267
      %2325 = vmatprep.subr.bf16.mxu0 0
      %2326 = vmatpush1.bf16.msra.mxu0 %v2266
      %2327 = vmatprep.subr.bf16.mxu0 0
      %2328 = vmatpush1.bf16.msra.mxu0 %v2265
      %2329 = vmatprep.subr.bf16.mxu0 0
      %2330 = vmatpush2.bf16.msra.mxu0 %v2280
      %2331 = vmatprep.subr.bf16.mxu0 0
      %2332 = vmatpush2.bf16.msra.mxu0 %v2279
      %2333 = vmatprep.subr.bf16.mxu0 0
      %2334 = vmatpush2.bf16.msra.mxu0 %v2278
      %2335 = vmatprep.subr.bf16.mxu0 0
      %2336 = vmatpush2.bf16.msra.mxu0 %v2277
      %2337 = vmatprep.subr.bf16.mxu0 0
      %2338 = vmatpush2.bf16.msra.mxu0 %v2276
      %2339 = vmatprep.subr.bf16.mxu0 0
      %2340 = vmatpush2.bf16.msra.mxu0 %v2275
      %2341 = vmatprep.subr.bf16.mxu0 0
      %2342 = vmatpush2.bf16.msra.mxu0 %v2274
      %2343 = vmatprep.subr.bf16.mxu0 0
      %2344 = vmatpush2.bf16.msra.mxu0 %v2273
      %2345 = vmatprep.mubr.bf16.mxu0 %v2122
      %2346 = vmatmul.mubr.bf16.gmra.mxu0 %v2121
      %v2347 = vpop.f32.mrf.mxu0
      %v2348 = vadd.f32 %v1979, %v2347
      %v2349 = vpop.f32.mrf.mxu0
      %v2350 = vpop.f32.mrf.mxu0
      %v2351 = vadd.f32 %v1982, %v2350
      %v2352 = vpop.f32.mrf.mxu0
      %2353 = vmatprep.mubr.bf16.mxu0 %v2125
      %2354 = vmatmul.mubr.bf16.gmra.mxu0 %v2124
      %v2355 = vpop.f32.mrf.mxu0
      %v2356 = vadd.f32 %v1987, %v2355
      %v2357 = vpop.f32.mrf.mxu0
      %v2358 = vpop.f32.mrf.mxu0
      %v2359 = vadd.f32 %v1990, %v2358
      %v2360 = vpop.f32.mrf.mxu0
      %2361 = vmatprep.mubr.bf16.mxu0 %v2128
      %2362 = vmatmul.mubr.bf16.gmra.mxu0 %v2127
      %v2363 = vpop.f32.mrf.mxu0
      %v2364 = vadd.f32 %v1995, %v2363
      %v2365 = vpop.f32.mrf.mxu0
      %v2366 = vpop.f32.mrf.mxu0
      %v2367 = vadd.f32 %v1998, %v2366
      %v2368 = vpop.f32.mrf.mxu0
      %2369 = vmatprep.mubr.bf16.mxu0 %v2131
      %2370 = vmatmul.mubr.bf16.gmra.mxu0 %v2130
      %v2371 = vpop.f32.mrf.mxu0
      %v2372 = vadd.f32 %v2003, %v2371
      %v2373 = vpop.f32.mrf.mxu0
      %v2374 = vpop.f32.mrf.mxu0
      %v2375 = vadd.f32 %v2006, %v2374
      %v2376 = vpop.f32.mrf.mxu0
      %2377 = vmatprep.mubr.bf16.mxu0 %v2134
      %2378 = vmatmul.mubr.bf16.gmra.mxu0 %v2133
      %v2379 = vpop.f32.mrf.mxu0
      %v2380 = vadd.f32 %v2011, %v2379
      %v2381 = vpop.f32.mrf.mxu0
      %v2382 = vpop.f32.mrf.mxu0
      %v2383 = vadd.f32 %v2014, %v2382
      %v2384 = vpop.f32.mrf.mxu0
      %2385 = vmatprep.mubr.bf16.mxu0 %v2137
      %2386 = vmatmul.mubr.bf16.gmra.mxu0 %v2136
      %v2387 = vpop.f32.mrf.mxu0
      %v2388 = vadd.f32 %v2019, %v2387
      %v2389 = vpop.f32.mrf.mxu0
      %v2390 = vpop.f32.mrf.mxu0
      %v2391 = vadd.f32 %v2022, %v2390
      %v2392 = vpop.f32.mrf.mxu0
      %2393 = vmatprep.mubr.bf16.mxu0 %v2140
      %2394 = vmatmul.mubr.bf16.gmra.mxu0 %v2139
      %v2395 = vpop.f32.mrf.mxu0
      %v2396 = vadd.f32 %v2027, %v2395
      %v2397 = vpop.f32.mrf.mxu0
      %v2398 = vpop.f32.mrf.mxu0
      %v2399 = vadd.f32 %v2030, %v2398
      %v2400 = vpop.f32.mrf.mxu0
      %2401 = vmatprep.mubr.bf16.mxu0 %v2143
      %2402 = vmatmul.mubr.bf16.gmra.mxu0 %v2142
      %v2403 = vpop.f32.mrf.mxu0
      %v2404 = vadd.f32 %v2035, %v2403
      %v2405 = vpop.f32.mrf.mxu0
      %v2406 = vpop.f32.mrf.mxu0
      %v2407 = vadd.f32 %v2038, %v2406
      %v2408 = vpop.f32.mrf.mxu0
      %2409 = vdwg.mxu0
      %2410 = vmatprep.subr.bf16.mxu0 0
      %2411 = vmatpush1.bf16.msra.mxu0 %v2288
      %2412 = vmatprep.subr.bf16.mxu0 0
      %2413 = vmatpush1.bf16.msra.mxu0 %v2287
      %2414 = vmatprep.subr.bf16.mxu0 0
      %2415 = vmatpush1.bf16.msra.mxu0 %v2286
      %2416 = vmatprep.subr.bf16.mxu0 0
      %2417 = vmatpush1.bf16.msra.mxu0 %v2285
      %2418 = vmatprep.subr.bf16.mxu0 0
      %2419 = vmatpush1.bf16.msra.mxu0 %v2284
      %2420 = vmatprep.subr.bf16.mxu0 0
      %2421 = vmatpush1.bf16.msra.mxu0 %v2283
      %2422 = vmatprep.subr.bf16.mxu0 0
      %2423 = vmatpush1.bf16.msra.mxu0 %v2282
      %2424 = vmatprep.subr.bf16.mxu0 0
      %2425 = vmatpush1.bf16.msra.mxu0 %v2281
      %2426 = vmatprep.subr.bf16.mxu0 0
      %2427 = vmatpush2.bf16.msra.mxu0 0
      %2428 = vmatprep.subr.bf16.mxu0 0
      %2429 = vmatpush2.bf16.msra.mxu0 0
      %2430 = vmatprep.subr.bf16.mxu0 0
      %2431 = vmatpush2.bf16.msra.mxu0 0
      %2432 = vmatprep.subr.bf16.mxu0 0
      %2433 = vmatpush2.bf16.msra.mxu0 0
      %2434 = vmatprep.subr.bf16.mxu0 0
      %2435 = vmatpush2.bf16.msra.mxu0 0
      %2436 = vmatprep.subr.bf16.mxu0 0
      %2437 = vmatpush2.bf16.msra.mxu0 0
      %2438 = vmatprep.subr.bf16.mxu0 0
      %2439 = vmatpush2.bf16.msra.mxu0 0
      %2440 = vmatprep.subr.bf16.mxu0 0
      %2441 = vmatpush2.bf16.msra.mxu0 0
      %2442 = vmatprep.mubr.bf16.mxu0 0
      %2443 = vmatmul.mubr.bf16.gmra.mxu0 %v2123
      %v2444 = vpop.f32.mrf.mxu0
      %v2445 = vadd.f32 %v2348, %v2444
      %v2446 = vpop.f32.mrf.mxu0
      %v2447 = vpop.f32.mrf.mxu0
      %v2448 = vadd.f32 %v2351, %v2447
      %v2449 = vpop.f32.mrf.mxu0
      %2450 = vmatprep.mubr.bf16.mxu0 0
      %2451 = vmatmul.mubr.bf16.gmra.mxu0 %v2126
      %v2452 = vpop.f32.mrf.mxu0
      %v2453 = vadd.f32 %v2356, %v2452
      %v2454 = vpop.f32.mrf.mxu0
      %v2455 = vpop.f32.mrf.mxu0
      %v2456 = vadd.f32 %v2359, %v2455
      %v2457 = vpop.f32.mrf.mxu0
      %2458 = vmatprep.mubr.bf16.mxu0 0
      %2459 = vmatmul.mubr.bf16.gmra.mxu0 %v2129
      %v2460 = vpop.f32.mrf.mxu0
      %v2461 = vadd.f32 %v2364, %v2460
      %v2462 = vpop.f32.mrf.mxu0
      %v2463 = vpop.f32.mrf.mxu0
      %v2464 = vadd.f32 %v2367, %v2463
      %v2465 = vpop.f32.mrf.mxu0
      %2466 = vmatprep.mubr.bf16.mxu0 0
      %2467 = vmatmul.mubr.bf16.gmra.mxu0 %v2132
      %v2468 = vpop.f32.mrf.mxu0
      %v2469 = vadd.f32 %v2372, %v2468
      %v2470 = vpop.f32.mrf.mxu0
      %v2471 = vpop.f32.mrf.mxu0
      %v2472 = vadd.f32 %v2375, %v2471
      %v2473 = vpop.f32.mrf.mxu0
      %2474 = vmatprep.mubr.bf16.mxu0 0
      %2475 = vmatmul.mubr.bf16.gmra.mxu0 %v2135
      %v2476 = vpop.f32.mrf.mxu0
      %v2477 = vadd.f32 %v2380, %v2476
      %v2478 = vpop.f32.mrf.mxu0
      %v2479 = vpop.f32.mrf.mxu0
      %v2480 = vadd.f32 %v2383, %v2479
      %v2481 = vpop.f32.mrf.mxu0
      %2482 = vmatprep.mubr.bf16.mxu0 0
      %2483 = vmatmul.mubr.bf16.gmra.mxu0 %v2138
      %v2484 = vpop.f32.mrf.mxu0
      %v2485 = vadd.f32 %v2388, %v2484
      %v2486 = vpop.f32.mrf.mxu0
      %v2487 = vpop.f32.mrf.mxu0
      %v2488 = vadd.f32 %v2391, %v2487
      %v2489 = vpop.f32.mrf.mxu0
      %2490 = vmatprep.mubr.bf16.mxu0 0
      %2491 = vmatmul.mubr.bf16.gmra.mxu0 %v2141
      %v2492 = vpop.f32.mrf.mxu0
      %v2493 = vadd.f32 %v2396, %v2492
      %v2494 = vpop.f32.mrf.mxu0
      %v2495 = vpop.f32.mrf.mxu0
      %v2496 = vadd.f32 %v2399, %v2495
      %v2497 = vpop.f32.mrf.mxu0
      %2498 = vmatprep.mubr.bf16.mxu0 0
      %2499 = vmatmul.mubr.bf16.gmra.mxu0 %v2144
      %v2500 = vpop.f32.mrf.mxu0
      %v2501 = vadd.f32 %v2404, %v2500
      %v2502 = vpop.f32.mrf.mxu0
      %v2503 = vpop.f32.mrf.mxu0
      %v2504 = vadd.f32 %v2407, %v2503
      %v2505 = vpop.f32.mrf.mxu0
      %2506 = vdwg.mxu0
      %s2507 = scalar_lea.vmem %s3, 384
      %v2508 = vld [vmem:[%s2507] sm:$0xf]
      %v2509 = vld [vmem:[%s2507 + $0x4] sm:$0xf]
      %v2510 = vld [vmem:[%s2507 + $0x8] sm:$0xf]
      %v2511 = vld [vmem:[%s2507 + $0xc] sm:$0xf]
      %v2512 = vld [vmem:[%s2507 + $0x10] sm:$0xf]
      %v2513 = vld [vmem:[%s2507 + $0x14] sm:$0xf]
      %v2514 = vld [vmem:[%s2507 + $0x18] sm:$0xf]
      %v2515 = vld [vmem:[%s2507 + $0x1c] sm:$0xf]
      %v2516 = vld [vmem:[%s2507 + $0x20] sm:$0xf]
      %v2517 = vld [vmem:[%s2507 + $0x24] sm:$0xf]
      %v2518 = vld [vmem:[%s2507 + $0x28] sm:$0xf]
      %v2519 = vld [vmem:[%s2507 + $0x2c] sm:$0xf]
      %v2520 = vld [vmem:[%s2507 + $0x30] sm:$0xf]
      %v2521 = vld [vmem:[%s2507 + $0x34] sm:$0xf]
      %v2522 = vld [vmem:[%s2507 + $0x38] sm:$0xf]
      %v2523 = vld [vmem:[%s2507 + $0x3c] sm:$0xf]
      %v2524 = vld [vmem:[%s2507 + $0x40] sm:$0xf]
      %v2525 = vld [vmem:[%s2507 + $0x44] sm:$0xf]
      %v2526 = vld [vmem:[%s2507 + $0x48] sm:$0xf]
      %v2527 = vld [vmem:[%s2507 + $0x4c] sm:$0xf]
      %v2528 = vld [vmem:[%s2507 + $0x50] sm:$0xf]
      %v2529 = vld [vmem:[%s2507 + $0x54] sm:$0xf]
      %v2530 = vld [vmem:[%s2507 + $0x58] sm:$0xf]
      %v2531 = vld [vmem:[%s2507 + $0x5c] sm:$0xf]
      %v2532 = vld [vmem:[%s2507 + $0x60] sm:$0xf]
      %v2533 = vld [vmem:[%s2507 + $0x64] sm:$0xf]
      %v2534 = vld [vmem:[%s2507 + $0x68] sm:$0xf]
      %v2535 = vld [vmem:[%s2507 + $0x6c] sm:$0xf]
      %v2536 = vld [vmem:[%s2507 + $0x70] sm:$0xf]
      %v2537 = vld [vmem:[%s2507 + $0x74] sm:$0xf]
      %v2538 = vld [vmem:[%s2507 + $0x78] sm:$0xf]
      %v2539 = vld [vmem:[%s2507 + $0x7c] sm:$0xf]
      %v2540 = vld [vmem:[%s2507 + $0x80] sm:$0xf]
      %v2541 = vld [vmem:[%s2507 + $0x84] sm:$0xf]
      %v2542 = vld [vmem:[%s2507 + $0x88] sm:$0xf]
      %v2543 = vld [vmem:[%s2507 + $0x8c] sm:$0xf]
      %v2544 = vld [vmem:[%s2507 + $0x90] sm:$0xf]
      %v2545 = vld [vmem:[%s2507 + $0x94] sm:$0xf]
      %v2546 = vld [vmem:[%s2507 + $0x98] sm:$0xf]
      %v2547 = vld [vmem:[%s2507 + $0x9c] sm:$0xf]
      %v2548 = vld [vmem:[%s2507 + $0xa0] sm:$0xf]
      %v2549 = vld [vmem:[%s2507 + $0xa4] sm:$0xf]
      %v2550 = vld [vmem:[%s2507 + $0xa8] sm:$0xf]
      %v2551 = vld [vmem:[%s2507 + $0xac] sm:$0xf]
      %v2552 = vld [vmem:[%s2507 + $0xb0] sm:$0xf]
      %v2553 = vld [vmem:[%s2507 + $0xb4] sm:$0xf]
      %v2554 = vld [vmem:[%s2507 + $0xb8] sm:$0xf]
      %v2555 = vld [vmem:[%s2507 + $0xbc] sm:$0xf]
      %v2588 = vunpack.c.l.b16 %v1446
      %v2589 = vunpack.c.h.b16 %v1446
      %v2590 = vunpack.c.l.b16 %v1447
      %v2591 = vunpack.c.l.b16 %v1448
      %v2592 = vunpack.c.h.b16 %v1448
      %v2593 = vunpack.c.l.b16 %v1449
      %v2594 = vunpack.c.l.b16 %v1450
      %v2595 = vunpack.c.h.b16 %v1450
      %v2596 = vunpack.c.l.b16 %v1451
      %v2597 = vunpack.c.l.b16 %v1452
      %v2598 = vunpack.c.h.b16 %v1452
      %v2599 = vunpack.c.l.b16 %v1453
      %v2600 = vunpack.c.l.b16 %v1454
      %v2601 = vunpack.c.h.b16 %v1454
      %v2602 = vunpack.c.l.b16 %v1455
      %v2603 = vunpack.c.l.b16 %v1456
      %v2604 = vunpack.c.h.b16 %v1456
      %v2605 = vunpack.c.l.b16 %v1457
      %v2606 = vunpack.c.l.b16 %v1458
      %v2607 = vunpack.c.h.b16 %v1458
      %v2608 = vunpack.c.l.b16 %v1459
      %v2609 = vunpack.c.l.b16 %v1460
      %v2610 = vunpack.c.h.b16 %v1460
      %v2611 = vunpack.c.l.b16 %v1461
      %v2612 = vunpack.c.l.b16 %v1462
      %v2613 = vunpack.c.h.b16 %v1462
      %v2614 = vunpack.c.l.b16 %v1463
      %v2615 = vunpack.c.l.b16 %v1464
      %v2616 = vunpack.c.h.b16 %v1464
      %v2617 = vunpack.c.l.b16 %v1465
      %v2618 = vunpack.c.l.b16 %v1466
      %v2619 = vunpack.c.h.b16 %v1466
      %v2620 = vunpack.c.l.b16 %v1467
      %v2621 = vunpack.c.l.b16 %v1468
      %v2622 = vunpack.c.h.b16 %v1468
      %v2623 = vunpack.c.l.b16 %v1469
      %v2624 = vunpack.c.l.b16 %v1470
      %v2625 = vunpack.c.h.b16 %v1470
      %v2626 = vunpack.c.l.b16 %v1471
      %v2627 = vunpack.c.l.b16 %v1472
      %v2628 = vunpack.c.h.b16 %v1472
      %v2629 = vunpack.c.l.b16 %v1473
      %v2630 = vunpack.c.l.b16 %v1474
      %v2631 = vunpack.c.h.b16 %v1474
      %v2632 = vunpack.c.l.b16 %v1475
      %v2633 = vunpack.c.l.b16 %v1476
      %v2634 = vunpack.c.h.b16 %v1476
      %v2635 = vunpack.c.l.b16 %v1477
      %v2636 = vpack.c.b16 %v2591, %v2588
      %v2637 = vpack.c.b16 %v2592, %v2589
      %v2638 = vpack.c.b16 %v2593, %v2590
      %v2639 = vpack.c.b16 %v2597, %v2594
      %v2640 = vpack.c.b16 %v2598, %v2595
      %v2641 = vpack.c.b16 %v2599, %v2596
      %v2642 = vpack.c.b16 %v2603, %v2600
      %v2643 = vpack.c.b16 %v2604, %v2601
      %v2644 = vpack.c.b16 %v2605, %v2602
      %v2645 = vpack.c.b16 %v2609, %v2606
      %v2646 = vpack.c.b16 %v2610, %v2607
      %v2647 = vpack.c.b16 %v2611, %v2608
      %v2648 = vpack.c.b16 %v2615, %v2612
      %v2649 = vpack.c.b16 %v2616, %v2613
      %v2650 = vpack.c.b16 %v2617, %v2614
      %v2651 = vpack.c.b16 %v2621, %v2618
      %v2652 = vpack.c.b16 %v2622, %v2619
      %v2653 = vpack.c.b16 %v2623, %v2620
      %v2654 = vpack.c.b16 %v2627, %v2624
      %v2655 = vpack.c.b16 %v2628, %v2625
      %v2656 = vpack.c.b16 %v2629, %v2626
      %v2657 = vpack.c.b16 %v2633, %v2630
      %v2658 = vpack.c.b16 %v2634, %v2631
      %v2659 = vpack.c.b16 %v2635, %v2632
      %v2732 = vunpack.c.l.b16 %v2508
      %v2733 = vunpack.c.l.b16 %v2509
      %v2734 = vunpack.c.l.b16 %v2510
      %v2735 = vunpack.c.l.b16 %v2511
      %v2736 = vunpack.c.l.b16 %v2512
      %v2737 = vunpack.c.l.b16 %v2513
      %v2738 = vunpack.c.l.b16 %v2514
      %v2739 = vunpack.c.l.b16 %v2515
      %v2740 = vunpack.c.l.b16 %v2516
      %v2741 = vunpack.c.l.b16 %v2517
      %v2742 = vunpack.c.l.b16 %v2518
      %v2743 = vunpack.c.l.b16 %v2519
      %v2744 = vunpack.c.l.b16 %v2520
      %v2745 = vunpack.c.l.b16 %v2521
      %v2746 = vunpack.c.l.b16 %v2522
      %v2747 = vunpack.c.l.b16 %v2523
      %v2748 = vunpack.c.l.b16 %v2524
      %v2749 = vunpack.c.l.b16 %v2525
      %v2750 = vunpack.c.l.b16 %v2526
      %v2751 = vunpack.c.l.b16 %v2527
      %v2752 = vunpack.c.l.b16 %v2528
      %v2753 = vunpack.c.l.b16 %v2529
      %v2754 = vunpack.c.l.b16 %v2530
      %v2755 = vunpack.c.l.b16 %v2531
      %v2756 = vunpack.c.l.b16 %v2532
      %v2757 = vunpack.c.l.b16 %v2533
      %v2758 = vunpack.c.l.b16 %v2534
      %v2759 = vunpack.c.l.b16 %v2535
      %v2760 = vunpack.c.l.b16 %v2536
      %v2761 = vunpack.c.l.b16 %v2537
      %v2762 = vunpack.c.l.b16 %v2538
      %v2763 = vunpack.c.l.b16 %v2539
      %v2764 = vunpack.c.l.b16 %v2540
      %v2765 = vunpack.c.l.b16 %v2541
      %v2766 = vunpack.c.l.b16 %v2542
      %v2767 = vunpack.c.l.b16 %v2543
      %v2768 = vunpack.c.l.b16 %v2544
      %v2769 = vunpack.c.l.b16 %v2545
      %v2770 = vunpack.c.l.b16 %v2546
      %v2771 = vunpack.c.l.b16 %v2547
      %v2772 = vunpack.c.l.b16 %v2548
      %v2773 = vunpack.c.l.b16 %v2549
      %v2774 = vunpack.c.l.b16 %v2550
      %v2775 = vunpack.c.l.b16 %v2551
      %v2776 = vunpack.c.l.b16 %v2552
      %v2777 = vunpack.c.l.b16 %v2553
      %v2778 = vunpack.c.l.b16 %v2554
      %v2779 = vunpack.c.l.b16 %v2555
      %v2780 = vpack.c.b16 %v2733, %v2732
      %v2781 = vpack.c.b16 %v2735, %v2734
      %v2782 = vpack.c.b16 %v2737, %v2736
      %v2783 = vpack.c.b16 %v2739, %v2738
      %v2784 = vpack.c.b16 %v2741, %v2740
      %v2785 = vpack.c.b16 %v2743, %v2742
      %v2786 = vpack.c.b16 %v2745, %v2744
      %v2787 = vpack.c.b16 %v2747, %v2746
      %v2788 = vpack.c.b16 %v2749, %v2748
      %v2789 = vpack.c.b16 %v2751, %v2750
      %v2790 = vpack.c.b16 %v2753, %v2752
      %v2791 = vpack.c.b16 %v2755, %v2754
      %v2792 = vpack.c.b16 %v2757, %v2756
      %v2793 = vpack.c.b16 %v2759, %v2758
      %v2794 = vpack.c.b16 %v2761, %v2760
      %v2795 = vpack.c.b16 %v2763, %v2762
      %v2796 = vpack.c.b16 %v2765, %v2764
      %v2797 = vpack.c.b16 %v2767, %v2766
      %v2798 = vpack.c.b16 %v2769, %v2768
      %v2799 = vpack.c.b16 %v2771, %v2770
      %v2800 = vpack.c.b16 %v2773, %v2772
      %v2801 = vpack.c.b16 %v2775, %v2774
      %v2802 = vpack.c.b16 %v2777, %v2776
      %v2803 = vpack.c.b16 %v2779, %v2778
      %2828 = vmatprep.subr.bf16.mxu0 0
      %2829 = vmatpush1.bf16.msra.mxu0 %v2787
      %2830 = vmatprep.subr.bf16.mxu0 0
      %2831 = vmatpush1.bf16.msra.mxu0 %v2786
      %2832 = vmatprep.subr.bf16.mxu0 0
      %2833 = vmatpush1.bf16.msra.mxu0 %v2785
      %2834 = vmatprep.subr.bf16.mxu0 0
      %2835 = vmatpush1.bf16.msra.mxu0 %v2784
      %2836 = vmatprep.subr.bf16.mxu0 0
      %2837 = vmatpush1.bf16.msra.mxu0 %v2783
      %2838 = vmatprep.subr.bf16.mxu0 0
      %2839 = vmatpush1.bf16.msra.mxu0 %v2782
      %2840 = vmatprep.subr.bf16.mxu0 0
      %2841 = vmatpush1.bf16.msra.mxu0 %v2781
      %2842 = vmatprep.subr.bf16.mxu0 0
      %2843 = vmatpush1.bf16.msra.mxu0 %v2780
      %2844 = vmatprep.subr.bf16.mxu0 0
      %2845 = vmatpush2.bf16.msra.mxu0 %v2795
      %2846 = vmatprep.subr.bf16.mxu0 0
      %2847 = vmatpush2.bf16.msra.mxu0 %v2794
      %2848 = vmatprep.subr.bf16.mxu0 0
      %2849 = vmatpush2.bf16.msra.mxu0 %v2793
      %2850 = vmatprep.subr.bf16.mxu0 0
      %2851 = vmatpush2.bf16.msra.mxu0 %v2792
      %2852 = vmatprep.subr.bf16.mxu0 0
      %2853 = vmatpush2.bf16.msra.mxu0 %v2791
      %2854 = vmatprep.subr.bf16.mxu0 0
      %2855 = vmatpush2.bf16.msra.mxu0 %v2790
      %2856 = vmatprep.subr.bf16.mxu0 0
      %2857 = vmatpush2.bf16.msra.mxu0 %v2789
      %2858 = vmatprep.subr.bf16.mxu0 0
      %2859 = vmatpush2.bf16.msra.mxu0 %v2788
      %2860 = vmatprep.mubr.bf16.mxu0 %v2637
      %2861 = vmatmul.mubr.bf16.gmra.mxu0 %v2636
      %v2862 = vpop.f32.mrf.mxu0
      %v2863 = vadd.f32 0.0, %v2862
      %v2864 = vpop.f32.mrf.mxu0
      %v2865 = vpop.f32.mrf.mxu0
      %v2866 = vadd.f32 0.0, %v2865
      %v2867 = vpop.f32.mrf.mxu0
      %2868 = vmatprep.mubr.bf16.mxu0 %v2640
      %2869 = vmatmul.mubr.bf16.gmra.mxu0 %v2639
      %v2870 = vpop.f32.mrf.mxu0
      %v2871 = vadd.f32 0.0, %v2870
      %v2872 = vpop.f32.mrf.mxu0
      %v2873 = vpop.f32.mrf.mxu0
      %v2874 = vadd.f32 0.0, %v2873
      %v2875 = vpop.f32.mrf.mxu0
      %2876 = vmatprep.mubr.bf16.mxu0 %v2643
      %2877 = vmatmul.mubr.bf16.gmra.mxu0 %v2642
      %v2878 = vpop.f32.mrf.mxu0
      %v2879 = vadd.f32 0.0, %v2878
      %v2880 = vpop.f32.mrf.mxu0
      %v2881 = vpop.f32.mrf.mxu0
      %v2882 = vadd.f32 0.0, %v2881
      %v2883 = vpop.f32.mrf.mxu0
      %2884 = vmatprep.mubr.bf16.mxu0 %v2646
      %2885 = vmatmul.mubr.bf16.gmra.mxu0 %v2645
      %v2886 = vpop.f32.mrf.mxu0
      %v2887 = vadd.f32 0.0, %v2886
      %v2888 = vpop.f32.mrf.mxu0
      %v2889 = vpop.f32.mrf.mxu0
      %v2890 = vadd.f32 0.0, %v2889
      %v2891 = vpop.f32.mrf.mxu0
      %2892 = vmatprep.mubr.bf16.mxu0 %v2649
      %2893 = vmatmul.mubr.bf16.gmra.mxu0 %v2648
      %v2894 = vpop.f32.mrf.mxu0
      %v2895 = vadd.f32 0.0, %v2894
      %v2896 = vpop.f32.mrf.mxu0
      %v2897 = vpop.f32.mrf.mxu0
      %v2898 = vadd.f32 0.0, %v2897
      %v2899 = vpop.f32.mrf.mxu0
      %2900 = vmatprep.mubr.bf16.mxu0 %v2652
      %2901 = vmatmul.mubr.bf16.gmra.mxu0 %v2651
      %v2902 = vpop.f32.mrf.mxu0
      %v2903 = vadd.f32 0.0, %v2902
      %v2904 = vpop.f32.mrf.mxu0
      %v2905 = vpop.f32.mrf.mxu0
      %v2906 = vadd.f32 0.0, %v2905
      %v2907 = vpop.f32.mrf.mxu0
      %2908 = vmatprep.mubr.bf16.mxu0 %v2655
      %2909 = vmatmul.mubr.bf16.gmra.mxu0 %v2654
      %v2910 = vpop.f32.mrf.mxu0
      %v2911 = vadd.f32 0.0, %v2910
      %v2912 = vpop.f32.mrf.mxu0
      %v2913 = vpop.f32.mrf.mxu0
      %v2914 = vadd.f32 0.0, %v2913
      %v2915 = vpop.f32.mrf.mxu0
      %2916 = vmatprep.mubr.bf16.mxu0 %v2658
      %2917 = vmatmul.mubr.bf16.gmra.mxu0 %v2657
      %v2918 = vpop.f32.mrf.mxu0
      %v2919 = vadd.f32 0.0, %v2918
      %v2920 = vpop.f32.mrf.mxu0
      %v2921 = vpop.f32.mrf.mxu0
      %v2922 = vadd.f32 0.0, %v2921
      %v2923 = vpop.f32.mrf.mxu0
      %2924 = vdwg.mxu0
      %2925 = vmatprep.subr.bf16.mxu0 0
      %2926 = vmatpush1.bf16.msra.mxu0 %v2803
      %2927 = vmatprep.subr.bf16.mxu0 0
      %2928 = vmatpush1.bf16.msra.mxu0 %v2802
      %2929 = vmatprep.subr.bf16.mxu0 0
      %2930 = vmatpush1.bf16.msra.mxu0 %v2801
      %2931 = vmatprep.subr.bf16.mxu0 0
      %2932 = vmatpush1.bf16.msra.mxu0 %v2800
      %2933 = vmatprep.subr.bf16.mxu0 0
      %2934 = vmatpush1.bf16.msra.mxu0 %v2799
      %2935 = vmatprep.subr.bf16.mxu0 0
      %2936 = vmatpush1.bf16.msra.mxu0 %v2798
      %2937 = vmatprep.subr.bf16.mxu0 0
      %2938 = vmatpush1.bf16.msra.mxu0 %v2797
      %2939 = vmatprep.subr.bf16.mxu0 0
      %2940 = vmatpush1.bf16.msra.mxu0 %v2796
      %2941 = vmatprep.subr.bf16.mxu0 0
      %2942 = vmatpush2.bf16.msra.mxu0 0
      %2943 = vmatprep.subr.bf16.mxu0 0
      %2944 = vmatpush2.bf16.msra.mxu0 0
      %2945 = vmatprep.subr.bf16.mxu0 0
      %2946 = vmatpush2.bf16.msra.mxu0 0
      %2947 = vmatprep.subr.bf16.mxu0 0
      %2948 = vmatpush2.bf16.msra.mxu0 0
      %2949 = vmatprep.subr.bf16.mxu0 0
      %2950 = vmatpush2.bf16.msra.mxu0 0
      %2951 = vmatprep.subr.bf16.mxu0 0
      %2952 = vmatpush2.bf16.msra.mxu0 0
      %2953 = vmatprep.subr.bf16.mxu0 0
      %2954 = vmatpush2.bf16.msra.mxu0 0
      %2955 = vmatprep.subr.bf16.mxu0 0
      %2956 = vmatpush2.bf16.msra.mxu0 0
      %2957 = vmatprep.mubr.bf16.mxu0 0
      %2958 = vmatmul.mubr.bf16.gmra.mxu0 %v2638
      %v2959 = vpop.f32.mrf.mxu0
      %v2960 = vadd.f32 %v2863, %v2959
      %v2961 = vpop.f32.mrf.mxu0
      %v2962 = vpop.f32.mrf.mxu0
      %v2963 = vadd.f32 %v2866, %v2962
      %v2964 = vpop.f32.mrf.mxu0
      %2965 = vmatprep.mubr.bf16.mxu0 0
      %2966 = vmatmul.mubr.bf16.gmra.mxu0 %v2641
      %v2967 = vpop.f32.mrf.mxu0
      %v2968 = vadd.f32 %v2871, %v2967
      %v2969 = vpop.f32.mrf.mxu0
      %v2970 = vpop.f32.mrf.mxu0
      %v2971 = vadd.f32 %v2874, %v2970
      %v2972 = vpop.f32.mrf.mxu0
      %2973 = vmatprep.mubr.bf16.mxu0 0
      %2974 = vmatmul.mubr.bf16.gmra.mxu0 %v2644
      %v2975 = vpop.f32.mrf.mxu0
      %v2976 = vadd.f32 %v2879, %v2975
      %v2977 = vpop.f32.mrf.mxu0
      %v2978 = vpop.f32.mrf.mxu0
      %v2979 = vadd.f32 %v2882, %v2978
      %v2980 = vpop.f32.mrf.mxu0
      %2981 = vmatprep.mubr.bf16.mxu0 0
      %2982 = vmatmul.mubr.bf16.gmra.mxu0 %v2647
      %v2983 = vpop.f32.mrf.mxu0
      %v2984 = vadd.f32 %v2887, %v2983
      %v2985 = vpop.f32.mrf.mxu0
      %v2986 = vpop.f32.mrf.mxu0
      %v2987 = vadd.f32 %v2890, %v2986
      %v2988 = vpop.f32.mrf.mxu0
      %2989 = vmatprep.mubr.bf16.mxu0 0
      %2990 = vmatmul.mubr.bf16.gmra.mxu0 %v2650
      %v2991 = vpop.f32.mrf.mxu0
      %v2992 = vadd.f32 %v2895, %v2991
      %v2993 = vpop.f32.mrf.mxu0
      %v2994 = vpop.f32.mrf.mxu0
      %v2995 = vadd.f32 %v2898, %v2994
      %v2996 = vpop.f32.mrf.mxu0
      %2997 = vmatprep.mubr.bf16.mxu0 0
      %2998 = vmatmul.mubr.bf16.gmra.mxu0 %v2653
      %v2999 = vpop.f32.mrf.mxu0
      %v3000 = vadd.f32 %v2903, %v2999
      %v3001 = vpop.f32.mrf.mxu0
      %v3002 = vpop.f32.mrf.mxu0
      %v3003 = vadd.f32 %v2906, %v3002
      %v3004 = vpop.f32.mrf.mxu0
      %3005 = vmatprep.mubr.bf16.mxu0 0
      %3006 = vmatmul.mubr.bf16.gmra.mxu0 %v2656
      %v3007 = vpop.f32.mrf.mxu0
      %v3008 = vadd.f32 %v2911, %v3007
      %v3009 = vpop.f32.mrf.mxu0
      %v3010 = vpop.f32.mrf.mxu0
      %v3011 = vadd.f32 %v2914, %v3010
      %v3012 = vpop.f32.mrf.mxu0
      %3013 = vmatprep.mubr.bf16.mxu0 0
      %3014 = vmatmul.mubr.bf16.gmra.mxu0 %v2659
      %v3015 = vpop.f32.mrf.mxu0
      %v3016 = vadd.f32 %v2919, %v3015
      %v3017 = vpop.f32.mrf.mxu0
      %v3018 = vpop.f32.mrf.mxu0
      %v3019 = vadd.f32 %v2922, %v3018
      %v3020 = vpop.f32.mrf.mxu0
      %3021 = vdwg.mxu0
      %v3022 = vadd.f32 %v2445, %v2960
      %v3023 = vadd.f32 %v2448, %v2963
      %v3024 = vadd.f32 %v2453, %v2968
      %v3025 = vadd.f32 %v2456, %v2971
      %v3026 = vadd.f32 %v2461, %v2976
      %v3027 = vadd.f32 %v2464, %v2979
      %v3028 = vadd.f32 %v2469, %v2984
      %v3029 = vadd.f32 %v2472, %v2987
      %v3030 = vadd.f32 %v2477, %v2992
      %v3031 = vadd.f32 %v2480, %v2995
      %v3032 = vadd.f32 %v2485, %v3000
      %v3033 = vadd.f32 %v2488, %v3003
      %v3034 = vadd.f32 %v2493, %v3008
      %v3035 = vadd.f32 %v2496, %v3011
      %v3036 = vadd.f32 %v2501, %v3016
      %v3037 = vadd.f32 %v2504, %v3019
      %v3038 = vpack.c.bf16 %v3023, %v3022
      %v3039 = vpack.c.bf16 %v3025, %v3024
      %v3040 = vpack.c.bf16 %v3027, %v3026
      %v3041 = vpack.c.bf16 %v3029, %v3028
      %v3042 = vpack.c.bf16 %v3031, %v3030
      %v3043 = vpack.c.bf16 %v3033, %v3032
      %v3044 = vpack.c.bf16 %v3035, %v3034
      %v3045 = vpack.c.bf16 %v3037, %v3036
      %v3054 = vunpack.c.l.b16 %v3038
      %v3055 = vunpack.c.h.b16 %v3038
      %v3056 = vunpack.c.l.b16 %v3039
      %v3057 = vunpack.c.h.b16 %v3039
      %v3058 = vunpack.c.l.b16 %v3040
      %v3059 = vunpack.c.h.b16 %v3040
      %v3060 = vunpack.c.l.b16 %v3041
      %v3061 = vunpack.c.h.b16 %v3041
      %v3062 = vunpack.c.l.b16 %v3042
      %v3063 = vunpack.c.h.b16 %v3042
      %v3064 = vunpack.c.l.b16 %v3043
      %v3065 = vunpack.c.h.b16 %v3043
      %v3066 = vunpack.c.l.b16 %v3044
      %v3067 = vunpack.c.h.b16 %v3044
      %v3068 = vunpack.c.l.b16 %v3045
      %v3069 = vunpack.c.h.b16 %v3045
      %v3070 = vpack.c.b16 %v3054, %v3054
      %v3071 = vpack.c.b16 %v3055, %v3055
      %v3072 = vpack.c.b16 %v3056, %v3056
      %v3073 = vpack.c.b16 %v3057, %v3057
      %v3074 = vpack.c.b16 %v3058, %v3058
      %v3075 = vpack.c.b16 %v3059, %v3059
      %v3076 = vpack.c.b16 %v3060, %v3060
      %v3077 = vpack.c.b16 %v3061, %v3061
      %v3078 = vpack.c.b16 %v3062, %v3062
      %v3079 = vpack.c.b16 %v3063, %v3063
      %v3080 = vpack.c.b16 %v3064, %v3064
      %v3081 = vpack.c.b16 %v3065, %v3065
      %v3082 = vpack.c.b16 %v3066, %v3066
      %v3083 = vpack.c.b16 %v3067, %v3067
      %v3084 = vpack.c.b16 %v3068, %v3068
      %v3085 = vpack.c.b16 %v3069, %v3069
      %3102 = vst [vmem:[%s300] sm:$0xf] %v3070
      %3103 = vst [vmem:[%s300 + $0x4] sm:$0xf] %v3071
      %3104 = vst [vmem:[%s300 + $0x8] sm:$0xf] %v3072
      %3105 = vst [vmem:[%s300 + $0xc] sm:$0xf] %v3073
      %3106 = vst [vmem:[%s300 + $0x10] sm:$0xf] %v3074
      %3107 = vst [vmem:[%s300 + $0x14] sm:$0xf] %v3075
      %3108 = vst [vmem:[%s300 + $0x18] sm:$0xf] %v3076
      %3109 = vst [vmem:[%s300 + $0x1c] sm:$0xf] %v3077
      %3110 = vst [vmem:[%s300 + $0x20] sm:$0xf] %v3078
      %3111 = vst [vmem:[%s300 + $0x24] sm:$0xf] %v3079
      %3112 = vst [vmem:[%s300 + $0x28] sm:$0xf] %v3080
      %3113 = vst [vmem:[%s300 + $0x2c] sm:$0xf] %v3081
      %3114 = vst [vmem:[%s300 + $0x30] sm:$0xf] %v3082
      %3115 = vst [vmem:[%s300 + $0x34] sm:$0xf] %v3083
      %3116 = vst [vmem:[%s300 + $0x38] sm:$0xf] %v3084
      %3117 = vst [vmem:[%s300 + $0x3c] sm:$0xf] %v3085
      %v3118 = vadd.f32 %v3022, %v3023
      %v3119 = vrot.slane %v3118, 4
      %v3120 = vadd.f32 %v3118, %v3119
      %v3121 = vrot.slane %v3120, 2
      %v3122 = vadd.f32 %v3120, %v3121
      %v3123 = vrot.slane %v3122, 1
      %v3124 = vadd.f32 %v3122, %v3123
      %v3125 = vadd.f32 %v3024, %v3025
      %v3126 = vrot.slane %v3125, 4
      %v3127 = vadd.f32 %v3125, %v3126
      %v3128 = vrot.slane %v3127, 2
      %v3129 = vadd.f32 %v3127, %v3128
      %v3130 = vrot.slane %v3129, 1
      %v3131 = vadd.f32 %v3129, %v3130
      %v3132 = vadd.f32 %v3026, %v3027
      %v3133 = vrot.slane %v3132, 4
      %v3134 = vadd.f32 %v3132, %v3133
      %v3135 = vrot.slane %v3134, 2
      %v3136 = vadd.f32 %v3134, %v3135
      %v3137 = vrot.slane %v3136, 1
      %v3138 = vadd.f32 %v3136, %v3137
      %v3139 = vadd.f32 %v3028, %v3029
      %v3140 = vrot.slane %v3139, 4
      %v3141 = vadd.f32 %v3139, %v3140
      %v3142 = vrot.slane %v3141, 2
      %v3143 = vadd.f32 %v3141, %v3142
      %v3144 = vrot.slane %v3143, 1
      %v3145 = vadd.f32 %v3143, %v3144
      %v3146 = vadd.f32 %v3030, %v3031
      %v3147 = vrot.slane %v3146, 4
      %v3148 = vadd.f32 %v3146, %v3147
      %v3149 = vrot.slane %v3148, 2
      %v3150 = vadd.f32 %v3148, %v3149
      %v3151 = vrot.slane %v3150, 1
      %v3152 = vadd.f32 %v3150, %v3151
      %v3153 = vadd.f32 %v3032, %v3033
      %v3154 = vrot.slane %v3153, 4
      %v3155 = vadd.f32 %v3153, %v3154
      %v3156 = vrot.slane %v3155, 2
      %v3157 = vadd.f32 %v3155, %v3156
      %v3158 = vrot.slane %v3157, 1
      %v3159 = vadd.f32 %v3157, %v3158
      %v3160 = vadd.f32 %v3034, %v3035
      %v3161 = vrot.slane %v3160, 4
      %v3162 = vadd.f32 %v3160, %v3161
      %v3163 = vrot.slane %v3162, 2
      %v3164 = vadd.f32 %v3162, %v3163
      %v3165 = vrot.slane %v3164, 1
      %v3166 = vadd.f32 %v3164, %v3165
      %v3167 = vadd.f32 %v3036, %v3037
      %v3168 = vrot.slane %v3167, 4
      %v3169 = vadd.f32 %v3167, %v3168
      %v3170 = vrot.slane %v3169, 2
      %v3171 = vadd.f32 %v3169, %v3170
      %v3172 = vrot.slane %v3171, 1
      %v3173 = vadd.f32 %v3171, %v3172
      %vm3182 = vcmask 1041409
      %v3183 = vsel %vm3182, %v3131, %v3124
      %vm3184 = vcmask 1042434
      %v3185 = vsel %vm3184, %v3138, %v3183
      %vm3186 = vcmask 1043459
      %v3187 = vsel %vm3186, %v3145, %v3185
      %vm3188 = vcmask 1044484
      %v3189 = vsel %vm3188, %v3152, %v3187
      %vm3190 = vcmask 1045509
      %v3191 = vsel %vm3190, %v3159, %v3189
      %vm3192 = vcmask 1046534
      %v3193 = vsel %vm3192, %v3166, %v3191
      %vm3194 = vcmask 1047559
      %v3195 = vsel %vm3194, %v3173, %v3193
      %3197 = vst [vmem:[%s309] sm:$0xff] %v3195
      %v3198 = vmul.f32 %v3022, %v3022
      %v3199 = vmul.f32 %v3023, %v3023
      %v3200 = vmul.f32 %v3024, %v3024
      %v3201 = vmul.f32 %v3025, %v3025
      %v3202 = vmul.f32 %v3026, %v3026
      %v3203 = vmul.f32 %v3027, %v3027
      %v3204 = vmul.f32 %v3028, %v3028
      %v3205 = vmul.f32 %v3029, %v3029
      %v3206 = vmul.f32 %v3030, %v3030
      %v3207 = vmul.f32 %v3031, %v3031
      %v3208 = vmul.f32 %v3032, %v3032
      %v3209 = vmul.f32 %v3033, %v3033
      %v3210 = vmul.f32 %v3034, %v3034
      %v3211 = vmul.f32 %v3035, %v3035
      %v3212 = vmul.f32 %v3036, %v3036
      %v3213 = vmul.f32 %v3037, %v3037
      %v3214 = vadd.f32 %v3198, %v3199
      %v3215 = vrot.slane %v3214, 4
      %v3216 = vadd.f32 %v3214, %v3215
      %v3217 = vrot.slane %v3216, 2
      %v3218 = vadd.f32 %v3216, %v3217
      %v3219 = vrot.slane %v3218, 1
      %v3220 = vadd.f32 %v3218, %v3219
      %v3221 = vadd.f32 %v3200, %v3201
      %v3222 = vrot.slane %v3221, 4
      %v3223 = vadd.f32 %v3221, %v3222
      %v3224 = vrot.slane %v3223, 2
      %v3225 = vadd.f32 %v3223, %v3224
      %v3226 = vrot.slane %v3225, 1
      %v3227 = vadd.f32 %v3225, %v3226
      %v3228 = vadd.f32 %v3202, %v3203
      %v3229 = vrot.slane %v3228, 4
      %v3230 = vadd.f32 %v3228, %v3229
      %v3231 = vrot.slane %v3230, 2
      %v3232 = vadd.f32 %v3230, %v3231
      %v3233 = vrot.slane %v3232, 1
      %v3234 = vadd.f32 %v3232, %v3233
      %v3235 = vadd.f32 %v3204, %v3205
      %v3236 = vrot.slane %v3235, 4
      %v3237 = vadd.f32 %v3235, %v3236
      %v3238 = vrot.slane %v3237, 2
      %v3239 = vadd.f32 %v3237, %v3238
      %v3240 = vrot.slane %v3239, 1
      %v3241 = vadd.f32 %v3239, %v3240
      %v3242 = vadd.f32 %v3206, %v3207
      %v3243 = vrot.slane %v3242, 4
      %v3244 = vadd.f32 %v3242, %v3243
      %v3245 = vrot.slane %v3244, 2
      %v3246 = vadd.f32 %v3244, %v3245
      %v3247 = vrot.slane %v3246, 1
      %v3248 = vadd.f32 %v3246, %v3247
      %v3249 = vadd.f32 %v3208, %v3209
      %v3250 = vrot.slane %v3249, 4
      %v3251 = vadd.f32 %v3249, %v3250
      %v3252 = vrot.slane %v3251, 2
      %v3253 = vadd.f32 %v3251, %v3252
      %v3254 = vrot.slane %v3253, 1
      %v3255 = vadd.f32 %v3253, %v3254
      %v3256 = vadd.f32 %v3210, %v3211
      %v3257 = vrot.slane %v3256, 4
      %v3258 = vadd.f32 %v3256, %v3257
      %v3259 = vrot.slane %v3258, 2
      %v3260 = vadd.f32 %v3258, %v3259
      %v3261 = vrot.slane %v3260, 1
      %v3262 = vadd.f32 %v3260, %v3261
      %v3263 = vadd.f32 %v3212, %v3213
      %v3264 = vrot.slane %v3263, 4
      %v3265 = vadd.f32 %v3263, %v3264
      %v3266 = vrot.slane %v3265, 2
      %v3267 = vadd.f32 %v3265, %v3266
      %v3268 = vrot.slane %v3267, 1
      %v3269 = vadd.f32 %v3267, %v3268
      %v3278 = vsel %vm3182, %v3227, %v3220
      %v3279 = vsel %vm3184, %v3234, %v3278
      %v3280 = vsel %vm3186, %v3241, %v3279
      %v3281 = vsel %vm3188, %v3248, %v3280
      %v3282 = vsel %vm3190, %v3255, %v3281
      %v3283 = vsel %vm3192, %v3262, %v3282
      %v3284 = vsel %vm3194, %v3269, %v3283
      %3286 = vst [vmem:[%s317] sm:$0xff] %v3284
      %s3287 = smul.u32 8, %s23
      %p3288 = scmp.lt.s32.totalorder %s22, 1
      %s3289 = scalar_select %p3288, %s22, 1
      %p3290 = scmp.lt.s32.totalorder %s3287, 15
      %s3291 = scalar_select %p3290, %s3287, 15
      %s3292 = smul.addr %s3291, 2
      %s3293 = smul.addr %s3289, 32
      %s3294 = sadd.s32 %s3292, %s3293
      %s3295 = smul.addr %s3294, 4
      %s3296 = scalar_lea.vmem %s4, %s3295
      %p3297 = scmp.lt.s32.totalorder %s22, 1
      %s3298 = scalar_select %p3297, %s22, 1
      %p3299 = scmp.lt.s32.totalorder %s23, 1
      %s3300 = scalar_select %p3299, %s23, 1
      %s3301 = smul.addr %s3298, 2
      %s3302 = sadd.s32 %s3300, %s3301
      %s3303 = smul.addr %s3302, 8
      %s3304 = scalar_lea.vmem %s5, %s3303
      %p3305 = scmp.lt.s32.totalorder %s22, 1
      %s3306 = scalar_select %p3305, %s22, 1
      %p3307 = scmp.lt.s32.totalorder %s23, 1
      %s3308 = scalar_select %p3307, %s23, 1
      %s3309 = smul.addr %s3306, 2
      %s3310 = sadd.s32 %s3308, %s3309
      %s3311 = smul.addr %s3310, 8
      %s3312 = scalar_lea.vmem %s6, %s3311
      // Predicated region
      $region41: #{bottleneck_forward.5} parent=35 // pred_check
        %p3313 = pneg %p139
      $region42: #{bottleneck_forward.5} parent=35 // pred_check_branch
        %3315 = sbr.rel (%p3313) target = $region44
      $region43: #{bottleneck_forward.5} parent=35 // pred_region
        %s3316 = smul.u32 8, %s23
      $region44: #{bottleneck_forward.5} parent=35 // pred_fallthru
        _
      // Predicated region
      $region45: #{bottleneck_forward.5} parent=35 // pred_check
        %p3317 = pneg %p167
      $region46: #{bottleneck_forward.5} parent=35 // pred_check_branch
        %3319 = sbr.rel (%p3317) target = $region48
      $region47: #{bottleneck_forward.5} parent=35 // pred_region
        _
      $region48: #{bottleneck_forward.5} parent=35 // pred_fallthru
        _
      // Predicated region
      $region49: #{bottleneck_forward.5} parent=35 // pred_check
        %p3320 = pneg %p195
      $region50: #{bottleneck_forward.5} parent=35 // pred_check_branch
        %3322 = sbr.rel (%p3320) target = $region52
      $region51: #{bottleneck_forward.5} parent=35 // pred_region
        _
      $region52: #{bottleneck_forward.5} parent=35 // pred_fallthru
        _
    $region36: #{bottleneck_forward.5} parent=5 // pred_fallthru
      _
    %p3323 = scmp.le.s32.totalorder 2, %s13
    // Predicated region
    $region53: #{bottleneck_forward.5} parent=5 // pred_check
      %p3324 = pneg %p3323
    $region54: #{bottleneck_forward.5} parent=5 // pred_check_branch
      %3326 = sbr.rel (%p3324) target = $region56
    $region55: #{bottleneck_forward.5} parent=5 // pred_region
      %s3327 = ssub.s32 %s13, 2
      // Predicated region
      $region57: #{bottleneck_forward.5} parent=55 // pred_check
        %p3328 = pneg %p145
      $region58: #{bottleneck_forward.5} parent=55 // pred_check_branch
        %3330 = sbr.rel (%p3328) target = $region60
      $region59: #{bottleneck_forward.5} parent=55 // pred_region
        %s3331 = smul.u32 8, %s25
        %p3332 = scmp.lt.s32.totalorder %s24, 1
        %s3333 = scalar_select %p3332, %s24, 1
        %p3334 = scmp.lt.s32.totalorder %s3331, 15
        %s3335 = scalar_select %p3334, %s3331, 15
        %s3336 = smul.addr %s3335, 2
        %s3337 = smul.addr %s3333, 32
        %s3338 = sadd.s32 %s3336, %s3337
        %s3339 = smul.addr %s3338, 4
        %s3340 = scalar_lea.vmem %s4, %s3339
      $region60: #{bottleneck_forward.5} parent=55 // pred_fallthru
        _
      // Predicated region
      $region61: #{bottleneck_forward.5} parent=55 // pred_check
        %p3341 = pneg %p173
      $region62: #{bottleneck_forward.5} parent=55 // pred_check_branch
        %3343 = sbr.rel (%p3341) target = $region64
      $region63: #{bottleneck_forward.5} parent=55 // pred_region
        %p3344 = scmp.lt.s32.totalorder %s24, 1
        %s3345 = scalar_select %p3344, %s24, 1
        %p3346 = scmp.lt.s32.totalorder %s25, 1
        %s3347 = scalar_select %p3346, %s25, 1
        %s3348 = smul.addr %s3345, 2
        %s3349 = sadd.s32 %s3347, %s3348
        %s3350 = smul.addr %s3349, 8
        %s3351 = scalar_lea.vmem %s5, %s3350
      $region64: #{bottleneck_forward.5} parent=55 // pred_fallthru
        _
      // Predicated region
      $region65: #{bottleneck_forward.5} parent=55 // pred_check
        %p3352 = pneg %p201
      $region66: #{bottleneck_forward.5} parent=55 // pred_check_branch
        %3354 = sbr.rel (%p3352) target = $region68
      $region67: #{bottleneck_forward.5} parent=55 // pred_region
        %p3355 = scmp.lt.s32.totalorder %s24, 1
        %s3356 = scalar_select %p3355, %s24, 1
        %p3357 = scmp.lt.s32.totalorder %s25, 1
        %s3358 = scalar_select %p3357, %s25, 1
        %s3359 = smul.addr %s3356, 2
        %s3360 = sadd.s32 %s3358, %s3359
        %s3361 = smul.addr %s3360, 8
        %s3362 = scalar_lea.vmem %s6, %s3361
      $region68: #{bottleneck_forward.5} parent=55 // pred_fallthru
        _
    $region56: #{bottleneck_forward.5} parent=5 // pred_fallthru
      _
  $region6: #{bottleneck_forward.5} parent=0 // loop_footer
    %s17 = sadd.s32 1, %s13
  $region7: #{bottleneck_forward.5} parent=0 // loop_footer_branch
    %12 = sbr.rel target = $region3
  $region8: #{bottleneck_forward.5} parent=0 // loop_exit
    _

</llo_original>
